<compile_context>
chip_gen: v6e
topology: v6e:2x2x1
jax: 0.10.0
libtpu: 0.0.40
codegen_flags: <defaults>
</compile_context>

<pallas_src>
import functools

import jax
import jax.numpy as jnp
from jax import lax
from jax.experimental import pallas as pl
from jax.experimental.pallas import tpu as pltpu


def _round_up(x, m):
    return (x + m - 1) // m * m


# --------------------------------------------------------------------------
# Pallas tiled matmul with fused epilogue (bias add and/or LeakyReLU)
# --------------------------------------------------------------------------
def _mm_kernel(*refs, act, has_bias):
    if has_bias:
        a_ref, b_ref, bias_ref, o_ref, acc_ref = refs
    else:
        a_ref, b_ref, o_ref, acc_ref = refs
        bias_ref = None

    @pl.when(pl.program_id(2) == 0)
    def _():
        acc_ref[...] = jnp.zeros_like(acc_ref)

    acc_ref[...] += jnp.dot(a_ref[...], b_ref[...],
                            preferred_element_type=jnp.float32)

    @pl.when(pl.program_id(2) == pl.num_programs(2) - 1)
    def _():
        y = acc_ref[...]
        if has_bias:
            y = y + bias_ref[...]
        if act == "lrelu":
            y = jnp.where(y > 0, y, 0.2 * y)
        o_ref[...] = y.astype(o_ref.dtype)


def pallas_matmul(a, b, bias=None, act=None):
    """a: (M, K), b: (K, N), optional bias (N,). bf16 MXU inputs, f32 acc."""
    M, K = a.shape
    K2, N = b.shape
    assert K == K2
    # Adaptive tiles: don't pad tiny dims up to 128/256 needlessly.
    tm = min(_round_up(M, 8), 256)
    tn = min(_round_up(N, 128), 256)
    tk = min(_round_up(K, 128), 512)
    Mp, Kp, Np = _round_up(M, tm), _round_up(K, tk), _round_up(N, tn)

    a_p = jnp.pad(a.astype(jnp.bfloat16), ((0, Mp - M), (0, Kp - K)))
    b_p = jnp.pad(b.astype(jnp.bfloat16), ((0, Kp - K), (0, Np - N)))

    has_bias = bias is not None
    inputs = [a_p, b_p]
    in_specs = [pl.BlockSpec((tm, tk), lambda i, j, k: (i, k)),
                pl.BlockSpec((tk, tn), lambda i, j, k: (k, j))]
    if has_bias:
        bias_p = jnp.pad(bias.reshape(1, N).astype(jnp.float32),
                         ((0, 0), (0, Np - N)))
        inputs.append(bias_p)
        in_specs.append(pl.BlockSpec((1, tn), lambda i, j, k: (0, j)))

    kern = functools.partial(_mm_kernel, act=act, has_bias=has_bias)
    out = pl.pallas_call(
        kern,
        out_shape=jax.ShapeDtypeStruct((Mp, Np), jnp.float32),
        grid_spec=pltpu.PrefetchScalarGridSpec(
            num_scalar_prefetch=0,
            grid=(Mp // tm, Np // tn, Kp // tk),
            in_specs=in_specs,
            out_specs=pl.BlockSpec((tm, tn), lambda i, j, k: (i, j)),
            scratch_shapes=[pltpu.VMEM((tm, tn), jnp.float32)],
        ),
        compiler_params=pltpu.CompilerParams(
            dimension_semantics=("parallel", "parallel", "arbitrary")),
    )(*inputs)
    return out[:M, :N]


# --------------------------------------------------------------------------
# Pallas BatchNorm (train-mode batch statistics) + LeakyReLU, tiled over M
# --------------------------------------------------------------------------
def _bn_stats_kernel(x_ref, sum_ref, sq_ref):
    @pl.when(pl.program_id(0) == 0)
    def _():
        sum_ref[...] = jnp.zeros_like(sum_ref)
        sq_ref[...] = jnp.zeros_like(sq_ref)
    x = x_ref[...].astype(jnp.float32)
    sum_ref[...] += jnp.sum(x, axis=0, keepdims=True)
    sq_ref[...] += jnp.sum(x * x, axis=0, keepdims=True)


def _bn_apply_kernel(x_ref, sum_ref, sq_ref, o_ref, *, inv_m, eps, neg):
    x = x_ref[...].astype(jnp.float32)
    mean = sum_ref[...] * inv_m                       # (1, C)
    var = sq_ref[...] * inv_m - mean * mean           # biased variance
    y = (x - mean) * lax.rsqrt(var + eps)
    y = jnp.where(y > 0, y, neg * y)
    o_ref[...] = y.astype(o_ref.dtype)


def pallas_bn_lrelu(x2d, eps=1e-5, neg=0.2):
    """Train-mode BatchNorm2d (gamma=1, beta=0) + LeakyReLU over (M, C) slab."""
    M, C = x2d.shape
    tm = min(_round_up(M, 8), 256)
    Mp = _round_up(M, tm)
    # Zero rows contribute 0 to sum/sumsq, so padded rows don't bias the stats
    # as long as we divide by the true M.
    xp = jnp.pad(x2d, ((0, Mp - M), (0, 0)))
    grid = (Mp // tm,)
    stat_spec = pl.BlockSpec((1, C), lambda i: (0, 0))

    s_sum, s_sq = pl.pallas_call(
        _bn_stats_kernel,
        out_shape=(jax.ShapeDtypeStruct((1, C), jnp.float32),
                   jax.ShapeDtypeStruct((1, C), jnp.float32)),
        grid=grid,
        in_specs=[pl.BlockSpec((tm, C), lambda i: (i, 0))],
        out_specs=(stat_spec, stat_spec),
        compiler_params=pltpu.CompilerParams(
            dimension_semantics=("arbitrary",)),
    )(xp)

    y = pl.pallas_call(
        functools.partial(_bn_apply_kernel, inv_m=1.0 / float(M),
                          eps=eps, neg=neg),
        out_shape=jax.ShapeDtypeStruct((Mp, C), x2d.dtype),
        grid=grid,
        in_specs=[pl.BlockSpec((tm, C), lambda i: (i, 0)),
                  stat_spec, stat_spec],
        out_specs=pl.BlockSpec((tm, C), lambda i: (i, 0)),
        compiler_params=pltpu.CompilerParams(
            dimension_semantics=("parallel",)),
    )(xp, s_sum, s_sq)
    return y[:M]


# --------------------------------------------------------------------------
# Conv2d(k=4, p=1, stride s) built on the Pallas matmul (im2col glue in JAX)
# --------------------------------------------------------------------------
# TODO(synk): the im2col gather is plain-JAX glue; it could be fused into the
# matmul via an index_map over the (kh,kw) taps to avoid materializing patches.
def conv4x4(x, w, stride, bias=None, act=None):
    """x: (N,H,W,Cin) NHWC.  w: torch Conv2d layout (Cout, Cin, 4, 4)."""
    N, H, W, Cin = x.shape
    Cout = w.shape[0]
    Ho = (H + 2 - 4) // stride + 1
    Wo = (W + 2 - 4) // stride + 1
    xp = jnp.pad(x, ((0, 0), (1, 1), (1, 1), (0, 0)))
    cols = []
    for kh in range(4):
        for kw in range(4):
            cols.append(xp[:, kh:kh + stride * (Ho - 1) + 1:stride,
                           kw:kw + stride * (Wo - 1) + 1:stride, :])
    patches = jnp.concatenate(cols, axis=-1).reshape(N * Ho * Wo, 16 * Cin)
    w_flat = jnp.transpose(w, (2, 3, 1, 0)).reshape(16 * Cin, Cout)
    y = pallas_matmul(patches, w_flat, bias=bias, act=act)
    return y.reshape(N, Ho, Wo, Cout)


# --------------------------------------------------------------------------
# PatchGANDiscriminator
# --------------------------------------------------------------------------
# (in_channels, out_channels, normalize)
CFG = [(6, 64, False), (64, 128, True), (128, 256, True), (256, 512, True)]


def init_params(key):
    params = {}
    keys = jax.random.split(key, len(CFG) + 2)
    for i, (ci, co, _) in enumerate(CFG):
        params[f"conv{i}"] = 0.05 * jax.random.normal(
            keys[i], (co, ci, 4, 4), jnp.float32)
    params["final_w"] = 0.05 * jax.random.normal(
        keys[len(CFG)], (1, 512, 4, 4), jnp.float32)
    params["final_b"] = 0.01 * jax.random.normal(
        keys[len(CFG) + 1], (1,), jnp.float32)
    return params


def discriminator_forward(params, x_nchw):
    x = jnp.transpose(x_nchw, (0, 2, 3, 1))  # NCHW -> NHWC
    for i, (_, _, normalize) in enumerate(CFG):
        if normalize:
            h = conv4x4(x, params[f"conv{i}"], stride=2)          # no bias
            N, H, W, C = h.shape
            x = pallas_bn_lrelu(h.reshape(-1, C)).reshape(N, H, W, C)
        else:
            # LeakyReLU fused into the matmul epilogue (no BatchNorm here).
            x = conv4x4(x, params[f"conv{i}"], stride=2, act="lrelu")
    # Final Conv2d(512, 1, k=4, s=1, p=1) with bias, no activation.
    y = conv4x4(x, params["final_w"], stride=1, bias=params["final_b"])
    return jnp.transpose(y, (0, 3, 1, 2))  # NHWC -> NCHW


if __name__ == "__main__":
    key = jax.random.PRNGKey(0)
    k_param, k_x = jax.random.split(key)
    params = init_params(k_param)

    # PatchGAN discriminator consumes a 6-channel (img_A, img_B) concat.
    # 4 stride-2 convs + final k=4,s=1,p=1 conv need spatial >= 32; 64 gives a
    # small but non-degenerate 3x3 patch map.
    x = jax.random.normal(k_x, (2, 6, 64, 64), jnp.float32)

    fwd = jax.jit(discriminator_forward)
    out = fwd(params, x)
    out = jax.block_until_ready(out)

    assert out.shape == (2, 1, 3, 3), out.shape
    assert bool(jnp.all(jnp.isfinite(out)))
    print("KERNEL_OK")
</pallas_src>

<mosaic_0001>
module attributes {stable_mosaic.version = 11 : i64} {
  func.func @_mm_kernel(%arg0: i32, %arg1: i32, %arg2: i32, %arg3: memref<256x128xbf16, #tpu.memory_space<vmem>>, %arg4: memref<128x128xbf16, #tpu.memory_space<vmem>>, %arg5: memref<256x128xf32, #tpu.memory_space<vmem>>, %arg6: memref<256x128xf32, #tpu.memory_space<vmem>>) attributes {dimension_semantics = [#tpu.dimension_semantics<parallel>, #tpu.dimension_semantics<parallel>, #tpu.dimension_semantics<arbitrary>], iteration_bounds = array<i64: 8, 1, 1>, scalar_prefetch = 0 : i64, scratch_operands = 1 : i64, tpu.core_type = #tpu.core_type<tc>, window_params = [{transform_indices = @transform_0, window_bounds = array<i64: 256, 128>}, {transform_indices = @transform_1, window_bounds = array<i64: 128, 128>}, {transform_indices = @transform_2, window_bounds = array<i64: 256, 128>}]} {
    %c0_i32 = arith.constant 0 : i32
    %0 = arith.cmpi eq, %arg2, %c0_i32 : i32
    %1 = arith.extui %0 : i1 to i32
    %c0_i32_0 = arith.constant 0 : i32
    %2 = arith.cmpi ne, %1, %c0_i32_0 : i32
    scf.if %2 {
      %cst_10 = arith.constant 0.000000e+00 : f32
      %12 = vector.broadcast %cst_10 : f32 to vector<256x128xf32>
      %c0_11 = arith.constant 0 : index
      %c0_12 = arith.constant 0 : index
      %13 = vector.load %arg6[%c0_11, %c0_12] : memref<256x128xf32, #tpu.memory_space<vmem>>, vector<256x128xf32>
      tpu.vector_store %arg6[%c0_11, %c0_12], %12 {strides = array<i32>} : memref<256x128xf32, #tpu.memory_space<vmem>>, vector<256x128xf32>,
    } else {
    }
    %c0 = arith.constant 0 : index
    %c0_1 = arith.constant 0 : index
    %3 = vector.load %arg6[%c0, %c0_1] : memref<256x128xf32, #tpu.memory_space<vmem>>, vector<256x128xf32>
    %c0_2 = arith.constant 0 : index
    %c0_3 = arith.constant 0 : index
    %4 = vector.load %arg3[%c0_2, %c0_3] : memref<256x128xbf16, #tpu.memory_space<vmem>>, vector<256x128xbf16>
    %c0_4 = arith.constant 0 : index
    %c0_5 = arith.constant 0 : index
    %5 = vector.load %arg4[%c0_4, %c0_5] : memref<128x128xbf16, #tpu.memory_space<vmem>>, vector<128x128xbf16>
    %cst = arith.constant dense<0.000000e+00> : vector<256x128xf32>
    %6 = tpu.matmul %4, %5, %cst {dimension_numbers = #tpu.dot_dimension_numbers<[1], [0], [0], [1], [0, 0, 1, 1], [], []>} : vector<256x128xbf16>, vector<128x128xbf16>, vector<256x128xf32> -> vector<256x128xf32>
    %7 = arith.addf %3, %6 : vector<256x128xf32>
    %c0_6 = arith.constant 0 : index
    %c0_7 = arith.constant 0 : index
    %8 = vector.load %arg6[%c0_6, %c0_7] : memref<256x128xf32, #tpu.memory_space<vmem>>, vector<256x128xf32>
    tpu.vector_store %arg6[%c0_6, %c0_7], %7 {strides = array<i32>} : memref<256x128xf32, #tpu.memory_space<vmem>>, vector<256x128xf32>,
    %c0_i32_8 = arith.constant 0 : i32
    %9 = arith.cmpi eq, %arg2, %c0_i32_8 : i32
    %10 = arith.extui %9 : i1 to i32
    %c0_i32_9 = arith.constant 0 : i32
    %11 = arith.cmpi ne, %10, %c0_i32_9 : i32
    scf.if %11 {
      %c0_10 = arith.constant 0 : index
      %c0_11 = arith.constant 0 : index
      %12 = vector.load %arg6[%c0_10, %c0_11] : memref<256x128xf32, #tpu.memory_space<vmem>>, vector<256x128xf32>
      %cst_12 = arith.constant 0.000000e+00 : f32
      %13 = vector.broadcast %cst_12 : f32 to vector<256x128xf32>
      %14 = arith.cmpf ogt, %12, %13 : vector<256x128xf32>
      %cst_13 = arith.constant 2.000000e-01 : f32
      %15 = vector.broadcast %cst_13 : f32 to vector<256x128xf32>
      %16 = arith.mulf %15, %12 : vector<256x128xf32>
      %17 = arith.select %14, %12, %16 : vector<256x128xi1>, vector<256x128xf32>
      %c0_14 = arith.constant 0 : index
      %c0_15 = arith.constant 0 : index
      %18 = vector.load %arg5[%c0_14, %c0_15] : memref<256x128xf32, #tpu.memory_space<vmem>>, vector<256x128xf32>
      tpu.vector_store %arg5[%c0_14, %c0_15], %17 {strides = array<i32>} : memref<256x128xf32, #tpu.memory_space<vmem>>, vector<256x128xf32>,
    } else {
    }
    return
  }
  func.func @transform_0(%arg0: i32, %arg1: i32, %arg2: i32) -> (i32, i32) {
    %c0_i32 = arith.constant 0 : i32
    return %arg0, %arg2 : i32, i32
  }
  func.func @transform_1(%arg0: i32, %arg1: i32, %arg2: i32) -> (i32, i32) {
    %c0_i32 = arith.constant 0 : i32
    return %arg2, %arg1 : i32, i32
  }
  func.func @transform_2(%arg0: i32, %arg1: i32, %arg2: i32) -> (i32, i32) {
    %c0_i32 = arith.constant 0 : i32
    return %arg0, %arg1 : i32, i32
  }
}

module attributes {stable_mosaic.version = 11 : i64} {
  func.func @_mm_kernel(%arg0: i32, %arg1: i32, %arg2: i32, %arg3: memref<256x512xbf16, #tpu.memory_space<vmem>>, %arg4: memref<512x128xbf16, #tpu.memory_space<vmem>>, %arg5: memref<256x128xf32, #tpu.memory_space<vmem>>, %arg6: memref<256x128xf32, #tpu.memory_space<vmem>>) attributes {dimension_semantics = [#tpu.dimension_semantics<parallel>, #tpu.dimension_semantics<parallel>, #tpu.dimension_semantics<arbitrary>], iteration_bounds = array<i64: 2, 1, 2>, scalar_prefetch = 0 : i64, scratch_operands = 1 : i64, tpu.core_type = #tpu.core_type<tc>, window_params = [{transform_indices = @transform_0, window_bounds = array<i64: 256, 512>}, {transform_indices = @transform_1, window_bounds = array<i64: 512, 128>}, {transform_indices = @transform_2, window_bounds = array<i64: 256, 128>}]} {
    %c0_i32 = arith.constant 0 : i32
    %0 = arith.cmpi eq, %arg2, %c0_i32 : i32
    %1 = arith.extui %0 : i1 to i32
    %c0_i32_0 = arith.constant 0 : i32
    %2 = arith.cmpi ne, %1, %c0_i32_0 : i32
    scf.if %2 {
      %cst_9 = arith.constant 0.000000e+00 : f32
      %12 = vector.broadcast %cst_9 : f32 to vector<256x128xf32>
      %c0_10 = arith.constant 0 : index
      %c0_11 = arith.constant 0 : index
      %13 = vector.load %arg6[%c0_10, %c0_11] : memref<256x128xf32, #tpu.memory_space<vmem>>, vector<256x128xf32>
      tpu.vector_store %arg6[%c0_10, %c0_11], %12 {strides = array<i32>} : memref<256x128xf32, #tpu.memory_space<vmem>>, vector<256x128xf32>,
    } else {
    }
    %c0 = arith.constant 0 : index
    %c0_1 = arith.constant 0 : index
    %3 = vector.load %arg6[%c0, %c0_1] : memref<256x128xf32, #tpu.memory_space<vmem>>, vector<256x128xf32>
    %c0_2 = arith.constant 0 : index
    %c0_3 = arith.constant 0 : index
    %4 = vector.load %arg3[%c0_2, %c0_3] : memref<256x512xbf16, #tpu.memory_space<vmem>>, vector<256x512xbf16>
    %c0_4 = arith.constant 0 : index
    %c0_5 = arith.constant 0 : index
    %5 = vector.load %arg4[%c0_4, %c0_5] : memref<512x128xbf16, #tpu.memory_space<vmem>>, vector<512x128xbf16>
    %cst = arith.constant dense<0.000000e+00> : vector<256x128xf32>
    %6 = tpu.matmul %4, %5, %cst {dimension_numbers = #tpu.dot_dimension_numbers<[1], [0], [0], [1], [0, 0, 1, 1], [], []>} : vector<256x512xbf16>, vector<512x128xbf16>, vector<256x128xf32> -> vector<256x128xf32>
    %7 = arith.addf %3, %6 : vector<256x128xf32>
    %c0_6 = arith.constant 0 : index
    %c0_7 = arith.constant 0 : index
    %8 = vector.load %arg6[%c0_6, %c0_7] : memref<256x128xf32, #tpu.memory_space<vmem>>, vector<256x128xf32>
    tpu.vector_store %arg6[%c0_6, %c0_7], %7 {strides = array<i32>} : memref<256x128xf32, #tpu.memory_space<vmem>>, vector<256x128xf32>,
    %c1_i32 = arith.constant 1 : i32
    %9 = arith.cmpi eq, %arg2, %c1_i32 : i32
    %10 = arith.extui %9 : i1 to i32
    %c0_i32_8 = arith.constant 0 : i32
    %11 = arith.cmpi ne, %10, %c0_i32_8 : i32
    scf.if %11 {
      %c0_9 = arith.constant 0 : index
      %c0_10 = arith.constant 0 : index
      %12 = vector.load %arg6[%c0_9, %c0_10] : memref<256x128xf32, #tpu.memory_space<vmem>>, vector<256x128xf32>
      %c0_11 = arith.constant 0 : index
      %c0_12 = arith.constant 0 : index
      %13 = vector.load %arg5[%c0_11, %c0_12] : memref<256x128xf32, #tpu.memory_space<vmem>>, vector<256x128xf32>
      tpu.vector_store %arg5[%c0_11, %c0_12], %12 {strides = array<i32>} : memref<256x128xf32, #tpu.memory_space<vmem>>, vector<256x128xf32>,
    } else {
    }
    return
  }
  func.func @transform_0(%arg0: i32, %arg1: i32, %arg2: i32) -> (i32, i32) {
    %c0_i32 = arith.constant 0 : i32
    return %arg0, %arg2 : i32, i32
  }
  func.func @transform_1(%arg0: i32, %arg1: i32, %arg2: i32) -> (i32, i32) {
    %c0_i32 = arith.constant 0 : i32
    return %arg2, %arg1 : i32, i32
  }
  func.func @transform_2(%arg0: i32, %arg1: i32, %arg2: i32) -> (i32, i32) {
    %c0_i32 = arith.constant 0 : i32
    return %arg0, %arg1 : i32, i32
  }
}

module attributes {stable_mosaic.version = 11 : i64} {
  func.func @_bn_stats_kernel(%arg0: i32, %arg1: memref<256x128xf32, #tpu.memory_space<vmem>>, %arg2: memref<1x128xf32, #tpu.memory_space<vmem>>, %arg3: memref<1x128xf32, #tpu.memory_space<vmem>>) attributes {dimension_semantics = [#tpu.dimension_semantics<arbitrary>], iteration_bounds = array<i64: 2>, scalar_prefetch = 0 : i64, scratch_operands = 0 : i64, tpu.core_type = #tpu.core_type<tc>, window_params = [{transform_indices = @transform_0, window_bounds = array<i64: 256, 128>}, {pipeline_mode = #tpu.pipeline_mode<synchronous>, transform_indices = @transform_1, window_bounds = array<i64: 1, 128>}, {pipeline_mode = #tpu.pipeline_mode<synchronous>, transform_indices = @transform_2, window_bounds = array<i64: 1, 128>}]} {
    %c0_i32 = arith.constant 0 : i32
    %0 = arith.cmpi eq, %arg0, %c0_i32 : i32
    %1 = arith.extui %0 : i1 to i32
    %c0_i32_0 = arith.constant 0 : i32
    %2 = arith.cmpi ne, %1, %c0_i32_0 : i32
    scf.if %2 {
      %cst_11 = arith.constant 0.000000e+00 : f32
      %15 = vector.broadcast %cst_11 : f32 to vector<1x128xf32>
      %c0_12 = arith.constant 0 : index
      %c0_13 = arith.constant 0 : index
      %16 = vector.load %arg2[%c0_12, %c0_13] : memref<1x128xf32, #tpu.memory_space<vmem>>, vector<1x128xf32>
      tpu.vector_store %arg2[%c0_12, %c0_13], %15 {strides = array<i32>} : memref<1x128xf32, #tpu.memory_space<vmem>>, vector<1x128xf32>,
      %cst_14 = arith.constant 0.000000e+00 : f32
      %17 = vector.broadcast %cst_14 : f32 to vector<1x128xf32>
      %c0_15 = arith.constant 0 : index
      %c0_16 = arith.constant 0 : index
      %18 = vector.load %arg3[%c0_15, %c0_16] : memref<1x128xf32, #tpu.memory_space<vmem>>, vector<1x128xf32>
      tpu.vector_store %arg3[%c0_15, %c0_16], %17 {strides = array<i32>} : memref<1x128xf32, #tpu.memory_space<vmem>>, vector<1x128xf32>,
    } else {
    }
    %c0 = arith.constant 0 : index
    %c0_1 = arith.constant 0 : index
    %3 = vector.load %arg1[%c0, %c0_1] : memref<256x128xf32, #tpu.memory_space<vmem>>, vector<256x128xf32>
    %c0_2 = arith.constant 0 : index
    %c0_3 = arith.constant 0 : index
    %4 = vector.load %arg2[%c0_2, %c0_3] : memref<1x128xf32, #tpu.memory_space<vmem>>, vector<1x128xf32>
    %cst = arith.constant dense<0.000000e+00> : vector<128xf32>
    %5 = vector.multi_reduction <add>, %3, %cst [0] : vector<256x128xf32> to vector<128xf32>
    %6 = vector.shape_cast %5 : vector<128xf32> to vector<1x128xf32>
    %7 = arith.addf %4, %6 : vector<1x128xf32>
    %c0_4 = arith.constant 0 : index
    %c0_5 = arith.constant 0 : index
    %8 = vector.load %arg2[%c0_4, %c0_5] : memref<1x128xf32, #tpu.memory_space<vmem>>, vector<1x128xf32>
    tpu.vector_store %arg2[%c0_4, %c0_5], %7 {strides = array<i32>} : memref<1x128xf32, #tpu.memory_space<vmem>>, vector<1x128xf32>,
    %c0_6 = arith.constant 0 : index
    %c0_7 = arith.constant 0 : index
    %9 = vector.load %arg3[%c0_6, %c0_7] : memref<1x128xf32, #tpu.memory_space<vmem>>, vector<1x128xf32>
    %10 = arith.mulf %3, %3 : vector<256x128xf32>
    %cst_8 = arith.constant dense<0.000000e+00> : vector<128xf32>
    %11 = vector.multi_reduction <add>, %10, %cst_8 [0] : vector<256x128xf32> to vector<128xf32>
    %12 = vector.shape_cast %11 : vector<128xf32> to vector<1x128xf32>
    %13 = arith.addf %9, %12 : vector<1x128xf32>
    %c0_9 = arith.constant 0 : index
    %c0_10 = arith.constant 0 : index
    %14 = vector.load %arg3[%c0_9, %c0_10] : memref<1x128xf32, #tpu.memory_space<vmem>>, vector<1x128xf32>
    tpu.vector_store %arg3[%c0_9, %c0_10], %13 {strides = array<i32>} : memref<1x128xf32, #tpu.memory_space<vmem>>, vector<1x128xf32>,
    return
  }
  func.func @transform_0(%arg0: i32) -> (i32, i32) {
    %c0_i32 = arith.constant 0 : i32
    %c0_i32_0 = arith.constant 0 : i32
    return %arg0, %c0_i32 : i32, i32
  }
  func.func @transform_1(%arg0: i32) -> (i32, i32) {
    %c0_i32 = arith.constant 0 : i32
    %c0_i32_0 = arith.constant 0 : i32
    %c0_i32_1 = arith.constant 0 : i32
    return %c0_i32, %c0_i32_0 : i32, i32
  }
  func.func @transform_2(%arg0: i32) -> (i32, i32) {
    %c0_i32 = arith.constant 0 : i32
    %c0_i32_0 = arith.constant 0 : i32
    %c0_i32_1 = arith.constant 0 : i32
    return %c0_i32, %c0_i32_0 : i32, i32
  }
}

module attributes {stable_mosaic.version = 11 : i64} {
  func.func @_bn_apply_kernel(%arg0: i32, %arg1: memref<256x128xf32, #tpu.memory_space<vmem>>, %arg2: memref<1x128xf32, #tpu.memory_space<vmem>>, %arg3: memref<1x128xf32, #tpu.memory_space<vmem>>, %arg4: memref<256x128xf32, #tpu.memory_space<vmem>>) attributes {dimension_semantics = [#tpu.dimension_semantics<parallel>], iteration_bounds = array<i64: 2>, scalar_prefetch = 0 : i64, scratch_operands = 0 : i64, tpu.core_type = #tpu.core_type<tc>, window_params = [{transform_indices = @transform_0, window_bounds = array<i64: 256, 128>}, {pipeline_mode = #tpu.pipeline_mode<synchronous>, transform_indices = @transform_1, window_bounds = array<i64: 1, 128>}, {pipeline_mode = #tpu.pipeline_mode<synchronous>, transform_indices = @transform_2, window_bounds = array<i64: 1, 128>}, {transform_indices = @transform_3, window_bounds = array<i64: 256, 128>}]} {
    %c0 = arith.constant 0 : index
    %c0_0 = arith.constant 0 : index
    %0 = vector.load %arg1[%c0, %c0_0] : memref<256x128xf32, #tpu.memory_space<vmem>>, vector<256x128xf32>
    %c0_1 = arith.constant 0 : index
    %c0_2 = arith.constant 0 : index
    %1 = vector.load %arg2[%c0_1, %c0_2] : memref<1x128xf32, #tpu.memory_space<vmem>>, vector<1x128xf32>
    %cst = arith.constant 0.001953125 : f32
    %2 = vector.broadcast %cst : f32 to vector<1x128xf32>
    %3 = arith.mulf %1, %2 : vector<1x128xf32>
    %c0_3 = arith.constant 0 : index
    %c0_4 = arith.constant 0 : index
    %4 = vector.load %arg3[%c0_3, %c0_4] : memref<1x128xf32, #tpu.memory_space<vmem>>, vector<1x128xf32>
    %cst_5 = arith.constant 0.001953125 : f32
    %5 = vector.broadcast %cst_5 : f32 to vector<1x128xf32>
    %6 = arith.mulf %4, %5 : vector<1x128xf32>
    %7 = arith.mulf %3, %3 : vector<1x128xf32>
    %8 = arith.subf %6, %7 : vector<1x128xf32>
    %9 = vector.broadcast %3 : vector<1x128xf32> to vector<256x128xf32>
    %10 = arith.subf %0, %9 : vector<256x128xf32>
    %cst_6 = arith.constant 9.99999974E-6 : f32
    %11 = vector.broadcast %cst_6 : f32 to vector<1x128xf32>
    %12 = arith.addf %8, %11 : vector<1x128xf32>
    %13 = math.rsqrt %12 : vector<1x128xf32>
    %14 = vector.broadcast %13 : vector<1x128xf32> to vector<256x128xf32>
    %15 = arith.mulf %10, %14 : vector<256x128xf32>
    %cst_7 = arith.constant 0.000000e+00 : f32
    %16 = vector.broadcast %cst_7 : f32 to vector<256x128xf32>
    %17 = arith.cmpf ogt, %15, %16 : vector<256x128xf32>
    %cst_8 = arith.constant 2.000000e-01 : f32
    %18 = vector.broadcast %cst_8 : f32 to vector<256x128xf32>
    %19 = arith.mulf %18, %15 : vector<256x128xf32>
    %20 = arith.select %17, %15, %19 : vector<256x128xi1>, vector<256x128xf32>
    %c0_9 = arith.constant 0 : index
    %c0_10 = arith.constant 0 : index
    %21 = vector.load %arg4[%c0_9, %c0_10] : memref<256x128xf32, #tpu.memory_space<vmem>>, vector<256x128xf32>
    tpu.vector_store %arg4[%c0_9, %c0_10], %20 {strides = array<i32>} : memref<256x128xf32, #tpu.memory_space<vmem>>, vector<256x128xf32>,
    return
  }
  func.func @transform_0(%arg0: i32) -> (i32, i32) {
    %c0_i32 = arith.constant 0 : i32
    %c0_i32_0 = arith.constant 0 : i32
    return %arg0, %c0_i32 : i32, i32
  }
  func.func @transform_1(%arg0: i32) -> (i32, i32) {
    %c0_i32 = arith.constant 0 : i32
    %c0_i32_0 = arith.constant 0 : i32
    %c0_i32_1 = arith.constant 0 : i32
    return %c0_i32, %c0_i32_0 : i32, i32
  }
  func.func @transform_2(%arg0: i32) -> (i32, i32) {
    %c0_i32 = arith.constant 0 : i32
    %c0_i32_0 = arith.constant 0 : i32
    %c0_i32_1 = arith.constant 0 : i32
    return %c0_i32, %c0_i32_0 : i32, i32
  }
  func.func @transform_3(%arg0: i32) -> (i32, i32) {
    %c0_i32 = arith.constant 0 : i32
    %c0_i32_0 = arith.constant 0 : i32
    return %arg0, %c0_i32 : i32, i32
  }
}

module attributes {stable_mosaic.version = 11 : i64} {
  func.func @_mm_kernel(%arg0: i32, %arg1: i32, %arg2: i32, %arg3: memref<128x512xbf16, #tpu.memory_space<vmem>>, %arg4: memref<512x256xbf16, #tpu.memory_space<vmem>>, %arg5: memref<128x256xf32, #tpu.memory_space<vmem>>, %arg6: memref<128x256xf32, #tpu.memory_space<vmem>>) attributes {dimension_semantics = [#tpu.dimension_semantics<parallel>, #tpu.dimension_semantics<parallel>, #tpu.dimension_semantics<arbitrary>], iteration_bounds = array<i64: 1, 1, 4>, scalar_prefetch = 0 : i64, scratch_operands = 1 : i64, tpu.core_type = #tpu.core_type<tc>, window_params = [{transform_indices = @transform_0, window_bounds = array<i64: 128, 512>}, {transform_indices = @transform_1, window_bounds = array<i64: 512, 256>}, {transform_indices = @transform_2, window_bounds = array<i64: 128, 256>}]} {
    %c0_i32 = arith.constant 0 : i32
    %0 = arith.cmpi eq, %arg2, %c0_i32 : i32
    %1 = arith.extui %0 : i1 to i32
    %c0_i32_0 = arith.constant 0 : i32
    %2 = arith.cmpi ne, %1, %c0_i32_0 : i32
    scf.if %2 {
      %cst_9 = arith.constant 0.000000e+00 : f32
      %12 = vector.broadcast %cst_9 : f32 to vector<128x256xf32>
      %c0_10 = arith.constant 0 : index
      %c0_11 = arith.constant 0 : index
      %13 = vector.load %arg6[%c0_10, %c0_11] : memref<128x256xf32, #tpu.memory_space<vmem>>, vector<128x256xf32>
      tpu.vector_store %arg6[%c0_10, %c0_11], %12 {strides = array<i32>} : memref<128x256xf32, #tpu.memory_space<vmem>>, vector<128x256xf32>,
    } else {
    }
    %c0 = arith.constant 0 : index
    %c0_1 = arith.constant 0 : index
    %3 = vector.load %arg6[%c0, %c0_1] : memref<128x256xf32, #tpu.memory_space<vmem>>, vector<128x256xf32>
    %c0_2 = arith.constant 0 : index
    %c0_3 = arith.constant 0 : index
    %4 = vector.load %arg3[%c0_2, %c0_3] : memref<128x512xbf16, #tpu.memory_space<vmem>>, vector<128x512xbf16>
    %c0_4 = arith.constant 0 : index
    %c0_5 = arith.constant 0 : index
    %5 = vector.load %arg4[%c0_4, %c0_5] : memref<512x256xbf16, #tpu.memory_space<vmem>>, vector<512x256xbf16>
    %cst = arith.constant dense<0.000000e+00> : vector<128x256xf32>
    %6 = tpu.matmul %4, %5, %cst {dimension_numbers = #tpu.dot_dimension_numbers<[1], [0], [0], [1], [0, 0, 1, 1], [], []>} : vector<128x512xbf16>, vector<512x256xbf16>, vector<128x256xf32> -> vector<128x256xf32>
    %7 = arith.addf %3, %6 : vector<128x256xf32>
    %c0_6 = arith.constant 0 : index
    %c0_7 = arith.constant 0 : index
    %8 = vector.load %arg6[%c0_6, %c0_7] : memref<128x256xf32, #tpu.memory_space<vmem>>, vector<128x256xf32>
    tpu.vector_store %arg6[%c0_6, %c0_7], %7 {strides = array<i32>} : memref<128x256xf32, #tpu.memory_space<vmem>>, vector<128x256xf32>,
    %c3_i32 = arith.constant 3 : i32
    %9 = arith.cmpi eq, %arg2, %c3_i32 : i32
    %10 = arith.extui %9 : i1 to i32
    %c0_i32_8 = arith.constant 0 : i32
    %11 = arith.cmpi ne, %10, %c0_i32_8 : i32
    scf.if %11 {
      %c0_9 = arith.constant 0 : index
      %c0_10 = arith.constant 0 : index
      %12 = vector.load %arg6[%c0_9, %c0_10] : memref<128x256xf32, #tpu.memory_space<vmem>>, vector<128x256xf32>
      %c0_11 = arith.constant 0 : index
      %c0_12 = arith.constant 0 : index
      %13 = vector.load %arg5[%c0_11, %c0_12] : memref<128x256xf32, #tpu.memory_space<vmem>>, vector<128x256xf32>
      tpu.vector_store %arg5[%c0_11, %c0_12], %12 {strides = array<i32>} : memref<128x256xf32, #tpu.memory_space<vmem>>, vector<128x256xf32>,
    } else {
    }
    return
  }
  func.func @transform_0(%arg0: i32, %arg1: i32, %arg2: i32) -> (i32, i32) {
    %c0_i32 = arith.constant 0 : i32
    return %arg0, %arg2 : i32, i32
  }
  func.func @transform_1(%arg0: i32, %arg1: i32, %arg2: i32) -> (i32, i32) {
    %c0_i32 = arith.constant 0 : i32
    return %arg2, %arg1 : i32, i32
  }
  func.func @transform_2(%arg0: i32, %arg1: i32, %arg2: i32) -> (i32, i32) {
    %c0_i32 = arith.constant 0 : i32
    return %arg0, %arg1 : i32, i32
  }
}

module attributes {stable_mosaic.version = 11 : i64} {
  func.func @_bn_stats_kernel(%arg0: i32, %arg1: memref<128x256xf32, #tpu.memory_space<vmem>>, %arg2: memref<1x256xf32, #tpu.memory_space<vmem>>, %arg3: memref<1x256xf32, #tpu.memory_space<vmem>>) attributes {dimension_semantics = [#tpu.dimension_semantics<arbitrary>], iteration_bounds = array<i64: 1>, scalar_prefetch = 0 : i64, scratch_operands = 0 : i64, tpu.core_type = #tpu.core_type<tc>, window_params = [{transform_indices = @transform_0, window_bounds = array<i64: 128, 256>}, {pipeline_mode = #tpu.pipeline_mode<synchronous>, transform_indices = @transform_1, window_bounds = array<i64: 1, 256>}, {pipeline_mode = #tpu.pipeline_mode<synchronous>, transform_indices = @transform_2, window_bounds = array<i64: 1, 256>}]} {
    %c0_i32 = arith.constant 0 : i32
    %0 = arith.cmpi eq, %arg0, %c0_i32 : i32
    %1 = arith.extui %0 : i1 to i32
    %c0_i32_0 = arith.constant 0 : i32
    %2 = arith.cmpi ne, %1, %c0_i32_0 : i32
    scf.if %2 {
      %cst_11 = arith.constant 0.000000e+00 : f32
      %15 = vector.broadcast %cst_11 : f32 to vector<1x256xf32>
      %c0_12 = arith.constant 0 : index
      %c0_13 = arith.constant 0 : index
      %16 = vector.load %arg2[%c0_12, %c0_13] : memref<1x256xf32, #tpu.memory_space<vmem>>, vector<1x256xf32>
      tpu.vector_store %arg2[%c0_12, %c0_13], %15 {strides = array<i32>} : memref<1x256xf32, #tpu.memory_space<vmem>>, vector<1x256xf32>,
      %cst_14 = arith.constant 0.000000e+00 : f32
      %17 = vector.broadcast %cst_14 : f32 to vector<1x256xf32>
      %c0_15 = arith.constant 0 : index
      %c0_16 = arith.constant 0 : index
      %18 = vector.load %arg3[%c0_15, %c0_16] : memref<1x256xf32, #tpu.memory_space<vmem>>, vector<1x256xf32>
      tpu.vector_store %arg3[%c0_15, %c0_16], %17 {strides = array<i32>} : memref<1x256xf32, #tpu.memory_space<vmem>>, vector<1x256xf32>,
    } else {
    }
    %c0 = arith.constant 0 : index
    %c0_1 = arith.constant 0 : index
    %3 = vector.load %arg1[%c0, %c0_1] : memref<128x256xf32, #tpu.memory_space<vmem>>, vector<128x256xf32>
    %c0_2 = arith.constant 0 : index
    %c0_3 = arith.constant 0 : index
    %4 = vector.load %arg2[%c0_2, %c0_3] : memref<1x256xf32, #tpu.memory_space<vmem>>, vector<1x256xf32>
    %cst = arith.constant dense<0.000000e+00> : vector<256xf32>
    %5 = vector.multi_reduction <add>, %3, %cst [0] : vector<128x256xf32> to vector<256xf32>
    %6 = vector.shape_cast %5 : vector<256xf32> to vector<1x256xf32>
    %7 = arith.addf %4, %6 : vector<1x256xf32>
    %c0_4 = arith.constant 0 : index
    %c0_5 = arith.constant 0 : index
    %8 = vector.load %arg2[%c0_4, %c0_5] : memref<1x256xf32, #tpu.memory_space<vmem>>, vector<1x256xf32>
    tpu.vector_store %arg2[%c0_4, %c0_5], %7 {strides = array<i32>} : memref<1x256xf32, #tpu.memory_space<vmem>>, vector<1x256xf32>,
    %c0_6 = arith.constant 0 : index
    %c0_7 = arith.constant 0 : index
    %9 = vector.load %arg3[%c0_6, %c0_7] : memref<1x256xf32, #tpu.memory_space<vmem>>, vector<1x256xf32>
    %10 = arith.mulf %3, %3 : vector<128x256xf32>
    %cst_8 = arith.constant dense<0.000000e+00> : vector<256xf32>
    %11 = vector.multi_reduction <add>, %10, %cst_8 [0] : vector<128x256xf32> to vector<256xf32>
    %12 = vector.shape_cast %11 : vector<256xf32> to vector<1x256xf32>
    %13 = arith.addf %9, %12 : vector<1x256xf32>
    %c0_9 = arith.constant 0 : index
    %c0_10 = arith.constant 0 : index
    %14 = vector.load %arg3[%c0_9, %c0_10] : memref<1x256xf32, #tpu.memory_space<vmem>>, vector<1x256xf32>
    tpu.vector_store %arg3[%c0_9, %c0_10], %13 {strides = array<i32>} : memref<1x256xf32, #tpu.memory_space<vmem>>, vector<1x256xf32>,
    return
  }
  func.func @transform_0(%arg0: i32) -> (i32, i32) {
    %c0_i32 = arith.constant 0 : i32
    %c0_i32_0 = arith.constant 0 : i32
    return %arg0, %c0_i32 : i32, i32
  }
  func.func @transform_1(%arg0: i32) -> (i32, i32) {
    %c0_i32 = arith.constant 0 : i32
    %c0_i32_0 = arith.constant 0 : i32
    %c0_i32_1 = arith.constant 0 : i32
    return %c0_i32, %c0_i32_0 : i32, i32
  }
  func.func @transform_2(%arg0: i32) -> (i32, i32) {
    %c0_i32 = arith.constant 0 : i32
    %c0_i32_0 = arith.constant 0 : i32
    %c0_i32_1 = arith.constant 0 : i32
    return %c0_i32, %c0_i32_0 : i32, i32
  }
}

module attributes {stable_mosaic.version = 11 : i64} {
  func.func @_bn_apply_kernel(%arg0: i32, %arg1: memref<128x256xf32, #tpu.memory_space<vmem>>, %arg2: memref<1x256xf32, #tpu.memory_space<vmem>>, %arg3: memref<1x256xf32, #tpu.memory_space<vmem>>, %arg4: memref<128x256xf32, #tpu.memory_space<vmem>>) attributes {dimension_semantics = [#tpu.dimension_semantics<parallel>], iteration_bounds = array<i64: 1>, scalar_prefetch = 0 : i64, scratch_operands = 0 : i64, tpu.core_type = #tpu.core_type<tc>, window_params = [{transform_indices = @transform_0, window_bounds = array<i64: 128, 256>}, {pipeline_mode = #tpu.pipeline_mode<synchronous>, transform_indices = @transform_1, window_bounds = array<i64: 1, 256>}, {pipeline_mode = #tpu.pipeline_mode<synchronous>, transform_indices = @transform_2, window_bounds = array<i64: 1, 256>}, {transform_indices = @transform_3, window_bounds = array<i64: 128, 256>}]} {
    %c0 = arith.constant 0 : index
    %c0_0 = arith.constant 0 : index
    %0 = vector.load %arg1[%c0, %c0_0] : memref<128x256xf32, #tpu.memory_space<vmem>>, vector<128x256xf32>
    %c0_1 = arith.constant 0 : index
    %c0_2 = arith.constant 0 : index
    %1 = vector.load %arg2[%c0_1, %c0_2] : memref<1x256xf32, #tpu.memory_space<vmem>>, vector<1x256xf32>
    %cst = arith.constant 7.812500e-03 : f32
    %2 = vector.broadcast %cst : f32 to vector<1x256xf32>
    %3 = arith.mulf %1, %2 : vector<1x256xf32>
    %c0_3 = arith.constant 0 : index
    %c0_4 = arith.constant 0 : index
    %4 = vector.load %arg3[%c0_3, %c0_4] : memref<1x256xf32, #tpu.memory_space<vmem>>, vector<1x256xf32>
    %cst_5 = arith.constant 7.812500e-03 : f32
    %5 = vector.broadcast %cst_5 : f32 to vector<1x256xf32>
    %6 = arith.mulf %4, %5 : vector<1x256xf32>
    %7 = arith.mulf %3, %3 : vector<1x256xf32>
    %8 = arith.subf %6, %7 : vector<1x256xf32>
    %9 = vector.broadcast %3 : vector<1x256xf32> to vector<128x256xf32>
    %10 = arith.subf %0, %9 : vector<128x256xf32>
    %cst_6 = arith.constant 9.99999974E-6 : f32
    %11 = vector.broadcast %cst_6 : f32 to vector<1x256xf32>
    %12 = arith.addf %8, %11 : vector<1x256xf32>
    %13 = math.rsqrt %12 : vector<1x256xf32>
    %14 = vector.broadcast %13 : vector<1x256xf32> to vector<128x256xf32>
    %15 = arith.mulf %10, %14 : vector<128x256xf32>
    %cst_7 = arith.constant 0.000000e+00 : f32
    %16 = vector.broadcast %cst_7 : f32 to vector<128x256xf32>
    %17 = arith.cmpf ogt, %15, %16 : vector<128x256xf32>
    %cst_8 = arith.constant 2.000000e-01 : f32
    %18 = vector.broadcast %cst_8 : f32 to vector<128x256xf32>
    %19 = arith.mulf %18, %15 : vector<128x256xf32>
    %20 = arith.select %17, %15, %19 : vector<128x256xi1>, vector<128x256xf32>
    %c0_9 = arith.constant 0 : index
    %c0_10 = arith.constant 0 : index
    %21 = vector.load %arg4[%c0_9, %c0_10] : memref<128x256xf32, #tpu.memory_space<vmem>>, vector<128x256xf32>
    tpu.vector_store %arg4[%c0_9, %c0_10], %20 {strides = array<i32>} : memref<128x256xf32, #tpu.memory_space<vmem>>, vector<128x256xf32>,
    return
  }
  func.func @transform_0(%arg0: i32) -> (i32, i32) {
    %c0_i32 = arith.constant 0 : i32
    %c0_i32_0 = arith.constant 0 : i32
    return %arg0, %c0_i32 : i32, i32
  }
  func.func @transform_1(%arg0: i32) -> (i32, i32) {
    %c0_i32 = arith.constant 0 : i32
    %c0_i32_0 = arith.constant 0 : i32
    %c0_i32_1 = arith.constant 0 : i32
    return %c0_i32, %c0_i32_0 : i32, i32
  }
  func.func @transform_2(%arg0: i32) -> (i32, i32) {
    %c0_i32 = arith.constant 0 : i32
    %c0_i32_0 = arith.constant 0 : i32
    %c0_i32_1 = arith.constant 0 : i32
    return %c0_i32, %c0_i32_0 : i32, i32
  }
  func.func @transform_3(%arg0: i32) -> (i32, i32) {
    %c0_i32 = arith.constant 0 : i32
    %c0_i32_0 = arith.constant 0 : i32
    return %arg0, %c0_i32 : i32, i32
  }
}

module attributes {stable_mosaic.version = 11 : i64} {
  func.func @_mm_kernel(%arg0: i32, %arg1: i32, %arg2: i32, %arg3: memref<32x512xbf16, #tpu.memory_space<vmem>>, %arg4: memref<512x256xbf16, #tpu.memory_space<vmem>>, %arg5: memref<32x256xf32, #tpu.memory_space<vmem>>, %arg6: memref<32x256xf32, #tpu.memory_space<vmem>>) attributes {dimension_semantics = [#tpu.dimension_semantics<parallel>, #tpu.dimension_semantics<parallel>, #tpu.dimension_semantics<arbitrary>], iteration_bounds = array<i64: 1, 2, 8>, scalar_prefetch = 0 : i64, scratch_operands = 1 : i64, tpu.core_type = #tpu.core_type<tc>, window_params = [{transform_indices = @transform_0, window_bounds = array<i64: 32, 512>}, {transform_indices = @transform_1, window_bounds = array<i64: 512, 256>}, {transform_indices = @transform_2, window_bounds = array<i64: 32, 256>}]} {
    %c0_i32 = arith.constant 0 : i32
    %0 = arith.cmpi eq, %arg2, %c0_i32 : i32
    %1 = arith.extui %0 : i1 to i32
    %c0_i32_0 = arith.constant 0 : i32
    %2 = arith.cmpi ne, %1, %c0_i32_0 : i32
    scf.if %2 {
      %cst_9 = arith.constant 0.000000e+00 : f32
      %12 = vector.broadcast %cst_9 : f32 to vector<32x256xf32>
      %c0_10 = arith.constant 0 : index
      %c0_11 = arith.constant 0 : index
      %13 = vector.load %arg6[%c0_10, %c0_11] : memref<32x256xf32, #tpu.memory_space<vmem>>, vector<32x256xf32>
      tpu.vector_store %arg6[%c0_10, %c0_11], %12 {strides = array<i32>} : memref<32x256xf32, #tpu.memory_space<vmem>>, vector<32x256xf32>,
    } else {
    }
    %c0 = arith.constant 0 : index
    %c0_1 = arith.constant 0 : index
    %3 = vector.load %arg6[%c0, %c0_1] : memref<32x256xf32, #tpu.memory_space<vmem>>, vector<32x256xf32>
    %c0_2 = arith.constant 0 : index
    %c0_3 = arith.constant 0 : index
    %4 = vector.load %arg3[%c0_2, %c0_3] : memref<32x512xbf16, #tpu.memory_space<vmem>>, vector<32x512xbf16>
    %c0_4 = arith.constant 0 : index
    %c0_5 = arith.constant 0 : index
    %5 = vector.load %arg4[%c0_4, %c0_5] : memref<512x256xbf16, #tpu.memory_space<vmem>>, vector<512x256xbf16>
    %cst = arith.constant dense<0.000000e+00> : vector<32x256xf32>
    %6 = tpu.matmul %4, %5, %cst {dimension_numbers = #tpu.dot_dimension_numbers<[1], [0], [0], [1], [0, 0, 1, 1], [], []>} : vector<32x512xbf16>, vector<512x256xbf16>, vector<32x256xf32> -> vector<32x256xf32>
    %7 = arith.addf %3, %6 : vector<32x256xf32>
    %c0_6 = arith.constant 0 : index
    %c0_7 = arith.constant 0 : index
    %8 = vector.load %arg6[%c0_6, %c0_7] : memref<32x256xf32, #tpu.memory_space<vmem>>, vector<32x256xf32>
    tpu.vector_store %arg6[%c0_6, %c0_7], %7 {strides = array<i32>} : memref<32x256xf32, #tpu.memory_space<vmem>>, vector<32x256xf32>,
    %c7_i32 = arith.constant 7 : i32
    %9 = arith.cmpi eq, %arg2, %c7_i32 : i32
    %10 = arith.extui %9 : i1 to i32
    %c0_i32_8 = arith.constant 0 : i32
    %11 = arith.cmpi ne, %10, %c0_i32_8 : i32
    scf.if %11 {
      %c0_9 = arith.constant 0 : index
      %c0_10 = arith.constant 0 : index
      %12 = vector.load %arg6[%c0_9, %c0_10] : memref<32x256xf32, #tpu.memory_space<vmem>>, vector<32x256xf32>
      %c0_11 = arith.constant 0 : index
      %c0_12 = arith.constant 0 : index
      %13 = vector.load %arg5[%c0_11, %c0_12] : memref<32x256xf32, #tpu.memory_space<vmem>>, vector<32x256xf32>
      tpu.vector_store %arg5[%c0_11, %c0_12], %12 {strides = array<i32>} : memref<32x256xf32, #tpu.memory_space<vmem>>, vector<32x256xf32>,
    } else {
    }
    return
  }
  func.func @transform_0(%arg0: i32, %arg1: i32, %arg2: i32) -> (i32, i32) {
    %c0_i32 = arith.constant 0 : i32
    return %arg0, %arg2 : i32, i32
  }
  func.func @transform_1(%arg0: i32, %arg1: i32, %arg2: i32) -> (i32, i32) {
    %c0_i32 = arith.constant 0 : i32
    return %arg2, %arg1 : i32, i32
  }
  func.func @transform_2(%arg0: i32, %arg1: i32, %arg2: i32) -> (i32, i32) {
    %c0_i32 = arith.constant 0 : i32
    return %arg0, %arg1 : i32, i32
  }
}

module attributes {stable_mosaic.version = 11 : i64} {
  func.func @_bn_stats_kernel(%arg0: i32, %arg1: memref<32x512xf32, #tpu.memory_space<vmem>>, %arg2: memref<1x512xf32, #tpu.memory_space<vmem>>, %arg3: memref<1x512xf32, #tpu.memory_space<vmem>>) attributes {dimension_semantics = [#tpu.dimension_semantics<arbitrary>], iteration_bounds = array<i64: 1>, scalar_prefetch = 0 : i64, scratch_operands = 0 : i64, tpu.core_type = #tpu.core_type<tc>, window_params = [{transform_indices = @transform_0, window_bounds = array<i64: 32, 512>}, {pipeline_mode = #tpu.pipeline_mode<synchronous>, transform_indices = @transform_1, window_bounds = array<i64: 1, 512>}, {pipeline_mode = #tpu.pipeline_mode<synchronous>, transform_indices = @transform_2, window_bounds = array<i64: 1, 512>}]} {
    %c0_i32 = arith.constant 0 : i32
    %0 = arith.cmpi eq, %arg0, %c0_i32 : i32
    %1 = arith.extui %0 : i1 to i32
    %c0_i32_0 = arith.constant 0 : i32
    %2 = arith.cmpi ne, %1, %c0_i32_0 : i32
    scf.if %2 {
      %cst_11 = arith.constant 0.000000e+00 : f32
      %15 = vector.broadcast %cst_11 : f32 to vector<1x512xf32>
      %c0_12 = arith.constant 0 : index
      %c0_13 = arith.constant 0 : index
      %16 = vector.load %arg2[%c0_12, %c0_13] : memref<1x512xf32, #tpu.memory_space<vmem>>, vector<1x512xf32>
      tpu.vector_store %arg2[%c0_12, %c0_13], %15 {strides = array<i32>} : memref<1x512xf32, #tpu.memory_space<vmem>>, vector<1x512xf32>,
      %cst_14 = arith.constant 0.000000e+00 : f32
      %17 = vector.broadcast %cst_14 : f32 to vector<1x512xf32>
      %c0_15 = arith.constant 0 : index
      %c0_16 = arith.constant 0 : index
      %18 = vector.load %arg3[%c0_15, %c0_16] : memref<1x512xf32, #tpu.memory_space<vmem>>, vector<1x512xf32>
      tpu.vector_store %arg3[%c0_15, %c0_16], %17 {strides = array<i32>} : memref<1x512xf32, #tpu.memory_space<vmem>>, vector<1x512xf32>,
    } else {
    }
    %c0 = arith.constant 0 : index
    %c0_1 = arith.constant 0 : index
    %3 = vector.load %arg1[%c0, %c0_1] : memref<32x512xf32, #tpu.memory_space<vmem>>, vector<32x512xf32>
    %c0_2 = arith.constant 0 : index
    %c0_3 = arith.constant 0 : index
    %4 = vector.load %arg2[%c0_2, %c0_3] : memref<1x512xf32, #tpu.memory_space<vmem>>, vector<1x512xf32>
    %cst = arith.constant dense<0.000000e+00> : vector<512xf32>
    %5 = vector.multi_reduction <add>, %3, %cst [0] : vector<32x512xf32> to vector<512xf32>
    %6 = vector.shape_cast %5 : vector<512xf32> to vector<1x512xf32>
    %7 = arith.addf %4, %6 : vector<1x512xf32>
    %c0_4 = arith.constant 0 : index
    %c0_5 = arith.constant 0 : index
    %8 = vector.load %arg2[%c0_4, %c0_5] : memref<1x512xf32, #tpu.memory_space<vmem>>, vector<1x512xf32>
    tpu.vector_store %arg2[%c0_4, %c0_5], %7 {strides = array<i32>} : memref<1x512xf32, #tpu.memory_space<vmem>>, vector<1x512xf32>,
    %c0_6 = arith.constant 0 : index
    %c0_7 = arith.constant 0 : index
    %9 = vector.load %arg3[%c0_6, %c0_7] : memref<1x512xf32, #tpu.memory_space<vmem>>, vector<1x512xf32>
    %10 = arith.mulf %3, %3 : vector<32x512xf32>
    %cst_8 = arith.constant dense<0.000000e+00> : vector<512xf32>
    %11 = vector.multi_reduction <add>, %10, %cst_8 [0] : vector<32x512xf32> to vector<512xf32>
    %12 = vector.shape_cast %11 : vector<512xf32> to vector<1x512xf32>
    %13 = arith.addf %9, %12 : vector<1x512xf32>
    %c0_9 = arith.constant 0 : index
    %c0_10 = arith.constant 0 : index
    %14 = vector.load %arg3[%c0_9, %c0_10] : memref<1x512xf32, #tpu.memory_space<vmem>>, vector<1x512xf32>
    tpu.vector_store %arg3[%c0_9, %c0_10], %13 {strides = array<i32>} : memref<1x512xf32, #tpu.memory_space<vmem>>, vector<1x512xf32>,
    return
  }
  func.func @transform_0(%arg0: i32) -> (i32, i32) {
    %c0_i32 = arith.constant 0 : i32
    %c0_i32_0 = arith.constant 0 : i32
    return %arg0, %c0_i32 : i32, i32
  }
  func.func @transform_1(%arg0: i32) -> (i32, i32) {
    %c0_i32 = arith.constant 0 : i32
    %c0_i32_0 = arith.constant 0 : i32
    %c0_i32_1 = arith.constant 0 : i32
    return %c0_i32, %c0_i32_0 : i32, i32
  }
  func.func @transform_2(%arg0: i32) -> (i32, i32) {
    %c0_i32 = arith.constant 0 : i32
    %c0_i32_0 = arith.constant 0 : i32
    %c0_i32_1 = arith.constant 0 : i32
    return %c0_i32, %c0_i32_0 : i32, i32
  }
}

module attributes {stable_mosaic.version = 11 : i64} {
  func.func @_bn_apply_kernel(%arg0: i32, %arg1: memref<32x512xf32, #tpu.memory_space<vmem>>, %arg2: memref<1x512xf32, #tpu.memory_space<vmem>>, %arg3: memref<1x512xf32, #tpu.memory_space<vmem>>, %arg4: memref<32x512xf32, #tpu.memory_space<vmem>>) attributes {dimension_semantics = [#tpu.dimension_semantics<parallel>], iteration_bounds = array<i64: 1>, scalar_prefetch = 0 : i64, scratch_operands = 0 : i64, tpu.core_type = #tpu.core_type<tc>, window_params = [{transform_indices = @transform_0, window_bounds = array<i64: 32, 512>}, {pipeline_mode = #tpu.pipeline_mode<synchronous>, transform_indices = @transform_1, window_bounds = array<i64: 1, 512>}, {pipeline_mode = #tpu.pipeline_mode<synchronous>, transform_indices = @transform_2, window_bounds = array<i64: 1, 512>}, {transform_indices = @transform_3, window_bounds = array<i64: 32, 512>}]} {
    %c0 = arith.constant 0 : index
    %c0_0 = arith.constant 0 : index
    %0 = vector.load %arg1[%c0, %c0_0] : memref<32x512xf32, #tpu.memory_space<vmem>>, vector<32x512xf32>
    %c0_1 = arith.constant 0 : index
    %c0_2 = arith.constant 0 : index
    %1 = vector.load %arg2[%c0_1, %c0_2] : memref<1x512xf32, #tpu.memory_space<vmem>>, vector<1x512xf32>
    %cst = arith.constant 3.125000e-02 : f32
    %2 = vector.broadcast %cst : f32 to vector<1x512xf32>
    %3 = arith.mulf %1, %2 : vector<1x512xf32>
    %c0_3 = arith.constant 0 : index
    %c0_4 = arith.constant 0 : index
    %4 = vector.load %arg3[%c0_3, %c0_4] : memref<1x512xf32, #tpu.memory_space<vmem>>, vector<1x512xf32>
    %cst_5 = arith.constant 3.125000e-02 : f32
    %5 = vector.broadcast %cst_5 : f32 to vector<1x512xf32>
    %6 = arith.mulf %4, %5 : vector<1x512xf32>
    %7 = arith.mulf %3, %3 : vector<1x512xf32>
    %8 = arith.subf %6, %7 : vector<1x512xf32>
    %9 = vector.broadcast %3 : vector<1x512xf32> to vector<32x512xf32>
    %10 = arith.subf %0, %9 : vector<32x512xf32>
    %cst_6 = arith.constant 9.99999974E-6 : f32
    %11 = vector.broadcast %cst_6 : f32 to vector<1x512xf32>
    %12 = arith.addf %8, %11 : vector<1x512xf32>
    %13 = math.rsqrt %12 : vector<1x512xf32>
    %14 = vector.broadcast %13 : vector<1x512xf32> to vector<32x512xf32>
    %15 = arith.mulf %10, %14 : vector<32x512xf32>
    %cst_7 = arith.constant 0.000000e+00 : f32
    %16 = vector.broadcast %cst_7 : f32 to vector<32x512xf32>
    %17 = arith.cmpf ogt, %15, %16 : vector<32x512xf32>
    %cst_8 = arith.constant 2.000000e-01 : f32
    %18 = vector.broadcast %cst_8 : f32 to vector<32x512xf32>
    %19 = arith.mulf %18, %15 : vector<32x512xf32>
    %20 = arith.select %17, %15, %19 : vector<32x512xi1>, vector<32x512xf32>
    %c0_9 = arith.constant 0 : index
    %c0_10 = arith.constant 0 : index
    %21 = vector.load %arg4[%c0_9, %c0_10] : memref<32x512xf32, #tpu.memory_space<vmem>>, vector<32x512xf32>
    tpu.vector_store %arg4[%c0_9, %c0_10], %20 {strides = array<i32>} : memref<32x512xf32, #tpu.memory_space<vmem>>, vector<32x512xf32>,
    return
  }
  func.func @transform_0(%arg0: i32) -> (i32, i32) {
    %c0_i32 = arith.constant 0 : i32
    %c0_i32_0 = arith.constant 0 : i32
    return %arg0, %c0_i32 : i32, i32
  }
  func.func @transform_1(%arg0: i32) -> (i32, i32) {
    %c0_i32 = arith.constant 0 : i32
    %c0_i32_0 = arith.constant 0 : i32
    %c0_i32_1 = arith.constant 0 : i32
    return %c0_i32, %c0_i32_0 : i32, i32
  }
  func.func @transform_2(%arg0: i32) -> (i32, i32) {
    %c0_i32 = arith.constant 0 : i32
    %c0_i32_0 = arith.constant 0 : i32
    %c0_i32_1 = arith.constant 0 : i32
    return %c0_i32, %c0_i32_0 : i32, i32
  }
  func.func @transform_3(%arg0: i32) -> (i32, i32) {
    %c0_i32 = arith.constant 0 : i32
    %c0_i32_0 = arith.constant 0 : i32
    return %arg0, %c0_i32 : i32, i32
  }
}

module attributes {stable_mosaic.version = 11 : i64} {
  func.func @_mm_kernel(%arg0: i32, %arg1: i32, %arg2: i32, %arg3: memref<24x512xbf16, #tpu.memory_space<vmem>>, %arg4: memref<512x128xbf16, #tpu.memory_space<vmem>>, %arg5: memref<1x128xf32, #tpu.memory_space<vmem>>, %arg6: memref<24x128xf32, #tpu.memory_space<vmem>>, %arg7: memref<24x128xf32, #tpu.memory_space<vmem>>) attributes {dimension_semantics = [#tpu.dimension_semantics<parallel>, #tpu.dimension_semantics<parallel>, #tpu.dimension_semantics<arbitrary>], iteration_bounds = array<i64: 1, 1, 16>, scalar_prefetch = 0 : i64, scratch_operands = 1 : i64, tpu.core_type = #tpu.core_type<tc>, window_params = [{transform_indices = @transform_0, window_bounds = array<i64: 24, 512>}, {transform_indices = @transform_1, window_bounds = array<i64: 512, 128>}, {transform_indices = @transform_2, window_bounds = array<i64: 1, 128>}, {transform_indices = @transform_3, window_bounds = array<i64: 24, 128>}]} {
    %c0_i32 = arith.constant 0 : i32
    %0 = arith.cmpi eq, %arg2, %c0_i32 : i32
    %1 = arith.extui %0 : i1 to i32
    %c0_i32_0 = arith.constant 0 : i32
    %2 = arith.cmpi ne, %1, %c0_i32_0 : i32
    scf.if %2 {
      %cst_9 = arith.constant 0.000000e+00 : f32
      %12 = vector.broadcast %cst_9 : f32 to vector<24x128xf32>
      %c0_10 = arith.constant 0 : index
      %c0_11 = arith.constant 0 : index
      %13 = vector.load %arg7[%c0_10, %c0_11] : memref<24x128xf32, #tpu.memory_space<vmem>>, vector<24x128xf32>
      tpu.vector_store %arg7[%c0_10, %c0_11], %12 {strides = array<i32>} : memref<24x128xf32, #tpu.memory_space<vmem>>, vector<24x128xf32>,
    } else {
    }
    %c0 = arith.constant 0 : index
    %c0_1 = arith.constant 0 : index
    %3 = vector.load %arg7[%c0, %c0_1] : memref<24x128xf32, #tpu.memory_space<vmem>>, vector<24x128xf32>
    %c0_2 = arith.constant 0 : index
    %c0_3 = arith.constant 0 : index
    %4 = vector.load %arg3[%c0_2, %c0_3] : memref<24x512xbf16, #tpu.memory_space<vmem>>, vector<24x512xbf16>
    %c0_4 = arith.constant 0 : index
    %c0_5 = arith.constant 0 : index
    %5 = vector.load %arg4[%c0_4, %c0_5] : memref<512x128xbf16, #tpu.memory_space<vmem>>, vector<512x128xbf16>
    %cst = arith.constant dense<0.000000e+00> : vector<24x128xf32>
    %6 = tpu.matmul %4, %5, %cst {dimension_numbers = #tpu.dot_dimension_numbers<[1], [0], [0], [1], [0, 0, 1, 1], [], []>} : vector<24x512xbf16>, vector<512x128xbf16>, vector<24x128xf32> -> vector<24x128xf32>
    %7 = arith.addf %3, %6 : vector<24x128xf32>
    %c0_6 = arith.constant 0 : index
    %c0_7 = arith.constant 0 : index
    %8 = vector.load %arg7[%c0_6, %c0_7] : memref<24x128xf32, #tpu.memory_space<vmem>>, vector<24x128xf32>
    tpu.vector_store %arg7[%c0_6, %c0_7], %7 {strides = array<i32>} : memref<24x128xf32, #tpu.memory_space<vmem>>, vector<24x128xf32>,
    %c15_i32 = arith.constant 15 : i32
    %9 = arith.cmpi eq, %arg2, %c15_i32 : i32
    %10 = arith.extui %9 : i1 to i32
    %c0_i32_8 = arith.constant 0 : i32
    %11 = arith.cmpi ne, %10, %c0_i32_8 : i32
    scf.if %11 {
      %c0_9 = arith.constant 0 : index
      %c0_10 = arith.constant 0 : index
      %12 = vector.load %arg7[%c0_9, %c0_10] : memref<24x128xf32, #tpu.memory_space<vmem>>, vector<24x128xf32>
      %c0_11 = arith.constant 0 : index
      %c0_12 = arith.constant 0 : index
      %13 = vector.load %arg5[%c0_11, %c0_12] : memref<1x128xf32, #tpu.memory_space<vmem>>, vector<1x128xf32>
      %14 = vector.broadcast %13 : vector<1x128xf32> to vector<24x128xf32>
      %15 = arith.addf %12, %14 : vector<24x128xf32>
      %c0_13 = arith.constant 0 : index
      %c0_14 = arith.constant 0 : index
      %16 = vector.load %arg6[%c0_13, %c0_14] : memref<24x128xf32, #tpu.memory_space<vmem>>, vector<24x128xf32>
      tpu.vector_store %arg6[%c0_13, %c0_14], %15 {strides = array<i32>} : memref<24x128xf32, #tpu.memory_space<vmem>>, vector<24x128xf32>,
    } else {
    }
    return
  }
  func.func @transform_0(%arg0: i32, %arg1: i32, %arg2: i32) -> (i32, i32) {
    %c0_i32 = arith.constant 0 : i32
    return %arg0, %arg2 : i32, i32
  }
  func.func @transform_1(%arg0: i32, %arg1: i32, %arg2: i32) -> (i32, i32) {
    %c0_i32 = arith.constant 0 : i32
    return %arg2, %arg1 : i32, i32
  }
  func.func @transform_2(%arg0: i32, %arg1: i32, %arg2: i32) -> (i32, i32) {
    %c0_i32 = arith.constant 0 : i32
    %c0_i32_0 = arith.constant 0 : i32
    return %c0_i32, %arg1 : i32, i32
  }
  func.func @transform_3(%arg0: i32, %arg1: i32, %arg2: i32) -> (i32, i32) {
    %c0_i32 = arith.constant 0 : i32
    return %arg0, %arg1 : i32, i32
  }
}

</mosaic_0001>

<llo_original>
// kernel: discriminator_forward.11
$region0: #{discriminator_forward.11}
  #allocation0 [shape = 'u32[]', space=smem, size = 0x4, offset = 0x4, fixed_abs, tag = 'smem constant byte address 0x4 - core index']
  #allocation1 [shape = 'u32[144,128]{1,0:T(1,128)}', space=vmem, size = 0x12000, scoped, tag = 'internal scratch']
  #allocation2 [shape = 'f32[256,128]{1,0:T(8,128)}', space=vmem, size = 0x20000, scoped, tag = 'scratch operand']
  %s0 = inlined_call_operand.vmem [shape: bf16[2048,128], index: 0, kind: input, shape index: {}]
  %s1 = inlined_call_operand.vmem [shape: bf16[128,128], index: 1, kind: input, shape index: {}]
  %s2 = inlined_call_operand.vmem [shape: f32[2048,128], index: 2, kind: output, shape index: {}]
  %s3 = sld [smem:[#allocation0]]
  $region49: #{discriminator_forward.11} parent=0
    _
  %s5 = ssub.s32 1, %s3
  %s6 = scalar_select 0, %s5, %s3
  loop: start=0, step=1, limit=10
  $region2: #{discriminator_forward.11} parent=0 // loop_pre_header
    _
  $region3: #{discriminator_forward.11} parent=0 // loop_header
    %s8 = sphi 0, %s12
    %p9 = scmp.ge.s32.totalorder %s8, 10
    %s15 = sphi 0, %s34
    %s16 = sphi 0, %s30
    %s17 = sphi 0, %s26
    %s18 = sphi 0, %s15
    %s19 = sphi 0, %s16
    %s20 = sphi 0, %s17
    %s21 = sphi 0, %s18
    %s22 = sphi 0, %s19
    %s23 = sphi 0, %s20
    %s39 = sphi 0, %s41
    %s42 = sphi 0, %s39
    %s43 = sphi 0, %s42
    %s59 = sphi 0, %s43
    %s67 = sphi 0, %s69
    %s70 = sphi 0, %s67
    %s71 = sphi 0, %s70
    %s87 = sphi 0, %s71
    %s95 = sphi 0, %s97
    %s98 = sphi 0, %s95
    %s99 = sphi 0, %s98
    %s115 = sphi 0, %s99
  $region4: #{discriminator_forward.11} parent=0 // loop_header_branch
    %11 = sbr.rel (%p9) target = $region8
  $region5: #{discriminator_forward.11} parent=0 // loop_body
    %s13 = ssub.s32 %s8, 1
    %s14 = ssub.s32 %s8, 2
    %s24 = sadd.s32 1, %s17
    %p25 = scmp.ge.s32.totalorder %s24, 1
    %s26 = scalar_select %p25, 0, %s24
    %s27 = sadd.s32 1, %s16
    %s28 = scalar_select %p25, %s27, %s16
    %p29 = scmp.ge.s32.totalorder %s28, 1
    %s30 = scalar_select %p29, 0, %s28
    %s31 = sadd.s32 1, %s15
    %s32 = scalar_select %p29, %s31, %s15
    %p33 = scmp.ge.s32.totalorder %s32, 8
    %s34 = scalar_select %p33, 0, %s32
    %s35 = ssub.s32 %s15, %s34
    %s36 = ssub.s32 %s17, %s26
    %s37 = sor.u32 %s35, %s36
    %p38 = scmp.eq.s32.totalorder %s37, 0
    %s40 = sadd.s32 %s39, 1
    %s41 = scalar_select %p38, %s39, %s40
    %p44 = pneg %p38
    %p45 = scmp.eq.s32.totalorder %s8, 7
    %p46 = por %p44, %p45
    %p47 = scmp.ne.s32.totalorder %s39, %s42
    %p48 = scmp.eq.s32.totalorder %s8, 0
    %p49 = por %p47, %p48
    %p50 = scmp.ne.s32.totalorder %s39, %s42
    %p51 = scmp.eq.s32.totalorder %s13, 7
    %p52 = por %p50, %p51
    %p53 = scmp.ne.s32.totalorder %s42, %s43
    %p54 = scmp.eq.s32.totalorder %s13, 0
    %p55 = por %p53, %p54
    %p56 = scmp.ne.s32.totalorder %s42, %s43
    %p57 = scmp.eq.s32.totalorder %s14, 7
    %p58 = por %p56, %p57
    %p60 = scmp.ne.s32.totalorder %s43, %s59
    %p61 = scmp.eq.s32.totalorder %s14, 0
    %p62 = por %p60, %p61
    %s63 = ssub.s32 %s17, %s26
    %s64 = ssub.s32 %s16, %s30
    %s65 = sor.u32 %s63, %s64
    %p66 = scmp.eq.s32.totalorder %s65, 0
    %s68 = sadd.s32 %s67, 1
    %s69 = scalar_select %p66, %s67, %s68
    %p72 = pneg %p66
    %p73 = scmp.eq.s32.totalorder %s8, 7
    %p74 = por %p72, %p73
    %p75 = scmp.ne.s32.totalorder %s67, %s70
    %p76 = scmp.eq.s32.totalorder %s8, 0
    %p77 = por %p75, %p76
    %p78 = scmp.ne.s32.totalorder %s67, %s70
    %p79 = scmp.eq.s32.totalorder %s13, 7
    %p80 = por %p78, %p79
    %p81 = scmp.ne.s32.totalorder %s70, %s71
    %p82 = scmp.eq.s32.totalorder %s13, 0
    %p83 = por %p81, %p82
    %p84 = scmp.ne.s32.totalorder %s70, %s71
    %p85 = scmp.eq.s32.totalorder %s14, 7
    %p86 = por %p84, %p85
    %p88 = scmp.ne.s32.totalorder %s71, %s87
    %p89 = scmp.eq.s32.totalorder %s14, 0
    %p90 = por %p88, %p89
    %s91 = ssub.s32 %s15, %s34
    %s92 = ssub.s32 %s16, %s30
    %s93 = sor.u32 %s91, %s92
    %p94 = scmp.eq.s32.totalorder %s93, 0
    %s96 = sadd.s32 %s95, 1
    %s97 = scalar_select %p94, %s95, %s96
    %p100 = pneg %p94
    %p101 = scmp.eq.s32.totalorder %s8, 7
    %p102 = por %p100, %p101
    %p103 = scmp.ne.s32.totalorder %s95, %s98
    %p104 = scmp.eq.s32.totalorder %s8, 0
    %p105 = por %p103, %p104
    %p106 = scmp.ne.s32.totalorder %s95, %s98
    %p107 = scmp.eq.s32.totalorder %s13, 7
    %p108 = por %p106, %p107
    %p109 = scmp.ne.s32.totalorder %s98, %s99
    %p110 = scmp.eq.s32.totalorder %s13, 0
    %p111 = por %p109, %p110
    %p112 = scmp.ne.s32.totalorder %s98, %s99
    %p113 = scmp.eq.s32.totalorder %s14, 7
    %p114 = por %p112, %p113
    %p116 = scmp.ne.s32.totalorder %s99, %s115
    %p117 = scmp.eq.s32.totalorder %s14, 0
    %p118 = por %p116, %p117
    %p119 = scmp.le.s32.totalorder 1, %s8
    %p120 = scmp.lt.s32.totalorder %s8, 9
    %p121 = pnand %p119, %p120
    %p122 = pneg %p121
    // Predicated region
    $region9: #{discriminator_forward.11} parent=5 // pred_check
      _
    $region10: #{discriminator_forward.11} parent=5 // pred_check_branch
      %124 = sbr.rel (%p121) target = $region12
    $region11: #{discriminator_forward.11} parent=5 // pred_region
      %s125 = ssub.s32 %s8, 1
      // Predicated region
      $region13: #{discriminator_forward.11} parent=11 // pred_check
        %p126 = pneg %p83
      $region14: #{discriminator_forward.11} parent=11 // pred_check_branch
        %128 = sbr.rel (%p126) target = $region16
      $region15: #{discriminator_forward.11} parent=11 // pred_region
        %s129 = smul.u32 16, %s20
        %p130 = scmp.lt.s32.totalorder %s129, 15
        %s131 = scalar_select %p130, %s129, 15
        %p132 = scmp.lt.s32.totalorder %s19, 0
        %s133 = scalar_select %p132, %s19, 0
        %s134 = sadd.s32 %s133, %s131
        %s135 = smul.addr %s134, 4
        %s136 = scalar_lea.vmem %s1, %s135
        %s137 = smul.u32 16, %s20
      $region16: #{discriminator_forward.11} parent=11 // pred_fallthru
        _
    $region12: #{discriminator_forward.11} parent=5 // pred_fallthru
      _
    %p138 = scmp.lt.s32.totalorder %s8, 8
    // Predicated region
    $region17: #{discriminator_forward.11} parent=5 // pred_check
      %p139 = pneg %p138
    $region18: #{discriminator_forward.11} parent=5 // pred_check_branch
      %141 = sbr.rel (%p139) target = $region20
    $region19: #{discriminator_forward.11} parent=5 // pred_region
      // Predicated region
      $region21: #{discriminator_forward.11} parent=19 // pred_check
        %p142 = pneg %p49
      $region22: #{discriminator_forward.11} parent=19 // pred_check_branch
        %144 = sbr.rel (%p142) target = $region24
      $region23: #{discriminator_forward.11} parent=19 // pred_region
        %s145 = smul.u32 32, %s15
        %p146 = scmp.lt.s32.totalorder %s145, 255
        %s147 = scalar_select %p146, %s145, 255
        %p148 = scmp.lt.s32.totalorder %s17, 0
        %s149 = scalar_select %p148, %s17, 0
        %s150 = sadd.s32 %s149, %s147
        %s151 = smul.addr %s150, 4
        %s152 = scalar_lea.vmem %s0, %s151
        %s153 = smul.u32 32, %s15
      $region24: #{discriminator_forward.11} parent=19 // pred_fallthru
        _
    $region20: #{discriminator_forward.11} parent=5 // pred_fallthru
      _
    %p154 = scmp.le.s32.totalorder 1, %s8
    %p155 = scmp.lt.s32.totalorder %s8, 9
    %p156 = pnand %p154, %p155
    %p157 = pneg %p156
    // Predicated region
    $region25: #{discriminator_forward.11} parent=5 // pred_check
      _
    $region26: #{discriminator_forward.11} parent=5 // pred_check_branch
      %159 = sbr.rel (%p156) target = $region28
    $region27: #{discriminator_forward.11} parent=5 // pred_region
      %s160 = ssub.s32 %s8, 1
      %s161 = smul.u32 32, %s18
      %p162 = scmp.lt.s32.totalorder %s161, 255
      %s163 = scalar_select %p162, %s161, 255
      %p164 = scmp.lt.s32.totalorder %s20, 0
      %s165 = scalar_select %p164, %s20, 0
      %s166 = sadd.s32 %s165, %s163
      %s167 = smul.addr %s166, 4
      %s168 = scalar_lea.vmem %s0, %s167
      %p169 = pneg %p55
      %p170 = pneg %p52
      %s171 = smul.u32 16, %s20
      %p172 = scmp.lt.s32.totalorder %s171, 15
      %s173 = scalar_select %p172, %s171, 15
      %p174 = scmp.lt.s32.totalorder %s19, 0
      %s175 = scalar_select %p174, %s19, 0
      %s176 = sadd.s32 %s175, %s173
      %s177 = smul.addr %s176, 4
      %s178 = scalar_lea.vmem %s1, %s177
      %p179 = pneg %p83
      %p180 = pneg %p80
      %p181 = pneg %p111
      %p182 = pneg %p108
      %s183 = smul.u32 32, %s18
      %p184 = scmp.lt.s32.totalorder %s183, 255
      %s185 = scalar_select %p184, %s183, 255
      %p186 = scmp.lt.s32.totalorder %s19, 0
      %s187 = scalar_select %p186, %s19, 0
      %s188 = sadd.s32 %s187, %s185
      %s189 = smul.addr %s188, 8
      %s190 = scalar_lea.vmem %s2, %s189
      %s191 = smul.u32 32, %s18
      %p192 = scmp.lt.s32.totalorder %s191, 255
      %s193 = scalar_select %p192, %s191, 255
      %p194 = scmp.lt.s32.totalorder %s20, 0
      %s195 = scalar_select %p194, %s20, 0
      %s196 = sadd.s32 %s195, %s193
      %s197 = smul.addr %s196, 4
      %s198 = scalar_lea.vmem %s0, %s197
      %s199 = smul.u32 32, %s18
      %s200 = smul.u32 16, %s20
      %p201 = scmp.lt.s32.totalorder %s200, 15
      %s202 = scalar_select %p201, %s200, 15
      %p203 = scmp.lt.s32.totalorder %s19, 0
      %s204 = scalar_select %p203, %s19, 0
      %s205 = sadd.s32 %s204, %s202
      %s206 = smul.addr %s205, 4
      %s207 = scalar_lea.vmem %s1, %s206
      %s208 = smul.u32 16, %s20
      %s209 = smul.u32 32, %s18
      %p210 = scmp.lt.s32.totalorder %s209, 255
      %s211 = scalar_select %p210, %s209, 255
      %p212 = scmp.lt.s32.totalorder %s19, 0
      %s213 = scalar_select %p212, %s19, 0
      %s214 = sadd.s32 %s213, %s211
      %s215 = smul.addr %s214, 8
      %s216 = scalar_lea.vmem %s2, %s215
      %s217 = smul.u32 32, %s18
      %p219 = scmp.eq.s32.totalorder %s20, 0
      // Predicated region
      $region29: #{discriminator_forward.11} parent=27 // pred_check
        %p220 = pneg %p219
      $region30: #{discriminator_forward.11} parent=27 // pred_check_branch
        %222 = sbr.rel (%p220) target = $region32
      $region31: #{discriminator_forward.11} parent=27 // pred_region
        %223 = vst [vmem:[#allocation2] sm:$0xff] 0.0
        %224 = vst [vmem:[#allocation2 + $0x8] sm:$0xff] 0.0
        %225 = vst [vmem:[#allocation2 + $0x10] sm:$0xff] 0.0
        %226 = vst [vmem:[#allocation2 + $0x18] sm:$0xff] 0.0
        %227 = vst [vmem:[#allocation2 + $0x20] sm:$0xff] 0.0
        %228 = vst [vmem:[#allocation2 + $0x28] sm:$0xff] 0.0
        %229 = vst [vmem:[#allocation2 + $0x30] sm:$0xff] 0.0
        %230 = vst [vmem:[#allocation2 + $0x38] sm:$0xff] 0.0
        %231 = vst [vmem:[#allocation2 + $0x40] sm:$0xff] 0.0
        %232 = vst [vmem:[#allocation2 + $0x48] sm:$0xff] 0.0
        %233 = vst [vmem:[#allocation2 + $0x50] sm:$0xff] 0.0
        %234 = vst [vmem:[#allocation2 + $0x58] sm:$0xff] 0.0
        %235 = vst [vmem:[#allocation2 + $0x60] sm:$0xff] 0.0
        %236 = vst [vmem:[#allocation2 + $0x68] sm:$0xff] 0.0
        %237 = vst [vmem:[#allocation2 + $0x70] sm:$0xff] 0.0
        %238 = vst [vmem:[#allocation2 + $0x78] sm:$0xff] 0.0
        %239 = vst [vmem:[#allocation2 + $0x80] sm:$0xff] 0.0
        %240 = vst [vmem:[#allocation2 + $0x88] sm:$0xff] 0.0
        %241 = vst [vmem:[#allocation2 + $0x90] sm:$0xff] 0.0
        %242 = vst [vmem:[#allocation2 + $0x98] sm:$0xff] 0.0
        %243 = vst [vmem:[#allocation2 + $0xa0] sm:$0xff] 0.0
        %244 = vst [vmem:[#allocation2 + $0xa8] sm:$0xff] 0.0
        %245 = vst [vmem:[#allocation2 + $0xb0] sm:$0xff] 0.0
        %246 = vst [vmem:[#allocation2 + $0xb8] sm:$0xff] 0.0
        %247 = vst [vmem:[#allocation2 + $0xc0] sm:$0xff] 0.0
        %248 = vst [vmem:[#allocation2 + $0xc8] sm:$0xff] 0.0
        %249 = vst [vmem:[#allocation2 + $0xd0] sm:$0xff] 0.0
        %250 = vst [vmem:[#allocation2 + $0xd8] sm:$0xff] 0.0
        %251 = vst [vmem:[#allocation2 + $0xe0] sm:$0xff] 0.0
        %252 = vst [vmem:[#allocation2 + $0xe8] sm:$0xff] 0.0
        %253 = vst [vmem:[#allocation2 + $0xf0] sm:$0xff] 0.0
        %254 = vst [vmem:[#allocation2 + $0xf8] sm:$0xff] 0.0
      $region32: #{discriminator_forward.11} parent=27 // pred_fallthru
        _
      %v255 = vld [vmem:[#allocation2] sm:$0xff]
      %v256 = vld [vmem:[#allocation2 + $0x8] sm:$0xff]
      %v257 = vld [vmem:[#allocation2 + $0x10] sm:$0xff]
      %v258 = vld [vmem:[#allocation2 + $0x18] sm:$0xff]
      %v259 = vld [vmem:[#allocation2 + $0x20] sm:$0xff]
      %v260 = vld [vmem:[#allocation2 + $0x28] sm:$0xff]
      %v261 = vld [vmem:[#allocation2 + $0x30] sm:$0xff]
      %v262 = vld [vmem:[#allocation2 + $0x38] sm:$0xff]
      %v263 = vld [vmem:[#allocation2 + $0x40] sm:$0xff]
      %v264 = vld [vmem:[#allocation2 + $0x48] sm:$0xff]
      %v265 = vld [vmem:[#allocation2 + $0x50] sm:$0xff]
      %v266 = vld [vmem:[#allocation2 + $0x58] sm:$0xff]
      %v267 = vld [vmem:[#allocation2 + $0x60] sm:$0xff]
      %v268 = vld [vmem:[#allocation2 + $0x68] sm:$0xff]
      %v269 = vld [vmem:[#allocation2 + $0x70] sm:$0xff]
      %v270 = vld [vmem:[#allocation2 + $0x78] sm:$0xff]
      %v271 = vld [vmem:[#allocation2 + $0x80] sm:$0xff]
      %v272 = vld [vmem:[#allocation2 + $0x88] sm:$0xff]
      %v273 = vld [vmem:[#allocation2 + $0x90] sm:$0xff]
      %v274 = vld [vmem:[#allocation2 + $0x98] sm:$0xff]
      %v275 = vld [vmem:[#allocation2 + $0xa0] sm:$0xff]
      %v276 = vld [vmem:[#allocation2 + $0xa8] sm:$0xff]
      %v277 = vld [vmem:[#allocation2 + $0xb0] sm:$0xff]
      %v278 = vld [vmem:[#allocation2 + $0xb8] sm:$0xff]
      %v279 = vld [vmem:[#allocation2 + $0xc0] sm:$0xff]
      %v280 = vld [vmem:[#allocation2 + $0xc8] sm:$0xff]
      %v281 = vld [vmem:[#allocation2 + $0xd0] sm:$0xff]
      %v282 = vld [vmem:[#allocation2 + $0xd8] sm:$0xff]
      %v283 = vld [vmem:[#allocation2 + $0xe0] sm:$0xff]
      %v284 = vld [vmem:[#allocation2 + $0xe8] sm:$0xff]
      %v285 = vld [vmem:[#allocation2 + $0xf0] sm:$0xff]
      %v286 = vld [vmem:[#allocation2 + $0xf8] sm:$0xff]
      %v287 = vld [vmem:[%s198] sm:$0xf]
      %v288 = vld [vmem:[%s198 + $0x4] sm:$0xf]
      %v289 = vld [vmem:[%s198 + $0x8] sm:$0xf]
      %v290 = vld [vmem:[%s198 + $0xc] sm:$0xf]
      %v291 = vld [vmem:[%s198 + $0x10] sm:$0xf]
      %v292 = vld [vmem:[%s198 + $0x14] sm:$0xf]
      %v293 = vld [vmem:[%s198 + $0x18] sm:$0xf]
      %v294 = vld [vmem:[%s198 + $0x1c] sm:$0xf]
      %v295 = vld [vmem:[%s198 + $0x20] sm:$0xf]
      %v296 = vld [vmem:[%s198 + $0x24] sm:$0xf]
      %v297 = vld [vmem:[%s198 + $0x28] sm:$0xf]
      %v298 = vld [vmem:[%s198 + $0x2c] sm:$0xf]
      %v299 = vld [vmem:[%s198 + $0x30] sm:$0xf]
      %v300 = vld [vmem:[%s198 + $0x34] sm:$0xf]
      %v301 = vld [vmem:[%s198 + $0x38] sm:$0xf]
      %v302 = vld [vmem:[%s198 + $0x3c] sm:$0xf]
      %v303 = vld [vmem:[%s198 + $0x40] sm:$0xf]
      %v304 = vld [vmem:[%s198 + $0x44] sm:$0xf]
      %v305 = vld [vmem:[%s198 + $0x48] sm:$0xf]
      %v306 = vld [vmem:[%s198 + $0x4c] sm:$0xf]
      %v307 = vld [vmem:[%s198 + $0x50] sm:$0xf]
      %v308 = vld [vmem:[%s198 + $0x54] sm:$0xf]
      %v309 = vld [vmem:[%s198 + $0x58] sm:$0xf]
      %v310 = vld [vmem:[%s198 + $0x5c] sm:$0xf]
      %v311 = vld [vmem:[%s198 + $0x60] sm:$0xf]
      %v312 = vld [vmem:[%s198 + $0x64] sm:$0xf]
      %v313 = vld [vmem:[%s198 + $0x68] sm:$0xf]
      %v314 = vld [vmem:[%s198 + $0x6c] sm:$0xf]
      %v315 = vld [vmem:[%s198 + $0x70] sm:$0xf]
      %v316 = vld [vmem:[%s198 + $0x74] sm:$0xf]
      %v317 = vld [vmem:[%s198 + $0x78] sm:$0xf]
      %v318 = vld [vmem:[%s198 + $0x7c] sm:$0xf]
      %v319 = vld [vmem:[%s207] sm:$0xf]
      %v320 = vld [vmem:[%s207 + $0x4] sm:$0xf]
      %v321 = vld [vmem:[%s207 + $0x8] sm:$0xf]
      %v322 = vld [vmem:[%s207 + $0xc] sm:$0xf]
      %v323 = vld [vmem:[%s207 + $0x10] sm:$0xf]
      %v324 = vld [vmem:[%s207 + $0x14] sm:$0xf]
      %v325 = vld [vmem:[%s207 + $0x18] sm:$0xf]
      %v326 = vld [vmem:[%s207 + $0x1c] sm:$0xf]
      %v327 = vld [vmem:[%s207 + $0x20] sm:$0xf]
      %v328 = vld [vmem:[%s207 + $0x24] sm:$0xf]
      %v329 = vld [vmem:[%s207 + $0x28] sm:$0xf]
      %v330 = vld [vmem:[%s207 + $0x2c] sm:$0xf]
      %v331 = vld [vmem:[%s207 + $0x30] sm:$0xf]
      %v332 = vld [vmem:[%s207 + $0x34] sm:$0xf]
      %v333 = vld [vmem:[%s207 + $0x38] sm:$0xf]
      %v334 = vld [vmem:[%s207 + $0x3c] sm:$0xf]
      %v367 = vunpack.c.l.b16 %v287
      %v368 = vunpack.c.l.b16 %v288
      %v369 = vunpack.c.l.b16 %v289
      %v370 = vunpack.c.l.b16 %v290
      %v371 = vunpack.c.l.b16 %v291
      %v372 = vunpack.c.l.b16 %v292
      %v373 = vunpack.c.l.b16 %v293
      %v374 = vunpack.c.l.b16 %v294
      %v375 = vunpack.c.l.b16 %v295
      %v376 = vunpack.c.l.b16 %v296
      %v377 = vunpack.c.l.b16 %v297
      %v378 = vunpack.c.l.b16 %v298
      %v379 = vunpack.c.l.b16 %v299
      %v380 = vunpack.c.l.b16 %v300
      %v381 = vunpack.c.l.b16 %v301
      %v382 = vunpack.c.l.b16 %v302
      %v383 = vunpack.c.l.b16 %v303
      %v384 = vunpack.c.l.b16 %v304
      %v385 = vunpack.c.l.b16 %v305
      %v386 = vunpack.c.l.b16 %v306
      %v387 = vunpack.c.l.b16 %v307
      %v388 = vunpack.c.l.b16 %v308
      %v389 = vunpack.c.l.b16 %v309
      %v390 = vunpack.c.l.b16 %v310
      %v391 = vunpack.c.l.b16 %v311
      %v392 = vunpack.c.l.b16 %v312
      %v393 = vunpack.c.l.b16 %v313
      %v394 = vunpack.c.l.b16 %v314
      %v395 = vunpack.c.l.b16 %v315
      %v396 = vunpack.c.l.b16 %v316
      %v397 = vunpack.c.l.b16 %v317
      %v398 = vunpack.c.l.b16 %v318
      %v399 = vpack.c.b16 %v368, %v367
      %v400 = vpack.c.b16 %v370, %v369
      %v401 = vpack.c.b16 %v372, %v371
      %v402 = vpack.c.b16 %v374, %v373
      %v403 = vpack.c.b16 %v376, %v375
      %v404 = vpack.c.b16 %v378, %v377
      %v405 = vpack.c.b16 %v380, %v379
      %v406 = vpack.c.b16 %v382, %v381
      %v407 = vpack.c.b16 %v384, %v383
      %v408 = vpack.c.b16 %v386, %v385
      %v409 = vpack.c.b16 %v388, %v387
      %v410 = vpack.c.b16 %v390, %v389
      %v411 = vpack.c.b16 %v392, %v391
      %v412 = vpack.c.b16 %v394, %v393
      %v413 = vpack.c.b16 %v396, %v395
      %v414 = vpack.c.b16 %v398, %v397
      %v447 = vunpack.c.l.b16 %v319
      %v448 = vunpack.c.l.b16 %v320
      %v449 = vunpack.c.l.b16 %v321
      %v450 = vunpack.c.l.b16 %v322
      %v451 = vunpack.c.l.b16 %v323
      %v452 = vunpack.c.l.b16 %v324
      %v453 = vunpack.c.l.b16 %v325
      %v454 = vunpack.c.l.b16 %v326
      %v455 = vunpack.c.l.b16 %v327
      %v456 = vunpack.c.l.b16 %v328
      %v457 = vunpack.c.l.b16 %v329
      %v458 = vunpack.c.l.b16 %v330
      %v459 = vunpack.c.l.b16 %v331
      %v460 = vunpack.c.l.b16 %v332
      %v461 = vunpack.c.l.b16 %v333
      %v462 = vunpack.c.l.b16 %v334
      %v463 = vpack.c.b16 %v448, %v447
      %v464 = vpack.c.b16 %v450, %v449
      %v465 = vpack.c.b16 %v452, %v451
      %v466 = vpack.c.b16 %v454, %v453
      %v467 = vpack.c.b16 %v456, %v455
      %v468 = vpack.c.b16 %v458, %v457
      %v469 = vpack.c.b16 %v460, %v459
      %v470 = vpack.c.b16 %v462, %v461
      %479 = vmatprep.subr.bf16.mxu0 0
      %480 = vmatpush1.bf16.msra.mxu0 %v470
      %481 = vmatprep.subr.bf16.mxu0 0
      %482 = vmatpush1.bf16.msra.mxu0 %v469
      %483 = vmatprep.subr.bf16.mxu0 0
      %484 = vmatpush1.bf16.msra.mxu0 %v468
      %485 = vmatprep.subr.bf16.mxu0 0
      %486 = vmatpush1.bf16.msra.mxu0 %v467
      %487 = vmatprep.subr.bf16.mxu0 0
      %488 = vmatpush1.bf16.msra.mxu0 %v466
      %489 = vmatprep.subr.bf16.mxu0 0
      %490 = vmatpush1.bf16.msra.mxu0 %v465
      %491 = vmatprep.subr.bf16.mxu0 0
      %492 = vmatpush1.bf16.msra.mxu0 %v464
      %493 = vmatprep.subr.bf16.mxu0 0
      %494 = vmatpush1.bf16.msra.mxu0 %v463
      %495 = vmatprep.subr.bf16.mxu0 0
      %496 = vmatpush2.bf16.msra.mxu0 0
      %497 = vmatprep.subr.bf16.mxu0 0
      %498 = vmatpush2.bf16.msra.mxu0 0
      %499 = vmatprep.subr.bf16.mxu0 0
      %500 = vmatpush2.bf16.msra.mxu0 0
      %501 = vmatprep.subr.bf16.mxu0 0
      %502 = vmatpush2.bf16.msra.mxu0 0
      %503 = vmatprep.subr.bf16.mxu0 0
      %504 = vmatpush2.bf16.msra.mxu0 0
      %505 = vmatprep.subr.bf16.mxu0 0
      %506 = vmatpush2.bf16.msra.mxu0 0
      %507 = vmatprep.subr.bf16.mxu0 0
      %508 = vmatpush2.bf16.msra.mxu0 0
      %509 = vmatprep.subr.bf16.mxu0 0
      %510 = vmatpush2.bf16.msra.mxu0 0
      %511 = vmatprep.mubr.bf16.mxu0 0
      %512 = vmatmul.mubr.bf16.gmra.mxu0 %v399
      %v513 = vpop.f32.mrf.mxu0
      %v514 = vadd.f32 0.0, %v513
      %v515 = vpop.f32.mrf.mxu0
      %v516 = vpop.f32.mrf.mxu0
      %v517 = vadd.f32 0.0, %v516
      %v518 = vpop.f32.mrf.mxu0
      %519 = vmatprep.mubr.bf16.mxu0 0
      %520 = vmatmul.mubr.bf16.gmra.mxu0 %v400
      %v521 = vpop.f32.mrf.mxu0
      %v522 = vadd.f32 0.0, %v521
      %v523 = vpop.f32.mrf.mxu0
      %v524 = vpop.f32.mrf.mxu0
      %v525 = vadd.f32 0.0, %v524
      %v526 = vpop.f32.mrf.mxu0
      %527 = vmatprep.mubr.bf16.mxu0 0
      %528 = vmatmul.mubr.bf16.gmra.mxu0 %v401
      %v529 = vpop.f32.mrf.mxu0
      %v530 = vadd.f32 0.0, %v529
      %v531 = vpop.f32.mrf.mxu0
      %v532 = vpop.f32.mrf.mxu0
      %v533 = vadd.f32 0.0, %v532
      %v534 = vpop.f32.mrf.mxu0
      %535 = vmatprep.mubr.bf16.mxu0 0
      %536 = vmatmul.mubr.bf16.gmra.mxu0 %v402
      %v537 = vpop.f32.mrf.mxu0
      %v538 = vadd.f32 0.0, %v537
      %v539 = vpop.f32.mrf.mxu0
      %v540 = vpop.f32.mrf.mxu0
      %v541 = vadd.f32 0.0, %v540
      %v542 = vpop.f32.mrf.mxu0
      %543 = vmatprep.mubr.bf16.mxu0 0
      %544 = vmatmul.mubr.bf16.gmra.mxu0 %v403
      %v545 = vpop.f32.mrf.mxu0
      %v546 = vadd.f32 0.0, %v545
      %v547 = vpop.f32.mrf.mxu0
      %v548 = vpop.f32.mrf.mxu0
      %v549 = vadd.f32 0.0, %v548
      %v550 = vpop.f32.mrf.mxu0
      %551 = vmatprep.mubr.bf16.mxu0 0
      %552 = vmatmul.mubr.bf16.gmra.mxu0 %v404
      %v553 = vpop.f32.mrf.mxu0
      %v554 = vadd.f32 0.0, %v553
      %v555 = vpop.f32.mrf.mxu0
      %v556 = vpop.f32.mrf.mxu0
      %v557 = vadd.f32 0.0, %v556
      %v558 = vpop.f32.mrf.mxu0
      %559 = vmatprep.mubr.bf16.mxu0 0
      %560 = vmatmul.mubr.bf16.gmra.mxu0 %v405
      %v561 = vpop.f32.mrf.mxu0
      %v562 = vadd.f32 0.0, %v561
      %v563 = vpop.f32.mrf.mxu0
      %v564 = vpop.f32.mrf.mxu0
      %v565 = vadd.f32 0.0, %v564
      %v566 = vpop.f32.mrf.mxu0
      %567 = vmatprep.mubr.bf16.mxu0 0
      %568 = vmatmul.mubr.bf16.gmra.mxu0 %v406
      %v569 = vpop.f32.mrf.mxu0
      %v570 = vadd.f32 0.0, %v569
      %v571 = vpop.f32.mrf.mxu0
      %v572 = vpop.f32.mrf.mxu0
      %v573 = vadd.f32 0.0, %v572
      %v574 = vpop.f32.mrf.mxu0
      %575 = vmatprep.mubr.bf16.mxu0 0
      %576 = vmatmul.mubr.bf16.gmra.mxu0 %v407
      %v577 = vpop.f32.mrf.mxu0
      %v578 = vadd.f32 0.0, %v577
      %v579 = vpop.f32.mrf.mxu0
      %v580 = vpop.f32.mrf.mxu0
      %v581 = vadd.f32 0.0, %v580
      %v582 = vpop.f32.mrf.mxu0
      %583 = vmatprep.mubr.bf16.mxu0 0
      %584 = vmatmul.mubr.bf16.gmra.mxu0 %v408
      %v585 = vpop.f32.mrf.mxu0
      %v586 = vadd.f32 0.0, %v585
      %v587 = vpop.f32.mrf.mxu0
      %v588 = vpop.f32.mrf.mxu0
      %v589 = vadd.f32 0.0, %v588
      %v590 = vpop.f32.mrf.mxu0
      %591 = vmatprep.mubr.bf16.mxu0 0
      %592 = vmatmul.mubr.bf16.gmra.mxu0 %v409
      %v593 = vpop.f32.mrf.mxu0
      %v594 = vadd.f32 0.0, %v593
      %v595 = vpop.f32.mrf.mxu0
      %v596 = vpop.f32.mrf.mxu0
      %v597 = vadd.f32 0.0, %v596
      %v598 = vpop.f32.mrf.mxu0
      %599 = vmatprep.mubr.bf16.mxu0 0
      %600 = vmatmul.mubr.bf16.gmra.mxu0 %v410
      %v601 = vpop.f32.mrf.mxu0
      %v602 = vadd.f32 0.0, %v601
      %v603 = vpop.f32.mrf.mxu0
      %v604 = vpop.f32.mrf.mxu0
      %v605 = vadd.f32 0.0, %v604
      %v606 = vpop.f32.mrf.mxu0
      %607 = vmatprep.mubr.bf16.mxu0 0
      %608 = vmatmul.mubr.bf16.gmra.mxu0 %v411
      %v609 = vpop.f32.mrf.mxu0
      %v610 = vadd.f32 0.0, %v609
      %v611 = vpop.f32.mrf.mxu0
      %v612 = vpop.f32.mrf.mxu0
      %v613 = vadd.f32 0.0, %v612
      %v614 = vpop.f32.mrf.mxu0
      %615 = vmatprep.mubr.bf16.mxu0 0
      %616 = vmatmul.mubr.bf16.gmra.mxu0 %v412
      %v617 = vpop.f32.mrf.mxu0
      %v618 = vadd.f32 0.0, %v617
      %v619 = vpop.f32.mrf.mxu0
      %v620 = vpop.f32.mrf.mxu0
      %v621 = vadd.f32 0.0, %v620
      %v622 = vpop.f32.mrf.mxu0
      %623 = vmatprep.mubr.bf16.mxu0 0
      %624 = vmatmul.mubr.bf16.gmra.mxu0 %v413
      %v625 = vpop.f32.mrf.mxu0
      %v626 = vadd.f32 0.0, %v625
      %v627 = vpop.f32.mrf.mxu0
      %v628 = vpop.f32.mrf.mxu0
      %v629 = vadd.f32 0.0, %v628
      %v630 = vpop.f32.mrf.mxu0
      %631 = vmatprep.mubr.bf16.mxu0 0
      %632 = vmatmul.mubr.bf16.gmra.mxu0 %v414
      %v633 = vpop.f32.mrf.mxu0
      %v634 = vadd.f32 0.0, %v633
      %v635 = vpop.f32.mrf.mxu0
      %v636 = vpop.f32.mrf.mxu0
      %v637 = vadd.f32 0.0, %v636
      %v638 = vpop.f32.mrf.mxu0
      %639 = vdwg.mxu0
      %v640 = vadd.f32 %v255, %v514
      %v641 = vadd.f32 %v256, %v517
      %v642 = vadd.f32 %v257, %v522
      %v643 = vadd.f32 %v258, %v525
      %v644 = vadd.f32 %v259, %v530
      %v645 = vadd.f32 %v260, %v533
      %v646 = vadd.f32 %v261, %v538
      %v647 = vadd.f32 %v262, %v541
      %v648 = vadd.f32 %v263, %v546
      %v649 = vadd.f32 %v264, %v549
      %v650 = vadd.f32 %v265, %v554
      %v651 = vadd.f32 %v266, %v557
      %v652 = vadd.f32 %v267, %v562
      %v653 = vadd.f32 %v268, %v565
      %v654 = vadd.f32 %v269, %v570
      %v655 = vadd.f32 %v270, %v573
      %v656 = vadd.f32 %v271, %v578
      %v657 = vadd.f32 %v272, %v581
      %v658 = vadd.f32 %v273, %v586
      %v659 = vadd.f32 %v274, %v589
      %v660 = vadd.f32 %v275, %v594
      %v661 = vadd.f32 %v276, %v597
      %v662 = vadd.f32 %v277, %v602
      %v663 = vadd.f32 %v278, %v605
      %v664 = vadd.f32 %v279, %v610
      %v665 = vadd.f32 %v280, %v613
      %v666 = vadd.f32 %v281, %v618
      %v667 = vadd.f32 %v282, %v621
      %v668 = vadd.f32 %v283, %v626
      %v669 = vadd.f32 %v284, %v629
      %v670 = vadd.f32 %v285, %v634
      %v671 = vadd.f32 %v286, %v637
      %672 = vst [vmem:[#allocation2] sm:$0xff] %v640
      %673 = vst [vmem:[#allocation2 + $0x8] sm:$0xff] %v641
      %674 = vst [vmem:[#allocation2 + $0x10] sm:$0xff] %v642
      %675 = vst [vmem:[#allocation2 + $0x18] sm:$0xff] %v643
      %676 = vst [vmem:[#allocation2 + $0x20] sm:$0xff] %v644
      %677 = vst [vmem:[#allocation2 + $0x28] sm:$0xff] %v645
      %678 = vst [vmem:[#allocation2 + $0x30] sm:$0xff] %v646
      %679 = vst [vmem:[#allocation2 + $0x38] sm:$0xff] %v647
      %680 = vst [vmem:[#allocation2 + $0x40] sm:$0xff] %v648
      %681 = vst [vmem:[#allocation2 + $0x48] sm:$0xff] %v649
      %682 = vst [vmem:[#allocation2 + $0x50] sm:$0xff] %v650
      %683 = vst [vmem:[#allocation2 + $0x58] sm:$0xff] %v651
      %684 = vst [vmem:[#allocation2 + $0x60] sm:$0xff] %v652
      %685 = vst [vmem:[#allocation2 + $0x68] sm:$0xff] %v653
      %686 = vst [vmem:[#allocation2 + $0x70] sm:$0xff] %v654
      %687 = vst [vmem:[#allocation2 + $0x78] sm:$0xff] %v655
      %688 = vst [vmem:[#allocation2 + $0x80] sm:$0xff] %v656
      %689 = vst [vmem:[#allocation2 + $0x88] sm:$0xff] %v657
      %690 = vst [vmem:[#allocation2 + $0x90] sm:$0xff] %v658
      %691 = vst [vmem:[#allocation2 + $0x98] sm:$0xff] %v659
      %692 = vst [vmem:[#allocation2 + $0xa0] sm:$0xff] %v660
      %693 = vst [vmem:[#allocation2 + $0xa8] sm:$0xff] %v661
      %694 = vst [vmem:[#allocation2 + $0xb0] sm:$0xff] %v662
      %695 = vst [vmem:[#allocation2 + $0xb8] sm:$0xff] %v663
      %696 = vst [vmem:[#allocation2 + $0xc0] sm:$0xff] %v664
      %697 = vst [vmem:[#allocation2 + $0xc8] sm:$0xff] %v665
      %698 = vst [vmem:[#allocation2 + $0xd0] sm:$0xff] %v666
      %699 = vst [vmem:[#allocation2 + $0xd8] sm:$0xff] %v667
      %700 = vst [vmem:[#allocation2 + $0xe0] sm:$0xff] %v668
      %701 = vst [vmem:[#allocation2 + $0xe8] sm:$0xff] %v669
      %702 = vst [vmem:[#allocation2 + $0xf0] sm:$0xff] %v670
      %703 = vst [vmem:[#allocation2 + $0xf8] sm:$0xff] %v671
      // Predicated region
      $region33: #{discriminator_forward.11} parent=27 // pred_check
        %p704 = pneg %p219
      $region34: #{discriminator_forward.11} parent=27 // pred_check_branch
        %706 = sbr.rel (%p704) target = $region36
      $region35: #{discriminator_forward.11} parent=27 // pred_region
        %v707 = vld [vmem:[#allocation2] sm:$0xff]
        %v708 = vld [vmem:[#allocation2 + $0x8] sm:$0xff]
        %v709 = vld [vmem:[#allocation2 + $0x10] sm:$0xff]
        %v710 = vld [vmem:[#allocation2 + $0x18] sm:$0xff]
        %v711 = vld [vmem:[#allocation2 + $0x20] sm:$0xff]
        %v712 = vld [vmem:[#allocation2 + $0x28] sm:$0xff]
        %v713 = vld [vmem:[#allocation2 + $0x30] sm:$0xff]
        %v714 = vld [vmem:[#allocation2 + $0x38] sm:$0xff]
        %v715 = vld [vmem:[#allocation2 + $0x40] sm:$0xff]
        %v716 = vld [vmem:[#allocation2 + $0x48] sm:$0xff]
        %v717 = vld [vmem:[#allocation2 + $0x50] sm:$0xff]
        %v718 = vld [vmem:[#allocation2 + $0x58] sm:$0xff]
        %v719 = vld [vmem:[#allocation2 + $0x60] sm:$0xff]
        %v720 = vld [vmem:[#allocation2 + $0x68] sm:$0xff]
        %v721 = vld [vmem:[#allocation2 + $0x70] sm:$0xff]
        %v722 = vld [vmem:[#allocation2 + $0x78] sm:$0xff]
        %v723 = vld [vmem:[#allocation2 + $0x80] sm:$0xff]
        %v724 = vld [vmem:[#allocation2 + $0x88] sm:$0xff]
        %v725 = vld [vmem:[#allocation2 + $0x90] sm:$0xff]
        %v726 = vld [vmem:[#allocation2 + $0x98] sm:$0xff]
        %v727 = vld [vmem:[#allocation2 + $0xa0] sm:$0xff]
        %v728 = vld [vmem:[#allocation2 + $0xa8] sm:$0xff]
        %v729 = vld [vmem:[#allocation2 + $0xb0] sm:$0xff]
        %v730 = vld [vmem:[#allocation2 + $0xb8] sm:$0xff]
        %v731 = vld [vmem:[#allocation2 + $0xc0] sm:$0xff]
        %v732 = vld [vmem:[#allocation2 + $0xc8] sm:$0xff]
        %v733 = vld [vmem:[#allocation2 + $0xd0] sm:$0xff]
        %v734 = vld [vmem:[#allocation2 + $0xd8] sm:$0xff]
        %v735 = vld [vmem:[#allocation2 + $0xe0] sm:$0xff]
        %v736 = vld [vmem:[#allocation2 + $0xe8] sm:$0xff]
        %v737 = vld [vmem:[#allocation2 + $0xf0] sm:$0xff]
        %v738 = vld [vmem:[#allocation2 + $0xf8] sm:$0xff]
        %vm739 = vcmp.gt.f32.partialorder %v707, 0.0
        %vm740 = vcmp.gt.f32.partialorder %v708, 0.0
        %vm741 = vcmp.gt.f32.partialorder %v709, 0.0
        %vm742 = vcmp.gt.f32.partialorder %v710, 0.0
        %vm743 = vcmp.gt.f32.partialorder %v711, 0.0
        %vm744 = vcmp.gt.f32.partialorder %v712, 0.0
        %vm745 = vcmp.gt.f32.partialorder %v713, 0.0
        %vm746 = vcmp.gt.f32.partialorder %v714, 0.0
        %vm747 = vcmp.gt.f32.partialorder %v715, 0.0
        %vm748 = vcmp.gt.f32.partialorder %v716, 0.0
        %vm749 = vcmp.gt.f32.partialorder %v717, 0.0
        %vm750 = vcmp.gt.f32.partialorder %v718, 0.0
        %vm751 = vcmp.gt.f32.partialorder %v719, 0.0
        %vm752 = vcmp.gt.f32.partialorder %v720, 0.0
        %vm753 = vcmp.gt.f32.partialorder %v721, 0.0
        %vm754 = vcmp.gt.f32.partialorder %v722, 0.0
        %vm755 = vcmp.gt.f32.partialorder %v723, 0.0
        %vm756 = vcmp.gt.f32.partialorder %v724, 0.0
        %vm757 = vcmp.gt.f32.partialorder %v725, 0.0
        %vm758 = vcmp.gt.f32.partialorder %v726, 0.0
        %vm759 = vcmp.gt.f32.partialorder %v727, 0.0
        %vm760 = vcmp.gt.f32.partialorder %v728, 0.0
        %vm761 = vcmp.gt.f32.partialorder %v729, 0.0
        %vm762 = vcmp.gt.f32.partialorder %v730, 0.0
        %vm763 = vcmp.gt.f32.partialorder %v731, 0.0
        %vm764 = vcmp.gt.f32.partialorder %v732, 0.0
        %vm765 = vcmp.gt.f32.partialorder %v733, 0.0
        %vm766 = vcmp.gt.f32.partialorder %v734, 0.0
        %vm767 = vcmp.gt.f32.partialorder %v735, 0.0
        %vm768 = vcmp.gt.f32.partialorder %v736, 0.0
        %vm769 = vcmp.gt.f32.partialorder %v737, 0.0
        %vm770 = vcmp.gt.f32.partialorder %v738, 0.0
        %v771 = vmul.f32 %v707, 0.2
        %v772 = vmul.f32 %v708, 0.2
        %v773 = vmul.f32 %v709, 0.2
        %v774 = vmul.f32 %v710, 0.2
        %v775 = vmul.f32 %v711, 0.2
        %v776 = vmul.f32 %v712, 0.2
        %v777 = vmul.f32 %v713, 0.2
        %v778 = vmul.f32 %v714, 0.2
        %v779 = vmul.f32 %v715, 0.2
        %v780 = vmul.f32 %v716, 0.2
        %v781 = vmul.f32 %v717, 0.2
        %v782 = vmul.f32 %v718, 0.2
        %v783 = vmul.f32 %v719, 0.2
        %v784 = vmul.f32 %v720, 0.2
        %v785 = vmul.f32 %v721, 0.2
        %v786 = vmul.f32 %v722, 0.2
        %v787 = vmul.f32 %v723, 0.2
        %v788 = vmul.f32 %v724, 0.2
        %v789 = vmul.f32 %v725, 0.2
        %v790 = vmul.f32 %v726, 0.2
        %v791 = vmul.f32 %v727, 0.2
        %v792 = vmul.f32 %v728, 0.2
        %v793 = vmul.f32 %v729, 0.2
        %v794 = vmul.f32 %v730, 0.2
        %v795 = vmul.f32 %v731, 0.2
        %v796 = vmul.f32 %v732, 0.2
        %v797 = vmul.f32 %v733, 0.2
        %v798 = vmul.f32 %v734, 0.2
        %v799 = vmul.f32 %v735, 0.2
        %v800 = vmul.f32 %v736, 0.2
        %v801 = vmul.f32 %v737, 0.2
        %v802 = vmul.f32 %v738, 0.2
        %v803 = vsel %vm739, %v707, %v771
        %v804 = vsel %vm740, %v708, %v772
        %v805 = vsel %vm741, %v709, %v773
        %v806 = vsel %vm742, %v710, %v774
        %v807 = vsel %vm743, %v711, %v775
        %v808 = vsel %vm744, %v712, %v776
        %v809 = vsel %vm745, %v713, %v777
        %v810 = vsel %vm746, %v714, %v778
        %v811 = vsel %vm747, %v715, %v779
        %v812 = vsel %vm748, %v716, %v780
        %v813 = vsel %vm749, %v717, %v781
        %v814 = vsel %vm750, %v718, %v782
        %v815 = vsel %vm751, %v719, %v783
        %v816 = vsel %vm752, %v720, %v784
        %v817 = vsel %vm753, %v721, %v785
        %v818 = vsel %vm754, %v722, %v786
        %v819 = vsel %vm755, %v723, %v787
        %v820 = vsel %vm756, %v724, %v788
        %v821 = vsel %vm757, %v725, %v789
        %v822 = vsel %vm758, %v726, %v790
        %v823 = vsel %vm759, %v727, %v791
        %v824 = vsel %vm760, %v728, %v792
        %v825 = vsel %vm761, %v729, %v793
        %v826 = vsel %vm762, %v730, %v794
        %v827 = vsel %vm763, %v731, %v795
        %v828 = vsel %vm764, %v732, %v796
        %v829 = vsel %vm765, %v733, %v797
        %v830 = vsel %vm766, %v734, %v798
        %v831 = vsel %vm767, %v735, %v799
        %v832 = vsel %vm768, %v736, %v800
        %v833 = vsel %vm769, %v737, %v801
        %v834 = vsel %vm770, %v738, %v802
        %835 = vst [vmem:[%s216] sm:$0xff] %v803
        %836 = vst [vmem:[%s216 + $0x8] sm:$0xff] %v804
        %837 = vst [vmem:[%s216 + $0x10] sm:$0xff] %v805
        %838 = vst [vmem:[%s216 + $0x18] sm:$0xff] %v806
        %839 = vst [vmem:[%s216 + $0x20] sm:$0xff] %v807
        %840 = vst [vmem:[%s216 + $0x28] sm:$0xff] %v808
        %841 = vst [vmem:[%s216 + $0x30] sm:$0xff] %v809
        %842 = vst [vmem:[%s216 + $0x38] sm:$0xff] %v810
        %843 = vst [vmem:[%s216 + $0x40] sm:$0xff] %v811
        %844 = vst [vmem:[%s216 + $0x48] sm:$0xff] %v812
        %845 = vst [vmem:[%s216 + $0x50] sm:$0xff] %v813
        %846 = vst [vmem:[%s216 + $0x58] sm:$0xff] %v814
        %847 = vst [vmem:[%s216 + $0x60] sm:$0xff] %v815
        %848 = vst [vmem:[%s216 + $0x68] sm:$0xff] %v816
        %849 = vst [vmem:[%s216 + $0x70] sm:$0xff] %v817
        %850 = vst [vmem:[%s216 + $0x78] sm:$0xff] %v818
        %851 = vst [vmem:[%s216 + $0x80] sm:$0xff] %v819
        %852 = vst [vmem:[%s216 + $0x88] sm:$0xff] %v820
        %853 = vst [vmem:[%s216 + $0x90] sm:$0xff] %v821
        %854 = vst [vmem:[%s216 + $0x98] sm:$0xff] %v822
        %855 = vst [vmem:[%s216 + $0xa0] sm:$0xff] %v823
        %856 = vst [vmem:[%s216 + $0xa8] sm:$0xff] %v824
        %857 = vst [vmem:[%s216 + $0xb0] sm:$0xff] %v825
        %858 = vst [vmem:[%s216 + $0xb8] sm:$0xff] %v826
        %859 = vst [vmem:[%s216 + $0xc0] sm:$0xff] %v827
        %860 = vst [vmem:[%s216 + $0xc8] sm:$0xff] %v828
        %861 = vst [vmem:[%s216 + $0xd0] sm:$0xff] %v829
        %862 = vst [vmem:[%s216 + $0xd8] sm:$0xff] %v830
        %863 = vst [vmem:[%s216 + $0xe0] sm:$0xff] %v831
        %864 = vst [vmem:[%s216 + $0xe8] sm:$0xff] %v832
        %865 = vst [vmem:[%s216 + $0xf0] sm:$0xff] %v833
        %866 = vst [vmem:[%s216 + $0xf8] sm:$0xff] %v834
      $region36: #{discriminator_forward.11} parent=27 // pred_fallthru
        _
      %s867 = smul.u32 32, %s18
      %p868 = scmp.lt.s32.totalorder %s867, 255
      %s869 = scalar_select %p868, %s867, 255
      %p870 = scmp.lt.s32.totalorder %s19, 0
      %s871 = scalar_select %p870, %s19, 0
      %s872 = sadd.s32 %s871, %s869
      %s873 = smul.addr %s872, 8
      %s874 = scalar_lea.vmem %s2, %s873
      // Predicated region
      $region37: #{discriminator_forward.11} parent=27 // pred_check
        %p875 = pneg %p108
      $region38: #{discriminator_forward.11} parent=27 // pred_check_branch
        %877 = sbr.rel (%p875) target = $region40
      $region39: #{discriminator_forward.11} parent=27 // pred_region
        %s878 = smul.u32 32, %s18
      $region40: #{discriminator_forward.11} parent=27 // pred_fallthru
        _
    $region28: #{discriminator_forward.11} parent=5 // pred_fallthru
      _
    %p879 = scmp.le.s32.totalorder 2, %s8
    // Predicated region
    $region41: #{discriminator_forward.11} parent=5 // pred_check
      %p880 = pneg %p879
    $region42: #{discriminator_forward.11} parent=5 // pred_check_branch
      %882 = sbr.rel (%p880) target = $region44
    $region43: #{discriminator_forward.11} parent=5 // pred_region
      %s883 = ssub.s32 %s8, 2
      // Predicated region
      $region45: #{discriminator_forward.11} parent=43 // pred_check
        %p884 = pneg %p114
      $region46: #{discriminator_forward.11} parent=43 // pred_check_branch
        %886 = sbr.rel (%p884) target = $region48
      $region47: #{discriminator_forward.11} parent=43 // pred_region
        %s887 = smul.u32 32, %s21
        %p888 = scmp.lt.s32.totalorder %s887, 255
        %s889 = scalar_select %p888, %s887, 255
        %p890 = scmp.lt.s32.totalorder %s22, 0
        %s891 = scalar_select %p890, %s22, 0
        %s892 = sadd.s32 %s891, %s889
        %s893 = smul.addr %s892, 8
        %s894 = scalar_lea.vmem %s2, %s893
      $region48: #{discriminator_forward.11} parent=43 // pred_fallthru
        _
    $region44: #{discriminator_forward.11} parent=5 // pred_fallthru
      _
  $region6: #{discriminator_forward.11} parent=0 // loop_footer
    %s12 = sadd.s32 1, %s8
  $region7: #{discriminator_forward.11} parent=0 // loop_footer_branch
    %7 = sbr.rel target = $region3
  $region8: #{discriminator_forward.11} parent=0 // loop_exit
    _

// kernel: discriminator_forward.13
$region0: #{discriminator_forward.13}
  #allocation0 [shape = 'u32[]', space=smem, size = 0x4, offset = 0x4, fixed_abs, tag = 'smem constant byte address 0x4 - core index']
  #allocation1 [shape = 'u32[144,128]{1,0:T(1,128)}', space=vmem, size = 0x12000, scoped, tag = 'internal scratch']
  %s0 = inlined_call_operand.vmem [shape: f32[512,128], index: 0, kind: input, shape index: {}]
  %s1 = inlined_call_operand.vmem [shape: f32[1,128], index: 1, kind: output, shape index: {0}]
  %s2 = inlined_call_operand.vmem [shape: f32[1,128], index: 2, kind: output, shape index: {1}]
  %3 = xla_tuple %s1, %s2
  %s4 = sld [smem:[#allocation0]]
  $region49: #{discriminator_forward.13} parent=0
    _
  %s6 = ssub.s32 1, %s4
  %s7 = scalar_select 0, %s6, %s4
  loop: start=0, step=1, limit=4
  $region2: #{discriminator_forward.13} parent=0 // loop_pre_header
    _
  $region3: #{discriminator_forward.13} parent=0 // loop_header
    %s9 = sphi 0, %s13
    %p10 = scmp.ge.s32.totalorder %s9, 4
    %s19 = sphi 0, %s21
    %s22 = sphi 0, %s19
    %s23 = sphi 0, %s22
    %s39 = sphi 0, %s23
    %s43 = sphi 0, %s43
    %s45 = sphi 0, %s43
    %s46 = sphi 0, %s45
    %s60 = sphi 0, %s46
    %s64 = sphi 0, %s64
    %s66 = sphi 0, %s64
    %s67 = sphi 0, %s66
    %s81 = sphi 0, %s67
  $region4: #{discriminator_forward.13} parent=0 // loop_header_branch
    %12 = sbr.rel (%p10) target = $region8
  $region5: #{discriminator_forward.13} parent=0 // loop_body
    %s14 = ssub.s32 %s9, 1
    %s15 = ssub.s32 %s9, 2
    %s16 = sadd.s32 %s9, 1
    %s17 = ssub.s32 %s9, %s16
    %p18 = scmp.eq.s32.totalorder %s17, 0
    %s20 = sadd.s32 %s19, 1
    %s21 = scalar_select %p18, %s19, %s20
    %p24 = pneg %p18
    %p25 = scmp.eq.s32.totalorder %s9, 1
    %p26 = por %p24, %p25
    %p27 = scmp.ne.s32.totalorder %s19, %s22
    %p28 = scmp.eq.s32.totalorder %s9, 0
    %p29 = por %p27, %p28
    %p30 = scmp.ne.s32.totalorder %s19, %s22
    %p31 = scmp.eq.s32.totalorder %s14, 1
    %p32 = por %p30, %p31
    %p33 = scmp.ne.s32.totalorder %s22, %s23
    %p34 = scmp.eq.s32.totalorder %s14, 0
    %p35 = por %p33, %p34
    %p36 = scmp.ne.s32.totalorder %s22, %s23
    %p37 = scmp.eq.s32.totalorder %s15, 1
    %p38 = por %p36, %p37
    %p40 = scmp.ne.s32.totalorder %s23, %s39
    %p41 = scmp.eq.s32.totalorder %s15, 0
    %p42 = por %p40, %p41
    %s44 = sadd.s32 %s43, 1
    %p47 = scmp.eq.s32.totalorder %s9, 1
    %p48 = scmp.ne.s32.totalorder %s43, %s45
    %p49 = scmp.eq.s32.totalorder %s9, 0
    %p50 = por %p48, %p49
    %p51 = scmp.ne.s32.totalorder %s43, %s45
    %p52 = scmp.eq.s32.totalorder %s14, 1
    %p53 = por %p51, %p52
    %p54 = scmp.ne.s32.totalorder %s45, %s46
    %p55 = scmp.eq.s32.totalorder %s14, 0
    %p56 = por %p54, %p55
    %p57 = scmp.ne.s32.totalorder %s45, %s46
    %p58 = scmp.eq.s32.totalorder %s15, 1
    %p59 = por %p57, %p58
    %p61 = scmp.ne.s32.totalorder %s46, %s60
    %p62 = scmp.eq.s32.totalorder %s15, 0
    %p63 = por %p61, %p62
    %s65 = sadd.s32 %s64, 1
    %p68 = scmp.eq.s32.totalorder %s9, 1
    %p69 = scmp.ne.s32.totalorder %s64, %s66
    %p70 = scmp.eq.s32.totalorder %s9, 0
    %p71 = por %p69, %p70
    %p72 = scmp.ne.s32.totalorder %s64, %s66
    %p73 = scmp.eq.s32.totalorder %s14, 1
    %p74 = por %p72, %p73
    %p75 = scmp.ne.s32.totalorder %s66, %s67
    %p76 = scmp.eq.s32.totalorder %s14, 0
    %p77 = por %p75, %p76
    %p78 = scmp.ne.s32.totalorder %s66, %s67
    %p79 = scmp.eq.s32.totalorder %s15, 1
    %p80 = por %p78, %p79
    %p82 = scmp.ne.s32.totalorder %s67, %s81
    %p83 = scmp.eq.s32.totalorder %s15, 0
    %p84 = por %p82, %p83
    %p85 = scmp.le.s32.totalorder 1, %s9
    %p86 = scmp.lt.s32.totalorder %s9, 3
    %p87 = pnand %p85, %p86
    %p88 = pneg %p87
    // Predicated region
    $region9: #{discriminator_forward.13} parent=5 // pred_check
      _
    $region10: #{discriminator_forward.13} parent=5 // pred_check_branch
      %90 = sbr.rel (%p87) target = $region12
    $region11: #{discriminator_forward.13} parent=5 // pred_region
      %s91 = ssub.s32 %s9, 1
    $region12: #{discriminator_forward.13} parent=5 // pred_fallthru
      _
    %p92 = scmp.lt.s32.totalorder %s9, 2
    // Predicated region
    $region13: #{discriminator_forward.13} parent=5 // pred_check
      %p93 = pneg %p92
    $region14: #{discriminator_forward.13} parent=5 // pred_check_branch
      %95 = sbr.rel (%p93) target = $region16
    $region15: #{discriminator_forward.13} parent=5 // pred_region
      // Predicated region
      $region17: #{discriminator_forward.13} parent=15 // pred_check
        %p96 = pneg %p29
      $region18: #{discriminator_forward.13} parent=15 // pred_check_branch
        %98 = sbr.rel (%p96) target = $region20
      $region19: #{discriminator_forward.13} parent=15 // pred_region
        %s99 = smul.u32 32, %s9
        %p100 = scmp.lt.s32.totalorder %s99, 63
        %s101 = scalar_select %p100, %s99, 63
        %s102 = smul.addr %s101, 8
        %s103 = scalar_lea.vmem %s0, %s102
        %s104 = smul.u32 32, %s9
      $region20: #{discriminator_forward.13} parent=15 // pred_fallthru
        _
    $region16: #{discriminator_forward.13} parent=5 // pred_fallthru
      _
    %p105 = scmp.le.s32.totalorder 1, %s9
    %p106 = scmp.lt.s32.totalorder %s9, 3
    %p107 = pnand %p105, %p106
    %p108 = pneg %p107
    // Predicated region
    $region21: #{discriminator_forward.13} parent=5 // pred_check
      _
    $region22: #{discriminator_forward.13} parent=5 // pred_check_branch
      %110 = sbr.rel (%p107) target = $region24
    $region23: #{discriminator_forward.13} parent=5 // pred_region
      %s111 = ssub.s32 %s9, 1
      %s112 = smul.u32 32, %s14
      %p113 = scmp.lt.s32.totalorder %s112, 63
      %s114 = scalar_select %p113, %s112, 63
      %s115 = smul.addr %s114, 8
      %s116 = scalar_lea.vmem %s0, %s115
      %p117 = pneg %p35
      %p118 = pneg %p32
      %p119 = pneg %p56
      %p120 = pneg %p53
      %p121 = pneg %p77
      %p122 = pneg %p74
      %s123 = smul.u32 32, %s14
      %p124 = scmp.lt.s32.totalorder %s123, 63
      %s125 = scalar_select %p124, %s123, 63
      %s126 = smul.addr %s125, 8
      %s127 = scalar_lea.vmem %s0, %s126
      %s128 = smul.u32 32, %s14
      %p129 = scmp.eq.s32.totalorder %s14, 0
      // Predicated region
      $region25: #{discriminator_forward.13} parent=23 // pred_check
        %p130 = pneg %p129
      $region26: #{discriminator_forward.13} parent=23 // pred_check_branch
        %132 = sbr.rel (%p130) target = $region28
      $region27: #{discriminator_forward.13} parent=23 // pred_region
        %133 = vst [vmem:[%s1] sm:$0x1] 0.0
        %134 = vst [vmem:[%s2] sm:$0x1] 0.0
      $region28: #{discriminator_forward.13} parent=23 // pred_fallthru
        _
      %v135 = vld [vmem:[%s127] sm:$0xff]
      %v136 = vld [vmem:[%s127 + $0x8] sm:$0xff]
      %v137 = vld [vmem:[%s127 + $0x10] sm:$0xff]
      %v138 = vld [vmem:[%s127 + $0x18] sm:$0xff]
      %v139 = vld [vmem:[%s127 + $0x20] sm:$0xff]
      %v140 = vld [vmem:[%s127 + $0x28] sm:$0xff]
      %v141 = vld [vmem:[%s127 + $0x30] sm:$0xff]
      %v142 = vld [vmem:[%s127 + $0x38] sm:$0xff]
      %v143 = vld [vmem:[%s127 + $0x40] sm:$0xff]
      %v144 = vld [vmem:[%s127 + $0x48] sm:$0xff]
      %v145 = vld [vmem:[%s127 + $0x50] sm:$0xff]
      %v146 = vld [vmem:[%s127 + $0x58] sm:$0xff]
      %v147 = vld [vmem:[%s127 + $0x60] sm:$0xff]
      %v148 = vld [vmem:[%s127 + $0x68] sm:$0xff]
      %v149 = vld [vmem:[%s127 + $0x70] sm:$0xff]
      %v150 = vld [vmem:[%s127 + $0x78] sm:$0xff]
      %v151 = vld [vmem:[%s127 + $0x80] sm:$0xff]
      %v152 = vld [vmem:[%s127 + $0x88] sm:$0xff]
      %v153 = vld [vmem:[%s127 + $0x90] sm:$0xff]
      %v154 = vld [vmem:[%s127 + $0x98] sm:$0xff]
      %v155 = vld [vmem:[%s127 + $0xa0] sm:$0xff]
      %v156 = vld [vmem:[%s127 + $0xa8] sm:$0xff]
      %v157 = vld [vmem:[%s127 + $0xb0] sm:$0xff]
      %v158 = vld [vmem:[%s127 + $0xb8] sm:$0xff]
      %v159 = vld [vmem:[%s127 + $0xc0] sm:$0xff]
      %v160 = vld [vmem:[%s127 + $0xc8] sm:$0xff]
      %v161 = vld [vmem:[%s127 + $0xd0] sm:$0xff]
      %v162 = vld [vmem:[%s127 + $0xd8] sm:$0xff]
      %v163 = vld [vmem:[%s127 + $0xe0] sm:$0xff]
      %v164 = vld [vmem:[%s127 + $0xe8] sm:$0xff]
      %v165 = vld [vmem:[%s127 + $0xf0] sm:$0xff]
      %v166 = vld [vmem:[%s127 + $0xf8] sm:$0xff]
      %v167 = vld [vmem:[%s1] sm:$0x1]
      %v168 = vadd.f32 %v135, %v136
      %v169 = vadd.f32 %v168, %v137
      %v170 = vadd.f32 %v169, %v138
      %v171 = vadd.f32 %v170, %v139
      %v172 = vadd.f32 %v171, %v140
      %v173 = vadd.f32 %v172, %v141
      %v174 = vadd.f32 %v173, %v142
      %v175 = vadd.f32 %v174, %v143
      %v176 = vadd.f32 %v175, %v144
      %v177 = vadd.f32 %v176, %v145
      %v178 = vadd.f32 %v177, %v146
      %v179 = vadd.f32 %v178, %v147
      %v180 = vadd.f32 %v179, %v148
      %v181 = vadd.f32 %v180, %v149
      %v182 = vadd.f32 %v181, %v150
      %v183 = vadd.f32 %v182, %v151
      %v184 = vadd.f32 %v183, %v152
      %v185 = vadd.f32 %v184, %v153
      %v186 = vadd.f32 %v185, %v154
      %v187 = vadd.f32 %v186, %v155
      %v188 = vadd.f32 %v187, %v156
      %v189 = vadd.f32 %v188, %v157
      %v190 = vadd.f32 %v189, %v158
      %v191 = vadd.f32 %v190, %v159
      %v192 = vadd.f32 %v191, %v160
      %v193 = vadd.f32 %v192, %v161
      %v194 = vadd.f32 %v193, %v162
      %v195 = vadd.f32 %v194, %v163
      %v196 = vadd.f32 %v195, %v164
      %v197 = vadd.f32 %v196, %v165
      %v198 = vadd.f32 %v197, %v166
      %v199 = vrot.slane %v198, 4
      %v200 = vadd.f32 %v198, %v199
      %v201 = vrot.slane %v200, 2
      %v202 = vadd.f32 %v200, %v201
      %v203 = vrot.slane %v202, 1
      %v204 = vadd.f32 %v202, %v203
      %v205 = vadd.f32 %v167, %v204
      %206 = vst [vmem:[%s1] sm:$0x1] %v205
      %v207 = vld [vmem:[%s2] sm:$0x1]
      %v208 = vmul.f32 %v135, %v135
      %v209 = vmul.f32 %v136, %v136
      %v210 = vmul.f32 %v137, %v137
      %v211 = vmul.f32 %v138, %v138
      %v212 = vmul.f32 %v139, %v139
      %v213 = vmul.f32 %v140, %v140
      %v214 = vmul.f32 %v141, %v141
      %v215 = vmul.f32 %v142, %v142
      %v216 = vmul.f32 %v143, %v143
      %v217 = vmul.f32 %v144, %v144
      %v218 = vmul.f32 %v145, %v145
      %v219 = vmul.f32 %v146, %v146
      %v220 = vmul.f32 %v147, %v147
      %v221 = vmul.f32 %v148, %v148
      %v222 = vmul.f32 %v149, %v149
      %v223 = vmul.f32 %v150, %v150
      %v224 = vmul.f32 %v151, %v151
      %v225 = vmul.f32 %v152, %v152
      %v226 = vmul.f32 %v153, %v153
      %v227 = vmul.f32 %v154, %v154
      %v228 = vmul.f32 %v155, %v155
      %v229 = vmul.f32 %v156, %v156
      %v230 = vmul.f32 %v157, %v157
      %v231 = vmul.f32 %v158, %v158
      %v232 = vmul.f32 %v159, %v159
      %v233 = vmul.f32 %v160, %v160
      %v234 = vmul.f32 %v161, %v161
      %v235 = vmul.f32 %v162, %v162
      %v236 = vmul.f32 %v163, %v163
      %v237 = vmul.f32 %v164, %v164
      %v238 = vmul.f32 %v165, %v165
      %v239 = vmul.f32 %v166, %v166
      %v240 = vadd.f32 %v208, %v209
      %v241 = vadd.f32 %v240, %v210
      %v242 = vadd.f32 %v241, %v211
      %v243 = vadd.f32 %v242, %v212
      %v244 = vadd.f32 %v243, %v213
      %v245 = vadd.f32 %v244, %v214
      %v246 = vadd.f32 %v245, %v215
      %v247 = vadd.f32 %v246, %v216
      %v248 = vadd.f32 %v247, %v217
      %v249 = vadd.f32 %v248, %v218
      %v250 = vadd.f32 %v249, %v219
      %v251 = vadd.f32 %v250, %v220
      %v252 = vadd.f32 %v251, %v221
      %v253 = vadd.f32 %v252, %v222
      %v254 = vadd.f32 %v253, %v223
      %v255 = vadd.f32 %v254, %v224
      %v256 = vadd.f32 %v255, %v225
      %v257 = vadd.f32 %v256, %v226
      %v258 = vadd.f32 %v257, %v227
      %v259 = vadd.f32 %v258, %v228
      %v260 = vadd.f32 %v259, %v229
      %v261 = vadd.f32 %v260, %v230
      %v262 = vadd.f32 %v261, %v231
      %v263 = vadd.f32 %v262, %v232
      %v264 = vadd.f32 %v263, %v233
      %v265 = vadd.f32 %v264, %v234
      %v266 = vadd.f32 %v265, %v235
      %v267 = vadd.f32 %v266, %v236
      %v268 = vadd.f32 %v267, %v237
      %v269 = vadd.f32 %v268, %v238
      %v270 = vadd.f32 %v269, %v239
      %v271 = vrot.slane %v270, 4
      %v272 = vadd.f32 %v270, %v271
      %v273 = vrot.slane %v272, 2
      %v274 = vadd.f32 %v272, %v273
      %v275 = vrot.slane %v274, 1
      %v276 = vadd.f32 %v274, %v275
      %v277 = vadd.f32 %v207, %v276
      %278 = vst [vmem:[%s2] sm:$0x1] %v277
      // Predicated region
      $region29: #{discriminator_forward.13} parent=23 // pred_check
        %p279 = pneg %p53
      $region30: #{discriminator_forward.13} parent=23 // pred_check_branch
        %281 = sbr.rel (%p279) target = $region32
      $region31: #{discriminator_forward.13} parent=23 // pred_region
        _
      $region32: #{discriminator_forward.13} parent=23 // pred_fallthru
        _
      // Predicated region
      $region33: #{discriminator_forward.13} parent=23 // pred_check
        %p282 = pneg %p74
      $region34: #{discriminator_forward.13} parent=23 // pred_check_branch
        %284 = sbr.rel (%p282) target = $region36
      $region35: #{discriminator_forward.13} parent=23 // pred_region
        _
      $region36: #{discriminator_forward.13} parent=23 // pred_fallthru
        _
      // Predicated region
      $region37: #{discriminator_forward.13} parent=23 // pred_check
        %p285 = pneg %p53
      $region38: #{discriminator_forward.13} parent=23 // pred_check_branch
        %287 = sbr.rel (%p285) target = $region40
      $region39: #{discriminator_forward.13} parent=23 // pred_region
        _
      $region40: #{discriminator_forward.13} parent=23 // pred_fallthru
        _
      // Predicated region
      $region41: #{discriminator_forward.13} parent=23 // pred_check
        %p288 = pneg %p74
      $region42: #{discriminator_forward.13} parent=23 // pred_check_branch
        %290 = sbr.rel (%p288) target = $region44
      $region43: #{discriminator_forward.13} parent=23 // pred_region
        _
      $region44: #{discriminator_forward.13} parent=23 // pred_fallthru
        _
    $region24: #{discriminator_forward.13} parent=5 // pred_fallthru
      _
    %p291 = scmp.le.s32.totalorder 2, %s9
    // Predicated region
    $region45: #{discriminator_forward.13} parent=5 // pred_check
      %p292 = pneg %p291
    $region46: #{discriminator_forward.13} parent=5 // pred_check_branch
      %294 = sbr.rel (%p292) target = $region48
    $region47: #{discriminator_forward.13} parent=5 // pred_region
      %s295 = ssub.s32 %s9, 2
    $region48: #{discriminator_forward.13} parent=5 // pred_fallthru
      _
  $region6: #{discriminator_forward.13} parent=0 // loop_footer
    %s13 = sadd.s32 1, %s9
  $region7: #{discriminator_forward.13} parent=0 // loop_footer_branch
    %8 = sbr.rel target = $region3
  $region8: #{discriminator_forward.13} parent=0 // loop_exit
    _

// kernel: discriminator_forward.12
$region0: #{discriminator_forward.12}
  #allocation0 [shape = 'u32[]', space=smem, size = 0x4, offset = 0x4, fixed_abs, tag = 'smem constant byte address 0x4 - core index']
  #allocation1 [shape = 'u32[144,128]{1,0:T(1,128)}', space=vmem, size = 0x12000, scoped, tag = 'internal scratch']
  #allocation2 [shape = 'f32[256,128]{1,0:T(8,128)}', space=vmem, size = 0x20000, scoped, tag = 'scratch operand']
  %s0 = inlined_call_operand.vmem [shape: bf16[512,1024], index: 0, kind: input, shape index: {}]
  %s1 = inlined_call_operand.vmem [shape: bf16[1024,128], index: 1, kind: input, shape index: {}]
  %s2 = inlined_call_operand.vmem [shape: f32[512,128], index: 2, kind: output, shape index: {}]
  %s3 = sld [smem:[#allocation0]]
  $region72: #{discriminator_forward.12} parent=0
    _
  %s5 = ssub.s32 1, %s3
  %s6 = scalar_select 0, %s5, %s3
  $region1: #{discriminator_forward.12} parent=0
    #allocation3 [shape = 'u8[524288]{0}', space=vmem, size = 0x80000, scoped, tag = 'input window, operand 0']
    loop: start=0, step=1, limit=6
    $region2: #{discriminator_forward.12} parent=1 // loop_pre_header
      _
    $region3: #{discriminator_forward.12} parent=1 // loop_header
      %s8 = sphi 0, %s12
      %p9 = scmp.ge.s32.totalorder %s8, 6
      %s15 = sphi 0, %s34
      %s16 = sphi 0, %s30
      %s17 = sphi 0, %s26
      %s18 = sphi 0, %s15
      %s19 = sphi 0, %s16
      %s20 = sphi 0, %s17
      %s21 = sphi 0, %s18
      %s22 = sphi 0, %s19
      %s23 = sphi 0, %s20
      %s39 = sphi 0, %s41
      %s42 = sphi 0, %s39
      %s43 = sphi 0, %s42
      %s59 = sphi 0, %s43
      %s67 = sphi 0, %s69
      %s70 = sphi 0, %s67
      %s71 = sphi 0, %s70
      %s87 = sphi 0, %s71
      %s95 = sphi 0, %s97
      %s98 = sphi 0, %s95
      %s99 = sphi 0, %s98
      %s115 = sphi 0, %s99
    $region4: #{discriminator_forward.12} parent=1 // loop_header_branch
      %11 = sbr.rel (%p9) target = $region8
    $region5: #{discriminator_forward.12} parent=1 // loop_body
      %s13 = ssub.s32 %s8, 1
      %s14 = ssub.s32 %s8, 2
      %s24 = sadd.s32 1, %s17
      %p25 = scmp.ge.s32.totalorder %s24, 2
      %s26 = scalar_select %p25, 0, %s24
      %s27 = sadd.s32 1, %s16
      %s28 = scalar_select %p25, %s27, %s16
      %p29 = scmp.ge.s32.totalorder %s28, 1
      %s30 = scalar_select %p29, 0, %s28
      %s31 = sadd.s32 1, %s15
      %s32 = scalar_select %p29, %s31, %s15
      %p33 = scmp.ge.s32.totalorder %s32, 2
      %s34 = scalar_select %p33, 0, %s32
      %s35 = ssub.s32 %s15, %s34
      %s36 = ssub.s32 %s17, %s26
      %s37 = sor.u32 %s35, %s36
      %p38 = scmp.eq.s32.totalorder %s37, 0
      %s40 = sadd.s32 %s39, 1
      %s41 = scalar_select %p38, %s39, %s40
      %p44 = pneg %p38
      %p45 = scmp.eq.s32.totalorder %s8, 3
      %p46 = por %p44, %p45
      %p47 = scmp.ne.s32.totalorder %s39, %s42
      %p48 = scmp.eq.s32.totalorder %s8, 0
      %p49 = por %p47, %p48
      %p50 = scmp.ne.s32.totalorder %s39, %s42
      %p51 = scmp.eq.s32.totalorder %s13, 3
      %p52 = por %p50, %p51
      %p53 = scmp.ne.s32.totalorder %s42, %s43
      %p54 = scmp.eq.s32.totalorder %s13, 0
      %p55 = por %p53, %p54
      %p56 = scmp.ne.s32.totalorder %s42, %s43
      %p57 = scmp.eq.s32.totalorder %s14, 3
      %p58 = por %p56, %p57
      %p60 = scmp.ne.s32.totalorder %s43, %s59
      %p61 = scmp.eq.s32.totalorder %s14, 0
      %p62 = por %p60, %p61
      %s63 = ssub.s32 %s17, %s26
      %s64 = ssub.s32 %s16, %s30
      %s65 = sor.u32 %s63, %s64
      %p66 = scmp.eq.s32.totalorder %s65, 0
      %s68 = sadd.s32 %s67, 1
      %s69 = scalar_select %p66, %s67, %s68
      %p72 = pneg %p66
      %p73 = scmp.eq.s32.totalorder %s8, 3
      %p74 = por %p72, %p73
      %p75 = scmp.ne.s32.totalorder %s67, %s70
      %p76 = scmp.eq.s32.totalorder %s8, 0
      %p77 = por %p75, %p76
      %p78 = scmp.ne.s32.totalorder %s67, %s70
      %p79 = scmp.eq.s32.totalorder %s13, 3
      %p80 = por %p78, %p79
      %p81 = scmp.ne.s32.totalorder %s70, %s71
      %p82 = scmp.eq.s32.totalorder %s13, 0
      %p83 = por %p81, %p82
      %p84 = scmp.ne.s32.totalorder %s70, %s71
      %p85 = scmp.eq.s32.totalorder %s14, 3
      %p86 = por %p84, %p85
      %p88 = scmp.ne.s32.totalorder %s71, %s87
      %p89 = scmp.eq.s32.totalorder %s14, 0
      %p90 = por %p88, %p89
      %s91 = ssub.s32 %s15, %s34
      %s92 = ssub.s32 %s16, %s30
      %s93 = sor.u32 %s91, %s92
      %p94 = scmp.eq.s32.totalorder %s93, 0
      %s96 = sadd.s32 %s95, 1
      %s97 = scalar_select %p94, %s95, %s96
      %p100 = pneg %p94
      %p101 = scmp.eq.s32.totalorder %s8, 3
      %p102 = por %p100, %p101
      %p103 = scmp.ne.s32.totalorder %s95, %s98
      %p104 = scmp.eq.s32.totalorder %s8, 0
      %p105 = por %p103, %p104
      %p106 = scmp.ne.s32.totalorder %s95, %s98
      %p107 = scmp.eq.s32.totalorder %s13, 3
      %p108 = por %p106, %p107
      %p109 = scmp.ne.s32.totalorder %s98, %s99
      %p110 = scmp.eq.s32.totalorder %s13, 0
      %p111 = por %p109, %p110
      %p112 = scmp.ne.s32.totalorder %s98, %s99
      %p113 = scmp.eq.s32.totalorder %s14, 3
      %p114 = por %p112, %p113
      %p116 = scmp.ne.s32.totalorder %s99, %s115
      %p117 = scmp.eq.s32.totalorder %s14, 0
      %p118 = por %p116, %p117
      %p119 = scmp.le.s32.totalorder 1, %s8
      %p120 = scmp.lt.s32.totalorder %s8, 5
      %p121 = pnand %p119, %p120
      %p122 = pneg %p121
      // Predicated region
      $region9: #{discriminator_forward.12} parent=5 // pred_check
        _
      $region10: #{discriminator_forward.12} parent=5 // pred_check_branch
        %124 = sbr.rel (%p121) target = $region12
      $region11: #{discriminator_forward.12} parent=5 // pred_region
        %s125 = ssub.s32 %s8, 1
      $region12: #{discriminator_forward.12} parent=5 // pred_fallthru
        _
      %p126 = scmp.lt.s32.totalorder %s8, 4
      // Predicated region
      $region13: #{discriminator_forward.12} parent=5 // pred_check
        %p127 = pneg %p126
      $region14: #{discriminator_forward.12} parent=5 // pred_check_branch
        %129 = sbr.rel (%p127) target = $region16
      $region15: #{discriminator_forward.12} parent=5 // pred_region
        // Predicated region
        $region17: #{discriminator_forward.12} parent=15 // pred_check
          %p130 = pneg %p49
        $region18: #{discriminator_forward.12} parent=15 // pred_check_branch
          %132 = sbr.rel (%p130) target = $region20
        $region19: #{discriminator_forward.12} parent=15 // pred_region
          %s133 = sand.u32 %s39, 1
          %s134 = sand.u32 %s39, 1
          %s135 = smul.addr %s134, 512
          %s136 = scalar_lea.vmem [#allocation3], %s135
          %s137 = smul.u32 32, %s15
          %s138 = smul.u32 4, %s17
          %s139 = smul.addr %s137, 8
          %s140 = sadd.s32 %s138, %s139
          %s141 = smul.addr %s140, 4
          %s142 = scalar_lea.vmem %s0, %s141
          // Predicated region
          $region21: #{discriminator_forward.12} parent=19 // pred_check
            _
          $region22: #{discriminator_forward.12} parent=19 // pred_check_branch
            %144 = sbr.rel (0) target = $region24
          $region23: #{discriminator_forward.12} parent=19 // pred_region
            // Predicated region
            $region25: #{discriminator_forward.12} parent=23 // pred_check
              _
            $region26: #{discriminator_forward.12} parent=23 // pred_check_branch
              %146 = sbr.rel (0) target = $region28
            $region27: #{discriminator_forward.12} parent=23 // pred_region
              loop: start=0, step=1, limit=1
              $region29: #{discriminator_forward.12} parent=27 // loop_pre_header
                _
              $region30: #{discriminator_forward.12} parent=27 // loop_header
                %s148 = sphi 0, %s152
                %p149 = scmp.ge.s32.totalorder %s148, 1
                %s153 = sphi %s142, %s142
                %s154 = sphi %s136, %s136
              $region31: #{discriminator_forward.12} parent=27 // loop_header_branch
                %151 = sbr.rel (%p149) target = $region35
              $region32: #{discriminator_forward.12} parent=27 // loop_body
                %v155 = vld [vmem:[%s153] sm:$0xff]
                %156 = vst [vmem:[%s154] sm:$0xff] %v155
                %v157 = vld [vmem:[%s153 + $0x8] sm:$0xff]
                %158 = vst [vmem:[%s154 + $0x8] sm:$0xff] %v157
                %v159 = vld [vmem:[%s153 + $0x20] sm:$0xff]
                %160 = vst [vmem:[%s154 + $0x10] sm:$0xff] %v159
                %v161 = vld [vmem:[%s153 + $0x28] sm:$0xff]
                %162 = vst [vmem:[%s154 + $0x18] sm:$0xff] %v161
                %v163 = vld [vmem:[%s153 + $0x40] sm:$0xff]
                %164 = vst [vmem:[%s154 + $0x20] sm:$0xff] %v163
                %v165 = vld [vmem:[%s153 + $0x48] sm:$0xff]
                %166 = vst [vmem:[%s154 + $0x28] sm:$0xff] %v165
                %v167 = vld [vmem:[%s153 + $0x60] sm:$0xff]
                %168 = vst [vmem:[%s154 + $0x30] sm:$0xff] %v167
                %v169 = vld [vmem:[%s153 + $0x68] sm:$0xff]
                %170 = vst [vmem:[%s154 + $0x38] sm:$0xff] %v169
                %v171 = vld [vmem:[%s153 + $0x80] sm:$0xff]
                %172 = vst [vmem:[%s154 + $0x40] sm:$0xff] %v171
                %v173 = vld [vmem:[%s153 + $0x88] sm:$0xff]
                %174 = vst [vmem:[%s154 + $0x48] sm:$0xff] %v173
                %v175 = vld [vmem:[%s153 + $0xa0] sm:$0xff]
                %176 = vst [vmem:[%s154 + $0x50] sm:$0xff] %v175
                %v177 = vld [vmem:[%s153 + $0xa8] sm:$0xff]
                %178 = vst [vmem:[%s154 + $0x58] sm:$0xff] %v177
                %v179 = vld [vmem:[%s153 + $0xc0] sm:$0xff]
                %180 = vst [vmem:[%s154 + $0x60] sm:$0xff] %v179
                %v181 = vld [vmem:[%s153 + $0xc8] sm:$0xff]
                %182 = vst [vmem:[%s154 + $0x68] sm:$0xff] %v181
                %v183 = vld [vmem:[%s153 + $0xe0] sm:$0xff]
                %184 = vst [vmem:[%s154 + $0x70] sm:$0xff] %v183
                %v185 = vld [vmem:[%s153 + $0xe8] sm:$0xff]
                %186 = vst [vmem:[%s154 + $0x78] sm:$0xff] %v185
                %v187 = vld [vmem:[%s153 + $0x100] sm:$0xff]
                %188 = vst [vmem:[%s154 + $0x80] sm:$0xff] %v187
                %v189 = vld [vmem:[%s153 + $0x108] sm:$0xff]
                %190 = vst [vmem:[%s154 + $0x88] sm:$0xff] %v189
                %v191 = vld [vmem:[%s153 + $0x120] sm:$0xff]
                %192 = vst [vmem:[%s154 + $0x90] sm:$0xff] %v191
                %v193 = vld [vmem:[%s153 + $0x128] sm:$0xff]
                %194 = vst [vmem:[%s154 + $0x98] sm:$0xff] %v193
                %v195 = vld [vmem:[%s153 + $0x140] sm:$0xff]
                %196 = vst [vmem:[%s154 + $0xa0] sm:$0xff] %v195
                %v197 = vld [vmem:[%s153 + $0x148] sm:$0xff]
                %198 = vst [vmem:[%s154 + $0xa8] sm:$0xff] %v197
                %v199 = vld [vmem:[%s153 + $0x160] sm:$0xff]
                %200 = vst [vmem:[%s154 + $0xb0] sm:$0xff] %v199
                %v201 = vld [vmem:[%s153 + $0x168] sm:$0xff]
                %202 = vst [vmem:[%s154 + $0xb8] sm:$0xff] %v201
                %v203 = vld [vmem:[%s153 + $0x180] sm:$0xff]
                %204 = vst [vmem:[%s154 + $0xc0] sm:$0xff] %v203
                %v205 = vld [vmem:[%s153 + $0x188] sm:$0xff]
                %206 = vst [vmem:[%s154 + $0xc8] sm:$0xff] %v205
                %v207 = vld [vmem:[%s153 + $0x1a0] sm:$0xff]
                %208 = vst [vmem:[%s154 + $0xd0] sm:$0xff] %v207
                %v209 = vld [vmem:[%s153 + $0x1a8] sm:$0xff]
                %210 = vst [vmem:[%s154 + $0xd8] sm:$0xff] %v209
                %v211 = vld [vmem:[%s153 + $0x1c0] sm:$0xff]
                %212 = vst [vmem:[%s154 + $0xe0] sm:$0xff] %v211
                %v213 = vld [vmem:[%s153 + $0x1c8] sm:$0xff]
                %214 = vst [vmem:[%s154 + $0xe8] sm:$0xff] %v213
                %v215 = vld [vmem:[%s153 + $0x1e0] sm:$0xff]
                %216 = vst [vmem:[%s154 + $0xf0] sm:$0xff] %v215
                %v217 = vld [vmem:[%s153 + $0x1e8] sm:$0xff]
                %218 = vst [vmem:[%s154 + $0xf8] sm:$0xff] %v217
                %v219 = vld [vmem:[%s153 + $0x200] sm:$0xff]
                %220 = vst [vmem:[%s154 + $0x100] sm:$0xff] %v219
                %v221 = vld [vmem:[%s153 + $0x208] sm:$0xff]
                %222 = vst [vmem:[%s154 + $0x108] sm:$0xff] %v221
                %v223 = vld [vmem:[%s153 + $0x220] sm:$0xff]
                %224 = vst [vmem:[%s154 + $0x110] sm:$0xff] %v223
                %v225 = vld [vmem:[%s153 + $0x228] sm:$0xff]
                %226 = vst [vmem:[%s154 + $0x118] sm:$0xff] %v225
                %v227 = vld [vmem:[%s153 + $0x240] sm:$0xff]
                %228 = vst [vmem:[%s154 + $0x120] sm:$0xff] %v227
                %v229 = vld [vmem:[%s153 + $0x248] sm:$0xff]
                %230 = vst [vmem:[%s154 + $0x128] sm:$0xff] %v229
                %v231 = vld [vmem:[%s153 + $0x260] sm:$0xff]
                %232 = vst [vmem:[%s154 + $0x130] sm:$0xff] %v231
                %v233 = vld [vmem:[%s153 + $0x268] sm:$0xff]
                %234 = vst [vmem:[%s154 + $0x138] sm:$0xff] %v233
                %v235 = vld [vmem:[%s153 + $0x280] sm:$0xff]
                %236 = vst [vmem:[%s154 + $0x140] sm:$0xff] %v235
                %v237 = vld [vmem:[%s153 + $0x288] sm:$0xff]
                %238 = vst [vmem:[%s154 + $0x148] sm:$0xff] %v237
                %v239 = vld [vmem:[%s153 + $0x2a0] sm:$0xff]
                %240 = vst [vmem:[%s154 + $0x150] sm:$0xff] %v239
                %v241 = vld [vmem:[%s153 + $0x2a8] sm:$0xff]
                %242 = vst [vmem:[%s154 + $0x158] sm:$0xff] %v241
                %v243 = vld [vmem:[%s153 + $0x2c0] sm:$0xff]
                %244 = vst [vmem:[%s154 + $0x160] sm:$0xff] %v243
                %v245 = vld [vmem:[%s153 + $0x2c8] sm:$0xff]
                %246 = vst [vmem:[%s154 + $0x168] sm:$0xff] %v245
                %v247 = vld [vmem:[%s153 + $0x2e0] sm:$0xff]
                %248 = vst [vmem:[%s154 + $0x170] sm:$0xff] %v247
                %v249 = vld [vmem:[%s153 + $0x2e8] sm:$0xff]
                %250 = vst [vmem:[%s154 + $0x178] sm:$0xff] %v249
                %v251 = vld [vmem:[%s153 + $0x300] sm:$0xff]
                %252 = vst [vmem:[%s154 + $0x180] sm:$0xff] %v251
                %v253 = vld [vmem:[%s153 + $0x308] sm:$0xff]
                %254 = vst [vmem:[%s154 + $0x188] sm:$0xff] %v253
                %v255 = vld [vmem:[%s153 + $0x320] sm:$0xff]
                %256 = vst [vmem:[%s154 + $0x190] sm:$0xff] %v255
                %v257 = vld [vmem:[%s153 + $0x328] sm:$0xff]
                %258 = vst [vmem:[%s154 + $0x198] sm:$0xff] %v257
                %v259 = vld [vmem:[%s153 + $0x340] sm:$0xff]
                %260 = vst [vmem:[%s154 + $0x1a0] sm:$0xff] %v259
                %v261 = vld [vmem:[%s153 + $0x348] sm:$0xff]
                %262 = vst [vmem:[%s154 + $0x1a8] sm:$0xff] %v261
                %v263 = vld [vmem:[%s153 + $0x360] sm:$0xff]
                %264 = vst [vmem:[%s154 + $0x1b0] sm:$0xff] %v263
                %v265 = vld [vmem:[%s153 + $0x368] sm:$0xff]
                %266 = vst [vmem:[%s154 + $0x1b8] sm:$0xff] %v265
                %v267 = vld [vmem:[%s153 + $0x380] sm:$0xff]
                %268 = vst [vmem:[%s154 + $0x1c0] sm:$0xff] %v267
                %v269 = vld [vmem:[%s153 + $0x388] sm:$0xff]
                %270 = vst [vmem:[%s154 + $0x1c8] sm:$0xff] %v269
                %v271 = vld [vmem:[%s153 + $0x3a0] sm:$0xff]
                %272 = vst [vmem:[%s154 + $0x1d0] sm:$0xff] %v271
                %v273 = vld [vmem:[%s153 + $0x3a8] sm:$0xff]
                %274 = vst [vmem:[%s154 + $0x1d8] sm:$0xff] %v273
                %v275 = vld [vmem:[%s153 + $0x3c0] sm:$0xff]
                %276 = vst [vmem:[%s154 + $0x1e0] sm:$0xff] %v275
                %v277 = vld [vmem:[%s153 + $0x3c8] sm:$0xff]
                %278 = vst [vmem:[%s154 + $0x1e8] sm:$0xff] %v277
                %v279 = vld [vmem:[%s153 + $0x3e0] sm:$0xff]
                %280 = vst [vmem:[%s154 + $0x1f0] sm:$0xff] %v279
                %v281 = vld [vmem:[%s153 + $0x3e8] sm:$0xff]
                %282 = vst [vmem:[%s154 + $0x1f8] sm:$0xff] %v281
              $region33: #{discriminator_forward.12} parent=27 // loop_footer
                %s152 = sadd.s32 1, %s148
              $region34: #{discriminator_forward.12} parent=27 // loop_footer_branch
                %147 = sbr.rel target = $region30
              $region35: #{discriminator_forward.12} parent=27 // loop_exit
                _
            $region28: #{discriminator_forward.12} parent=23 // pred_fallthru
              _
            // Predicated region
            $region36: #{discriminator_forward.12} parent=23 // pred_check
              _
            $region37: #{discriminator_forward.12} parent=23 // pred_check_branch
              %284 = sbr.rel target = $region39
            $region38: #{discriminator_forward.12} parent=23 // pred_region
              _
            $region39: #{discriminator_forward.12} parent=23 // pred_fallthru
              _
          $region24: #{discriminator_forward.12} parent=19 // pred_fallthru
            _
          %285 = vnop
        $region20: #{discriminator_forward.12} parent=15 // pred_fallthru
          _
        // Predicated region
        $region40: #{discriminator_forward.12} parent=15 // pred_check
          %p286 = pneg %p77
        $region41: #{discriminator_forward.12} parent=15 // pred_check_branch
          %288 = sbr.rel (%p286) target = $region43
        $region42: #{discriminator_forward.12} parent=15 // pred_region
          %s289 = smul.u32 64, %s17
          %p290 = scmp.lt.s32.totalorder %s289, 127
          %s291 = scalar_select %p290, %s289, 127
          %p292 = scmp.lt.s32.totalorder %s16, 0
          %s293 = scalar_select %p292, %s16, 0
          %s294 = sadd.s32 %s293, %s291
          %s295 = smul.addr %s294, 4
          %s296 = scalar_lea.vmem %s1, %s295
          %s297 = smul.u32 64, %s17
        $region43: #{discriminator_forward.12} parent=15 // pred_fallthru
          _
      $region16: #{discriminator_forward.12} parent=5 // pred_fallthru
        _
      %p298 = scmp.le.s32.totalorder 1, %s8
      %p299 = scmp.lt.s32.totalorder %s8, 5
      %p300 = pnand %p298, %p299
      %p301 = pneg %p300
      // Predicated region
      $region44: #{discriminator_forward.12} parent=5 // pred_check
        _
      $region45: #{discriminator_forward.12} parent=5 // pred_check_branch
        %303 = sbr.rel (%p300) target = $region47
      $region46: #{discriminator_forward.12} parent=5 // pred_region
        %s304 = ssub.s32 %s8, 1
        %s305 = sand.u32 %s42, 1
        %s306 = sand.u32 %s42, 1
        %s307 = smul.addr %s306, 512
        %s308 = scalar_lea.vmem [#allocation3], %s307
        // Predicated region
        $region48: #{discriminator_forward.12} parent=46 // pred_check
          %p309 = pneg %p55
        $region49: #{discriminator_forward.12} parent=46 // pred_check_branch
          %311 = sbr.rel (%p309) target = $region51
        $region50: #{discriminator_forward.12} parent=46 // pred_region
          _
        $region51: #{discriminator_forward.12} parent=46 // pred_fallthru
          _
        %s312 = sand.u32 %s42, 1
        %s313 = sand.u32 %s42, 1
        %s314 = smul.addr %s313, 512
        %s315 = scalar_lea.vmem [#allocation3], %s314
        %p316 = pneg %p55
        %p317 = pneg %p52
        %s318 = smul.u32 64, %s20
        %p319 = scmp.lt.s32.totalorder %s318, 127
        %s320 = scalar_select %p319, %s318, 127
        %p321 = scmp.lt.s32.totalorder %s19, 0
        %s322 = scalar_select %p321, %s19, 0
        %s323 = sadd.s32 %s322, %s320
        %s324 = smul.addr %s323, 4
        %s325 = scalar_lea.vmem %s1, %s324
        %p326 = pneg %p83
        %p327 = pneg %p80
        %p328 = pneg %p111
        %p329 = pneg %p108
        %s330 = smul.u32 32, %s18
        %p331 = scmp.lt.s32.totalorder %s330, 63
        %s332 = scalar_select %p331, %s330, 63
        %p333 = scmp.lt.s32.totalorder %s19, 0
        %s334 = scalar_select %p333, %s19, 0
        %s335 = sadd.s32 %s334, %s332
        %s336 = smul.addr %s335, 8
        %s337 = scalar_lea.vmem %s2, %s336
        %s338 = smul.u32 32, %s18
        %s339 = smul.u32 4, %s20
        %s340 = smul.u32 64, %s20
        %p341 = scmp.lt.s32.totalorder %s340, 127
        %s342 = scalar_select %p341, %s340, 127
        %p343 = scmp.lt.s32.totalorder %s19, 0
        %s344 = scalar_select %p343, %s19, 0
        %s345 = sadd.s32 %s344, %s342
        %s346 = smul.addr %s345, 4
        %s347 = scalar_lea.vmem %s1, %s346
        %s348 = smul.u32 64, %s20
        %s349 = smul.u32 32, %s18
        %p350 = scmp.lt.s32.totalorder %s349, 63
        %s351 = scalar_select %p350, %s349, 63
        %p352 = scmp.lt.s32.totalorder %s19, 0
        %s353 = scalar_select %p352, %s19, 0
        %s354 = sadd.s32 %s353, %s351
        %s355 = smul.addr %s354, 8
        %s356 = scalar_lea.vmem %s2, %s355
        %s357 = smul.u32 32, %s18
        %p359 = scmp.eq.s32.totalorder %s20, 0
        // Predicated region
        $region52: #{discriminator_forward.12} parent=46 // pred_check
          %p360 = pneg %p359
        $region53: #{discriminator_forward.12} parent=46 // pred_check_branch
          %362 = sbr.rel (%p360) target = $region55
        $region54: #{discriminator_forward.12} parent=46 // pred_region
          %363 = vst [vmem:[#allocation2] sm:$0xff] 0.0
          %364 = vst [vmem:[#allocation2 + $0x8] sm:$0xff] 0.0
          %365 = vst [vmem:[#allocation2 + $0x10] sm:$0xff] 0.0
          %366 = vst [vmem:[#allocation2 + $0x18] sm:$0xff] 0.0
          %367 = vst [vmem:[#allocation2 + $0x20] sm:$0xff] 0.0
          %368 = vst [vmem:[#allocation2 + $0x28] sm:$0xff] 0.0
          %369 = vst [vmem:[#allocation2 + $0x30] sm:$0xff] 0.0
          %370 = vst [vmem:[#allocation2 + $0x38] sm:$0xff] 0.0
          %371 = vst [vmem:[#allocation2 + $0x40] sm:$0xff] 0.0
          %372 = vst [vmem:[#allocation2 + $0x48] sm:$0xff] 0.0
          %373 = vst [vmem:[#allocation2 + $0x50] sm:$0xff] 0.0
          %374 = vst [vmem:[#allocation2 + $0x58] sm:$0xff] 0.0
          %375 = vst [vmem:[#allocation2 + $0x60] sm:$0xff] 0.0
          %376 = vst [vmem:[#allocation2 + $0x68] sm:$0xff] 0.0
          %377 = vst [vmem:[#allocation2 + $0x70] sm:$0xff] 0.0
          %378 = vst [vmem:[#allocation2 + $0x78] sm:$0xff] 0.0
          %379 = vst [vmem:[#allocation2 + $0x80] sm:$0xff] 0.0
          %380 = vst [vmem:[#allocation2 + $0x88] sm:$0xff] 0.0
          %381 = vst [vmem:[#allocation2 + $0x90] sm:$0xff] 0.0
          %382 = vst [vmem:[#allocation2 + $0x98] sm:$0xff] 0.0
          %383 = vst [vmem:[#allocation2 + $0xa0] sm:$0xff] 0.0
          %384 = vst [vmem:[#allocation2 + $0xa8] sm:$0xff] 0.0
          %385 = vst [vmem:[#allocation2 + $0xb0] sm:$0xff] 0.0
          %386 = vst [vmem:[#allocation2 + $0xb8] sm:$0xff] 0.0
          %387 = vst [vmem:[#allocation2 + $0xc0] sm:$0xff] 0.0
          %388 = vst [vmem:[#allocation2 + $0xc8] sm:$0xff] 0.0
          %389 = vst [vmem:[#allocation2 + $0xd0] sm:$0xff] 0.0
          %390 = vst [vmem:[#allocation2 + $0xd8] sm:$0xff] 0.0
          %391 = vst [vmem:[#allocation2 + $0xe0] sm:$0xff] 0.0
          %392 = vst [vmem:[#allocation2 + $0xe8] sm:$0xff] 0.0
          %393 = vst [vmem:[#allocation2 + $0xf0] sm:$0xff] 0.0
          %394 = vst [vmem:[#allocation2 + $0xf8] sm:$0xff] 0.0
        $region55: #{discriminator_forward.12} parent=46 // pred_fallthru
          _
        %v395 = vld [vmem:[#allocation2] sm:$0xff]
        %v396 = vld [vmem:[#allocation2 + $0x8] sm:$0xff]
        %v397 = vld [vmem:[#allocation2 + $0x10] sm:$0xff]
        %v398 = vld [vmem:[#allocation2 + $0x18] sm:$0xff]
        %v399 = vld [vmem:[#allocation2 + $0x20] sm:$0xff]
        %v400 = vld [vmem:[#allocation2 + $0x28] sm:$0xff]
        %v401 = vld [vmem:[#allocation2 + $0x30] sm:$0xff]
        %v402 = vld [vmem:[#allocation2 + $0x38] sm:$0xff]
        %v403 = vld [vmem:[#allocation2 + $0x40] sm:$0xff]
        %v404 = vld [vmem:[#allocation2 + $0x48] sm:$0xff]
        %v405 = vld [vmem:[#allocation2 + $0x50] sm:$0xff]
        %v406 = vld [vmem:[#allocation2 + $0x58] sm:$0xff]
        %v407 = vld [vmem:[#allocation2 + $0x60] sm:$0xff]
        %v408 = vld [vmem:[#allocation2 + $0x68] sm:$0xff]
        %v409 = vld [vmem:[#allocation2 + $0x70] sm:$0xff]
        %v410 = vld [vmem:[#allocation2 + $0x78] sm:$0xff]
        %v411 = vld [vmem:[#allocation2 + $0x80] sm:$0xff]
        %v412 = vld [vmem:[#allocation2 + $0x88] sm:$0xff]
        %v413 = vld [vmem:[#allocation2 + $0x90] sm:$0xff]
        %v414 = vld [vmem:[#allocation2 + $0x98] sm:$0xff]
        %v415 = vld [vmem:[#allocation2 + $0xa0] sm:$0xff]
        %v416 = vld [vmem:[#allocation2 + $0xa8] sm:$0xff]
        %v417 = vld [vmem:[#allocation2 + $0xb0] sm:$0xff]
        %v418 = vld [vmem:[#allocation2 + $0xb8] sm:$0xff]
        %v419 = vld [vmem:[#allocation2 + $0xc0] sm:$0xff]
        %v420 = vld [vmem:[#allocation2 + $0xc8] sm:$0xff]
        %v421 = vld [vmem:[#allocation2 + $0xd0] sm:$0xff]
        %v422 = vld [vmem:[#allocation2 + $0xd8] sm:$0xff]
        %v423 = vld [vmem:[#allocation2 + $0xe0] sm:$0xff]
        %v424 = vld [vmem:[#allocation2 + $0xe8] sm:$0xff]
        %v425 = vld [vmem:[#allocation2 + $0xf0] sm:$0xff]
        %v426 = vld [vmem:[#allocation2 + $0xf8] sm:$0xff]
        %v427 = vld [vmem:[%s308] sm:$0xff]
        %v428 = vld [vmem:[%s308 + $0x8] sm:$0xff]
        %v429 = vld [vmem:[%s308 + $0x10] sm:$0xff]
        %v430 = vld [vmem:[%s308 + $0x18] sm:$0xff]
        %v431 = vld [vmem:[%s308 + $0x20] sm:$0xff]
        %v432 = vld [vmem:[%s308 + $0x28] sm:$0xff]
        %v433 = vld [vmem:[%s308 + $0x30] sm:$0xff]
        %v434 = vld [vmem:[%s308 + $0x38] sm:$0xff]
        %v435 = vld [vmem:[%s308 + $0x40] sm:$0xff]
        %v436 = vld [vmem:[%s308 + $0x48] sm:$0xff]
        %v437 = vld [vmem:[%s308 + $0x50] sm:$0xff]
        %v438 = vld [vmem:[%s308 + $0x58] sm:$0xff]
        %v439 = vld [vmem:[%s308 + $0x60] sm:$0xff]
        %v440 = vld [vmem:[%s308 + $0x68] sm:$0xff]
        %v441 = vld [vmem:[%s308 + $0x70] sm:$0xff]
        %v442 = vld [vmem:[%s308 + $0x78] sm:$0xff]
        %v443 = vld [vmem:[%s308 + $0x80] sm:$0xff]
        %v444 = vld [vmem:[%s308 + $0x88] sm:$0xff]
        %v445 = vld [vmem:[%s308 + $0x90] sm:$0xff]
        %v446 = vld [vmem:[%s308 + $0x98] sm:$0xff]
        %v447 = vld [vmem:[%s308 + $0xa0] sm:$0xff]
        %v448 = vld [vmem:[%s308 + $0xa8] sm:$0xff]
        %v449 = vld [vmem:[%s308 + $0xb0] sm:$0xff]
        %v450 = vld [vmem:[%s308 + $0xb8] sm:$0xff]
        %v451 = vld [vmem:[%s308 + $0xc0] sm:$0xff]
        %v452 = vld [vmem:[%s308 + $0xc8] sm:$0xff]
        %v453 = vld [vmem:[%s308 + $0xd0] sm:$0xff]
        %v454 = vld [vmem:[%s308 + $0xd8] sm:$0xff]
        %v455 = vld [vmem:[%s308 + $0xe0] sm:$0xff]
        %v456 = vld [vmem:[%s308 + $0xe8] sm:$0xff]
        %v457 = vld [vmem:[%s308 + $0xf0] sm:$0xff]
        %v458 = vld [vmem:[%s308 + $0xf8] sm:$0xff]
        %v459 = vld [vmem:[%s308 + $0x100] sm:$0xff]
        %v460 = vld [vmem:[%s308 + $0x108] sm:$0xff]
        %v461 = vld [vmem:[%s308 + $0x110] sm:$0xff]
        %v462 = vld [vmem:[%s308 + $0x118] sm:$0xff]
        %v463 = vld [vmem:[%s308 + $0x120] sm:$0xff]
        %v464 = vld [vmem:[%s308 + $0x128] sm:$0xff]
        %v465 = vld [vmem:[%s308 + $0x130] sm:$0xff]
        %v466 = vld [vmem:[%s308 + $0x138] sm:$0xff]
        %v467 = vld [vmem:[%s308 + $0x140] sm:$0xff]
        %v468 = vld [vmem:[%s308 + $0x148] sm:$0xff]
        %v469 = vld [vmem:[%s308 + $0x150] sm:$0xff]
        %v470 = vld [vmem:[%s308 + $0x158] sm:$0xff]
        %v471 = vld [vmem:[%s308 + $0x160] sm:$0xff]
        %v472 = vld [vmem:[%s308 + $0x168] sm:$0xff]
        %v473 = vld [vmem:[%s308 + $0x170] sm:$0xff]
        %v474 = vld [vmem:[%s308 + $0x178] sm:$0xff]
        %v475 = vld [vmem:[%s308 + $0x180] sm:$0xff]
        %v476 = vld [vmem:[%s308 + $0x188] sm:$0xff]
        %v477 = vld [vmem:[%s308 + $0x190] sm:$0xff]
        %v478 = vld [vmem:[%s308 + $0x198] sm:$0xff]
        %v479 = vld [vmem:[%s308 + $0x1a0] sm:$0xff]
        %v480 = vld [vmem:[%s308 + $0x1a8] sm:$0xff]
        %v481 = vld [vmem:[%s308 + $0x1b0] sm:$0xff]
        %v482 = vld [vmem:[%s308 + $0x1b8] sm:$0xff]
        %v483 = vld [vmem:[%s308 + $0x1c0] sm:$0xff]
        %v484 = vld [vmem:[%s308 + $0x1c8] sm:$0xff]
        %v485 = vld [vmem:[%s308 + $0x1d0] sm:$0xff]
        %v486 = vld [vmem:[%s308 + $0x1d8] sm:$0xff]
        %v487 = vld [vmem:[%s308 + $0x1e0] sm:$0xff]
        %v488 = vld [vmem:[%s308 + $0x1e8] sm:$0xff]
        %v489 = vld [vmem:[%s308 + $0x1f0] sm:$0xff]
        %v490 = vld [vmem:[%s308 + $0x1f8] sm:$0xff]
        %v491 = vld [vmem:[%s347] sm:$0xf]
        %v492 = vld [vmem:[%s347 + $0x4] sm:$0xf]
        %v493 = vld [vmem:[%s347 + $0x8] sm:$0xf]
        %v494 = vld [vmem:[%s347 + $0xc] sm:$0xf]
        %v495 = vld [vmem:[%s347 + $0x10] sm:$0xf]
        %v496 = vld [vmem:[%s347 + $0x14] sm:$0xf]
        %v497 = vld [vmem:[%s347 + $0x18] sm:$0xf]
        %v498 = vld [vmem:[%s347 + $0x1c] sm:$0xf]
        %v499 = vld [vmem:[%s347 + $0x20] sm:$0xf]
        %v500 = vld [vmem:[%s347 + $0x24] sm:$0xf]
        %v501 = vld [vmem:[%s347 + $0x28] sm:$0xf]
        %v502 = vld [vmem:[%s347 + $0x2c] sm:$0xf]
        %v503 = vld [vmem:[%s347 + $0x30] sm:$0xf]
        %v504 = vld [vmem:[%s347 + $0x34] sm:$0xf]
        %v505 = vld [vmem:[%s347 + $0x38] sm:$0xf]
        %v506 = vld [vmem:[%s347 + $0x3c] sm:$0xf]
        %v507 = vld [vmem:[%s347 + $0x40] sm:$0xf]
        %v508 = vld [vmem:[%s347 + $0x44] sm:$0xf]
        %v509 = vld [vmem:[%s347 + $0x48] sm:$0xf]
        %v510 = vld [vmem:[%s347 + $0x4c] sm:$0xf]
        %v511 = vld [vmem:[%s347 + $0x50] sm:$0xf]
        %v512 = vld [vmem:[%s347 + $0x54] sm:$0xf]
        %v513 = vld [vmem:[%s347 + $0x58] sm:$0xf]
        %v514 = vld [vmem:[%s347 + $0x5c] sm:$0xf]
        %v515 = vld [vmem:[%s347 + $0x60] sm:$0xf]
        %v516 = vld [vmem:[%s347 + $0x64] sm:$0xf]
        %v517 = vld [vmem:[%s347 + $0x68] sm:$0xf]
        %v518 = vld [vmem:[%s347 + $0x6c] sm:$0xf]
        %v519 = vld [vmem:[%s347 + $0x70] sm:$0xf]
        %v520 = vld [vmem:[%s347 + $0x74] sm:$0xf]
        %v521 = vld [vmem:[%s347 + $0x78] sm:$0xf]
        %v522 = vld [vmem:[%s347 + $0x7c] sm:$0xf]
        %v523 = vld [vmem:[%s347 + $0x80] sm:$0xf]
        %v524 = vld [vmem:[%s347 + $0x84] sm:$0xf]
        %v525 = vld [vmem:[%s347 + $0x88] sm:$0xf]
        %v526 = vld [vmem:[%s347 + $0x8c] sm:$0xf]
        %v527 = vld [vmem:[%s347 + $0x90] sm:$0xf]
        %v528 = vld [vmem:[%s347 + $0x94] sm:$0xf]
        %v529 = vld [vmem:[%s347 + $0x98] sm:$0xf]
        %v530 = vld [vmem:[%s347 + $0x9c] sm:$0xf]
        %v531 = vld [vmem:[%s347 + $0xa0] sm:$0xf]
        %v532 = vld [vmem:[%s347 + $0xa4] sm:$0xf]
        %v533 = vld [vmem:[%s347 + $0xa8] sm:$0xf]
        %v534 = vld [vmem:[%s347 + $0xac] sm:$0xf]
        %v535 = vld [vmem:[%s347 + $0xb0] sm:$0xf]
        %v536 = vld [vmem:[%s347 + $0xb4] sm:$0xf]
        %v537 = vld [vmem:[%s347 + $0xb8] sm:$0xf]
        %v538 = vld [vmem:[%s347 + $0xbc] sm:$0xf]
        %v539 = vld [vmem:[%s347 + $0xc0] sm:$0xf]
        %v540 = vld [vmem:[%s347 + $0xc4] sm:$0xf]
        %v541 = vld [vmem:[%s347 + $0xc8] sm:$0xf]
        %v542 = vld [vmem:[%s347 + $0xcc] sm:$0xf]
        %v543 = vld [vmem:[%s347 + $0xd0] sm:$0xf]
        %v544 = vld [vmem:[%s347 + $0xd4] sm:$0xf]
        %v545 = vld [vmem:[%s347 + $0xd8] sm:$0xf]
        %v546 = vld [vmem:[%s347 + $0xdc] sm:$0xf]
        %v547 = vld [vmem:[%s347 + $0xe0] sm:$0xf]
        %v548 = vld [vmem:[%s347 + $0xe4] sm:$0xf]
        %v549 = vld [vmem:[%s347 + $0xe8] sm:$0xf]
        %v550 = vld [vmem:[%s347 + $0xec] sm:$0xf]
        %v551 = vld [vmem:[%s347 + $0xf0] sm:$0xf]
        %v552 = vld [vmem:[%s347 + $0xf4] sm:$0xf]
        %v553 = vld [vmem:[%s347 + $0xf8] sm:$0xf]
        %v554 = vld [vmem:[%s347 + $0xfc] sm:$0xf]
        %v619 = vunpack.c.l.b16 %v427
        %v620 = vunpack.c.h.b16 %v427
        %v621 = vunpack.c.l.b16 %v428
        %v622 = vunpack.c.h.b16 %v428
        %v623 = vunpack.c.l.b16 %v429
        %v624 = vunpack.c.h.b16 %v429
        %v625 = vunpack.c.l.b16 %v430
        %v626 = vunpack.c.h.b16 %v430
        %v627 = vunpack.c.l.b16 %v431
        %v628 = vunpack.c.h.b16 %v431
        %v629 = vunpack.c.l.b16 %v432
        %v630 = vunpack.c.h.b16 %v432
        %v631 = vunpack.c.l.b16 %v433
        %v632 = vunpack.c.h.b16 %v433
        %v633 = vunpack.c.l.b16 %v434
        %v634 = vunpack.c.h.b16 %v434
        %v635 = vunpack.c.l.b16 %v435
        %v636 = vunpack.c.h.b16 %v435
        %v637 = vunpack.c.l.b16 %v436
        %v638 = vunpack.c.h.b16 %v436
        %v639 = vunpack.c.l.b16 %v437
        %v640 = vunpack.c.h.b16 %v437
        %v641 = vunpack.c.l.b16 %v438
        %v642 = vunpack.c.h.b16 %v438
        %v643 = vunpack.c.l.b16 %v439
        %v644 = vunpack.c.h.b16 %v439
        %v645 = vunpack.c.l.b16 %v440
        %v646 = vunpack.c.h.b16 %v440
        %v647 = vunpack.c.l.b16 %v441
        %v648 = vunpack.c.h.b16 %v441
        %v649 = vunpack.c.l.b16 %v442
        %v650 = vunpack.c.h.b16 %v442
        %v651 = vunpack.c.l.b16 %v443
        %v652 = vunpack.c.h.b16 %v443
        %v653 = vunpack.c.l.b16 %v444
        %v654 = vunpack.c.h.b16 %v444
        %v655 = vunpack.c.l.b16 %v445
        %v656 = vunpack.c.h.b16 %v445
        %v657 = vunpack.c.l.b16 %v446
        %v658 = vunpack.c.h.b16 %v446
        %v659 = vunpack.c.l.b16 %v447
        %v660 = vunpack.c.h.b16 %v447
        %v661 = vunpack.c.l.b16 %v448
        %v662 = vunpack.c.h.b16 %v448
        %v663 = vunpack.c.l.b16 %v449
        %v664 = vunpack.c.h.b16 %v449
        %v665 = vunpack.c.l.b16 %v450
        %v666 = vunpack.c.h.b16 %v450
        %v667 = vunpack.c.l.b16 %v451
        %v668 = vunpack.c.h.b16 %v451
        %v669 = vunpack.c.l.b16 %v452
        %v670 = vunpack.c.h.b16 %v452
        %v671 = vunpack.c.l.b16 %v453
        %v672 = vunpack.c.h.b16 %v453
        %v673 = vunpack.c.l.b16 %v454
        %v674 = vunpack.c.h.b16 %v454
        %v675 = vunpack.c.l.b16 %v455
        %v676 = vunpack.c.h.b16 %v455
        %v677 = vunpack.c.l.b16 %v456
        %v678 = vunpack.c.h.b16 %v456
        %v679 = vunpack.c.l.b16 %v457
        %v680 = vunpack.c.h.b16 %v457
        %v681 = vunpack.c.l.b16 %v458
        %v682 = vunpack.c.h.b16 %v458
        %v683 = vunpack.c.l.b16 %v459
        %v684 = vunpack.c.h.b16 %v459
        %v685 = vunpack.c.l.b16 %v460
        %v686 = vunpack.c.h.b16 %v460
        %v687 = vunpack.c.l.b16 %v461
        %v688 = vunpack.c.h.b16 %v461
        %v689 = vunpack.c.l.b16 %v462
        %v690 = vunpack.c.h.b16 %v462
        %v691 = vunpack.c.l.b16 %v463
        %v692 = vunpack.c.h.b16 %v463
        %v693 = vunpack.c.l.b16 %v464
        %v694 = vunpack.c.h.b16 %v464
        %v695 = vunpack.c.l.b16 %v465
        %v696 = vunpack.c.h.b16 %v465
        %v697 = vunpack.c.l.b16 %v466
        %v698 = vunpack.c.h.b16 %v466
        %v699 = vunpack.c.l.b16 %v467
        %v700 = vunpack.c.h.b16 %v467
        %v701 = vunpack.c.l.b16 %v468
        %v702 = vunpack.c.h.b16 %v468
        %v703 = vunpack.c.l.b16 %v469
        %v704 = vunpack.c.h.b16 %v469
        %v705 = vunpack.c.l.b16 %v470
        %v706 = vunpack.c.h.b16 %v470
        %v707 = vunpack.c.l.b16 %v471
        %v708 = vunpack.c.h.b16 %v471
        %v709 = vunpack.c.l.b16 %v472
        %v710 = vunpack.c.h.b16 %v472
        %v711 = vunpack.c.l.b16 %v473
        %v712 = vunpack.c.h.b16 %v473
        %v713 = vunpack.c.l.b16 %v474
        %v714 = vunpack.c.h.b16 %v474
        %v715 = vunpack.c.l.b16 %v475
        %v716 = vunpack.c.h.b16 %v475
        %v717 = vunpack.c.l.b16 %v476
        %v718 = vunpack.c.h.b16 %v476
        %v719 = vunpack.c.l.b16 %v477
        %v720 = vunpack.c.h.b16 %v477
        %v721 = vunpack.c.l.b16 %v478
        %v722 = vunpack.c.h.b16 %v478
        %v723 = vunpack.c.l.b16 %v479
        %v724 = vunpack.c.h.b16 %v479
        %v725 = vunpack.c.l.b16 %v480
        %v726 = vunpack.c.h.b16 %v480
        %v727 = vunpack.c.l.b16 %v481
        %v728 = vunpack.c.h.b16 %v481
        %v729 = vunpack.c.l.b16 %v482
        %v730 = vunpack.c.h.b16 %v482
        %v731 = vunpack.c.l.b16 %v483
        %v732 = vunpack.c.h.b16 %v483
        %v733 = vunpack.c.l.b16 %v484
        %v734 = vunpack.c.h.b16 %v484
        %v735 = vunpack.c.l.b16 %v485
        %v736 = vunpack.c.h.b16 %v485
        %v737 = vunpack.c.l.b16 %v486
        %v738 = vunpack.c.h.b16 %v486
        %v739 = vunpack.c.l.b16 %v487
        %v740 = vunpack.c.h.b16 %v487
        %v741 = vunpack.c.l.b16 %v488
        %v742 = vunpack.c.h.b16 %v488
        %v743 = vunpack.c.l.b16 %v489
        %v744 = vunpack.c.h.b16 %v489
        %v745 = vunpack.c.l.b16 %v490
        %v746 = vunpack.c.h.b16 %v490
        %v747 = vpack.c.b16 %v623, %v619
        %v748 = vpack.c.b16 %v624, %v620
        %v749 = vpack.c.b16 %v625, %v621
        %v750 = vpack.c.b16 %v626, %v622
        %v751 = vpack.c.b16 %v631, %v627
        %v752 = vpack.c.b16 %v632, %v628
        %v753 = vpack.c.b16 %v633, %v629
        %v754 = vpack.c.b16 %v634, %v630
        %v755 = vpack.c.b16 %v639, %v635
        %v756 = vpack.c.b16 %v640, %v636
        %v757 = vpack.c.b16 %v641, %v637
        %v758 = vpack.c.b16 %v642, %v638
        %v759 = vpack.c.b16 %v647, %v643
        %v760 = vpack.c.b16 %v648, %v644
        %v761 = vpack.c.b16 %v649, %v645
        %v762 = vpack.c.b16 %v650, %v646
        %v763 = vpack.c.b16 %v655, %v651
        %v764 = vpack.c.b16 %v656, %v652
        %v765 = vpack.c.b16 %v657, %v653
        %v766 = vpack.c.b16 %v658, %v654
        %v767 = vpack.c.b16 %v663, %v659
        %v768 = vpack.c.b16 %v664, %v660
        %v769 = vpack.c.b16 %v665, %v661
        %v770 = vpack.c.b16 %v666, %v662
        %v771 = vpack.c.b16 %v671, %v667
        %v772 = vpack.c.b16 %v672, %v668
        %v773 = vpack.c.b16 %v673, %v669
        %v774 = vpack.c.b16 %v674, %v670
        %v775 = vpack.c.b16 %v679, %v675
        %v776 = vpack.c.b16 %v680, %v676
        %v777 = vpack.c.b16 %v681, %v677
        %v778 = vpack.c.b16 %v682, %v678
        %v779 = vpack.c.b16 %v687, %v683
        %v780 = vpack.c.b16 %v688, %v684
        %v781 = vpack.c.b16 %v689, %v685
        %v782 = vpack.c.b16 %v690, %v686
        %v783 = vpack.c.b16 %v695, %v691
        %v784 = vpack.c.b16 %v696, %v692
        %v785 = vpack.c.b16 %v697, %v693
        %v786 = vpack.c.b16 %v698, %v694
        %v787 = vpack.c.b16 %v703, %v699
        %v788 = vpack.c.b16 %v704, %v700
        %v789 = vpack.c.b16 %v705, %v701
        %v790 = vpack.c.b16 %v706, %v702
        %v791 = vpack.c.b16 %v711, %v707
        %v792 = vpack.c.b16 %v712, %v708
        %v793 = vpack.c.b16 %v713, %v709
        %v794 = vpack.c.b16 %v714, %v710
        %v795 = vpack.c.b16 %v719, %v715
        %v796 = vpack.c.b16 %v720, %v716
        %v797 = vpack.c.b16 %v721, %v717
        %v798 = vpack.c.b16 %v722, %v718
        %v799 = vpack.c.b16 %v727, %v723
        %v800 = vpack.c.b16 %v728, %v724
        %v801 = vpack.c.b16 %v729, %v725
        %v802 = vpack.c.b16 %v730, %v726
        %v803 = vpack.c.b16 %v735, %v731
        %v804 = vpack.c.b16 %v736, %v732
        %v805 = vpack.c.b16 %v737, %v733
        %v806 = vpack.c.b16 %v738, %v734
        %v807 = vpack.c.b16 %v743, %v739
        %v808 = vpack.c.b16 %v744, %v740
        %v809 = vpack.c.b16 %v745, %v741
        %v810 = vpack.c.b16 %v746, %v742
        %v939 = vunpack.c.l.b16 %v491
        %v940 = vunpack.c.l.b16 %v492
        %v941 = vunpack.c.l.b16 %v493
        %v942 = vunpack.c.l.b16 %v494
        %v943 = vunpack.c.l.b16 %v495
        %v944 = vunpack.c.l.b16 %v496
        %v945 = vunpack.c.l.b16 %v497
        %v946 = vunpack.c.l.b16 %v498
        %v947 = vunpack.c.l.b16 %v499
        %v948 = vunpack.c.l.b16 %v500
        %v949 = vunpack.c.l.b16 %v501
        %v950 = vunpack.c.l.b16 %v502
        %v951 = vunpack.c.l.b16 %v503
        %v952 = vunpack.c.l.b16 %v504
        %v953 = vunpack.c.l.b16 %v505
        %v954 = vunpack.c.l.b16 %v506
        %v955 = vunpack.c.l.b16 %v507
        %v956 = vunpack.c.l.b16 %v508
        %v957 = vunpack.c.l.b16 %v509
        %v958 = vunpack.c.l.b16 %v510
        %v959 = vunpack.c.l.b16 %v511
        %v960 = vunpack.c.l.b16 %v512
        %v961 = vunpack.c.l.b16 %v513
        %v962 = vunpack.c.l.b16 %v514
        %v963 = vunpack.c.l.b16 %v515
        %v964 = vunpack.c.l.b16 %v516
        %v965 = vunpack.c.l.b16 %v517
        %v966 = vunpack.c.l.b16 %v518
        %v967 = vunpack.c.l.b16 %v519
        %v968 = vunpack.c.l.b16 %v520
        %v969 = vunpack.c.l.b16 %v521
        %v970 = vunpack.c.l.b16 %v522
        %v971 = vunpack.c.l.b16 %v523
        %v972 = vunpack.c.l.b16 %v524
        %v973 = vunpack.c.l.b16 %v525
        %v974 = vunpack.c.l.b16 %v526
        %v975 = vunpack.c.l.b16 %v527
        %v976 = vunpack.c.l.b16 %v528
        %v977 = vunpack.c.l.b16 %v529
        %v978 = vunpack.c.l.b16 %v530
        %v979 = vunpack.c.l.b16 %v531
        %v980 = vunpack.c.l.b16 %v532
        %v981 = vunpack.c.l.b16 %v533
        %v982 = vunpack.c.l.b16 %v534
        %v983 = vunpack.c.l.b16 %v535
        %v984 = vunpack.c.l.b16 %v536
        %v985 = vunpack.c.l.b16 %v537
        %v986 = vunpack.c.l.b16 %v538
        %v987 = vunpack.c.l.b16 %v539
        %v988 = vunpack.c.l.b16 %v540
        %v989 = vunpack.c.l.b16 %v541
        %v990 = vunpack.c.l.b16 %v542
        %v991 = vunpack.c.l.b16 %v543
        %v992 = vunpack.c.l.b16 %v544
        %v993 = vunpack.c.l.b16 %v545
        %v994 = vunpack.c.l.b16 %v546
        %v995 = vunpack.c.l.b16 %v547
        %v996 = vunpack.c.l.b16 %v548
        %v997 = vunpack.c.l.b16 %v549
        %v998 = vunpack.c.l.b16 %v550
        %v999 = vunpack.c.l.b16 %v551
        %v1000 = vunpack.c.l.b16 %v552
        %v1001 = vunpack.c.l.b16 %v553
        %v1002 = vunpack.c.l.b16 %v554
        %v1003 = vpack.c.b16 %v940, %v939
        %v1004 = vpack.c.b16 %v942, %v941
        %v1005 = vpack.c.b16 %v944, %v943
        %v1006 = vpack.c.b16 %v946, %v945
        %v1007 = vpack.c.b16 %v948, %v947
        %v1008 = vpack.c.b16 %v950, %v949
        %v1009 = vpack.c.b16 %v952, %v951
        %v1010 = vpack.c.b16 %v954, %v953
        %v1011 = vpack.c.b16 %v956, %v955
        %v1012 = vpack.c.b16 %v958, %v957
        %v1013 = vpack.c.b16 %v960, %v959
        %v1014 = vpack.c.b16 %v962, %v961
        %v1015 = vpack.c.b16 %v964, %v963
        %v1016 = vpack.c.b16 %v966, %v965
        %v1017 = vpack.c.b16 %v968, %v967
        %v1018 = vpack.c.b16 %v970, %v969
        %v1019 = vpack.c.b16 %v972, %v971
        %v1020 = vpack.c.b16 %v974, %v973
        %v1021 = vpack.c.b16 %v976, %v975
        %v1022 = vpack.c.b16 %v978, %v977
        %v1023 = vpack.c.b16 %v980, %v979
        %v1024 = vpack.c.b16 %v982, %v981
        %v1025 = vpack.c.b16 %v984, %v983
        %v1026 = vpack.c.b16 %v986, %v985
        %v1027 = vpack.c.b16 %v988, %v987
        %v1028 = vpack.c.b16 %v990, %v989
        %v1029 = vpack.c.b16 %v992, %v991
        %v1030 = vpack.c.b16 %v994, %v993
        %v1031 = vpack.c.b16 %v996, %v995
        %v1032 = vpack.c.b16 %v998, %v997
        %v1033 = vpack.c.b16 %v1000, %v999
        %v1034 = vpack.c.b16 %v1002, %v1001
        %1067 = vmatprep.subr.bf16.mxu0 0
        %1068 = vmatpush1.bf16.msra.mxu0 %v1010
        %1069 = vmatprep.subr.bf16.mxu0 0
        %1070 = vmatpush1.bf16.msra.mxu0 %v1009
        %1071 = vmatprep.subr.bf16.mxu0 0
        %1072 = vmatpush1.bf16.msra.mxu0 %v1008
        %1073 = vmatprep.subr.bf16.mxu0 0
        %1074 = vmatpush1.bf16.msra.mxu0 %v1007
        %1075 = vmatprep.subr.bf16.mxu0 0
        %1076 = vmatpush1.bf16.msra.mxu0 %v1006
        %1077 = vmatprep.subr.bf16.mxu0 0
        %1078 = vmatpush1.bf16.msra.mxu0 %v1005
        %1079 = vmatprep.subr.bf16.mxu0 0
        %1080 = vmatpush1.bf16.msra.mxu0 %v1004
        %1081 = vmatprep.subr.bf16.mxu0 0
        %1082 = vmatpush1.bf16.msra.mxu0 %v1003
        %1083 = vmatprep.subr.bf16.mxu0 0
        %1084 = vmatpush2.bf16.msra.mxu0 %v1018
        %1085 = vmatprep.subr.bf16.mxu0 0
        %1086 = vmatpush2.bf16.msra.mxu0 %v1017
        %1087 = vmatprep.subr.bf16.mxu0 0
        %1088 = vmatpush2.bf16.msra.mxu0 %v1016
        %1089 = vmatprep.subr.bf16.mxu0 0
        %1090 = vmatpush2.bf16.msra.mxu0 %v1015
        %1091 = vmatprep.subr.bf16.mxu0 0
        %1092 = vmatpush2.bf16.msra.mxu0 %v1014
        %1093 = vmatprep.subr.bf16.mxu0 0
        %1094 = vmatpush2.bf16.msra.mxu0 %v1013
        %1095 = vmatprep.subr.bf16.mxu0 0
        %1096 = vmatpush2.bf16.msra.mxu0 %v1012
        %1097 = vmatprep.subr.bf16.mxu0 0
        %1098 = vmatpush2.bf16.msra.mxu0 %v1011
        %1099 = vmatprep.mubr.bf16.mxu0 %v748
        %1100 = vmatmul.mubr.bf16.gmra.mxu0 %v747
        %v1101 = vpop.f32.mrf.mxu0
        %v1102 = vadd.f32 0.0, %v1101
        %v1103 = vpop.f32.mrf.mxu0
        %v1104 = vpop.f32.mrf.mxu0
        %v1105 = vadd.f32 0.0, %v1104
        %v1106 = vpop.f32.mrf.mxu0
        %1107 = vmatprep.mubr.bf16.mxu0 %v752
        %1108 = vmatmul.mubr.bf16.gmra.mxu0 %v751
        %v1109 = vpop.f32.mrf.mxu0
        %v1110 = vadd.f32 0.0, %v1109
        %v1111 = vpop.f32.mrf.mxu0
        %v1112 = vpop.f32.mrf.mxu0
        %v1113 = vadd.f32 0.0, %v1112
        %v1114 = vpop.f32.mrf.mxu0
        %1115 = vmatprep.mubr.bf16.mxu0 %v756
        %1116 = vmatmul.mubr.bf16.gmra.mxu0 %v755
        %v1117 = vpop.f32.mrf.mxu0
        %v1118 = vadd.f32 0.0, %v1117
        %v1119 = vpop.f32.mrf.mxu0
        %v1120 = vpop.f32.mrf.mxu0
        %v1121 = vadd.f32 0.0, %v1120
        %v1122 = vpop.f32.mrf.mxu0
        %1123 = vmatprep.mubr.bf16.mxu0 %v760
        %1124 = vmatmul.mubr.bf16.gmra.mxu0 %v759
        %v1125 = vpop.f32.mrf.mxu0
        %v1126 = vadd.f32 0.0, %v1125
        %v1127 = vpop.f32.mrf.mxu0
        %v1128 = vpop.f32.mrf.mxu0
        %v1129 = vadd.f32 0.0, %v1128
        %v1130 = vpop.f32.mrf.mxu0
        %1131 = vmatprep.mubr.bf16.mxu0 %v764
        %1132 = vmatmul.mubr.bf16.gmra.mxu0 %v763
        %v1133 = vpop.f32.mrf.mxu0
        %v1134 = vadd.f32 0.0, %v1133
        %v1135 = vpop.f32.mrf.mxu0
        %v1136 = vpop.f32.mrf.mxu0
        %v1137 = vadd.f32 0.0, %v1136
        %v1138 = vpop.f32.mrf.mxu0
        %1139 = vmatprep.mubr.bf16.mxu0 %v768
        %1140 = vmatmul.mubr.bf16.gmra.mxu0 %v767
        %v1141 = vpop.f32.mrf.mxu0
        %v1142 = vadd.f32 0.0, %v1141
        %v1143 = vpop.f32.mrf.mxu0
        %v1144 = vpop.f32.mrf.mxu0
        %v1145 = vadd.f32 0.0, %v1144
        %v1146 = vpop.f32.mrf.mxu0
        %1147 = vmatprep.mubr.bf16.mxu0 %v772
        %1148 = vmatmul.mubr.bf16.gmra.mxu0 %v771
        %v1149 = vpop.f32.mrf.mxu0
        %v1150 = vadd.f32 0.0, %v1149
        %v1151 = vpop.f32.mrf.mxu0
        %v1152 = vpop.f32.mrf.mxu0
        %v1153 = vadd.f32 0.0, %v1152
        %v1154 = vpop.f32.mrf.mxu0
        %1155 = vmatprep.mubr.bf16.mxu0 %v776
        %1156 = vmatmul.mubr.bf16.gmra.mxu0 %v775
        %v1157 = vpop.f32.mrf.mxu0
        %v1158 = vadd.f32 0.0, %v1157
        %v1159 = vpop.f32.mrf.mxu0
        %v1160 = vpop.f32.mrf.mxu0
        %v1161 = vadd.f32 0.0, %v1160
        %v1162 = vpop.f32.mrf.mxu0
        %1163 = vmatprep.mubr.bf16.mxu0 %v780
        %1164 = vmatmul.mubr.bf16.gmra.mxu0 %v779
        %v1165 = vpop.f32.mrf.mxu0
        %v1166 = vadd.f32 0.0, %v1165
        %v1167 = vpop.f32.mrf.mxu0
        %v1168 = vpop.f32.mrf.mxu0
        %v1169 = vadd.f32 0.0, %v1168
        %v1170 = vpop.f32.mrf.mxu0
        %1171 = vmatprep.mubr.bf16.mxu0 %v784
        %1172 = vmatmul.mubr.bf16.gmra.mxu0 %v783
        %v1173 = vpop.f32.mrf.mxu0
        %v1174 = vadd.f32 0.0, %v1173
        %v1175 = vpop.f32.mrf.mxu0
        %v1176 = vpop.f32.mrf.mxu0
        %v1177 = vadd.f32 0.0, %v1176
        %v1178 = vpop.f32.mrf.mxu0
        %1179 = vmatprep.mubr.bf16.mxu0 %v788
        %1180 = vmatmul.mubr.bf16.gmra.mxu0 %v787
        %v1181 = vpop.f32.mrf.mxu0
        %v1182 = vadd.f32 0.0, %v1181
        %v1183 = vpop.f32.mrf.mxu0
        %v1184 = vpop.f32.mrf.mxu0
        %v1185 = vadd.f32 0.0, %v1184
        %v1186 = vpop.f32.mrf.mxu0
        %1187 = vmatprep.mubr.bf16.mxu0 %v792
        %1188 = vmatmul.mubr.bf16.gmra.mxu0 %v791
        %v1189 = vpop.f32.mrf.mxu0
        %v1190 = vadd.f32 0.0, %v1189
        %v1191 = vpop.f32.mrf.mxu0
        %v1192 = vpop.f32.mrf.mxu0
        %v1193 = vadd.f32 0.0, %v1192
        %v1194 = vpop.f32.mrf.mxu0
        %1195 = vmatprep.mubr.bf16.mxu0 %v796
        %1196 = vmatmul.mubr.bf16.gmra.mxu0 %v795
        %v1197 = vpop.f32.mrf.mxu0
        %v1198 = vadd.f32 0.0, %v1197
        %v1199 = vpop.f32.mrf.mxu0
        %v1200 = vpop.f32.mrf.mxu0
        %v1201 = vadd.f32 0.0, %v1200
        %v1202 = vpop.f32.mrf.mxu0
        %1203 = vmatprep.mubr.bf16.mxu0 %v800
        %1204 = vmatmul.mubr.bf16.gmra.mxu0 %v799
        %v1205 = vpop.f32.mrf.mxu0
        %v1206 = vadd.f32 0.0, %v1205
        %v1207 = vpop.f32.mrf.mxu0
        %v1208 = vpop.f32.mrf.mxu0
        %v1209 = vadd.f32 0.0, %v1208
        %v1210 = vpop.f32.mrf.mxu0
        %1211 = vmatprep.mubr.bf16.mxu0 %v804
        %1212 = vmatmul.mubr.bf16.gmra.mxu0 %v803
        %v1213 = vpop.f32.mrf.mxu0
        %v1214 = vadd.f32 0.0, %v1213
        %v1215 = vpop.f32.mrf.mxu0
        %v1216 = vpop.f32.mrf.mxu0
        %v1217 = vadd.f32 0.0, %v1216
        %v1218 = vpop.f32.mrf.mxu0
        %1219 = vmatprep.mubr.bf16.mxu0 %v808
        %1220 = vmatmul.mubr.bf16.gmra.mxu0 %v807
        %v1221 = vpop.f32.mrf.mxu0
        %v1222 = vadd.f32 0.0, %v1221
        %v1223 = vpop.f32.mrf.mxu0
        %v1224 = vpop.f32.mrf.mxu0
        %v1225 = vadd.f32 0.0, %v1224
        %v1226 = vpop.f32.mrf.mxu0
        %1227 = vdwg.mxu0
        %1228 = vmatprep.subr.bf16.mxu0 0
        %1229 = vmatpush1.bf16.msra.mxu0 %v1026
        %1230 = vmatprep.subr.bf16.mxu0 0
        %1231 = vmatpush1.bf16.msra.mxu0 %v1025
        %1232 = vmatprep.subr.bf16.mxu0 0
        %1233 = vmatpush1.bf16.msra.mxu0 %v1024
        %1234 = vmatprep.subr.bf16.mxu0 0
        %1235 = vmatpush1.bf16.msra.mxu0 %v1023
        %1236 = vmatprep.subr.bf16.mxu0 0
        %1237 = vmatpush1.bf16.msra.mxu0 %v1022
        %1238 = vmatprep.subr.bf16.mxu0 0
        %1239 = vmatpush1.bf16.msra.mxu0 %v1021
        %1240 = vmatprep.subr.bf16.mxu0 0
        %1241 = vmatpush1.bf16.msra.mxu0 %v1020
        %1242 = vmatprep.subr.bf16.mxu0 0
        %1243 = vmatpush1.bf16.msra.mxu0 %v1019
        %1244 = vmatprep.subr.bf16.mxu0 0
        %1245 = vmatpush2.bf16.msra.mxu0 %v1034
        %1246 = vmatprep.subr.bf16.mxu0 0
        %1247 = vmatpush2.bf16.msra.mxu0 %v1033
        %1248 = vmatprep.subr.bf16.mxu0 0
        %1249 = vmatpush2.bf16.msra.mxu0 %v1032
        %1250 = vmatprep.subr.bf16.mxu0 0
        %1251 = vmatpush2.bf16.msra.mxu0 %v1031
        %1252 = vmatprep.subr.bf16.mxu0 0
        %1253 = vmatpush2.bf16.msra.mxu0 %v1030
        %1254 = vmatprep.subr.bf16.mxu0 0
        %1255 = vmatpush2.bf16.msra.mxu0 %v1029
        %1256 = vmatprep.subr.bf16.mxu0 0
        %1257 = vmatpush2.bf16.msra.mxu0 %v1028
        %1258 = vmatprep.subr.bf16.mxu0 0
        %1259 = vmatpush2.bf16.msra.mxu0 %v1027
        %1260 = vmatprep.mubr.bf16.mxu0 %v750
        %1261 = vmatmul.mubr.bf16.gmra.mxu0 %v749
        %v1262 = vpop.f32.mrf.mxu0
        %v1263 = vadd.f32 %v1102, %v1262
        %v1264 = vpop.f32.mrf.mxu0
        %v1265 = vpop.f32.mrf.mxu0
        %v1266 = vadd.f32 %v1105, %v1265
        %v1267 = vpop.f32.mrf.mxu0
        %1268 = vmatprep.mubr.bf16.mxu0 %v754
        %1269 = vmatmul.mubr.bf16.gmra.mxu0 %v753
        %v1270 = vpop.f32.mrf.mxu0
        %v1271 = vadd.f32 %v1110, %v1270
        %v1272 = vpop.f32.mrf.mxu0
        %v1273 = vpop.f32.mrf.mxu0
        %v1274 = vadd.f32 %v1113, %v1273
        %v1275 = vpop.f32.mrf.mxu0
        %1276 = vmatprep.mubr.bf16.mxu0 %v758
        %1277 = vmatmul.mubr.bf16.gmra.mxu0 %v757
        %v1278 = vpop.f32.mrf.mxu0
        %v1279 = vadd.f32 %v1118, %v1278
        %v1280 = vpop.f32.mrf.mxu0
        %v1281 = vpop.f32.mrf.mxu0
        %v1282 = vadd.f32 %v1121, %v1281
        %v1283 = vpop.f32.mrf.mxu0
        %1284 = vmatprep.mubr.bf16.mxu0 %v762
        %1285 = vmatmul.mubr.bf16.gmra.mxu0 %v761
        %v1286 = vpop.f32.mrf.mxu0
        %v1287 = vadd.f32 %v1126, %v1286
        %v1288 = vpop.f32.mrf.mxu0
        %v1289 = vpop.f32.mrf.mxu0
        %v1290 = vadd.f32 %v1129, %v1289
        %v1291 = vpop.f32.mrf.mxu0
        %1292 = vmatprep.mubr.bf16.mxu0 %v766
        %1293 = vmatmul.mubr.bf16.gmra.mxu0 %v765
        %v1294 = vpop.f32.mrf.mxu0
        %v1295 = vadd.f32 %v1134, %v1294
        %v1296 = vpop.f32.mrf.mxu0
        %v1297 = vpop.f32.mrf.mxu0
        %v1298 = vadd.f32 %v1137, %v1297
        %v1299 = vpop.f32.mrf.mxu0
        %1300 = vmatprep.mubr.bf16.mxu0 %v770
        %1301 = vmatmul.mubr.bf16.gmra.mxu0 %v769
        %v1302 = vpop.f32.mrf.mxu0
        %v1303 = vadd.f32 %v1142, %v1302
        %v1304 = vpop.f32.mrf.mxu0
        %v1305 = vpop.f32.mrf.mxu0
        %v1306 = vadd.f32 %v1145, %v1305
        %v1307 = vpop.f32.mrf.mxu0
        %1308 = vmatprep.mubr.bf16.mxu0 %v774
        %1309 = vmatmul.mubr.bf16.gmra.mxu0 %v773
        %v1310 = vpop.f32.mrf.mxu0
        %v1311 = vadd.f32 %v1150, %v1310
        %v1312 = vpop.f32.mrf.mxu0
        %v1313 = vpop.f32.mrf.mxu0
        %v1314 = vadd.f32 %v1153, %v1313
        %v1315 = vpop.f32.mrf.mxu0
        %1316 = vmatprep.mubr.bf16.mxu0 %v778
        %1317 = vmatmul.mubr.bf16.gmra.mxu0 %v777
        %v1318 = vpop.f32.mrf.mxu0
        %v1319 = vadd.f32 %v1158, %v1318
        %v1320 = vpop.f32.mrf.mxu0
        %v1321 = vpop.f32.mrf.mxu0
        %v1322 = vadd.f32 %v1161, %v1321
        %v1323 = vpop.f32.mrf.mxu0
        %1324 = vmatprep.mubr.bf16.mxu0 %v782
        %1325 = vmatmul.mubr.bf16.gmra.mxu0 %v781
        %v1326 = vpop.f32.mrf.mxu0
        %v1327 = vadd.f32 %v1166, %v1326
        %v1328 = vpop.f32.mrf.mxu0
        %v1329 = vpop.f32.mrf.mxu0
        %v1330 = vadd.f32 %v1169, %v1329
        %v1331 = vpop.f32.mrf.mxu0
        %1332 = vmatprep.mubr.bf16.mxu0 %v786
        %1333 = vmatmul.mubr.bf16.gmra.mxu0 %v785
        %v1334 = vpop.f32.mrf.mxu0
        %v1335 = vadd.f32 %v1174, %v1334
        %v1336 = vpop.f32.mrf.mxu0
        %v1337 = vpop.f32.mrf.mxu0
        %v1338 = vadd.f32 %v1177, %v1337
        %v1339 = vpop.f32.mrf.mxu0
        %1340 = vmatprep.mubr.bf16.mxu0 %v790
        %1341 = vmatmul.mubr.bf16.gmra.mxu0 %v789
        %v1342 = vpop.f32.mrf.mxu0
        %v1343 = vadd.f32 %v1182, %v1342
        %v1344 = vpop.f32.mrf.mxu0
        %v1345 = vpop.f32.mrf.mxu0
        %v1346 = vadd.f32 %v1185, %v1345
        %v1347 = vpop.f32.mrf.mxu0
        %1348 = vmatprep.mubr.bf16.mxu0 %v794
        %1349 = vmatmul.mubr.bf16.gmra.mxu0 %v793
        %v1350 = vpop.f32.mrf.mxu0
        %v1351 = vadd.f32 %v1190, %v1350
        %v1352 = vpop.f32.mrf.mxu0
        %v1353 = vpop.f32.mrf.mxu0
        %v1354 = vadd.f32 %v1193, %v1353
        %v1355 = vpop.f32.mrf.mxu0
        %1356 = vmatprep.mubr.bf16.mxu0 %v798
        %1357 = vmatmul.mubr.bf16.gmra.mxu0 %v797
        %v1358 = vpop.f32.mrf.mxu0
        %v1359 = vadd.f32 %v1198, %v1358
        %v1360 = vpop.f32.mrf.mxu0
        %v1361 = vpop.f32.mrf.mxu0
        %v1362 = vadd.f32 %v1201, %v1361
        %v1363 = vpop.f32.mrf.mxu0
        %1364 = vmatprep.mubr.bf16.mxu0 %v802
        %1365 = vmatmul.mubr.bf16.gmra.mxu0 %v801
        %v1366 = vpop.f32.mrf.mxu0
        %v1367 = vadd.f32 %v1206, %v1366
        %v1368 = vpop.f32.mrf.mxu0
        %v1369 = vpop.f32.mrf.mxu0
        %v1370 = vadd.f32 %v1209, %v1369
        %v1371 = vpop.f32.mrf.mxu0
        %1372 = vmatprep.mubr.bf16.mxu0 %v806
        %1373 = vmatmul.mubr.bf16.gmra.mxu0 %v805
        %v1374 = vpop.f32.mrf.mxu0
        %v1375 = vadd.f32 %v1214, %v1374
        %v1376 = vpop.f32.mrf.mxu0
        %v1377 = vpop.f32.mrf.mxu0
        %v1378 = vadd.f32 %v1217, %v1377
        %v1379 = vpop.f32.mrf.mxu0
        %1380 = vmatprep.mubr.bf16.mxu0 %v810
        %1381 = vmatmul.mubr.bf16.gmra.mxu0 %v809
        %v1382 = vpop.f32.mrf.mxu0
        %v1383 = vadd.f32 %v1222, %v1382
        %v1384 = vpop.f32.mrf.mxu0
        %v1385 = vpop.f32.mrf.mxu0
        %v1386 = vadd.f32 %v1225, %v1385
        %v1387 = vpop.f32.mrf.mxu0
        %1388 = vdwg.mxu0
        %v1389 = vadd.f32 %v395, %v1263
        %v1390 = vadd.f32 %v396, %v1266
        %v1391 = vadd.f32 %v397, %v1271
        %v1392 = vadd.f32 %v398, %v1274
        %v1393 = vadd.f32 %v399, %v1279
        %v1394 = vadd.f32 %v400, %v1282
        %v1395 = vadd.f32 %v401, %v1287
        %v1396 = vadd.f32 %v402, %v1290
        %v1397 = vadd.f32 %v403, %v1295
        %v1398 = vadd.f32 %v404, %v1298
        %v1399 = vadd.f32 %v405, %v1303
        %v1400 = vadd.f32 %v406, %v1306
        %v1401 = vadd.f32 %v407, %v1311
        %v1402 = vadd.f32 %v408, %v1314
        %v1403 = vadd.f32 %v409, %v1319
        %v1404 = vadd.f32 %v410, %v1322
        %v1405 = vadd.f32 %v411, %v1327
        %v1406 = vadd.f32 %v412, %v1330
        %v1407 = vadd.f32 %v413, %v1335
        %v1408 = vadd.f32 %v414, %v1338
        %v1409 = vadd.f32 %v415, %v1343
        %v1410 = vadd.f32 %v416, %v1346
        %v1411 = vadd.f32 %v417, %v1351
        %v1412 = vadd.f32 %v418, %v1354
        %v1413 = vadd.f32 %v419, %v1359
        %v1414 = vadd.f32 %v420, %v1362
        %v1415 = vadd.f32 %v421, %v1367
        %v1416 = vadd.f32 %v422, %v1370
        %v1417 = vadd.f32 %v423, %v1375
        %v1418 = vadd.f32 %v424, %v1378
        %v1419 = vadd.f32 %v425, %v1383
        %v1420 = vadd.f32 %v426, %v1386
        %1421 = vst [vmem:[#allocation2] sm:$0xff] %v1389
        %1422 = vst [vmem:[#allocation2 + $0x8] sm:$0xff] %v1390
        %1423 = vst [vmem:[#allocation2 + $0x10] sm:$0xff] %v1391
        %1424 = vst [vmem:[#allocation2 + $0x18] sm:$0xff] %v1392
        %1425 = vst [vmem:[#allocation2 + $0x20] sm:$0xff] %v1393
        %1426 = vst [vmem:[#allocation2 + $0x28] sm:$0xff] %v1394
        %1427 = vst [vmem:[#allocation2 + $0x30] sm:$0xff] %v1395
        %1428 = vst [vmem:[#allocation2 + $0x38] sm:$0xff] %v1396
        %1429 = vst [vmem:[#allocation2 + $0x40] sm:$0xff] %v1397
        %1430 = vst [vmem:[#allocation2 + $0x48] sm:$0xff] %v1398
        %1431 = vst [vmem:[#allocation2 + $0x50] sm:$0xff] %v1399
        %1432 = vst [vmem:[#allocation2 + $0x58] sm:$0xff] %v1400
        %1433 = vst [vmem:[#allocation2 + $0x60] sm:$0xff] %v1401
        %1434 = vst [vmem:[#allocation2 + $0x68] sm:$0xff] %v1402
        %1435 = vst [vmem:[#allocation2 + $0x70] sm:$0xff] %v1403
        %1436 = vst [vmem:[#allocation2 + $0x78] sm:$0xff] %v1404
        %1437 = vst [vmem:[#allocation2 + $0x80] sm:$0xff] %v1405
        %1438 = vst [vmem:[#allocation2 + $0x88] sm:$0xff] %v1406
        %1439 = vst [vmem:[#allocation2 + $0x90] sm:$0xff] %v1407
        %1440 = vst [vmem:[#allocation2 + $0x98] sm:$0xff] %v1408
        %1441 = vst [vmem:[#allocation2 + $0xa0] sm:$0xff] %v1409
        %1442 = vst [vmem:[#allocation2 + $0xa8] sm:$0xff] %v1410
        %1443 = vst [vmem:[#allocation2 + $0xb0] sm:$0xff] %v1411
        %1444 = vst [vmem:[#allocation2 + $0xb8] sm:$0xff] %v1412
        %1445 = vst [vmem:[#allocation2 + $0xc0] sm:$0xff] %v1413
        %1446 = vst [vmem:[#allocation2 + $0xc8] sm:$0xff] %v1414
        %1447 = vst [vmem:[#allocation2 + $0xd0] sm:$0xff] %v1415
        %1448 = vst [vmem:[#allocation2 + $0xd8] sm:$0xff] %v1416
        %1449 = vst [vmem:[#allocation2 + $0xe0] sm:$0xff] %v1417
        %1450 = vst [vmem:[#allocation2 + $0xe8] sm:$0xff] %v1418
        %1451 = vst [vmem:[#allocation2 + $0xf0] sm:$0xff] %v1419
        %1452 = vst [vmem:[#allocation2 + $0xf8] sm:$0xff] %v1420
        %p1453 = scmp.eq.s32.totalorder %s20, 1
        // Predicated region
        $region56: #{discriminator_forward.12} parent=46 // pred_check
          %p1454 = pneg %p1453
        $region57: #{discriminator_forward.12} parent=46 // pred_check_branch
          %1456 = sbr.rel (%p1454) target = $region59
        $region58: #{discriminator_forward.12} parent=46 // pred_region
          %v1457 = vld [vmem:[#allocation2] sm:$0xff]
          %v1458 = vld [vmem:[#allocation2 + $0x8] sm:$0xff]
          %v1459 = vld [vmem:[#allocation2 + $0x10] sm:$0xff]
          %v1460 = vld [vmem:[#allocation2 + $0x18] sm:$0xff]
          %v1461 = vld [vmem:[#allocation2 + $0x20] sm:$0xff]
          %v1462 = vld [vmem:[#allocation2 + $0x28] sm:$0xff]
          %v1463 = vld [vmem:[#allocation2 + $0x30] sm:$0xff]
          %v1464 = vld [vmem:[#allocation2 + $0x38] sm:$0xff]
          %v1465 = vld [vmem:[#allocation2 + $0x40] sm:$0xff]
          %v1466 = vld [vmem:[#allocation2 + $0x48] sm:$0xff]
          %v1467 = vld [vmem:[#allocation2 + $0x50] sm:$0xff]
          %v1468 = vld [vmem:[#allocation2 + $0x58] sm:$0xff]
          %v1469 = vld [vmem:[#allocation2 + $0x60] sm:$0xff]
          %v1470 = vld [vmem:[#allocation2 + $0x68] sm:$0xff]
          %v1471 = vld [vmem:[#allocation2 + $0x70] sm:$0xff]
          %v1472 = vld [vmem:[#allocation2 + $0x78] sm:$0xff]
          %v1473 = vld [vmem:[#allocation2 + $0x80] sm:$0xff]
          %v1474 = vld [vmem:[#allocation2 + $0x88] sm:$0xff]
          %v1475 = vld [vmem:[#allocation2 + $0x90] sm:$0xff]
          %v1476 = vld [vmem:[#allocation2 + $0x98] sm:$0xff]
          %v1477 = vld [vmem:[#allocation2 + $0xa0] sm:$0xff]
          %v1478 = vld [vmem:[#allocation2 + $0xa8] sm:$0xff]
          %v1479 = vld [vmem:[#allocation2 + $0xb0] sm:$0xff]
          %v1480 = vld [vmem:[#allocation2 + $0xb8] sm:$0xff]
          %v1481 = vld [vmem:[#allocation2 + $0xc0] sm:$0xff]
          %v1482 = vld [vmem:[#allocation2 + $0xc8] sm:$0xff]
          %v1483 = vld [vmem:[#allocation2 + $0xd0] sm:$0xff]
          %v1484 = vld [vmem:[#allocation2 + $0xd8] sm:$0xff]
          %v1485 = vld [vmem:[#allocation2 + $0xe0] sm:$0xff]
          %v1486 = vld [vmem:[#allocation2 + $0xe8] sm:$0xff]
          %v1487 = vld [vmem:[#allocation2 + $0xf0] sm:$0xff]
          %v1488 = vld [vmem:[#allocation2 + $0xf8] sm:$0xff]
          %1489 = vst [vmem:[%s356] sm:$0xff] %v1457
          %1490 = vst [vmem:[%s356 + $0x8] sm:$0xff] %v1458
          %1491 = vst [vmem:[%s356 + $0x10] sm:$0xff] %v1459
          %1492 = vst [vmem:[%s356 + $0x18] sm:$0xff] %v1460
          %1493 = vst [vmem:[%s356 + $0x20] sm:$0xff] %v1461
          %1494 = vst [vmem:[%s356 + $0x28] sm:$0xff] %v1462
          %1495 = vst [vmem:[%s356 + $0x30] sm:$0xff] %v1463
          %1496 = vst [vmem:[%s356 + $0x38] sm:$0xff] %v1464
          %1497 = vst [vmem:[%s356 + $0x40] sm:$0xff] %v1465
          %1498 = vst [vmem:[%s356 + $0x48] sm:$0xff] %v1466
          %1499 = vst [vmem:[%s356 + $0x50] sm:$0xff] %v1467
          %1500 = vst [vmem:[%s356 + $0x58] sm:$0xff] %v1468
          %1501 = vst [vmem:[%s356 + $0x60] sm:$0xff] %v1469
          %1502 = vst [vmem:[%s356 + $0x68] sm:$0xff] %v1470
          %1503 = vst [vmem:[%s356 + $0x70] sm:$0xff] %v1471
          %1504 = vst [vmem:[%s356 + $0x78] sm:$0xff] %v1472
          %1505 = vst [vmem:[%s356 + $0x80] sm:$0xff] %v1473
          %1506 = vst [vmem:[%s356 + $0x88] sm:$0xff] %v1474
          %1507 = vst [vmem:[%s356 + $0x90] sm:$0xff] %v1475
          %1508 = vst [vmem:[%s356 + $0x98] sm:$0xff] %v1476
          %1509 = vst [vmem:[%s356 + $0xa0] sm:$0xff] %v1477
          %1510 = vst [vmem:[%s356 + $0xa8] sm:$0xff] %v1478
          %1511 = vst [vmem:[%s356 + $0xb0] sm:$0xff] %v1479
          %1512 = vst [vmem:[%s356 + $0xb8] sm:$0xff] %v1480
          %1513 = vst [vmem:[%s356 + $0xc0] sm:$0xff] %v1481
          %1514 = vst [vmem:[%s356 + $0xc8] sm:$0xff] %v1482
          %1515 = vst [vmem:[%s356 + $0xd0] sm:$0xff] %v1483
          %1516 = vst [vmem:[%s356 + $0xd8] sm:$0xff] %v1484
          %1517 = vst [vmem:[%s356 + $0xe0] sm:$0xff] %v1485
          %1518 = vst [vmem:[%s356 + $0xe8] sm:$0xff] %v1486
          %1519 = vst [vmem:[%s356 + $0xf0] sm:$0xff] %v1487
          %1520 = vst [vmem:[%s356 + $0xf8] sm:$0xff] %v1488
        $region59: #{discriminator_forward.12} parent=46 // pred_fallthru
          _
        %s1521 = smul.u32 32, %s18
        %p1522 = scmp.lt.s32.totalorder %s1521, 63
        %s1523 = scalar_select %p1522, %s1521, 63
        %p1524 = scmp.lt.s32.totalorder %s19, 0
        %s1525 = scalar_select %p1524, %s19, 0
        %s1526 = sadd.s32 %s1525, %s1523
        %s1527 = smul.addr %s1526, 8
        %s1528 = scalar_lea.vmem %s2, %s1527
        // Predicated region
        $region60: #{discriminator_forward.12} parent=46 // pred_check
          %p1529 = pneg %p108
        $region61: #{discriminator_forward.12} parent=46 // pred_check_branch
          %1531 = sbr.rel (%p1529) target = $region63
        $region62: #{discriminator_forward.12} parent=46 // pred_region
          %s1532 = smul.u32 32, %s18
        $region63: #{discriminator_forward.12} parent=46 // pred_fallthru
          _
      $region47: #{discriminator_forward.12} parent=5 // pred_fallthru
        _
      %p1533 = scmp.le.s32.totalorder 2, %s8
      // Predicated region
      $region64: #{discriminator_forward.12} parent=5 // pred_check
        %p1534 = pneg %p1533
      $region65: #{discriminator_forward.12} parent=5 // pred_check_branch
        %1536 = sbr.rel (%p1534) target = $region67
      $region66: #{discriminator_forward.12} parent=5 // pred_region
        %s1537 = ssub.s32 %s8, 2
        // Predicated region
        $region68: #{discriminator_forward.12} parent=66 // pred_check
          %p1538 = pneg %p114
        $region69: #{discriminator_forward.12} parent=66 // pred_check_branch
          %1540 = sbr.rel (%p1538) target = $region71
        $region70: #{discriminator_forward.12} parent=66 // pred_region
          %s1541 = smul.u32 32, %s21
          %p1542 = scmp.lt.s32.totalorder %s1541, 63
          %s1543 = scalar_select %p1542, %s1541, 63
          %p1544 = scmp.lt.s32.totalorder %s22, 0
          %s1545 = scalar_select %p1544, %s22, 0
          %s1546 = sadd.s32 %s1545, %s1543
          %s1547 = smul.addr %s1546, 8
          %s1548 = scalar_lea.vmem %s2, %s1547
        $region71: #{discriminator_forward.12} parent=66 // pred_fallthru
          _
      $region67: #{discriminator_forward.12} parent=5 // pred_fallthru
        _
    $region6: #{discriminator_forward.12} parent=1 // loop_footer
      %s12 = sadd.s32 1, %s8
    $region7: #{discriminator_forward.12} parent=1 // loop_footer_branch
      %7 = sbr.rel target = $region3
    $region8: #{discriminator_forward.12} parent=1 // loop_exit
      _

// kernel: discriminator_forward.14
$region0: #{discriminator_forward.14}
  #allocation0 [shape = 'u32[]', space=smem, size = 0x4, offset = 0x4, fixed_abs, tag = 'smem constant byte address 0x4 - core index']
  #allocation1 [shape = 'u32[144,128]{1,0:T(1,128)}', space=vmem, size = 0x12000, scoped, tag = 'internal scratch']
  %s0 = inlined_call_operand.vmem [shape: f32[512,128], index: 0, kind: input, shape index: {}]
  %s1 = inlined_call_operand.vmem [shape: f32[1,128], index: 1, kind: input, shape index: {}]
  %s2 = inlined_call_operand.vmem [shape: f32[1,128], index: 2, kind: input, shape index: {}]
  %s3 = inlined_call_operand.vmem [shape: f32[512,128], index: 3, kind: output, shape index: {}]
  %s4 = sld [smem:[#allocation0]]
  $region45: #{discriminator_forward.14} parent=0
    _
  %s6 = ssub.s32 1, %s4
  %s7 = scalar_select 0, %s6, %s4
  loop: start=0, step=1, limit=4
  $region2: #{discriminator_forward.14} parent=0 // loop_pre_header
    _
  $region3: #{discriminator_forward.14} parent=0 // loop_header
    %s9 = sphi 0, %s13
    %p10 = scmp.ge.s32.totalorder %s9, 4
    %s19 = sphi 0, %s21
    %s22 = sphi 0, %s19
    %s23 = sphi 0, %s22
    %s39 = sphi 0, %s23
    %s43 = sphi 0, %s43
    %s45 = sphi 0, %s43
    %s46 = sphi 0, %s45
    %s60 = sphi 0, %s46
    %s64 = sphi 0, %s64
    %s66 = sphi 0, %s64
    %s67 = sphi 0, %s66
    %s81 = sphi 0, %s67
    %s87 = sphi 0, %s89
    %s90 = sphi 0, %s87
    %s91 = sphi 0, %s90
    %s107 = sphi 0, %s91
  $region4: #{discriminator_forward.14} parent=0 // loop_header_branch
    %12 = sbr.rel (%p10) target = $region8
  $region5: #{discriminator_forward.14} parent=0 // loop_body
    %s14 = ssub.s32 %s9, 1
    %s15 = ssub.s32 %s9, 2
    %s16 = sadd.s32 %s9, 1
    %s17 = ssub.s32 %s9, %s16
    %p18 = scmp.eq.s32.totalorder %s17, 0
    %s20 = sadd.s32 %s19, 1
    %s21 = scalar_select %p18, %s19, %s20
    %p24 = pneg %p18
    %p25 = scmp.eq.s32.totalorder %s9, 1
    %p26 = por %p24, %p25
    %p27 = scmp.ne.s32.totalorder %s19, %s22
    %p28 = scmp.eq.s32.totalorder %s9, 0
    %p29 = por %p27, %p28
    %p30 = scmp.ne.s32.totalorder %s19, %s22
    %p31 = scmp.eq.s32.totalorder %s14, 1
    %p32 = por %p30, %p31
    %p33 = scmp.ne.s32.totalorder %s22, %s23
    %p34 = scmp.eq.s32.totalorder %s14, 0
    %p35 = por %p33, %p34
    %p36 = scmp.ne.s32.totalorder %s22, %s23
    %p37 = scmp.eq.s32.totalorder %s15, 1
    %p38 = por %p36, %p37
    %p40 = scmp.ne.s32.totalorder %s23, %s39
    %p41 = scmp.eq.s32.totalorder %s15, 0
    %p42 = por %p40, %p41
    %s44 = sadd.s32 %s43, 1
    %p47 = scmp.eq.s32.totalorder %s9, 1
    %p48 = scmp.ne.s32.totalorder %s43, %s45
    %p49 = scmp.eq.s32.totalorder %s9, 0
    %p50 = por %p48, %p49
    %p51 = scmp.ne.s32.totalorder %s43, %s45
    %p52 = scmp.eq.s32.totalorder %s14, 1
    %p53 = por %p51, %p52
    %p54 = scmp.ne.s32.totalorder %s45, %s46
    %p55 = scmp.eq.s32.totalorder %s14, 0
    %p56 = por %p54, %p55
    %p57 = scmp.ne.s32.totalorder %s45, %s46
    %p58 = scmp.eq.s32.totalorder %s15, 1
    %p59 = por %p57, %p58
    %p61 = scmp.ne.s32.totalorder %s46, %s60
    %p62 = scmp.eq.s32.totalorder %s15, 0
    %p63 = por %p61, %p62
    %s65 = sadd.s32 %s64, 1
    %p68 = scmp.eq.s32.totalorder %s9, 1
    %p69 = scmp.ne.s32.totalorder %s64, %s66
    %p70 = scmp.eq.s32.totalorder %s9, 0
    %p71 = por %p69, %p70
    %p72 = scmp.ne.s32.totalorder %s64, %s66
    %p73 = scmp.eq.s32.totalorder %s14, 1
    %p74 = por %p72, %p73
    %p75 = scmp.ne.s32.totalorder %s66, %s67
    %p76 = scmp.eq.s32.totalorder %s14, 0
    %p77 = por %p75, %p76
    %p78 = scmp.ne.s32.totalorder %s66, %s67
    %p79 = scmp.eq.s32.totalorder %s15, 1
    %p80 = por %p78, %p79
    %p82 = scmp.ne.s32.totalorder %s67, %s81
    %p83 = scmp.eq.s32.totalorder %s15, 0
    %p84 = por %p82, %p83
    %s85 = ssub.s32 %s9, %s16
    %p86 = scmp.eq.s32.totalorder %s85, 0
    %s88 = sadd.s32 %s87, 1
    %s89 = scalar_select %p86, %s87, %s88
    %p92 = pneg %p86
    %p93 = scmp.eq.s32.totalorder %s9, 1
    %p94 = por %p92, %p93
    %p95 = scmp.ne.s32.totalorder %s87, %s90
    %p96 = scmp.eq.s32.totalorder %s9, 0
    %p97 = por %p95, %p96
    %p98 = scmp.ne.s32.totalorder %s87, %s90
    %p99 = scmp.eq.s32.totalorder %s14, 1
    %p100 = por %p98, %p99
    %p101 = scmp.ne.s32.totalorder %s90, %s91
    %p102 = scmp.eq.s32.totalorder %s14, 0
    %p103 = por %p101, %p102
    %p104 = scmp.ne.s32.totalorder %s90, %s91
    %p105 = scmp.eq.s32.totalorder %s15, 1
    %p106 = por %p104, %p105
    %p108 = scmp.ne.s32.totalorder %s91, %s107
    %p109 = scmp.eq.s32.totalorder %s15, 0
    %p110 = por %p108, %p109
    %p111 = scmp.le.s32.totalorder 1, %s9
    %p112 = scmp.lt.s32.totalorder %s9, 3
    %p113 = pnand %p111, %p112
    %p114 = pneg %p113
    // Predicated region
    $region9: #{discriminator_forward.14} parent=5 // pred_check
      _
    $region10: #{discriminator_forward.14} parent=5 // pred_check_branch
      %116 = sbr.rel (%p113) target = $region12
    $region11: #{discriminator_forward.14} parent=5 // pred_region
      %s117 = ssub.s32 %s9, 1
      // Predicated region
      $region13: #{discriminator_forward.14} parent=11 // pred_check
        %p118 = pneg %p56
      $region14: #{discriminator_forward.14} parent=11 // pred_check_branch
        %120 = sbr.rel (%p118) target = $region16
      $region15: #{discriminator_forward.14} parent=11 // pred_region
        _
      $region16: #{discriminator_forward.14} parent=11 // pred_fallthru
        _
      // Predicated region
      $region17: #{discriminator_forward.14} parent=11 // pred_check
        %p121 = pneg %p77
      $region18: #{discriminator_forward.14} parent=11 // pred_check_branch
        %123 = sbr.rel (%p121) target = $region20
      $region19: #{discriminator_forward.14} parent=11 // pred_region
        _
      $region20: #{discriminator_forward.14} parent=11 // pred_fallthru
        _
    $region12: #{discriminator_forward.14} parent=5 // pred_fallthru
      _
    %p124 = scmp.lt.s32.totalorder %s9, 2
    // Predicated region
    $region21: #{discriminator_forward.14} parent=5 // pred_check
      %p125 = pneg %p124
    $region22: #{discriminator_forward.14} parent=5 // pred_check_branch
      %127 = sbr.rel (%p125) target = $region24
    $region23: #{discriminator_forward.14} parent=5 // pred_region
      // Predicated region
      $region25: #{discriminator_forward.14} parent=23 // pred_check
        %p128 = pneg %p29
      $region26: #{discriminator_forward.14} parent=23 // pred_check_branch
        %130 = sbr.rel (%p128) target = $region28
      $region27: #{discriminator_forward.14} parent=23 // pred_region
        %s131 = smul.u32 32, %s9
        %p132 = scmp.lt.s32.totalorder %s131, 63
        %s133 = scalar_select %p132, %s131, 63
        %s134 = smul.addr %s133, 8
        %s135 = scalar_lea.vmem %s0, %s134
        %s136 = smul.u32 32, %s9
      $region28: #{discriminator_forward.14} parent=23 // pred_fallthru
        _
    $region24: #{discriminator_forward.14} parent=5 // pred_fallthru
      _
    %p137 = scmp.le.s32.totalorder 1, %s9
    %p138 = scmp.lt.s32.totalorder %s9, 3
    %p139 = pnand %p137, %p138
    %p140 = pneg %p139
    // Predicated region
    $region29: #{discriminator_forward.14} parent=5 // pred_check
      _
    $region30: #{discriminator_forward.14} parent=5 // pred_check_branch
      %142 = sbr.rel (%p139) target = $region32
    $region31: #{discriminator_forward.14} parent=5 // pred_region
      %s143 = ssub.s32 %s9, 1
      %s144 = smul.u32 32, %s14
      %p145 = scmp.lt.s32.totalorder %s144, 63
      %s146 = scalar_select %p145, %s144, 63
      %s147 = smul.addr %s146, 8
      %s148 = scalar_lea.vmem %s0, %s147
      %p149 = pneg %p35
      %p150 = pneg %p32
      %p151 = pneg %p56
      %p152 = pneg %p53
      %p153 = pneg %p77
      %p154 = pneg %p74
      %p155 = pneg %p103
      %p156 = pneg %p100
      %s157 = smul.u32 32, %s14
      %p158 = scmp.lt.s32.totalorder %s157, 63
      %s159 = scalar_select %p158, %s157, 63
      %s160 = smul.addr %s159, 8
      %s161 = scalar_lea.vmem %s3, %s160
      %s162 = smul.u32 32, %s14
      %p163 = scmp.lt.s32.totalorder %s162, 63
      %s164 = scalar_select %p163, %s162, 63
      %s165 = smul.addr %s164, 8
      %s166 = scalar_lea.vmem %s0, %s165
      %s167 = smul.u32 32, %s14
      %s168 = smul.u32 32, %s14
      %p169 = scmp.lt.s32.totalorder %s168, 63
      %s170 = scalar_select %p169, %s168, 63
      %s171 = smul.addr %s170, 8
      %s172 = scalar_lea.vmem %s3, %s171
      %s173 = smul.u32 32, %s14
      %v174 = vld [vmem:[%s166] sm:$0xff]
      %v175 = vld [vmem:[%s166 + $0x8] sm:$0xff]
      %v176 = vld [vmem:[%s166 + $0x10] sm:$0xff]
      %v177 = vld [vmem:[%s166 + $0x18] sm:$0xff]
      %v178 = vld [vmem:[%s166 + $0x20] sm:$0xff]
      %v179 = vld [vmem:[%s166 + $0x28] sm:$0xff]
      %v180 = vld [vmem:[%s166 + $0x30] sm:$0xff]
      %v181 = vld [vmem:[%s166 + $0x38] sm:$0xff]
      %v182 = vld [vmem:[%s166 + $0x40] sm:$0xff]
      %v183 = vld [vmem:[%s166 + $0x48] sm:$0xff]
      %v184 = vld [vmem:[%s166 + $0x50] sm:$0xff]
      %v185 = vld [vmem:[%s166 + $0x58] sm:$0xff]
      %v186 = vld [vmem:[%s166 + $0x60] sm:$0xff]
      %v187 = vld [vmem:[%s166 + $0x68] sm:$0xff]
      %v188 = vld [vmem:[%s166 + $0x70] sm:$0xff]
      %v189 = vld [vmem:[%s166 + $0x78] sm:$0xff]
      %v190 = vld [vmem:[%s166 + $0x80] sm:$0xff]
      %v191 = vld [vmem:[%s166 + $0x88] sm:$0xff]
      %v192 = vld [vmem:[%s166 + $0x90] sm:$0xff]
      %v193 = vld [vmem:[%s166 + $0x98] sm:$0xff]
      %v194 = vld [vmem:[%s166 + $0xa0] sm:$0xff]
      %v195 = vld [vmem:[%s166 + $0xa8] sm:$0xff]
      %v196 = vld [vmem:[%s166 + $0xb0] sm:$0xff]
      %v197 = vld [vmem:[%s166 + $0xb8] sm:$0xff]
      %v198 = vld [vmem:[%s166 + $0xc0] sm:$0xff]
      %v199 = vld [vmem:[%s166 + $0xc8] sm:$0xff]
      %v200 = vld [vmem:[%s166 + $0xd0] sm:$0xff]
      %v201 = vld [vmem:[%s166 + $0xd8] sm:$0xff]
      %v202 = vld [vmem:[%s166 + $0xe0] sm:$0xff]
      %v203 = vld [vmem:[%s166 + $0xe8] sm:$0xff]
      %v204 = vld [vmem:[%s166 + $0xf0] sm:$0xff]
      %v205 = vld [vmem:[%s166 + $0xf8] sm:$0xff]
      %v206 = vld [vmem:[%s1] sm:$0x1]
      %v207 = vmul.f32 %v206, 0.001953125
      %v208 = vld [vmem:[%s2] sm:$0x1]
      %v209 = vmul.f32 %v208, 0.001953125
      %v210 = vmul.f32 %v207, %v207
      %v211 = vsub.f32 %v209, %v210
      %v213 = vlaneseq
      %v214 = vshrl.u32 %v213, 7
      %v215 = vsub.s32 0, %v214
      %v216 = vrot.slane %v207, %v215
      %v218 = vsub.f32 %v174, %v216
      %v219 = vsub.f32 %v175, %v216
      %v220 = vsub.f32 %v176, %v216
      %v221 = vsub.f32 %v177, %v216
      %v222 = vsub.f32 %v178, %v216
      %v223 = vsub.f32 %v179, %v216
      %v224 = vsub.f32 %v180, %v216
      %v225 = vsub.f32 %v181, %v216
      %v226 = vsub.f32 %v182, %v216
      %v227 = vsub.f32 %v183, %v216
      %v228 = vsub.f32 %v184, %v216
      %v229 = vsub.f32 %v185, %v216
      %v230 = vsub.f32 %v186, %v216
      %v231 = vsub.f32 %v187, %v216
      %v232 = vsub.f32 %v188, %v216
      %v233 = vsub.f32 %v189, %v216
      %v234 = vsub.f32 %v190, %v216
      %v235 = vsub.f32 %v191, %v216
      %v236 = vsub.f32 %v192, %v216
      %v237 = vsub.f32 %v193, %v216
      %v238 = vsub.f32 %v194, %v216
      %v239 = vsub.f32 %v195, %v216
      %v240 = vsub.f32 %v196, %v216
      %v241 = vsub.f32 %v197, %v216
      %v242 = vsub.f32 %v198, %v216
      %v243 = vsub.f32 %v199, %v216
      %v244 = vsub.f32 %v200, %v216
      %v245 = vsub.f32 %v201, %v216
      %v246 = vsub.f32 %v202, %v216
      %v247 = vsub.f32 %v203, %v216
      %v248 = vsub.f32 %v204, %v216
      %v249 = vsub.f32 %v205, %v216
      %v250 = vadd.f32 %v211, 1e-05
      %v251 = vrsqrt.pop %v250
      %v253 = vlaneseq
      %v254 = vshrl.u32 %v253, 7
      %v255 = vsub.s32 0, %v254
      %v256 = vrot.slane %v251, %v255
      %v258 = vmul.f32 %v218, %v256
      %v259 = vmul.f32 %v219, %v256
      %v260 = vmul.f32 %v220, %v256
      %v261 = vmul.f32 %v221, %v256
      %v262 = vmul.f32 %v222, %v256
      %v263 = vmul.f32 %v223, %v256
      %v264 = vmul.f32 %v224, %v256
      %v265 = vmul.f32 %v225, %v256
      %v266 = vmul.f32 %v226, %v256
      %v267 = vmul.f32 %v227, %v256
      %v268 = vmul.f32 %v228, %v256
      %v269 = vmul.f32 %v229, %v256
      %v270 = vmul.f32 %v230, %v256
      %v271 = vmul.f32 %v231, %v256
      %v272 = vmul.f32 %v232, %v256
      %v273 = vmul.f32 %v233, %v256
      %v274 = vmul.f32 %v234, %v256
      %v275 = vmul.f32 %v235, %v256
      %v276 = vmul.f32 %v236, %v256
      %v277 = vmul.f32 %v237, %v256
      %v278 = vmul.f32 %v238, %v256
      %v279 = vmul.f32 %v239, %v256
      %v280 = vmul.f32 %v240, %v256
      %v281 = vmul.f32 %v241, %v256
      %v282 = vmul.f32 %v242, %v256
      %v283 = vmul.f32 %v243, %v256
      %v284 = vmul.f32 %v244, %v256
      %v285 = vmul.f32 %v245, %v256
      %v286 = vmul.f32 %v246, %v256
      %v287 = vmul.f32 %v247, %v256
      %v288 = vmul.f32 %v248, %v256
      %v289 = vmul.f32 %v249, %v256
      %vm290 = vcmp.gt.f32.partialorder %v258, 0.0
      %vm291 = vcmp.gt.f32.partialorder %v259, 0.0
      %vm292 = vcmp.gt.f32.partialorder %v260, 0.0
      %vm293 = vcmp.gt.f32.partialorder %v261, 0.0
      %vm294 = vcmp.gt.f32.partialorder %v262, 0.0
      %vm295 = vcmp.gt.f32.partialorder %v263, 0.0
      %vm296 = vcmp.gt.f32.partialorder %v264, 0.0
      %vm297 = vcmp.gt.f32.partialorder %v265, 0.0
      %vm298 = vcmp.gt.f32.partialorder %v266, 0.0
      %vm299 = vcmp.gt.f32.partialorder %v267, 0.0
      %vm300 = vcmp.gt.f32.partialorder %v268, 0.0
      %vm301 = vcmp.gt.f32.partialorder %v269, 0.0
      %vm302 = vcmp.gt.f32.partialorder %v270, 0.0
      %vm303 = vcmp.gt.f32.partialorder %v271, 0.0
      %vm304 = vcmp.gt.f32.partialorder %v272, 0.0
      %vm305 = vcmp.gt.f32.partialorder %v273, 0.0
      %vm306 = vcmp.gt.f32.partialorder %v274, 0.0
      %vm307 = vcmp.gt.f32.partialorder %v275, 0.0
      %vm308 = vcmp.gt.f32.partialorder %v276, 0.0
      %vm309 = vcmp.gt.f32.partialorder %v277, 0.0
      %vm310 = vcmp.gt.f32.partialorder %v278, 0.0
      %vm311 = vcmp.gt.f32.partialorder %v279, 0.0
      %vm312 = vcmp.gt.f32.partialorder %v280, 0.0
      %vm313 = vcmp.gt.f32.partialorder %v281, 0.0
      %vm314 = vcmp.gt.f32.partialorder %v282, 0.0
      %vm315 = vcmp.gt.f32.partialorder %v283, 0.0
      %vm316 = vcmp.gt.f32.partialorder %v284, 0.0
      %vm317 = vcmp.gt.f32.partialorder %v285, 0.0
      %vm318 = vcmp.gt.f32.partialorder %v286, 0.0
      %vm319 = vcmp.gt.f32.partialorder %v287, 0.0
      %vm320 = vcmp.gt.f32.partialorder %v288, 0.0
      %vm321 = vcmp.gt.f32.partialorder %v289, 0.0
      %v322 = vmul.f32 %v258, 0.2
      %v323 = vmul.f32 %v259, 0.2
      %v324 = vmul.f32 %v260, 0.2
      %v325 = vmul.f32 %v261, 0.2
      %v326 = vmul.f32 %v262, 0.2
      %v327 = vmul.f32 %v263, 0.2
      %v328 = vmul.f32 %v264, 0.2
      %v329 = vmul.f32 %v265, 0.2
      %v330 = vmul.f32 %v266, 0.2
      %v331 = vmul.f32 %v267, 0.2
      %v332 = vmul.f32 %v268, 0.2
      %v333 = vmul.f32 %v269, 0.2
      %v334 = vmul.f32 %v270, 0.2
      %v335 = vmul.f32 %v271, 0.2
      %v336 = vmul.f32 %v272, 0.2
      %v337 = vmul.f32 %v273, 0.2
      %v338 = vmul.f32 %v274, 0.2
      %v339 = vmul.f32 %v275, 0.2
      %v340 = vmul.f32 %v276, 0.2
      %v341 = vmul.f32 %v277, 0.2
      %v342 = vmul.f32 %v278, 0.2
      %v343 = vmul.f32 %v279, 0.2
      %v344 = vmul.f32 %v280, 0.2
      %v345 = vmul.f32 %v281, 0.2
      %v346 = vmul.f32 %v282, 0.2
      %v347 = vmul.f32 %v283, 0.2
      %v348 = vmul.f32 %v284, 0.2
      %v349 = vmul.f32 %v285, 0.2
      %v350 = vmul.f32 %v286, 0.2
      %v351 = vmul.f32 %v287, 0.2
      %v352 = vmul.f32 %v288, 0.2
      %v353 = vmul.f32 %v289, 0.2
      %v354 = vsel %vm290, %v258, %v322
      %v355 = vsel %vm291, %v259, %v323
      %v356 = vsel %vm292, %v260, %v324
      %v357 = vsel %vm293, %v261, %v325
      %v358 = vsel %vm294, %v262, %v326
      %v359 = vsel %vm295, %v263, %v327
      %v360 = vsel %vm296, %v264, %v328
      %v361 = vsel %vm297, %v265, %v329
      %v362 = vsel %vm298, %v266, %v330
      %v363 = vsel %vm299, %v267, %v331
      %v364 = vsel %vm300, %v268, %v332
      %v365 = vsel %vm301, %v269, %v333
      %v366 = vsel %vm302, %v270, %v334
      %v367 = vsel %vm303, %v271, %v335
      %v368 = vsel %vm304, %v272, %v336
      %v369 = vsel %vm305, %v273, %v337
      %v370 = vsel %vm306, %v274, %v338
      %v371 = vsel %vm307, %v275, %v339
      %v372 = vsel %vm308, %v276, %v340
      %v373 = vsel %vm309, %v277, %v341
      %v374 = vsel %vm310, %v278, %v342
      %v375 = vsel %vm311, %v279, %v343
      %v376 = vsel %vm312, %v280, %v344
      %v377 = vsel %vm313, %v281, %v345
      %v378 = vsel %vm314, %v282, %v346
      %v379 = vsel %vm315, %v283, %v347
      %v380 = vsel %vm316, %v284, %v348
      %v381 = vsel %vm317, %v285, %v349
      %v382 = vsel %vm318, %v286, %v350
      %v383 = vsel %vm319, %v287, %v351
      %v384 = vsel %vm320, %v288, %v352
      %v385 = vsel %vm321, %v289, %v353
      %386 = vst [vmem:[%s172] sm:$0xff] %v354
      %387 = vst [vmem:[%s172 + $0x8] sm:$0xff] %v355
      %388 = vst [vmem:[%s172 + $0x10] sm:$0xff] %v356
      %389 = vst [vmem:[%s172 + $0x18] sm:$0xff] %v357
      %390 = vst [vmem:[%s172 + $0x20] sm:$0xff] %v358
      %391 = vst [vmem:[%s172 + $0x28] sm:$0xff] %v359
      %392 = vst [vmem:[%s172 + $0x30] sm:$0xff] %v360
      %393 = vst [vmem:[%s172 + $0x38] sm:$0xff] %v361
      %394 = vst [vmem:[%s172 + $0x40] sm:$0xff] %v362
      %395 = vst [vmem:[%s172 + $0x48] sm:$0xff] %v363
      %396 = vst [vmem:[%s172 + $0x50] sm:$0xff] %v364
      %397 = vst [vmem:[%s172 + $0x58] sm:$0xff] %v365
      %398 = vst [vmem:[%s172 + $0x60] sm:$0xff] %v366
      %399 = vst [vmem:[%s172 + $0x68] sm:$0xff] %v367
      %400 = vst [vmem:[%s172 + $0x70] sm:$0xff] %v368
      %401 = vst [vmem:[%s172 + $0x78] sm:$0xff] %v369
      %402 = vst [vmem:[%s172 + $0x80] sm:$0xff] %v370
      %403 = vst [vmem:[%s172 + $0x88] sm:$0xff] %v371
      %404 = vst [vmem:[%s172 + $0x90] sm:$0xff] %v372
      %405 = vst [vmem:[%s172 + $0x98] sm:$0xff] %v373
      %406 = vst [vmem:[%s172 + $0xa0] sm:$0xff] %v374
      %407 = vst [vmem:[%s172 + $0xa8] sm:$0xff] %v375
      %408 = vst [vmem:[%s172 + $0xb0] sm:$0xff] %v376
      %409 = vst [vmem:[%s172 + $0xb8] sm:$0xff] %v377
      %410 = vst [vmem:[%s172 + $0xc0] sm:$0xff] %v378
      %411 = vst [vmem:[%s172 + $0xc8] sm:$0xff] %v379
      %412 = vst [vmem:[%s172 + $0xd0] sm:$0xff] %v380
      %413 = vst [vmem:[%s172 + $0xd8] sm:$0xff] %v381
      %414 = vst [vmem:[%s172 + $0xe0] sm:$0xff] %v382
      %415 = vst [vmem:[%s172 + $0xe8] sm:$0xff] %v383
      %416 = vst [vmem:[%s172 + $0xf0] sm:$0xff] %v384
      %417 = vst [vmem:[%s172 + $0xf8] sm:$0xff] %v385
      %s418 = smul.u32 32, %s14
      %p419 = scmp.lt.s32.totalorder %s418, 63
      %s420 = scalar_select %p419, %s418, 63
      %s421 = smul.addr %s420, 8
      %s422 = scalar_lea.vmem %s3, %s421
      // Predicated region
      $region33: #{discriminator_forward.14} parent=31 // pred_check
        %p423 = pneg %p100
      $region34: #{discriminator_forward.14} parent=31 // pred_check_branch
        %425 = sbr.rel (%p423) target = $region36
      $region35: #{discriminator_forward.14} parent=31 // pred_region
        %s426 = smul.u32 32, %s14
      $region36: #{discriminator_forward.14} parent=31 // pred_fallthru
        _
    $region32: #{discriminator_forward.14} parent=5 // pred_fallthru
      _
    %p427 = scmp.le.s32.totalorder 2, %s9
    // Predicated region
    $region37: #{discriminator_forward.14} parent=5 // pred_check
      %p428 = pneg %p427
    $region38: #{discriminator_forward.14} parent=5 // pred_check_branch
      %430 = sbr.rel (%p428) target = $region40
    $region39: #{discriminator_forward.14} parent=5 // pred_region
      %s431 = ssub.s32 %s9, 2
      // Predicated region
      $region41: #{discriminator_forward.14} parent=39 // pred_check
        %p432 = pneg %p106
      $region42: #{discriminator_forward.14} parent=39 // pred_check_branch
        %434 = sbr.rel (%p432) target = $region44
      $region43: #{discriminator_forward.14} parent=39 // pred_region
        %s435 = smul.u32 32, %s15
        %p436 = scmp.lt.s32.totalorder %s435, 63
        %s437 = scalar_select %p436, %s435, 63
        %s438 = smul.addr %s437, 8
        %s439 = scalar_lea.vmem %s3, %s438
      $region44: #{discriminator_forward.14} parent=39 // pred_fallthru
        _
    $region40: #{discriminator_forward.14} parent=5 // pred_fallthru
      _
  $region6: #{discriminator_forward.14} parent=0 // loop_footer
    %s13 = sadd.s32 1, %s9
  $region7: #{discriminator_forward.14} parent=0 // loop_footer_branch
    %8 = sbr.rel target = $region3
  $region8: #{discriminator_forward.14} parent=0 // loop_exit
    _

// kernel: discriminator_forward.15
$region0: #{discriminator_forward.15}
  #allocation0 [shape = 'u32[]', space=smem, size = 0x4, offset = 0x4, fixed_abs, tag = 'smem constant byte address 0x4 - core index']
  #allocation1 [shape = 'u32[144,128]{1,0:T(1,128)}', space=vmem, size = 0x12000, scoped, tag = 'internal scratch']
  #allocation2 [shape = 'f32[128,256]{1,0:T(8,128)}', space=vmem, size = 0x20000, scoped, tag = 'scratch operand']
  %s0 = inlined_call_operand.vmem [shape: bf16[128,2048], index: 0, kind: input, shape index: {}]
  %s1 = inlined_call_operand.vmem [shape: bf16[2048,256], index: 1, kind: input, shape index: {}]
  %s2 = inlined_call_operand.vmem [shape: f32[128,256], index: 2, kind: output, shape index: {}]
  %s3 = sld [smem:[#allocation0]]
  $region72: #{discriminator_forward.15} parent=0
    _
  %s5 = ssub.s32 1, %s3
  %s6 = scalar_select 0, %s5, %s3
  $region1: #{discriminator_forward.15} parent=0
    #allocation3 [shape = 'u8[262144]{0}', space=vmem, size = 0x40000, scoped, tag = 'input window, operand 0']
    loop: start=0, step=1, limit=6
    $region2: #{discriminator_forward.15} parent=1 // loop_pre_header
      _
    $region3: #{discriminator_forward.15} parent=1 // loop_header
      %s8 = sphi 0, %s12
      %p9 = scmp.ge.s32.totalorder %s8, 6
      %s15 = sphi 0, %s34
      %s16 = sphi 0, %s30
      %s17 = sphi 0, %s26
      %s18 = sphi 0, %s15
      %s19 = sphi 0, %s16
      %s20 = sphi 0, %s17
      %s21 = sphi 0, %s18
      %s22 = sphi 0, %s19
      %s23 = sphi 0, %s20
      %s39 = sphi 0, %s41
      %s42 = sphi 0, %s39
      %s43 = sphi 0, %s42
      %s59 = sphi 0, %s43
      %s67 = sphi 0, %s69
      %s70 = sphi 0, %s67
      %s71 = sphi 0, %s70
      %s87 = sphi 0, %s71
      %s95 = sphi 0, %s97
      %s98 = sphi 0, %s95
      %s99 = sphi 0, %s98
      %s115 = sphi 0, %s99
    $region4: #{discriminator_forward.15} parent=1 // loop_header_branch
      %11 = sbr.rel (%p9) target = $region8
    $region5: #{discriminator_forward.15} parent=1 // loop_body
      %s13 = ssub.s32 %s8, 1
      %s14 = ssub.s32 %s8, 2
      %s24 = sadd.s32 1, %s17
      %p25 = scmp.ge.s32.totalorder %s24, 4
      %s26 = scalar_select %p25, 0, %s24
      %s27 = sadd.s32 1, %s16
      %s28 = scalar_select %p25, %s27, %s16
      %p29 = scmp.ge.s32.totalorder %s28, 1
      %s30 = scalar_select %p29, 0, %s28
      %s31 = sadd.s32 1, %s15
      %s32 = scalar_select %p29, %s31, %s15
      %p33 = scmp.ge.s32.totalorder %s32, 1
      %s34 = scalar_select %p33, 0, %s32
      %s35 = ssub.s32 %s15, %s34
      %s36 = ssub.s32 %s17, %s26
      %s37 = sor.u32 %s35, %s36
      %p38 = scmp.eq.s32.totalorder %s37, 0
      %s40 = sadd.s32 %s39, 1
      %s41 = scalar_select %p38, %s39, %s40
      %p44 = pneg %p38
      %p45 = scmp.eq.s32.totalorder %s8, 3
      %p46 = por %p44, %p45
      %p47 = scmp.ne.s32.totalorder %s39, %s42
      %p48 = scmp.eq.s32.totalorder %s8, 0
      %p49 = por %p47, %p48
      %p50 = scmp.ne.s32.totalorder %s39, %s42
      %p51 = scmp.eq.s32.totalorder %s13, 3
      %p52 = por %p50, %p51
      %p53 = scmp.ne.s32.totalorder %s42, %s43
      %p54 = scmp.eq.s32.totalorder %s13, 0
      %p55 = por %p53, %p54
      %p56 = scmp.ne.s32.totalorder %s42, %s43
      %p57 = scmp.eq.s32.totalorder %s14, 3
      %p58 = por %p56, %p57
      %p60 = scmp.ne.s32.totalorder %s43, %s59
      %p61 = scmp.eq.s32.totalorder %s14, 0
      %p62 = por %p60, %p61
      %s63 = ssub.s32 %s17, %s26
      %s64 = ssub.s32 %s16, %s30
      %s65 = sor.u32 %s63, %s64
      %p66 = scmp.eq.s32.totalorder %s65, 0
      %s68 = sadd.s32 %s67, 1
      %s69 = scalar_select %p66, %s67, %s68
      %p72 = pneg %p66
      %p73 = scmp.eq.s32.totalorder %s8, 3
      %p74 = por %p72, %p73
      %p75 = scmp.ne.s32.totalorder %s67, %s70
      %p76 = scmp.eq.s32.totalorder %s8, 0
      %p77 = por %p75, %p76
      %p78 = scmp.ne.s32.totalorder %s67, %s70
      %p79 = scmp.eq.s32.totalorder %s13, 3
      %p80 = por %p78, %p79
      %p81 = scmp.ne.s32.totalorder %s70, %s71
      %p82 = scmp.eq.s32.totalorder %s13, 0
      %p83 = por %p81, %p82
      %p84 = scmp.ne.s32.totalorder %s70, %s71
      %p85 = scmp.eq.s32.totalorder %s14, 3
      %p86 = por %p84, %p85
      %p88 = scmp.ne.s32.totalorder %s71, %s87
      %p89 = scmp.eq.s32.totalorder %s14, 0
      %p90 = por %p88, %p89
      %s91 = ssub.s32 %s15, %s34
      %s92 = ssub.s32 %s16, %s30
      %s93 = sor.u32 %s91, %s92
      %p94 = scmp.eq.s32.totalorder %s93, 0
      %s96 = sadd.s32 %s95, 1
      %s97 = scalar_select %p94, %s95, %s96
      %p100 = pneg %p94
      %p101 = scmp.eq.s32.totalorder %s8, 3
      %p102 = por %p100, %p101
      %p103 = scmp.ne.s32.totalorder %s95, %s98
      %p104 = scmp.eq.s32.totalorder %s8, 0
      %p105 = por %p103, %p104
      %p106 = scmp.ne.s32.totalorder %s95, %s98
      %p107 = scmp.eq.s32.totalorder %s13, 3
      %p108 = por %p106, %p107
      %p109 = scmp.ne.s32.totalorder %s98, %s99
      %p110 = scmp.eq.s32.totalorder %s13, 0
      %p111 = por %p109, %p110
      %p112 = scmp.ne.s32.totalorder %s98, %s99
      %p113 = scmp.eq.s32.totalorder %s14, 3
      %p114 = por %p112, %p113
      %p116 = scmp.ne.s32.totalorder %s99, %s115
      %p117 = scmp.eq.s32.totalorder %s14, 0
      %p118 = por %p116, %p117
      %p119 = scmp.le.s32.totalorder 1, %s8
      %p120 = scmp.lt.s32.totalorder %s8, 5
      %p121 = pnand %p119, %p120
      %p122 = pneg %p121
      // Predicated region
      $region9: #{discriminator_forward.15} parent=5 // pred_check
        _
      $region10: #{discriminator_forward.15} parent=5 // pred_check_branch
        %124 = sbr.rel (%p121) target = $region12
      $region11: #{discriminator_forward.15} parent=5 // pred_region
        %s125 = ssub.s32 %s8, 1
      $region12: #{discriminator_forward.15} parent=5 // pred_fallthru
        _
      %p126 = scmp.lt.s32.totalorder %s8, 4
      // Predicated region
      $region13: #{discriminator_forward.15} parent=5 // pred_check
        %p127 = pneg %p126
      $region14: #{discriminator_forward.15} parent=5 // pred_check_branch
        %129 = sbr.rel (%p127) target = $region16
      $region15: #{discriminator_forward.15} parent=5 // pred_region
        // Predicated region
        $region17: #{discriminator_forward.15} parent=15 // pred_check
          %p130 = pneg %p49
        $region18: #{discriminator_forward.15} parent=15 // pred_check_branch
          %132 = sbr.rel (%p130) target = $region20
        $region19: #{discriminator_forward.15} parent=15 // pred_region
          %s133 = sand.u32 %s39, 1
          %s134 = sand.u32 %s39, 1
          %s135 = smul.addr %s134, 256
          %s136 = scalar_lea.vmem [#allocation3], %s135
          %s137 = smul.u32 16, %s15
          %s138 = smul.u32 4, %s17
          %s139 = smul.addr %s137, 16
          %s140 = sadd.s32 %s138, %s139
          %s141 = smul.addr %s140, 4
          %s142 = scalar_lea.vmem %s0, %s141
          // Predicated region
          $region21: #{discriminator_forward.15} parent=19 // pred_check
            _
          $region22: #{discriminator_forward.15} parent=19 // pred_check_branch
            %144 = sbr.rel (0) target = $region24
          $region23: #{discriminator_forward.15} parent=19 // pred_region
            // Predicated region
            $region25: #{discriminator_forward.15} parent=23 // pred_check
              _
            $region26: #{discriminator_forward.15} parent=23 // pred_check_branch
              %146 = sbr.rel (0) target = $region28
            $region27: #{discriminator_forward.15} parent=23 // pred_region
              loop: start=0, step=1, limit=1
              $region29: #{discriminator_forward.15} parent=27 // loop_pre_header
                _
              $region30: #{discriminator_forward.15} parent=27 // loop_header
                %s148 = sphi 0, %s152
                %p149 = scmp.ge.s32.totalorder %s148, 1
                %s153 = sphi %s142, %s142
                %s154 = sphi %s136, %s136
              $region31: #{discriminator_forward.15} parent=27 // loop_header_branch
                %151 = sbr.rel (%p149) target = $region35
              $region32: #{discriminator_forward.15} parent=27 // loop_body
                %v155 = vld [vmem:[%s153] sm:$0xff]
                %156 = vst [vmem:[%s154] sm:$0xff] %v155
                %v157 = vld [vmem:[%s153 + $0x8] sm:$0xff]
                %158 = vst [vmem:[%s154 + $0x8] sm:$0xff] %v157
                %v159 = vld [vmem:[%s153 + $0x40] sm:$0xff]
                %160 = vst [vmem:[%s154 + $0x10] sm:$0xff] %v159
                %v161 = vld [vmem:[%s153 + $0x48] sm:$0xff]
                %162 = vst [vmem:[%s154 + $0x18] sm:$0xff] %v161
                %v163 = vld [vmem:[%s153 + $0x80] sm:$0xff]
                %164 = vst [vmem:[%s154 + $0x20] sm:$0xff] %v163
                %v165 = vld [vmem:[%s153 + $0x88] sm:$0xff]
                %166 = vst [vmem:[%s154 + $0x28] sm:$0xff] %v165
                %v167 = vld [vmem:[%s153 + $0xc0] sm:$0xff]
                %168 = vst [vmem:[%s154 + $0x30] sm:$0xff] %v167
                %v169 = vld [vmem:[%s153 + $0xc8] sm:$0xff]
                %170 = vst [vmem:[%s154 + $0x38] sm:$0xff] %v169
                %v171 = vld [vmem:[%s153 + $0x100] sm:$0xff]
                %172 = vst [vmem:[%s154 + $0x40] sm:$0xff] %v171
                %v173 = vld [vmem:[%s153 + $0x108] sm:$0xff]
                %174 = vst [vmem:[%s154 + $0x48] sm:$0xff] %v173
                %v175 = vld [vmem:[%s153 + $0x140] sm:$0xff]
                %176 = vst [vmem:[%s154 + $0x50] sm:$0xff] %v175
                %v177 = vld [vmem:[%s153 + $0x148] sm:$0xff]
                %178 = vst [vmem:[%s154 + $0x58] sm:$0xff] %v177
                %v179 = vld [vmem:[%s153 + $0x180] sm:$0xff]
                %180 = vst [vmem:[%s154 + $0x60] sm:$0xff] %v179
                %v181 = vld [vmem:[%s153 + $0x188] sm:$0xff]
                %182 = vst [vmem:[%s154 + $0x68] sm:$0xff] %v181
                %v183 = vld [vmem:[%s153 + $0x1c0] sm:$0xff]
                %184 = vst [vmem:[%s154 + $0x70] sm:$0xff] %v183
                %v185 = vld [vmem:[%s153 + $0x1c8] sm:$0xff]
                %186 = vst [vmem:[%s154 + $0x78] sm:$0xff] %v185
                %v187 = vld [vmem:[%s153 + $0x200] sm:$0xff]
                %188 = vst [vmem:[%s154 + $0x80] sm:$0xff] %v187
                %v189 = vld [vmem:[%s153 + $0x208] sm:$0xff]
                %190 = vst [vmem:[%s154 + $0x88] sm:$0xff] %v189
                %v191 = vld [vmem:[%s153 + $0x240] sm:$0xff]
                %192 = vst [vmem:[%s154 + $0x90] sm:$0xff] %v191
                %v193 = vld [vmem:[%s153 + $0x248] sm:$0xff]
                %194 = vst [vmem:[%s154 + $0x98] sm:$0xff] %v193
                %v195 = vld [vmem:[%s153 + $0x280] sm:$0xff]
                %196 = vst [vmem:[%s154 + $0xa0] sm:$0xff] %v195
                %v197 = vld [vmem:[%s153 + $0x288] sm:$0xff]
                %198 = vst [vmem:[%s154 + $0xa8] sm:$0xff] %v197
                %v199 = vld [vmem:[%s153 + $0x2c0] sm:$0xff]
                %200 = vst [vmem:[%s154 + $0xb0] sm:$0xff] %v199
                %v201 = vld [vmem:[%s153 + $0x2c8] sm:$0xff]
                %202 = vst [vmem:[%s154 + $0xb8] sm:$0xff] %v201
                %v203 = vld [vmem:[%s153 + $0x300] sm:$0xff]
                %204 = vst [vmem:[%s154 + $0xc0] sm:$0xff] %v203
                %v205 = vld [vmem:[%s153 + $0x308] sm:$0xff]
                %206 = vst [vmem:[%s154 + $0xc8] sm:$0xff] %v205
                %v207 = vld [vmem:[%s153 + $0x340] sm:$0xff]
                %208 = vst [vmem:[%s154 + $0xd0] sm:$0xff] %v207
                %v209 = vld [vmem:[%s153 + $0x348] sm:$0xff]
                %210 = vst [vmem:[%s154 + $0xd8] sm:$0xff] %v209
                %v211 = vld [vmem:[%s153 + $0x380] sm:$0xff]
                %212 = vst [vmem:[%s154 + $0xe0] sm:$0xff] %v211
                %v213 = vld [vmem:[%s153 + $0x388] sm:$0xff]
                %214 = vst [vmem:[%s154 + $0xe8] sm:$0xff] %v213
                %v215 = vld [vmem:[%s153 + $0x3c0] sm:$0xff]
                %216 = vst [vmem:[%s154 + $0xf0] sm:$0xff] %v215
                %v217 = vld [vmem:[%s153 + $0x3c8] sm:$0xff]
                %218 = vst [vmem:[%s154 + $0xf8] sm:$0xff] %v217
              $region33: #{discriminator_forward.15} parent=27 // loop_footer
                %s152 = sadd.s32 1, %s148
              $region34: #{discriminator_forward.15} parent=27 // loop_footer_branch
                %147 = sbr.rel target = $region30
              $region35: #{discriminator_forward.15} parent=27 // loop_exit
                _
            $region28: #{discriminator_forward.15} parent=23 // pred_fallthru
              _
            // Predicated region
            $region36: #{discriminator_forward.15} parent=23 // pred_check
              _
            $region37: #{discriminator_forward.15} parent=23 // pred_check_branch
              %220 = sbr.rel target = $region39
            $region38: #{discriminator_forward.15} parent=23 // pred_region
              _
            $region39: #{discriminator_forward.15} parent=23 // pred_fallthru
              _
          $region24: #{discriminator_forward.15} parent=19 // pred_fallthru
            _
          %221 = vnop
        $region20: #{discriminator_forward.15} parent=15 // pred_fallthru
          _
        // Predicated region
        $region40: #{discriminator_forward.15} parent=15 // pred_check
          %p222 = pneg %p77
        $region41: #{discriminator_forward.15} parent=15 // pred_check_branch
          %224 = sbr.rel (%p222) target = $region43
        $region42: #{discriminator_forward.15} parent=15 // pred_region
          %s225 = smul.u32 64, %s17
          %s226 = smul.u32 2, %s16
          %p227 = scmp.lt.s32.totalorder %s225, 255
          %s228 = scalar_select %p227, %s225, 255
          %p229 = scmp.lt.s32.totalorder %s226, 1
          %s230 = scalar_select %p229, %s226, 1
          %s231 = smul.addr %s228, 2
          %s232 = sadd.s32 %s230, %s231
          %s233 = smul.addr %s232, 4
          %s234 = scalar_lea.vmem %s1, %s233
          %s235 = smul.u32 64, %s17
          %s236 = smul.u32 2, %s16
        $region43: #{discriminator_forward.15} parent=15 // pred_fallthru
          _
      $region16: #{discriminator_forward.15} parent=5 // pred_fallthru
        _
      %p237 = scmp.le.s32.totalorder 1, %s8
      %p238 = scmp.lt.s32.totalorder %s8, 5
      %p239 = pnand %p237, %p238
      %p240 = pneg %p239
      // Predicated region
      $region44: #{discriminator_forward.15} parent=5 // pred_check
        _
      $region45: #{discriminator_forward.15} parent=5 // pred_check_branch
        %242 = sbr.rel (%p239) target = $region47
      $region46: #{discriminator_forward.15} parent=5 // pred_region
        %s243 = ssub.s32 %s8, 1
        %s244 = sand.u32 %s42, 1
        %s245 = sand.u32 %s42, 1
        %s246 = smul.addr %s245, 256
        %s247 = scalar_lea.vmem [#allocation3], %s246
        // Predicated region
        $region48: #{discriminator_forward.15} parent=46 // pred_check
          %p248 = pneg %p55
        $region49: #{discriminator_forward.15} parent=46 // pred_check_branch
          %250 = sbr.rel (%p248) target = $region51
        $region50: #{discriminator_forward.15} parent=46 // pred_region
          _
        $region51: #{discriminator_forward.15} parent=46 // pred_fallthru
          _
        %s251 = sand.u32 %s42, 1
        %s252 = sand.u32 %s42, 1
        %s253 = smul.addr %s252, 256
        %s254 = scalar_lea.vmem [#allocation3], %s253
        %p255 = pneg %p55
        %p256 = pneg %p52
        %s257 = smul.u32 64, %s20
        %s258 = smul.u32 2, %s19
        %p259 = scmp.lt.s32.totalorder %s257, 255
        %s260 = scalar_select %p259, %s257, 255
        %p261 = scmp.lt.s32.totalorder %s258, 1
        %s262 = scalar_select %p261, %s258, 1
        %s263 = smul.addr %s260, 2
        %s264 = sadd.s32 %s262, %s263
        %s265 = smul.addr %s264, 4
        %s266 = scalar_lea.vmem %s1, %s265
        %p267 = pneg %p83
        %p268 = pneg %p80
        %p269 = pneg %p111
        %p270 = pneg %p108
        %s271 = smul.u32 16, %s18
        %s272 = smul.u32 2, %s19
        %p273 = scmp.lt.s32.totalorder %s271, 15
        %s274 = scalar_select %p273, %s271, 15
        %p275 = scmp.lt.s32.totalorder %s272, 1
        %s276 = scalar_select %p275, %s272, 1
        %s277 = smul.addr %s274, 2
        %s278 = sadd.s32 %s276, %s277
        %s279 = smul.addr %s278, 8
        %s280 = scalar_lea.vmem %s2, %s279
        %s281 = smul.u32 16, %s18
        %s282 = smul.u32 4, %s20
        %s283 = smul.u32 64, %s20
        %s284 = smul.u32 2, %s19
        %p285 = scmp.lt.s32.totalorder %s283, 255
        %s286 = scalar_select %p285, %s283, 255
        %p287 = scmp.lt.s32.totalorder %s284, 1
        %s288 = scalar_select %p287, %s284, 1
        %s289 = smul.addr %s286, 2
        %s290 = sadd.s32 %s288, %s289
        %s291 = smul.addr %s290, 4
        %s292 = scalar_lea.vmem %s1, %s291
        %s293 = smul.u32 64, %s20
        %s294 = smul.u32 2, %s19
        %s295 = smul.u32 16, %s18
        %s296 = smul.u32 2, %s19
        %p297 = scmp.lt.s32.totalorder %s295, 15
        %s298 = scalar_select %p297, %s295, 15
        %p299 = scmp.lt.s32.totalorder %s296, 1
        %s300 = scalar_select %p299, %s296, 1
        %s301 = smul.addr %s298, 2
        %s302 = sadd.s32 %s300, %s301
        %s303 = smul.addr %s302, 8
        %s304 = scalar_lea.vmem %s2, %s303
        %s305 = smul.u32 16, %s18
        %s306 = smul.u32 2, %s19
        %p307 = scmp.eq.s32.totalorder %s20, 0
        // Predicated region
        $region52: #{discriminator_forward.15} parent=46 // pred_check
          %p308 = pneg %p307
        $region53: #{discriminator_forward.15} parent=46 // pred_check_branch
          %310 = sbr.rel (%p308) target = $region55
        $region54: #{discriminator_forward.15} parent=46 // pred_region
          %311 = vst [vmem:[#allocation2] sm:$0xff] 0.0
          %312 = vst [vmem:[#allocation2 + $0x8] sm:$0xff] 0.0
          %313 = vst [vmem:[#allocation2 + $0x10] sm:$0xff] 0.0
          %314 = vst [vmem:[#allocation2 + $0x18] sm:$0xff] 0.0
          %315 = vst [vmem:[#allocation2 + $0x20] sm:$0xff] 0.0
          %316 = vst [vmem:[#allocation2 + $0x28] sm:$0xff] 0.0
          %317 = vst [vmem:[#allocation2 + $0x30] sm:$0xff] 0.0
          %318 = vst [vmem:[#allocation2 + $0x38] sm:$0xff] 0.0
          %319 = vst [vmem:[#allocation2 + $0x40] sm:$0xff] 0.0
          %320 = vst [vmem:[#allocation2 + $0x48] sm:$0xff] 0.0
          %321 = vst [vmem:[#allocation2 + $0x50] sm:$0xff] 0.0
          %322 = vst [vmem:[#allocation2 + $0x58] sm:$0xff] 0.0
          %323 = vst [vmem:[#allocation2 + $0x60] sm:$0xff] 0.0
          %324 = vst [vmem:[#allocation2 + $0x68] sm:$0xff] 0.0
          %325 = vst [vmem:[#allocation2 + $0x70] sm:$0xff] 0.0
          %326 = vst [vmem:[#allocation2 + $0x78] sm:$0xff] 0.0
          %327 = vst [vmem:[#allocation2 + $0x80] sm:$0xff] 0.0
          %328 = vst [vmem:[#allocation2 + $0x88] sm:$0xff] 0.0
          %329 = vst [vmem:[#allocation2 + $0x90] sm:$0xff] 0.0
          %330 = vst [vmem:[#allocation2 + $0x98] sm:$0xff] 0.0
          %331 = vst [vmem:[#allocation2 + $0xa0] sm:$0xff] 0.0
          %332 = vst [vmem:[#allocation2 + $0xa8] sm:$0xff] 0.0
          %333 = vst [vmem:[#allocation2 + $0xb0] sm:$0xff] 0.0
          %334 = vst [vmem:[#allocation2 + $0xb8] sm:$0xff] 0.0
          %335 = vst [vmem:[#allocation2 + $0xc0] sm:$0xff] 0.0
          %336 = vst [vmem:[#allocation2 + $0xc8] sm:$0xff] 0.0
          %337 = vst [vmem:[#allocation2 + $0xd0] sm:$0xff] 0.0
          %338 = vst [vmem:[#allocation2 + $0xd8] sm:$0xff] 0.0
          %339 = vst [vmem:[#allocation2 + $0xe0] sm:$0xff] 0.0
          %340 = vst [vmem:[#allocation2 + $0xe8] sm:$0xff] 0.0
          %341 = vst [vmem:[#allocation2 + $0xf0] sm:$0xff] 0.0
          %342 = vst [vmem:[#allocation2 + $0xf8] sm:$0xff] 0.0
        $region55: #{discriminator_forward.15} parent=46 // pred_fallthru
          _
        %v343 = vld [vmem:[#allocation2] sm:$0xff]
        %v344 = vld [vmem:[#allocation2 + $0x8] sm:$0xff]
        %v345 = vld [vmem:[#allocation2 + $0x10] sm:$0xff]
        %v346 = vld [vmem:[#allocation2 + $0x18] sm:$0xff]
        %v347 = vld [vmem:[#allocation2 + $0x20] sm:$0xff]
        %v348 = vld [vmem:[#allocation2 + $0x28] sm:$0xff]
        %v349 = vld [vmem:[#allocation2 + $0x30] sm:$0xff]
        %v350 = vld [vmem:[#allocation2 + $0x38] sm:$0xff]
        %v351 = vld [vmem:[#allocation2 + $0x40] sm:$0xff]
        %v352 = vld [vmem:[#allocation2 + $0x48] sm:$0xff]
        %v353 = vld [vmem:[#allocation2 + $0x50] sm:$0xff]
        %v354 = vld [vmem:[#allocation2 + $0x58] sm:$0xff]
        %v355 = vld [vmem:[#allocation2 + $0x60] sm:$0xff]
        %v356 = vld [vmem:[#allocation2 + $0x68] sm:$0xff]
        %v357 = vld [vmem:[#allocation2 + $0x70] sm:$0xff]
        %v358 = vld [vmem:[#allocation2 + $0x78] sm:$0xff]
        %v359 = vld [vmem:[#allocation2 + $0x80] sm:$0xff]
        %v360 = vld [vmem:[#allocation2 + $0x88] sm:$0xff]
        %v361 = vld [vmem:[#allocation2 + $0x90] sm:$0xff]
        %v362 = vld [vmem:[#allocation2 + $0x98] sm:$0xff]
        %v363 = vld [vmem:[#allocation2 + $0xa0] sm:$0xff]
        %v364 = vld [vmem:[#allocation2 + $0xa8] sm:$0xff]
        %v365 = vld [vmem:[#allocation2 + $0xb0] sm:$0xff]
        %v366 = vld [vmem:[#allocation2 + $0xb8] sm:$0xff]
        %v367 = vld [vmem:[#allocation2 + $0xc0] sm:$0xff]
        %v368 = vld [vmem:[#allocation2 + $0xc8] sm:$0xff]
        %v369 = vld [vmem:[#allocation2 + $0xd0] sm:$0xff]
        %v370 = vld [vmem:[#allocation2 + $0xd8] sm:$0xff]
        %v371 = vld [vmem:[#allocation2 + $0xe0] sm:$0xff]
        %v372 = vld [vmem:[#allocation2 + $0xe8] sm:$0xff]
        %v373 = vld [vmem:[#allocation2 + $0xf0] sm:$0xff]
        %v374 = vld [vmem:[#allocation2 + $0xf8] sm:$0xff]
        %v375 = vld [vmem:[%s247] sm:$0xff]
        %v376 = vld [vmem:[%s247 + $0x8] sm:$0xff]
        %v377 = vld [vmem:[%s247 + $0x10] sm:$0xff]
        %v378 = vld [vmem:[%s247 + $0x18] sm:$0xff]
        %v379 = vld [vmem:[%s247 + $0x20] sm:$0xff]
        %v380 = vld [vmem:[%s247 + $0x28] sm:$0xff]
        %v381 = vld [vmem:[%s247 + $0x30] sm:$0xff]
        %v382 = vld [vmem:[%s247 + $0x38] sm:$0xff]
        %v383 = vld [vmem:[%s247 + $0x40] sm:$0xff]
        %v384 = vld [vmem:[%s247 + $0x48] sm:$0xff]
        %v385 = vld [vmem:[%s247 + $0x50] sm:$0xff]
        %v386 = vld [vmem:[%s247 + $0x58] sm:$0xff]
        %v387 = vld [vmem:[%s247 + $0x60] sm:$0xff]
        %v388 = vld [vmem:[%s247 + $0x68] sm:$0xff]
        %v389 = vld [vmem:[%s247 + $0x70] sm:$0xff]
        %v390 = vld [vmem:[%s247 + $0x78] sm:$0xff]
        %v391 = vld [vmem:[%s247 + $0x80] sm:$0xff]
        %v392 = vld [vmem:[%s247 + $0x88] sm:$0xff]
        %v393 = vld [vmem:[%s247 + $0x90] sm:$0xff]
        %v394 = vld [vmem:[%s247 + $0x98] sm:$0xff]
        %v395 = vld [vmem:[%s247 + $0xa0] sm:$0xff]
        %v396 = vld [vmem:[%s247 + $0xa8] sm:$0xff]
        %v397 = vld [vmem:[%s247 + $0xb0] sm:$0xff]
        %v398 = vld [vmem:[%s247 + $0xb8] sm:$0xff]
        %v399 = vld [vmem:[%s247 + $0xc0] sm:$0xff]
        %v400 = vld [vmem:[%s247 + $0xc8] sm:$0xff]
        %v401 = vld [vmem:[%s247 + $0xd0] sm:$0xff]
        %v402 = vld [vmem:[%s247 + $0xd8] sm:$0xff]
        %v403 = vld [vmem:[%s247 + $0xe0] sm:$0xff]
        %v404 = vld [vmem:[%s247 + $0xe8] sm:$0xff]
        %v405 = vld [vmem:[%s247 + $0xf0] sm:$0xff]
        %v406 = vld [vmem:[%s247 + $0xf8] sm:$0xff]
        %v407 = vld [vmem:[%s292] sm:$0xff]
        %v408 = vld [vmem:[%s292 + $0x8] sm:$0xff]
        %v409 = vld [vmem:[%s292 + $0x10] sm:$0xff]
        %v410 = vld [vmem:[%s292 + $0x18] sm:$0xff]
        %v411 = vld [vmem:[%s292 + $0x20] sm:$0xff]
        %v412 = vld [vmem:[%s292 + $0x28] sm:$0xff]
        %v413 = vld [vmem:[%s292 + $0x30] sm:$0xff]
        %v414 = vld [vmem:[%s292 + $0x38] sm:$0xff]
        %v415 = vld [vmem:[%s292 + $0x40] sm:$0xff]
        %v416 = vld [vmem:[%s292 + $0x48] sm:$0xff]
        %v417 = vld [vmem:[%s292 + $0x50] sm:$0xff]
        %v418 = vld [vmem:[%s292 + $0x58] sm:$0xff]
        %v419 = vld [vmem:[%s292 + $0x60] sm:$0xff]
        %v420 = vld [vmem:[%s292 + $0x68] sm:$0xff]
        %v421 = vld [vmem:[%s292 + $0x70] sm:$0xff]
        %v422 = vld [vmem:[%s292 + $0x78] sm:$0xff]
        %v423 = vld [vmem:[%s292 + $0x80] sm:$0xff]
        %v424 = vld [vmem:[%s292 + $0x88] sm:$0xff]
        %v425 = vld [vmem:[%s292 + $0x90] sm:$0xff]
        %v426 = vld [vmem:[%s292 + $0x98] sm:$0xff]
        %v427 = vld [vmem:[%s292 + $0xa0] sm:$0xff]
        %v428 = vld [vmem:[%s292 + $0xa8] sm:$0xff]
        %v429 = vld [vmem:[%s292 + $0xb0] sm:$0xff]
        %v430 = vld [vmem:[%s292 + $0xb8] sm:$0xff]
        %v431 = vld [vmem:[%s292 + $0xc0] sm:$0xff]
        %v432 = vld [vmem:[%s292 + $0xc8] sm:$0xff]
        %v433 = vld [vmem:[%s292 + $0xd0] sm:$0xff]
        %v434 = vld [vmem:[%s292 + $0xd8] sm:$0xff]
        %v435 = vld [vmem:[%s292 + $0xe0] sm:$0xff]
        %v436 = vld [vmem:[%s292 + $0xe8] sm:$0xff]
        %v437 = vld [vmem:[%s292 + $0xf0] sm:$0xff]
        %v438 = vld [vmem:[%s292 + $0xf8] sm:$0xff]
        %v439 = vld [vmem:[%s292 + $0x100] sm:$0xff]
        %v440 = vld [vmem:[%s292 + $0x108] sm:$0xff]
        %v441 = vld [vmem:[%s292 + $0x110] sm:$0xff]
        %v442 = vld [vmem:[%s292 + $0x118] sm:$0xff]
        %v443 = vld [vmem:[%s292 + $0x120] sm:$0xff]
        %v444 = vld [vmem:[%s292 + $0x128] sm:$0xff]
        %v445 = vld [vmem:[%s292 + $0x130] sm:$0xff]
        %v446 = vld [vmem:[%s292 + $0x138] sm:$0xff]
        %v447 = vld [vmem:[%s292 + $0x140] sm:$0xff]
        %v448 = vld [vmem:[%s292 + $0x148] sm:$0xff]
        %v449 = vld [vmem:[%s292 + $0x150] sm:$0xff]
        %v450 = vld [vmem:[%s292 + $0x158] sm:$0xff]
        %v451 = vld [vmem:[%s292 + $0x160] sm:$0xff]
        %v452 = vld [vmem:[%s292 + $0x168] sm:$0xff]
        %v453 = vld [vmem:[%s292 + $0x170] sm:$0xff]
        %v454 = vld [vmem:[%s292 + $0x178] sm:$0xff]
        %v455 = vld [vmem:[%s292 + $0x180] sm:$0xff]
        %v456 = vld [vmem:[%s292 + $0x188] sm:$0xff]
        %v457 = vld [vmem:[%s292 + $0x190] sm:$0xff]
        %v458 = vld [vmem:[%s292 + $0x198] sm:$0xff]
        %v459 = vld [vmem:[%s292 + $0x1a0] sm:$0xff]
        %v460 = vld [vmem:[%s292 + $0x1a8] sm:$0xff]
        %v461 = vld [vmem:[%s292 + $0x1b0] sm:$0xff]
        %v462 = vld [vmem:[%s292 + $0x1b8] sm:$0xff]
        %v463 = vld [vmem:[%s292 + $0x1c0] sm:$0xff]
        %v464 = vld [vmem:[%s292 + $0x1c8] sm:$0xff]
        %v465 = vld [vmem:[%s292 + $0x1d0] sm:$0xff]
        %v466 = vld [vmem:[%s292 + $0x1d8] sm:$0xff]
        %v467 = vld [vmem:[%s292 + $0x1e0] sm:$0xff]
        %v468 = vld [vmem:[%s292 + $0x1e8] sm:$0xff]
        %v469 = vld [vmem:[%s292 + $0x1f0] sm:$0xff]
        %v470 = vld [vmem:[%s292 + $0x1f8] sm:$0xff]
        %v503 = vunpack.c.l.b16 %v375
        %v504 = vunpack.c.h.b16 %v375
        %v505 = vunpack.c.l.b16 %v376
        %v506 = vunpack.c.h.b16 %v376
        %v507 = vunpack.c.l.b16 %v377
        %v508 = vunpack.c.h.b16 %v377
        %v509 = vunpack.c.l.b16 %v378
        %v510 = vunpack.c.h.b16 %v378
        %v511 = vunpack.c.l.b16 %v379
        %v512 = vunpack.c.h.b16 %v379
        %v513 = vunpack.c.l.b16 %v380
        %v514 = vunpack.c.h.b16 %v380
        %v515 = vunpack.c.l.b16 %v381
        %v516 = vunpack.c.h.b16 %v381
        %v517 = vunpack.c.l.b16 %v382
        %v518 = vunpack.c.h.b16 %v382
        %v519 = vunpack.c.l.b16 %v383
        %v520 = vunpack.c.h.b16 %v383
        %v521 = vunpack.c.l.b16 %v384
        %v522 = vunpack.c.h.b16 %v384
        %v523 = vunpack.c.l.b16 %v385
        %v524 = vunpack.c.h.b16 %v385
        %v525 = vunpack.c.l.b16 %v386
        %v526 = vunpack.c.h.b16 %v386
        %v527 = vunpack.c.l.b16 %v387
        %v528 = vunpack.c.h.b16 %v387
        %v529 = vunpack.c.l.b16 %v388
        %v530 = vunpack.c.h.b16 %v388
        %v531 = vunpack.c.l.b16 %v389
        %v532 = vunpack.c.h.b16 %v389
        %v533 = vunpack.c.l.b16 %v390
        %v534 = vunpack.c.h.b16 %v390
        %v535 = vunpack.c.l.b16 %v391
        %v536 = vunpack.c.h.b16 %v391
        %v537 = vunpack.c.l.b16 %v392
        %v538 = vunpack.c.h.b16 %v392
        %v539 = vunpack.c.l.b16 %v393
        %v540 = vunpack.c.h.b16 %v393
        %v541 = vunpack.c.l.b16 %v394
        %v542 = vunpack.c.h.b16 %v394
        %v543 = vunpack.c.l.b16 %v395
        %v544 = vunpack.c.h.b16 %v395
        %v545 = vunpack.c.l.b16 %v396
        %v546 = vunpack.c.h.b16 %v396
        %v547 = vunpack.c.l.b16 %v397
        %v548 = vunpack.c.h.b16 %v397
        %v549 = vunpack.c.l.b16 %v398
        %v550 = vunpack.c.h.b16 %v398
        %v551 = vunpack.c.l.b16 %v399
        %v552 = vunpack.c.h.b16 %v399
        %v553 = vunpack.c.l.b16 %v400
        %v554 = vunpack.c.h.b16 %v400
        %v555 = vunpack.c.l.b16 %v401
        %v556 = vunpack.c.h.b16 %v401
        %v557 = vunpack.c.l.b16 %v402
        %v558 = vunpack.c.h.b16 %v402
        %v559 = vunpack.c.l.b16 %v403
        %v560 = vunpack.c.h.b16 %v403
        %v561 = vunpack.c.l.b16 %v404
        %v562 = vunpack.c.h.b16 %v404
        %v563 = vunpack.c.l.b16 %v405
        %v564 = vunpack.c.h.b16 %v405
        %v565 = vunpack.c.l.b16 %v406
        %v566 = vunpack.c.h.b16 %v406
        %v567 = vpack.c.b16 %v507, %v503
        %v568 = vpack.c.b16 %v508, %v504
        %v569 = vpack.c.b16 %v509, %v505
        %v570 = vpack.c.b16 %v510, %v506
        %v571 = vpack.c.b16 %v515, %v511
        %v572 = vpack.c.b16 %v516, %v512
        %v573 = vpack.c.b16 %v517, %v513
        %v574 = vpack.c.b16 %v518, %v514
        %v575 = vpack.c.b16 %v523, %v519
        %v576 = vpack.c.b16 %v524, %v520
        %v577 = vpack.c.b16 %v525, %v521
        %v578 = vpack.c.b16 %v526, %v522
        %v579 = vpack.c.b16 %v531, %v527
        %v580 = vpack.c.b16 %v532, %v528
        %v581 = vpack.c.b16 %v533, %v529
        %v582 = vpack.c.b16 %v534, %v530
        %v583 = vpack.c.b16 %v539, %v535
        %v584 = vpack.c.b16 %v540, %v536
        %v585 = vpack.c.b16 %v541, %v537
        %v586 = vpack.c.b16 %v542, %v538
        %v587 = vpack.c.b16 %v547, %v543
        %v588 = vpack.c.b16 %v548, %v544
        %v589 = vpack.c.b16 %v549, %v545
        %v590 = vpack.c.b16 %v550, %v546
        %v591 = vpack.c.b16 %v555, %v551
        %v592 = vpack.c.b16 %v556, %v552
        %v593 = vpack.c.b16 %v557, %v553
        %v594 = vpack.c.b16 %v558, %v554
        %v595 = vpack.c.b16 %v563, %v559
        %v596 = vpack.c.b16 %v564, %v560
        %v597 = vpack.c.b16 %v565, %v561
        %v598 = vpack.c.b16 %v566, %v562
        %v695 = vunpack.c.l.b16 %v407
        %v696 = vunpack.c.h.b16 %v407
        %v697 = vunpack.c.l.b16 %v408
        %v698 = vunpack.c.h.b16 %v408
        %v699 = vunpack.c.l.b16 %v409
        %v700 = vunpack.c.h.b16 %v409
        %v701 = vunpack.c.l.b16 %v410
        %v702 = vunpack.c.h.b16 %v410
        %v703 = vunpack.c.l.b16 %v411
        %v704 = vunpack.c.h.b16 %v411
        %v705 = vunpack.c.l.b16 %v412
        %v706 = vunpack.c.h.b16 %v412
        %v707 = vunpack.c.l.b16 %v413
        %v708 = vunpack.c.h.b16 %v413
        %v709 = vunpack.c.l.b16 %v414
        %v710 = vunpack.c.h.b16 %v414
        %v711 = vunpack.c.l.b16 %v415
        %v712 = vunpack.c.h.b16 %v415
        %v713 = vunpack.c.l.b16 %v416
        %v714 = vunpack.c.h.b16 %v416
        %v715 = vunpack.c.l.b16 %v417
        %v716 = vunpack.c.h.b16 %v417
        %v717 = vunpack.c.l.b16 %v418
        %v718 = vunpack.c.h.b16 %v418
        %v719 = vunpack.c.l.b16 %v419
        %v720 = vunpack.c.h.b16 %v419
        %v721 = vunpack.c.l.b16 %v420
        %v722 = vunpack.c.h.b16 %v420
        %v723 = vunpack.c.l.b16 %v421
        %v724 = vunpack.c.h.b16 %v421
        %v725 = vunpack.c.l.b16 %v422
        %v726 = vunpack.c.h.b16 %v422
        %v727 = vunpack.c.l.b16 %v423
        %v728 = vunpack.c.h.b16 %v423
        %v729 = vunpack.c.l.b16 %v424
        %v730 = vunpack.c.h.b16 %v424
        %v731 = vunpack.c.l.b16 %v425
        %v732 = vunpack.c.h.b16 %v425
        %v733 = vunpack.c.l.b16 %v426
        %v734 = vunpack.c.h.b16 %v426
        %v735 = vunpack.c.l.b16 %v427
        %v736 = vunpack.c.h.b16 %v427
        %v737 = vunpack.c.l.b16 %v428
        %v738 = vunpack.c.h.b16 %v428
        %v739 = vunpack.c.l.b16 %v429
        %v740 = vunpack.c.h.b16 %v429
        %v741 = vunpack.c.l.b16 %v430
        %v742 = vunpack.c.h.b16 %v430
        %v743 = vunpack.c.l.b16 %v431
        %v744 = vunpack.c.h.b16 %v431
        %v745 = vunpack.c.l.b16 %v432
        %v746 = vunpack.c.h.b16 %v432
        %v747 = vunpack.c.l.b16 %v433
        %v748 = vunpack.c.h.b16 %v433
        %v749 = vunpack.c.l.b16 %v434
        %v750 = vunpack.c.h.b16 %v434
        %v751 = vunpack.c.l.b16 %v435
        %v752 = vunpack.c.h.b16 %v435
        %v753 = vunpack.c.l.b16 %v436
        %v754 = vunpack.c.h.b16 %v436
        %v755 = vunpack.c.l.b16 %v437
        %v756 = vunpack.c.h.b16 %v437
        %v757 = vunpack.c.l.b16 %v438
        %v758 = vunpack.c.h.b16 %v438
        %v759 = vunpack.c.l.b16 %v439
        %v760 = vunpack.c.h.b16 %v439
        %v761 = vunpack.c.l.b16 %v440
        %v762 = vunpack.c.h.b16 %v440
        %v763 = vunpack.c.l.b16 %v441
        %v764 = vunpack.c.h.b16 %v441
        %v765 = vunpack.c.l.b16 %v442
        %v766 = vunpack.c.h.b16 %v442
        %v767 = vunpack.c.l.b16 %v443
        %v768 = vunpack.c.h.b16 %v443
        %v769 = vunpack.c.l.b16 %v444
        %v770 = vunpack.c.h.b16 %v444
        %v771 = vunpack.c.l.b16 %v445
        %v772 = vunpack.c.h.b16 %v445
        %v773 = vunpack.c.l.b16 %v446
        %v774 = vunpack.c.h.b16 %v446
        %v775 = vunpack.c.l.b16 %v447
        %v776 = vunpack.c.h.b16 %v447
        %v777 = vunpack.c.l.b16 %v448
        %v778 = vunpack.c.h.b16 %v448
        %v779 = vunpack.c.l.b16 %v449
        %v780 = vunpack.c.h.b16 %v449
        %v781 = vunpack.c.l.b16 %v450
        %v782 = vunpack.c.h.b16 %v450
        %v783 = vunpack.c.l.b16 %v451
        %v784 = vunpack.c.h.b16 %v451
        %v785 = vunpack.c.l.b16 %v452
        %v786 = vunpack.c.h.b16 %v452
        %v787 = vunpack.c.l.b16 %v453
        %v788 = vunpack.c.h.b16 %v453
        %v789 = vunpack.c.l.b16 %v454
        %v790 = vunpack.c.h.b16 %v454
        %v791 = vunpack.c.l.b16 %v455
        %v792 = vunpack.c.h.b16 %v455
        %v793 = vunpack.c.l.b16 %v456
        %v794 = vunpack.c.h.b16 %v456
        %v795 = vunpack.c.l.b16 %v457
        %v796 = vunpack.c.h.b16 %v457
        %v797 = vunpack.c.l.b16 %v458
        %v798 = vunpack.c.h.b16 %v458
        %v799 = vunpack.c.l.b16 %v459
        %v800 = vunpack.c.h.b16 %v459
        %v801 = vunpack.c.l.b16 %v460
        %v802 = vunpack.c.h.b16 %v460
        %v803 = vunpack.c.l.b16 %v461
        %v804 = vunpack.c.h.b16 %v461
        %v805 = vunpack.c.l.b16 %v462
        %v806 = vunpack.c.h.b16 %v462
        %v807 = vunpack.c.l.b16 %v463
        %v808 = vunpack.c.h.b16 %v463
        %v809 = vunpack.c.l.b16 %v464
        %v810 = vunpack.c.h.b16 %v464
        %v811 = vunpack.c.l.b16 %v465
        %v812 = vunpack.c.h.b16 %v465
        %v813 = vunpack.c.l.b16 %v466
        %v814 = vunpack.c.h.b16 %v466
        %v815 = vunpack.c.l.b16 %v467
        %v816 = vunpack.c.h.b16 %v467
        %v817 = vunpack.c.l.b16 %v468
        %v818 = vunpack.c.h.b16 %v468
        %v819 = vunpack.c.l.b16 %v469
        %v820 = vunpack.c.h.b16 %v469
        %v821 = vunpack.c.l.b16 %v470
        %v822 = vunpack.c.h.b16 %v470
        %v823 = vpack.c.b16 %v697, %v695
        %v824 = vpack.c.b16 %v698, %v696
        %v825 = vpack.c.b16 %v701, %v699
        %v826 = vpack.c.b16 %v702, %v700
        %v827 = vpack.c.b16 %v705, %v703
        %v828 = vpack.c.b16 %v706, %v704
        %v829 = vpack.c.b16 %v709, %v707
        %v830 = vpack.c.b16 %v710, %v708
        %v831 = vpack.c.b16 %v713, %v711
        %v832 = vpack.c.b16 %v714, %v712
        %v833 = vpack.c.b16 %v717, %v715
        %v834 = vpack.c.b16 %v718, %v716
        %v835 = vpack.c.b16 %v721, %v719
        %v836 = vpack.c.b16 %v722, %v720
        %v837 = vpack.c.b16 %v725, %v723
        %v838 = vpack.c.b16 %v726, %v724
        %v839 = vpack.c.b16 %v729, %v727
        %v840 = vpack.c.b16 %v730, %v728
        %v841 = vpack.c.b16 %v733, %v731
        %v842 = vpack.c.b16 %v734, %v732
        %v843 = vpack.c.b16 %v737, %v735
        %v844 = vpack.c.b16 %v738, %v736
        %v845 = vpack.c.b16 %v741, %v739
        %v846 = vpack.c.b16 %v742, %v740
        %v847 = vpack.c.b16 %v745, %v743
        %v848 = vpack.c.b16 %v746, %v744
        %v849 = vpack.c.b16 %v749, %v747
        %v850 = vpack.c.b16 %v750, %v748
        %v851 = vpack.c.b16 %v753, %v751
        %v852 = vpack.c.b16 %v754, %v752
        %v853 = vpack.c.b16 %v757, %v755
        %v854 = vpack.c.b16 %v758, %v756
        %v855 = vpack.c.b16 %v761, %v759
        %v856 = vpack.c.b16 %v762, %v760
        %v857 = vpack.c.b16 %v765, %v763
        %v858 = vpack.c.b16 %v766, %v764
        %v859 = vpack.c.b16 %v769, %v767
        %v860 = vpack.c.b16 %v770, %v768
        %v861 = vpack.c.b16 %v773, %v771
        %v862 = vpack.c.b16 %v774, %v772
        %v863 = vpack.c.b16 %v777, %v775
        %v864 = vpack.c.b16 %v778, %v776
        %v865 = vpack.c.b16 %v781, %v779
        %v866 = vpack.c.b16 %v782, %v780
        %v867 = vpack.c.b16 %v785, %v783
        %v868 = vpack.c.b16 %v786, %v784
        %v869 = vpack.c.b16 %v789, %v787
        %v870 = vpack.c.b16 %v790, %v788
        %v871 = vpack.c.b16 %v793, %v791
        %v872 = vpack.c.b16 %v794, %v792
        %v873 = vpack.c.b16 %v797, %v795
        %v874 = vpack.c.b16 %v798, %v796
        %v875 = vpack.c.b16 %v801, %v799
        %v876 = vpack.c.b16 %v802, %v800
        %v877 = vpack.c.b16 %v805, %v803
        %v878 = vpack.c.b16 %v806, %v804
        %v879 = vpack.c.b16 %v809, %v807
        %v880 = vpack.c.b16 %v810, %v808
        %v881 = vpack.c.b16 %v813, %v811
        %v882 = vpack.c.b16 %v814, %v812
        %v883 = vpack.c.b16 %v817, %v815
        %v884 = vpack.c.b16 %v818, %v816
        %v885 = vpack.c.b16 %v821, %v819
        %v886 = vpack.c.b16 %v822, %v820
        %951 = vmatprep.subr.bf16.mxu0 %v838
        %952 = vmatpush1.bf16.msra.mxu0 %v837
        %953 = vmatprep.subr.bf16.mxu0 %v836
        %954 = vmatpush1.bf16.msra.mxu0 %v835
        %955 = vmatprep.subr.bf16.mxu0 %v834
        %956 = vmatpush1.bf16.msra.mxu0 %v833
        %957 = vmatprep.subr.bf16.mxu0 %v832
        %958 = vmatpush1.bf16.msra.mxu0 %v831
        %959 = vmatprep.subr.bf16.mxu0 %v830
        %960 = vmatpush1.bf16.msra.mxu0 %v829
        %961 = vmatprep.subr.bf16.mxu0 %v828
        %962 = vmatpush1.bf16.msra.mxu0 %v827
        %963 = vmatprep.subr.bf16.mxu0 %v826
        %964 = vmatpush1.bf16.msra.mxu0 %v825
        %965 = vmatprep.subr.bf16.mxu0 %v824
        %966 = vmatpush1.bf16.msra.mxu0 %v823
        %967 = vmatprep.subr.bf16.mxu0 %v854
        %968 = vmatpush2.bf16.msra.mxu0 %v853
        %969 = vmatprep.subr.bf16.mxu0 %v852
        %970 = vmatpush2.bf16.msra.mxu0 %v851
        %971 = vmatprep.subr.bf16.mxu0 %v850
        %972 = vmatpush2.bf16.msra.mxu0 %v849
        %973 = vmatprep.subr.bf16.mxu0 %v848
        %974 = vmatpush2.bf16.msra.mxu0 %v847
        %975 = vmatprep.subr.bf16.mxu0 %v846
        %976 = vmatpush2.bf16.msra.mxu0 %v845
        %977 = vmatprep.subr.bf16.mxu0 %v844
        %978 = vmatpush2.bf16.msra.mxu0 %v843
        %979 = vmatprep.subr.bf16.mxu0 %v842
        %980 = vmatpush2.bf16.msra.mxu0 %v841
        %981 = vmatprep.subr.bf16.mxu0 %v840
        %982 = vmatpush2.bf16.msra.mxu0 %v839
        %983 = vmatprep.mubr.bf16.mxu0 %v568
        %984 = vmatmul.mubr.bf16.gmra.mxu0 %v567
        %v985 = vpop.f32.mrf.mxu0
        %v986 = vadd.f32 0.0, %v985
        %v987 = vpop.f32.mrf.mxu0
        %v988 = vadd.f32 0.0, %v987
        %v989 = vpop.f32.mrf.mxu0
        %v990 = vadd.f32 0.0, %v989
        %v991 = vpop.f32.mrf.mxu0
        %v992 = vadd.f32 0.0, %v991
        %993 = vmatprep.mubr.bf16.mxu0 %v572
        %994 = vmatmul.mubr.bf16.gmra.mxu0 %v571
        %v995 = vpop.f32.mrf.mxu0
        %v996 = vadd.f32 0.0, %v995
        %v997 = vpop.f32.mrf.mxu0
        %v998 = vadd.f32 0.0, %v997
        %v999 = vpop.f32.mrf.mxu0
        %v1000 = vadd.f32 0.0, %v999
        %v1001 = vpop.f32.mrf.mxu0
        %v1002 = vadd.f32 0.0, %v1001
        %1003 = vmatprep.mubr.bf16.mxu0 %v576
        %1004 = vmatmul.mubr.bf16.gmra.mxu0 %v575
        %v1005 = vpop.f32.mrf.mxu0
        %v1006 = vadd.f32 0.0, %v1005
        %v1007 = vpop.f32.mrf.mxu0
        %v1008 = vadd.f32 0.0, %v1007
        %v1009 = vpop.f32.mrf.mxu0
        %v1010 = vadd.f32 0.0, %v1009
        %v1011 = vpop.f32.mrf.mxu0
        %v1012 = vadd.f32 0.0, %v1011
        %1013 = vmatprep.mubr.bf16.mxu0 %v580
        %1014 = vmatmul.mubr.bf16.gmra.mxu0 %v579
        %v1015 = vpop.f32.mrf.mxu0
        %v1016 = vadd.f32 0.0, %v1015
        %v1017 = vpop.f32.mrf.mxu0
        %v1018 = vadd.f32 0.0, %v1017
        %v1019 = vpop.f32.mrf.mxu0
        %v1020 = vadd.f32 0.0, %v1019
        %v1021 = vpop.f32.mrf.mxu0
        %v1022 = vadd.f32 0.0, %v1021
        %1023 = vmatprep.mubr.bf16.mxu0 %v584
        %1024 = vmatmul.mubr.bf16.gmra.mxu0 %v583
        %v1025 = vpop.f32.mrf.mxu0
        %v1026 = vadd.f32 0.0, %v1025
        %v1027 = vpop.f32.mrf.mxu0
        %v1028 = vadd.f32 0.0, %v1027
        %v1029 = vpop.f32.mrf.mxu0
        %v1030 = vadd.f32 0.0, %v1029
        %v1031 = vpop.f32.mrf.mxu0
        %v1032 = vadd.f32 0.0, %v1031
        %1033 = vmatprep.mubr.bf16.mxu0 %v588
        %1034 = vmatmul.mubr.bf16.gmra.mxu0 %v587
        %v1035 = vpop.f32.mrf.mxu0
        %v1036 = vadd.f32 0.0, %v1035
        %v1037 = vpop.f32.mrf.mxu0
        %v1038 = vadd.f32 0.0, %v1037
        %v1039 = vpop.f32.mrf.mxu0
        %v1040 = vadd.f32 0.0, %v1039
        %v1041 = vpop.f32.mrf.mxu0
        %v1042 = vadd.f32 0.0, %v1041
        %1043 = vmatprep.mubr.bf16.mxu0 %v592
        %1044 = vmatmul.mubr.bf16.gmra.mxu0 %v591
        %v1045 = vpop.f32.mrf.mxu0
        %v1046 = vadd.f32 0.0, %v1045
        %v1047 = vpop.f32.mrf.mxu0
        %v1048 = vadd.f32 0.0, %v1047
        %v1049 = vpop.f32.mrf.mxu0
        %v1050 = vadd.f32 0.0, %v1049
        %v1051 = vpop.f32.mrf.mxu0
        %v1052 = vadd.f32 0.0, %v1051
        %1053 = vmatprep.mubr.bf16.mxu0 %v596
        %1054 = vmatmul.mubr.bf16.gmra.mxu0 %v595
        %v1055 = vpop.f32.mrf.mxu0
        %v1056 = vadd.f32 0.0, %v1055
        %v1057 = vpop.f32.mrf.mxu0
        %v1058 = vadd.f32 0.0, %v1057
        %v1059 = vpop.f32.mrf.mxu0
        %v1060 = vadd.f32 0.0, %v1059
        %v1061 = vpop.f32.mrf.mxu0
        %v1062 = vadd.f32 0.0, %v1061
        %1063 = vdwg.mxu0
        %1064 = vmatprep.subr.bf16.mxu0 %v870
        %1065 = vmatpush1.bf16.msra.mxu0 %v869
        %1066 = vmatprep.subr.bf16.mxu0 %v868
        %1067 = vmatpush1.bf16.msra.mxu0 %v867
        %1068 = vmatprep.subr.bf16.mxu0 %v866
        %1069 = vmatpush1.bf16.msra.mxu0 %v865
        %1070 = vmatprep.subr.bf16.mxu0 %v864
        %1071 = vmatpush1.bf16.msra.mxu0 %v863
        %1072 = vmatprep.subr.bf16.mxu0 %v862
        %1073 = vmatpush1.bf16.msra.mxu0 %v861
        %1074 = vmatprep.subr.bf16.mxu0 %v860
        %1075 = vmatpush1.bf16.msra.mxu0 %v859
        %1076 = vmatprep.subr.bf16.mxu0 %v858
        %1077 = vmatpush1.bf16.msra.mxu0 %v857
        %1078 = vmatprep.subr.bf16.mxu0 %v856
        %1079 = vmatpush1.bf16.msra.mxu0 %v855
        %1080 = vmatprep.subr.bf16.mxu0 %v886
        %1081 = vmatpush2.bf16.msra.mxu0 %v885
        %1082 = vmatprep.subr.bf16.mxu0 %v884
        %1083 = vmatpush2.bf16.msra.mxu0 %v883
        %1084 = vmatprep.subr.bf16.mxu0 %v882
        %1085 = vmatpush2.bf16.msra.mxu0 %v881
        %1086 = vmatprep.subr.bf16.mxu0 %v880
        %1087 = vmatpush2.bf16.msra.mxu0 %v879
        %1088 = vmatprep.subr.bf16.mxu0 %v878
        %1089 = vmatpush2.bf16.msra.mxu0 %v877
        %1090 = vmatprep.subr.bf16.mxu0 %v876
        %1091 = vmatpush2.bf16.msra.mxu0 %v875
        %1092 = vmatprep.subr.bf16.mxu0 %v874
        %1093 = vmatpush2.bf16.msra.mxu0 %v873
        %1094 = vmatprep.subr.bf16.mxu0 %v872
        %1095 = vmatpush2.bf16.msra.mxu0 %v871
        %1096 = vmatprep.mubr.bf16.mxu0 %v570
        %1097 = vmatmul.mubr.bf16.gmra.mxu0 %v569
        %v1098 = vpop.f32.mrf.mxu0
        %v1099 = vadd.f32 %v986, %v1098
        %v1100 = vpop.f32.mrf.mxu0
        %v1101 = vadd.f32 %v988, %v1100
        %v1102 = vpop.f32.mrf.mxu0
        %v1103 = vadd.f32 %v990, %v1102
        %v1104 = vpop.f32.mrf.mxu0
        %v1105 = vadd.f32 %v992, %v1104
        %1106 = vmatprep.mubr.bf16.mxu0 %v574
        %1107 = vmatmul.mubr.bf16.gmra.mxu0 %v573
        %v1108 = vpop.f32.mrf.mxu0
        %v1109 = vadd.f32 %v996, %v1108
        %v1110 = vpop.f32.mrf.mxu0
        %v1111 = vadd.f32 %v998, %v1110
        %v1112 = vpop.f32.mrf.mxu0
        %v1113 = vadd.f32 %v1000, %v1112
        %v1114 = vpop.f32.mrf.mxu0
        %v1115 = vadd.f32 %v1002, %v1114
        %1116 = vmatprep.mubr.bf16.mxu0 %v578
        %1117 = vmatmul.mubr.bf16.gmra.mxu0 %v577
        %v1118 = vpop.f32.mrf.mxu0
        %v1119 = vadd.f32 %v1006, %v1118
        %v1120 = vpop.f32.mrf.mxu0
        %v1121 = vadd.f32 %v1008, %v1120
        %v1122 = vpop.f32.mrf.mxu0
        %v1123 = vadd.f32 %v1010, %v1122
        %v1124 = vpop.f32.mrf.mxu0
        %v1125 = vadd.f32 %v1012, %v1124
        %1126 = vmatprep.mubr.bf16.mxu0 %v582
        %1127 = vmatmul.mubr.bf16.gmra.mxu0 %v581
        %v1128 = vpop.f32.mrf.mxu0
        %v1129 = vadd.f32 %v1016, %v1128
        %v1130 = vpop.f32.mrf.mxu0
        %v1131 = vadd.f32 %v1018, %v1130
        %v1132 = vpop.f32.mrf.mxu0
        %v1133 = vadd.f32 %v1020, %v1132
        %v1134 = vpop.f32.mrf.mxu0
        %v1135 = vadd.f32 %v1022, %v1134
        %1136 = vmatprep.mubr.bf16.mxu0 %v586
        %1137 = vmatmul.mubr.bf16.gmra.mxu0 %v585
        %v1138 = vpop.f32.mrf.mxu0
        %v1139 = vadd.f32 %v1026, %v1138
        %v1140 = vpop.f32.mrf.mxu0
        %v1141 = vadd.f32 %v1028, %v1140
        %v1142 = vpop.f32.mrf.mxu0
        %v1143 = vadd.f32 %v1030, %v1142
        %v1144 = vpop.f32.mrf.mxu0
        %v1145 = vadd.f32 %v1032, %v1144
        %1146 = vmatprep.mubr.bf16.mxu0 %v590
        %1147 = vmatmul.mubr.bf16.gmra.mxu0 %v589
        %v1148 = vpop.f32.mrf.mxu0
        %v1149 = vadd.f32 %v1036, %v1148
        %v1150 = vpop.f32.mrf.mxu0
        %v1151 = vadd.f32 %v1038, %v1150
        %v1152 = vpop.f32.mrf.mxu0
        %v1153 = vadd.f32 %v1040, %v1152
        %v1154 = vpop.f32.mrf.mxu0
        %v1155 = vadd.f32 %v1042, %v1154
        %1156 = vmatprep.mubr.bf16.mxu0 %v594
        %1157 = vmatmul.mubr.bf16.gmra.mxu0 %v593
        %v1158 = vpop.f32.mrf.mxu0
        %v1159 = vadd.f32 %v1046, %v1158
        %v1160 = vpop.f32.mrf.mxu0
        %v1161 = vadd.f32 %v1048, %v1160
        %v1162 = vpop.f32.mrf.mxu0
        %v1163 = vadd.f32 %v1050, %v1162
        %v1164 = vpop.f32.mrf.mxu0
        %v1165 = vadd.f32 %v1052, %v1164
        %1166 = vmatprep.mubr.bf16.mxu0 %v598
        %1167 = vmatmul.mubr.bf16.gmra.mxu0 %v597
        %v1168 = vpop.f32.mrf.mxu0
        %v1169 = vadd.f32 %v1056, %v1168
        %v1170 = vpop.f32.mrf.mxu0
        %v1171 = vadd.f32 %v1058, %v1170
        %v1172 = vpop.f32.mrf.mxu0
        %v1173 = vadd.f32 %v1060, %v1172
        %v1174 = vpop.f32.mrf.mxu0
        %v1175 = vadd.f32 %v1062, %v1174
        %1176 = vdwg.mxu0
        %v1177 = vadd.f32 %v343, %v1099
        %v1178 = vadd.f32 %v344, %v1101
        %v1179 = vadd.f32 %v345, %v1103
        %v1180 = vadd.f32 %v346, %v1105
        %v1181 = vadd.f32 %v347, %v1109
        %v1182 = vadd.f32 %v348, %v1111
        %v1183 = vadd.f32 %v349, %v1113
        %v1184 = vadd.f32 %v350, %v1115
        %v1185 = vadd.f32 %v351, %v1119
        %v1186 = vadd.f32 %v352, %v1121
        %v1187 = vadd.f32 %v353, %v1123
        %v1188 = vadd.f32 %v354, %v1125
        %v1189 = vadd.f32 %v355, %v1129
        %v1190 = vadd.f32 %v356, %v1131
        %v1191 = vadd.f32 %v357, %v1133
        %v1192 = vadd.f32 %v358, %v1135
        %v1193 = vadd.f32 %v359, %v1139
        %v1194 = vadd.f32 %v360, %v1141
        %v1195 = vadd.f32 %v361, %v1143
        %v1196 = vadd.f32 %v362, %v1145
        %v1197 = vadd.f32 %v363, %v1149
        %v1198 = vadd.f32 %v364, %v1151
        %v1199 = vadd.f32 %v365, %v1153
        %v1200 = vadd.f32 %v366, %v1155
        %v1201 = vadd.f32 %v367, %v1159
        %v1202 = vadd.f32 %v368, %v1161
        %v1203 = vadd.f32 %v369, %v1163
        %v1204 = vadd.f32 %v370, %v1165
        %v1205 = vadd.f32 %v371, %v1169
        %v1206 = vadd.f32 %v372, %v1171
        %v1207 = vadd.f32 %v373, %v1173
        %v1208 = vadd.f32 %v374, %v1175
        %1209 = vst [vmem:[#allocation2] sm:$0xff] %v1177
        %1210 = vst [vmem:[#allocation2 + $0x8] sm:$0xff] %v1178
        %1211 = vst [vmem:[#allocation2 + $0x10] sm:$0xff] %v1179
        %1212 = vst [vmem:[#allocation2 + $0x18] sm:$0xff] %v1180
        %1213 = vst [vmem:[#allocation2 + $0x20] sm:$0xff] %v1181
        %1214 = vst [vmem:[#allocation2 + $0x28] sm:$0xff] %v1182
        %1215 = vst [vmem:[#allocation2 + $0x30] sm:$0xff] %v1183
        %1216 = vst [vmem:[#allocation2 + $0x38] sm:$0xff] %v1184
        %1217 = vst [vmem:[#allocation2 + $0x40] sm:$0xff] %v1185
        %1218 = vst [vmem:[#allocation2 + $0x48] sm:$0xff] %v1186
        %1219 = vst [vmem:[#allocation2 + $0x50] sm:$0xff] %v1187
        %1220 = vst [vmem:[#allocation2 + $0x58] sm:$0xff] %v1188
        %1221 = vst [vmem:[#allocation2 + $0x60] sm:$0xff] %v1189
        %1222 = vst [vmem:[#allocation2 + $0x68] sm:$0xff] %v1190
        %1223 = vst [vmem:[#allocation2 + $0x70] sm:$0xff] %v1191
        %1224 = vst [vmem:[#allocation2 + $0x78] sm:$0xff] %v1192
        %1225 = vst [vmem:[#allocation2 + $0x80] sm:$0xff] %v1193
        %1226 = vst [vmem:[#allocation2 + $0x88] sm:$0xff] %v1194
        %1227 = vst [vmem:[#allocation2 + $0x90] sm:$0xff] %v1195
        %1228 = vst [vmem:[#allocation2 + $0x98] sm:$0xff] %v1196
        %1229 = vst [vmem:[#allocation2 + $0xa0] sm:$0xff] %v1197
        %1230 = vst [vmem:[#allocation2 + $0xa8] sm:$0xff] %v1198
        %1231 = vst [vmem:[#allocation2 + $0xb0] sm:$0xff] %v1199
        %1232 = vst [vmem:[#allocation2 + $0xb8] sm:$0xff] %v1200
        %1233 = vst [vmem:[#allocation2 + $0xc0] sm:$0xff] %v1201
        %1234 = vst [vmem:[#allocation2 + $0xc8] sm:$0xff] %v1202
        %1235 = vst [vmem:[#allocation2 + $0xd0] sm:$0xff] %v1203
        %1236 = vst [vmem:[#allocation2 + $0xd8] sm:$0xff] %v1204
        %1237 = vst [vmem:[#allocation2 + $0xe0] sm:$0xff] %v1205
        %1238 = vst [vmem:[#allocation2 + $0xe8] sm:$0xff] %v1206
        %1239 = vst [vmem:[#allocation2 + $0xf0] sm:$0xff] %v1207
        %1240 = vst [vmem:[#allocation2 + $0xf8] sm:$0xff] %v1208
        %p1241 = scmp.eq.s32.totalorder %s20, 3
        // Predicated region
        $region56: #{discriminator_forward.15} parent=46 // pred_check
          %p1242 = pneg %p1241
        $region57: #{discriminator_forward.15} parent=46 // pred_check_branch
          %1244 = sbr.rel (%p1242) target = $region59
        $region58: #{discriminator_forward.15} parent=46 // pred_region
          %v1245 = vld [vmem:[#allocation2] sm:$0xff]
          %v1246 = vld [vmem:[#allocation2 + $0x8] sm:$0xff]
          %v1247 = vld [vmem:[#allocation2 + $0x10] sm:$0xff]
          %v1248 = vld [vmem:[#allocation2 + $0x18] sm:$0xff]
          %v1249 = vld [vmem:[#allocation2 + $0x20] sm:$0xff]
          %v1250 = vld [vmem:[#allocation2 + $0x28] sm:$0xff]
          %v1251 = vld [vmem:[#allocation2 + $0x30] sm:$0xff]
          %v1252 = vld [vmem:[#allocation2 + $0x38] sm:$0xff]
          %v1253 = vld [vmem:[#allocation2 + $0x40] sm:$0xff]
          %v1254 = vld [vmem:[#allocation2 + $0x48] sm:$0xff]
          %v1255 = vld [vmem:[#allocation2 + $0x50] sm:$0xff]
          %v1256 = vld [vmem:[#allocation2 + $0x58] sm:$0xff]
          %v1257 = vld [vmem:[#allocation2 + $0x60] sm:$0xff]
          %v1258 = vld [vmem:[#allocation2 + $0x68] sm:$0xff]
          %v1259 = vld [vmem:[#allocation2 + $0x70] sm:$0xff]
          %v1260 = vld [vmem:[#allocation2 + $0x78] sm:$0xff]
          %v1261 = vld [vmem:[#allocation2 + $0x80] sm:$0xff]
          %v1262 = vld [vmem:[#allocation2 + $0x88] sm:$0xff]
          %v1263 = vld [vmem:[#allocation2 + $0x90] sm:$0xff]
          %v1264 = vld [vmem:[#allocation2 + $0x98] sm:$0xff]
          %v1265 = vld [vmem:[#allocation2 + $0xa0] sm:$0xff]
          %v1266 = vld [vmem:[#allocation2 + $0xa8] sm:$0xff]
          %v1267 = vld [vmem:[#allocation2 + $0xb0] sm:$0xff]
          %v1268 = vld [vmem:[#allocation2 + $0xb8] sm:$0xff]
          %v1269 = vld [vmem:[#allocation2 + $0xc0] sm:$0xff]
          %v1270 = vld [vmem:[#allocation2 + $0xc8] sm:$0xff]
          %v1271 = vld [vmem:[#allocation2 + $0xd0] sm:$0xff]
          %v1272 = vld [vmem:[#allocation2 + $0xd8] sm:$0xff]
          %v1273 = vld [vmem:[#allocation2 + $0xe0] sm:$0xff]
          %v1274 = vld [vmem:[#allocation2 + $0xe8] sm:$0xff]
          %v1275 = vld [vmem:[#allocation2 + $0xf0] sm:$0xff]
          %v1276 = vld [vmem:[#allocation2 + $0xf8] sm:$0xff]
          %1277 = vst [vmem:[%s304] sm:$0xff] %v1245
          %1278 = vst [vmem:[%s304 + $0x8] sm:$0xff] %v1246
          %1279 = vst [vmem:[%s304 + $0x10] sm:$0xff] %v1247
          %1280 = vst [vmem:[%s304 + $0x18] sm:$0xff] %v1248
          %1281 = vst [vmem:[%s304 + $0x20] sm:$0xff] %v1249
          %1282 = vst [vmem:[%s304 + $0x28] sm:$0xff] %v1250
          %1283 = vst [vmem:[%s304 + $0x30] sm:$0xff] %v1251
          %1284 = vst [vmem:[%s304 + $0x38] sm:$0xff] %v1252
          %1285 = vst [vmem:[%s304 + $0x40] sm:$0xff] %v1253
          %1286 = vst [vmem:[%s304 + $0x48] sm:$0xff] %v1254
          %1287 = vst [vmem:[%s304 + $0x50] sm:$0xff] %v1255
          %1288 = vst [vmem:[%s304 + $0x58] sm:$0xff] %v1256
          %1289 = vst [vmem:[%s304 + $0x60] sm:$0xff] %v1257
          %1290 = vst [vmem:[%s304 + $0x68] sm:$0xff] %v1258
          %1291 = vst [vmem:[%s304 + $0x70] sm:$0xff] %v1259
          %1292 = vst [vmem:[%s304 + $0x78] sm:$0xff] %v1260
          %1293 = vst [vmem:[%s304 + $0x80] sm:$0xff] %v1261
          %1294 = vst [vmem:[%s304 + $0x88] sm:$0xff] %v1262
          %1295 = vst [vmem:[%s304 + $0x90] sm:$0xff] %v1263
          %1296 = vst [vmem:[%s304 + $0x98] sm:$0xff] %v1264
          %1297 = vst [vmem:[%s304 + $0xa0] sm:$0xff] %v1265
          %1298 = vst [vmem:[%s304 + $0xa8] sm:$0xff] %v1266
          %1299 = vst [vmem:[%s304 + $0xb0] sm:$0xff] %v1267
          %1300 = vst [vmem:[%s304 + $0xb8] sm:$0xff] %v1268
          %1301 = vst [vmem:[%s304 + $0xc0] sm:$0xff] %v1269
          %1302 = vst [vmem:[%s304 + $0xc8] sm:$0xff] %v1270
          %1303 = vst [vmem:[%s304 + $0xd0] sm:$0xff] %v1271
          %1304 = vst [vmem:[%s304 + $0xd8] sm:$0xff] %v1272
          %1305 = vst [vmem:[%s304 + $0xe0] sm:$0xff] %v1273
          %1306 = vst [vmem:[%s304 + $0xe8] sm:$0xff] %v1274
          %1307 = vst [vmem:[%s304 + $0xf0] sm:$0xff] %v1275
          %1308 = vst [vmem:[%s304 + $0xf8] sm:$0xff] %v1276
        $region59: #{discriminator_forward.15} parent=46 // pred_fallthru
          _
        %s1309 = smul.u32 16, %s18
        %s1310 = smul.u32 2, %s19
        %p1311 = scmp.lt.s32.totalorder %s1309, 15
        %s1312 = scalar_select %p1311, %s1309, 15
        %p1313 = scmp.lt.s32.totalorder %s1310, 1
        %s1314 = scalar_select %p1313, %s1310, 1
        %s1315 = smul.addr %s1312, 2
        %s1316 = sadd.s32 %s1314, %s1315
        %s1317 = smul.addr %s1316, 8
        %s1318 = scalar_lea.vmem %s2, %s1317
        // Predicated region
        $region60: #{discriminator_forward.15} parent=46 // pred_check
          %p1319 = pneg %p108
        $region61: #{discriminator_forward.15} parent=46 // pred_check_branch
          %1321 = sbr.rel (%p1319) target = $region63
        $region62: #{discriminator_forward.15} parent=46 // pred_region
          %s1322 = smul.u32 16, %s18
          %s1323 = smul.u32 2, %s19
        $region63: #{discriminator_forward.15} parent=46 // pred_fallthru
          _
        // Predicated region
        $region64: #{discriminator_forward.15} parent=46 // pred_check
          %p1324 = pneg %p108
        $region65: #{discriminator_forward.15} parent=46 // pred_check_branch
          %1326 = sbr.rel (%p1324) target = $region67
        $region66: #{discriminator_forward.15} parent=46 // pred_region
          %s1327 = smul.u32 16, %s18
          %s1328 = smul.u32 2, %s19
          %p1329 = scmp.lt.s32.totalorder %s1327, 15
          %s1330 = scalar_select %p1329, %s1327, 15
          %p1331 = scmp.lt.s32.totalorder %s1328, 1
          %s1332 = scalar_select %p1331, %s1328, 1
          %s1333 = smul.addr %s1330, 2
          %s1334 = sadd.s32 %s1332, %s1333
          %s1335 = smul.addr %s1334, 8
          %s1336 = scalar_lea.vmem %s2, %s1335
        $region67: #{discriminator_forward.15} parent=46 // pred_fallthru
          _
      $region47: #{discriminator_forward.15} parent=5 // pred_fallthru
        _
      %p1337 = scmp.le.s32.totalorder 2, %s8
      // Predicated region
      $region68: #{discriminator_forward.15} parent=5 // pred_check
        %p1338 = pneg %p1337
      $region69: #{discriminator_forward.15} parent=5 // pred_check_branch
        %1340 = sbr.rel (%p1338) target = $region71
      $region70: #{discriminator_forward.15} parent=5 // pred_region
        %s1341 = ssub.s32 %s8, 2
      $region71: #{discriminator_forward.15} parent=5 // pred_fallthru
        _
    $region6: #{discriminator_forward.15} parent=1 // loop_footer
      %s12 = sadd.s32 1, %s8
    $region7: #{discriminator_forward.15} parent=1 // loop_footer_branch
      %7 = sbr.rel target = $region3
    $region8: #{discriminator_forward.15} parent=1 // loop_exit
      _

// kernel: discriminator_forward.16
$region0: #{discriminator_forward.16}
  #allocation0 [shape = 'u32[]', space=smem, size = 0x4, offset = 0x4, fixed_abs, tag = 'smem constant byte address 0x4 - core index']
  #allocation1 [shape = 'u32[144,128]{1,0:T(1,128)}', space=vmem, size = 0x12000, scoped, tag = 'internal scratch']
  %s0 = inlined_call_operand.vmem [shape: f32[128,256], index: 0, kind: input, shape index: {}]
  %s1 = inlined_call_operand.vmem [shape: f32[1,256], index: 1, kind: output, shape index: {0}]
  %s2 = inlined_call_operand.vmem [shape: f32[1,256], index: 2, kind: output, shape index: {1}]
  %3 = xla_tuple %s1, %s2
  %s4 = sld [smem:[#allocation0]]
  $region26: #{discriminator_forward.16} parent=0
    _
  %s6 = ssub.s32 1, %s4
  %s7 = scalar_select 0, %s6, %s4
  // Predicated region
  $region2: #{discriminator_forward.16} parent=0 // pred_check
    _
  $region3: #{discriminator_forward.16} parent=0 // pred_check_branch
    %9 = sbr.rel (0) target = $region5
  $region4: #{discriminator_forward.16} parent=0 // pred_region
    _
  $region5: #{discriminator_forward.16} parent=0 // pred_fallthru
    _
  %p10 = scmp.eq.s32.totalorder 0, 0
  // Predicated region
  $region6: #{discriminator_forward.16} parent=0 // pred_check
    %p11 = pneg %p10
  $region7: #{discriminator_forward.16} parent=0 // pred_check_branch
    %13 = sbr.rel (%p11) target = $region9
  $region8: #{discriminator_forward.16} parent=0 // pred_region
    %v14 = vlaneseq
    %vm15 = vcmp.ge.s32.totalorder %v14, 0
    %vm16 = vcmp.lt.s32.totalorder %v14, 256
    %vm17 = vmand %vm15, %vm16
    %18 = vst.msk [vmem:[%s1] sm:$0x3] %vm17, 0.0
    %19 = vst.msk [vmem:[%s2] sm:$0x3] %vm17, 0.0
  $region9: #{discriminator_forward.16} parent=0 // pred_fallthru
    _
  %v20 = vld [vmem:[%s0] sm:$0xff]
  %v21 = vld [vmem:[%s0 + $0x8] sm:$0xff]
  %v22 = vld [vmem:[%s0 + $0x10] sm:$0xff]
  %v23 = vld [vmem:[%s0 + $0x18] sm:$0xff]
  %v24 = vld [vmem:[%s0 + $0x20] sm:$0xff]
  %v25 = vld [vmem:[%s0 + $0x28] sm:$0xff]
  %v26 = vld [vmem:[%s0 + $0x30] sm:$0xff]
  %v27 = vld [vmem:[%s0 + $0x38] sm:$0xff]
  %v28 = vld [vmem:[%s0 + $0x40] sm:$0xff]
  %v29 = vld [vmem:[%s0 + $0x48] sm:$0xff]
  %v30 = vld [vmem:[%s0 + $0x50] sm:$0xff]
  %v31 = vld [vmem:[%s0 + $0x58] sm:$0xff]
  %v32 = vld [vmem:[%s0 + $0x60] sm:$0xff]
  %v33 = vld [vmem:[%s0 + $0x68] sm:$0xff]
  %v34 = vld [vmem:[%s0 + $0x70] sm:$0xff]
  %v35 = vld [vmem:[%s0 + $0x78] sm:$0xff]
  %v36 = vld [vmem:[%s0 + $0x80] sm:$0xff]
  %v37 = vld [vmem:[%s0 + $0x88] sm:$0xff]
  %v38 = vld [vmem:[%s0 + $0x90] sm:$0xff]
  %v39 = vld [vmem:[%s0 + $0x98] sm:$0xff]
  %v40 = vld [vmem:[%s0 + $0xa0] sm:$0xff]
  %v41 = vld [vmem:[%s0 + $0xa8] sm:$0xff]
  %v42 = vld [vmem:[%s0 + $0xb0] sm:$0xff]
  %v43 = vld [vmem:[%s0 + $0xb8] sm:$0xff]
  %v44 = vld [vmem:[%s0 + $0xc0] sm:$0xff]
  %v45 = vld [vmem:[%s0 + $0xc8] sm:$0xff]
  %v46 = vld [vmem:[%s0 + $0xd0] sm:$0xff]
  %v47 = vld [vmem:[%s0 + $0xd8] sm:$0xff]
  %v48 = vld [vmem:[%s0 + $0xe0] sm:$0xff]
  %v49 = vld [vmem:[%s0 + $0xe8] sm:$0xff]
  %v50 = vld [vmem:[%s0 + $0xf0] sm:$0xff]
  %v51 = vld [vmem:[%s0 + $0xf8] sm:$0xff]
  %v52 = vld [vmem:[%s1] sm:$0x3]
  %v53 = vadd.f32 %v20, %v22
  %v54 = vadd.f32 %v53, %v24
  %v55 = vadd.f32 %v54, %v26
  %v56 = vadd.f32 %v55, %v28
  %v57 = vadd.f32 %v56, %v30
  %v58 = vadd.f32 %v57, %v32
  %v59 = vadd.f32 %v58, %v34
  %v60 = vadd.f32 %v59, %v36
  %v61 = vadd.f32 %v60, %v38
  %v62 = vadd.f32 %v61, %v40
  %v63 = vadd.f32 %v62, %v42
  %v64 = vadd.f32 %v63, %v44
  %v65 = vadd.f32 %v64, %v46
  %v66 = vadd.f32 %v65, %v48
  %v67 = vadd.f32 %v66, %v50
  %v68 = vrot.slane %v67, 4
  %v69 = vadd.f32 %v67, %v68
  %v70 = vrot.slane %v69, 2
  %v71 = vadd.f32 %v69, %v70
  %v72 = vrot.slane %v71, 1
  %v73 = vadd.f32 %v71, %v72
  %v74 = vadd.f32 %v21, %v23
  %v75 = vadd.f32 %v74, %v25
  %v76 = vadd.f32 %v75, %v27
  %v77 = vadd.f32 %v76, %v29
  %v78 = vadd.f32 %v77, %v31
  %v79 = vadd.f32 %v78, %v33
  %v80 = vadd.f32 %v79, %v35
  %v81 = vadd.f32 %v80, %v37
  %v82 = vadd.f32 %v81, %v39
  %v83 = vadd.f32 %v82, %v41
  %v84 = vadd.f32 %v83, %v43
  %v85 = vadd.f32 %v84, %v45
  %v86 = vadd.f32 %v85, %v47
  %v87 = vadd.f32 %v86, %v49
  %v88 = vadd.f32 %v87, %v51
  %v89 = vrot.slane %v88, 4
  %v90 = vadd.f32 %v88, %v89
  %v91 = vrot.slane %v90, 2
  %v92 = vadd.f32 %v90, %v91
  %v93 = vrot.slane %v92, 1
  %v94 = vadd.f32 %v92, %v93
  %v97 = vcombine.low %v73, %v94
  %v99 = vunpack.c.l.s4 1966171168
  %v100 = vunpack.c.0.s8 %v99
  %v101 = vlaneseq
  %v102 = vshrl.u32 %v101, 7
  %v103 = vsub.s32 %v100, %v102
  %v104 = vrot.slane %v97, %v103
  %v106 = vunpack.c.l.s4 1966171168
  %v107 = vunpack.c.0.s8 %v106
  %v108 = vlaneseq
  %v109 = vshrl.u32 %v108, 7
  %v110 = vsub.s32 %v107, %v109
  %v111 = vrot.slane %v104, %v110
  %v113 = vadd.f32 %v52, %v111
  %v114 = vlaneseq
  %vm115 = vcmp.ge.s32.totalorder %v114, 0
  %vm116 = vcmp.lt.s32.totalorder %v114, 256
  %vm117 = vmand %vm115, %vm116
  %118 = vst.msk [vmem:[%s1] sm:$0x3] %vm117, %v113
  %v119 = vld [vmem:[%s2] sm:$0x3]
  %v120 = vmul.f32 %v20, %v20
  %v121 = vmul.f32 %v21, %v21
  %v122 = vmul.f32 %v22, %v22
  %v123 = vmul.f32 %v23, %v23
  %v124 = vmul.f32 %v24, %v24
  %v125 = vmul.f32 %v25, %v25
  %v126 = vmul.f32 %v26, %v26
  %v127 = vmul.f32 %v27, %v27
  %v128 = vmul.f32 %v28, %v28
  %v129 = vmul.f32 %v29, %v29
  %v130 = vmul.f32 %v30, %v30
  %v131 = vmul.f32 %v31, %v31
  %v132 = vmul.f32 %v32, %v32
  %v133 = vmul.f32 %v33, %v33
  %v134 = vmul.f32 %v34, %v34
  %v135 = vmul.f32 %v35, %v35
  %v136 = vmul.f32 %v36, %v36
  %v137 = vmul.f32 %v37, %v37
  %v138 = vmul.f32 %v38, %v38
  %v139 = vmul.f32 %v39, %v39
  %v140 = vmul.f32 %v40, %v40
  %v141 = vmul.f32 %v41, %v41
  %v142 = vmul.f32 %v42, %v42
  %v143 = vmul.f32 %v43, %v43
  %v144 = vmul.f32 %v44, %v44
  %v145 = vmul.f32 %v45, %v45
  %v146 = vmul.f32 %v46, %v46
  %v147 = vmul.f32 %v47, %v47
  %v148 = vmul.f32 %v48, %v48
  %v149 = vmul.f32 %v49, %v49
  %v150 = vmul.f32 %v50, %v50
  %v151 = vmul.f32 %v51, %v51
  %v152 = vadd.f32 %v120, %v122
  %v153 = vadd.f32 %v152, %v124
  %v154 = vadd.f32 %v153, %v126
  %v155 = vadd.f32 %v154, %v128
  %v156 = vadd.f32 %v155, %v130
  %v157 = vadd.f32 %v156, %v132
  %v158 = vadd.f32 %v157, %v134
  %v159 = vadd.f32 %v158, %v136
  %v160 = vadd.f32 %v159, %v138
  %v161 = vadd.f32 %v160, %v140
  %v162 = vadd.f32 %v161, %v142
  %v163 = vadd.f32 %v162, %v144
  %v164 = vadd.f32 %v163, %v146
  %v165 = vadd.f32 %v164, %v148
  %v166 = vadd.f32 %v165, %v150
  %v167 = vrot.slane %v166, 4
  %v168 = vadd.f32 %v166, %v167
  %v169 = vrot.slane %v168, 2
  %v170 = vadd.f32 %v168, %v169
  %v171 = vrot.slane %v170, 1
  %v172 = vadd.f32 %v170, %v171
  %v173 = vadd.f32 %v121, %v123
  %v174 = vadd.f32 %v173, %v125
  %v175 = vadd.f32 %v174, %v127
  %v176 = vadd.f32 %v175, %v129
  %v177 = vadd.f32 %v176, %v131
  %v178 = vadd.f32 %v177, %v133
  %v179 = vadd.f32 %v178, %v135
  %v180 = vadd.f32 %v179, %v137
  %v181 = vadd.f32 %v180, %v139
  %v182 = vadd.f32 %v181, %v141
  %v183 = vadd.f32 %v182, %v143
  %v184 = vadd.f32 %v183, %v145
  %v185 = vadd.f32 %v184, %v147
  %v186 = vadd.f32 %v185, %v149
  %v187 = vadd.f32 %v186, %v151
  %v188 = vrot.slane %v187, 4
  %v189 = vadd.f32 %v187, %v188
  %v190 = vrot.slane %v189, 2
  %v191 = vadd.f32 %v189, %v190
  %v192 = vrot.slane %v191, 1
  %v193 = vadd.f32 %v191, %v192
  %v196 = vcombine.low %v172, %v193
  %v198 = vunpack.c.l.s4 1966171168
  %v199 = vunpack.c.0.s8 %v198
  %v200 = vlaneseq
  %v201 = vshrl.u32 %v200, 7
  %v202 = vsub.s32 %v199, %v201
  %v203 = vrot.slane %v196, %v202
  %v205 = vunpack.c.l.s4 1966171168
  %v206 = vunpack.c.0.s8 %v205
  %v207 = vlaneseq
  %v208 = vshrl.u32 %v207, 7
  %v209 = vsub.s32 %v206, %v208
  %v210 = vrot.slane %v203, %v209
  %v212 = vadd.f32 %v119, %v210
  %213 = vst.msk [vmem:[%s2] sm:$0x3] %vm117, %v212
  // Predicated region
  $region10: #{discriminator_forward.16} parent=0 // pred_check
    _
  $region11: #{discriminator_forward.16} parent=0 // pred_check_branch
    %215 = sbr.rel (0) target = $region13
  $region12: #{discriminator_forward.16} parent=0 // pred_region
    _
  $region13: #{discriminator_forward.16} parent=0 // pred_fallthru
    _
  // Predicated region
  $region14: #{discriminator_forward.16} parent=0 // pred_check
    _
  $region15: #{discriminator_forward.16} parent=0 // pred_check_branch
    %217 = sbr.rel (0) target = $region17
  $region16: #{discriminator_forward.16} parent=0 // pred_region
    _
  $region17: #{discriminator_forward.16} parent=0 // pred_fallthru
    _
  // Predicated region
  $region18: #{discriminator_forward.16} parent=0 // pred_check
    _
  $region19: #{discriminator_forward.16} parent=0 // pred_check_branch
    %219 = sbr.rel (0) target = $region21
  $region20: #{discriminator_forward.16} parent=0 // pred_region
    _
  $region21: #{discriminator_forward.16} parent=0 // pred_fallthru
    _
  // Predicated region
  $region22: #{discriminator_forward.16} parent=0 // pred_check
    _
  $region23: #{discriminator_forward.16} parent=0 // pred_check_branch
    %221 = sbr.rel (0) target = $region25
  $region24: #{discriminator_forward.16} parent=0 // pred_region
    _
  $region25: #{discriminator_forward.16} parent=0 // pred_fallthru
    _

// kernel: discriminator_forward.17
$region0: #{discriminator_forward.17}
  #allocation0 [shape = 'u32[]', space=smem, size = 0x4, offset = 0x4, fixed_abs, tag = 'smem constant byte address 0x4 - core index']
  #allocation1 [shape = 'u32[144,128]{1,0:T(1,128)}', space=vmem, size = 0x12000, scoped, tag = 'internal scratch']
  %s0 = inlined_call_operand.vmem [shape: f32[128,256], index: 0, kind: input, shape index: {}]
  %s1 = inlined_call_operand.vmem [shape: f32[1,256], index: 1, kind: input, shape index: {}]
  %s2 = inlined_call_operand.vmem [shape: f32[1,256], index: 2, kind: input, shape index: {}]
  %s3 = inlined_call_operand.vmem [shape: f32[128,256], index: 3, kind: output, shape index: {}]
  %s4 = sld [smem:[#allocation0]]
  $region22: #{discriminator_forward.17} parent=0
    _
  %s6 = ssub.s32 1, %s4
  %s7 = scalar_select 0, %s6, %s4
  // Predicated region
  $region2: #{discriminator_forward.17} parent=0 // pred_check
    _
  $region3: #{discriminator_forward.17} parent=0 // pred_check_branch
    %9 = sbr.rel (0) target = $region5
  $region4: #{discriminator_forward.17} parent=0 // pred_region
    _
  $region5: #{discriminator_forward.17} parent=0 // pred_fallthru
    _
  // Predicated region
  $region6: #{discriminator_forward.17} parent=0 // pred_check
    _
  $region7: #{discriminator_forward.17} parent=0 // pred_check_branch
    %11 = sbr.rel (0) target = $region9
  $region8: #{discriminator_forward.17} parent=0 // pred_region
    _
  $region9: #{discriminator_forward.17} parent=0 // pred_fallthru
    _
  // Predicated region
  $region10: #{discriminator_forward.17} parent=0 // pred_check
    _
  $region11: #{discriminator_forward.17} parent=0 // pred_check_branch
    %13 = sbr.rel (0) target = $region13
  $region12: #{discriminator_forward.17} parent=0 // pred_region
    _
  $region13: #{discriminator_forward.17} parent=0 // pred_fallthru
    _
  %v14 = vld [vmem:[%s0] sm:$0xff]
  %v15 = vld [vmem:[%s0 + $0x8] sm:$0xff]
  %v16 = vld [vmem:[%s0 + $0x10] sm:$0xff]
  %v17 = vld [vmem:[%s0 + $0x18] sm:$0xff]
  %v18 = vld [vmem:[%s0 + $0x20] sm:$0xff]
  %v19 = vld [vmem:[%s0 + $0x28] sm:$0xff]
  %v20 = vld [vmem:[%s0 + $0x30] sm:$0xff]
  %v21 = vld [vmem:[%s0 + $0x38] sm:$0xff]
  %v22 = vld [vmem:[%s0 + $0x40] sm:$0xff]
  %v23 = vld [vmem:[%s0 + $0x48] sm:$0xff]
  %v24 = vld [vmem:[%s0 + $0x50] sm:$0xff]
  %v25 = vld [vmem:[%s0 + $0x58] sm:$0xff]
  %v26 = vld [vmem:[%s0 + $0x60] sm:$0xff]
  %v27 = vld [vmem:[%s0 + $0x68] sm:$0xff]
  %v28 = vld [vmem:[%s0 + $0x70] sm:$0xff]
  %v29 = vld [vmem:[%s0 + $0x78] sm:$0xff]
  %v30 = vld [vmem:[%s0 + $0x80] sm:$0xff]
  %v31 = vld [vmem:[%s0 + $0x88] sm:$0xff]
  %v32 = vld [vmem:[%s0 + $0x90] sm:$0xff]
  %v33 = vld [vmem:[%s0 + $0x98] sm:$0xff]
  %v34 = vld [vmem:[%s0 + $0xa0] sm:$0xff]
  %v35 = vld [vmem:[%s0 + $0xa8] sm:$0xff]
  %v36 = vld [vmem:[%s0 + $0xb0] sm:$0xff]
  %v37 = vld [vmem:[%s0 + $0xb8] sm:$0xff]
  %v38 = vld [vmem:[%s0 + $0xc0] sm:$0xff]
  %v39 = vld [vmem:[%s0 + $0xc8] sm:$0xff]
  %v40 = vld [vmem:[%s0 + $0xd0] sm:$0xff]
  %v41 = vld [vmem:[%s0 + $0xd8] sm:$0xff]
  %v42 = vld [vmem:[%s0 + $0xe0] sm:$0xff]
  %v43 = vld [vmem:[%s0 + $0xe8] sm:$0xff]
  %v44 = vld [vmem:[%s0 + $0xf0] sm:$0xff]
  %v45 = vld [vmem:[%s0 + $0xf8] sm:$0xff]
  %v46 = vld [vmem:[%s1] sm:$0x3]
  %v47 = vmul.f32 %v46, 0.0078125
  %v48 = vld [vmem:[%s2] sm:$0x3]
  %v49 = vmul.f32 %v48, 0.0078125
  %v50 = vmul.f32 %v47, %v47
  %v51 = vsub.f32 %v49, %v50
  %v53 = vlaneseq
  %v54 = vshrl.u32 %v53, 7
  %v55 = vsub.s32 0, %v54
  %v56 = vrot.slane %v47, %v55
  %v57 = vlaneseq
  %v58 = vshrl.u32 %v57, 7
  %v59 = vsub.s32 1, %v58
  %v60 = vrot.slane %v47, %v59
  %v63 = vsub.f32 %v14, %v56
  %v64 = vsub.f32 %v15, %v60
  %v65 = vsub.f32 %v16, %v56
  %v66 = vsub.f32 %v17, %v60
  %v67 = vsub.f32 %v18, %v56
  %v68 = vsub.f32 %v19, %v60
  %v69 = vsub.f32 %v20, %v56
  %v70 = vsub.f32 %v21, %v60
  %v71 = vsub.f32 %v22, %v56
  %v72 = vsub.f32 %v23, %v60
  %v73 = vsub.f32 %v24, %v56
  %v74 = vsub.f32 %v25, %v60
  %v75 = vsub.f32 %v26, %v56
  %v76 = vsub.f32 %v27, %v60
  %v77 = vsub.f32 %v28, %v56
  %v78 = vsub.f32 %v29, %v60
  %v79 = vsub.f32 %v30, %v56
  %v80 = vsub.f32 %v31, %v60
  %v81 = vsub.f32 %v32, %v56
  %v82 = vsub.f32 %v33, %v60
  %v83 = vsub.f32 %v34, %v56
  %v84 = vsub.f32 %v35, %v60
  %v85 = vsub.f32 %v36, %v56
  %v86 = vsub.f32 %v37, %v60
  %v87 = vsub.f32 %v38, %v56
  %v88 = vsub.f32 %v39, %v60
  %v89 = vsub.f32 %v40, %v56
  %v90 = vsub.f32 %v41, %v60
  %v91 = vsub.f32 %v42, %v56
  %v92 = vsub.f32 %v43, %v60
  %v93 = vsub.f32 %v44, %v56
  %v94 = vsub.f32 %v45, %v60
  %v95 = vadd.f32 %v51, 1e-05
  %v96 = vrsqrt.pop %v95
  %v98 = vlaneseq
  %v99 = vshrl.u32 %v98, 7
  %v100 = vsub.s32 0, %v99
  %v101 = vrot.slane %v96, %v100
  %v102 = vlaneseq
  %v103 = vshrl.u32 %v102, 7
  %v104 = vsub.s32 1, %v103
  %v105 = vrot.slane %v96, %v104
  %v108 = vmul.f32 %v63, %v101
  %v109 = vmul.f32 %v64, %v105
  %v110 = vmul.f32 %v65, %v101
  %v111 = vmul.f32 %v66, %v105
  %v112 = vmul.f32 %v67, %v101
  %v113 = vmul.f32 %v68, %v105
  %v114 = vmul.f32 %v69, %v101
  %v115 = vmul.f32 %v70, %v105
  %v116 = vmul.f32 %v71, %v101
  %v117 = vmul.f32 %v72, %v105
  %v118 = vmul.f32 %v73, %v101
  %v119 = vmul.f32 %v74, %v105
  %v120 = vmul.f32 %v75, %v101
  %v121 = vmul.f32 %v76, %v105
  %v122 = vmul.f32 %v77, %v101
  %v123 = vmul.f32 %v78, %v105
  %v124 = vmul.f32 %v79, %v101
  %v125 = vmul.f32 %v80, %v105
  %v126 = vmul.f32 %v81, %v101
  %v127 = vmul.f32 %v82, %v105
  %v128 = vmul.f32 %v83, %v101
  %v129 = vmul.f32 %v84, %v105
  %v130 = vmul.f32 %v85, %v101
  %v131 = vmul.f32 %v86, %v105
  %v132 = vmul.f32 %v87, %v101
  %v133 = vmul.f32 %v88, %v105
  %v134 = vmul.f32 %v89, %v101
  %v135 = vmul.f32 %v90, %v105
  %v136 = vmul.f32 %v91, %v101
  %v137 = vmul.f32 %v92, %v105
  %v138 = vmul.f32 %v93, %v101
  %v139 = vmul.f32 %v94, %v105
  %vm140 = vcmp.gt.f32.partialorder %v108, 0.0
  %vm141 = vcmp.gt.f32.partialorder %v109, 0.0
  %vm142 = vcmp.gt.f32.partialorder %v110, 0.0
  %vm143 = vcmp.gt.f32.partialorder %v111, 0.0
  %vm144 = vcmp.gt.f32.partialorder %v112, 0.0
  %vm145 = vcmp.gt.f32.partialorder %v113, 0.0
  %vm146 = vcmp.gt.f32.partialorder %v114, 0.0
  %vm147 = vcmp.gt.f32.partialorder %v115, 0.0
  %vm148 = vcmp.gt.f32.partialorder %v116, 0.0
  %vm149 = vcmp.gt.f32.partialorder %v117, 0.0
  %vm150 = vcmp.gt.f32.partialorder %v118, 0.0
  %vm151 = vcmp.gt.f32.partialorder %v119, 0.0
  %vm152 = vcmp.gt.f32.partialorder %v120, 0.0
  %vm153 = vcmp.gt.f32.partialorder %v121, 0.0
  %vm154 = vcmp.gt.f32.partialorder %v122, 0.0
  %vm155 = vcmp.gt.f32.partialorder %v123, 0.0
  %vm156 = vcmp.gt.f32.partialorder %v124, 0.0
  %vm157 = vcmp.gt.f32.partialorder %v125, 0.0
  %vm158 = vcmp.gt.f32.partialorder %v126, 0.0
  %vm159 = vcmp.gt.f32.partialorder %v127, 0.0
  %vm160 = vcmp.gt.f32.partialorder %v128, 0.0
  %vm161 = vcmp.gt.f32.partialorder %v129, 0.0
  %vm162 = vcmp.gt.f32.partialorder %v130, 0.0
  %vm163 = vcmp.gt.f32.partialorder %v131, 0.0
  %vm164 = vcmp.gt.f32.partialorder %v132, 0.0
  %vm165 = vcmp.gt.f32.partialorder %v133, 0.0
  %vm166 = vcmp.gt.f32.partialorder %v134, 0.0
  %vm167 = vcmp.gt.f32.partialorder %v135, 0.0
  %vm168 = vcmp.gt.f32.partialorder %v136, 0.0
  %vm169 = vcmp.gt.f32.partialorder %v137, 0.0
  %vm170 = vcmp.gt.f32.partialorder %v138, 0.0
  %vm171 = vcmp.gt.f32.partialorder %v139, 0.0
  %v172 = vmul.f32 %v108, 0.2
  %v173 = vmul.f32 %v109, 0.2
  %v174 = vmul.f32 %v110, 0.2
  %v175 = vmul.f32 %v111, 0.2
  %v176 = vmul.f32 %v112, 0.2
  %v177 = vmul.f32 %v113, 0.2
  %v178 = vmul.f32 %v114, 0.2
  %v179 = vmul.f32 %v115, 0.2
  %v180 = vmul.f32 %v116, 0.2
  %v181 = vmul.f32 %v117, 0.2
  %v182 = vmul.f32 %v118, 0.2
  %v183 = vmul.f32 %v119, 0.2
  %v184 = vmul.f32 %v120, 0.2
  %v185 = vmul.f32 %v121, 0.2
  %v186 = vmul.f32 %v122, 0.2
  %v187 = vmul.f32 %v123, 0.2
  %v188 = vmul.f32 %v124, 0.2
  %v189 = vmul.f32 %v125, 0.2
  %v190 = vmul.f32 %v126, 0.2
  %v191 = vmul.f32 %v127, 0.2
  %v192 = vmul.f32 %v128, 0.2
  %v193 = vmul.f32 %v129, 0.2
  %v194 = vmul.f32 %v130, 0.2
  %v195 = vmul.f32 %v131, 0.2
  %v196 = vmul.f32 %v132, 0.2
  %v197 = vmul.f32 %v133, 0.2
  %v198 = vmul.f32 %v134, 0.2
  %v199 = vmul.f32 %v135, 0.2
  %v200 = vmul.f32 %v136, 0.2
  %v201 = vmul.f32 %v137, 0.2
  %v202 = vmul.f32 %v138, 0.2
  %v203 = vmul.f32 %v139, 0.2
  %v204 = vsel %vm140, %v108, %v172
  %v205 = vsel %vm141, %v109, %v173
  %v206 = vsel %vm142, %v110, %v174
  %v207 = vsel %vm143, %v111, %v175
  %v208 = vsel %vm144, %v112, %v176
  %v209 = vsel %vm145, %v113, %v177
  %v210 = vsel %vm146, %v114, %v178
  %v211 = vsel %vm147, %v115, %v179
  %v212 = vsel %vm148, %v116, %v180
  %v213 = vsel %vm149, %v117, %v181
  %v214 = vsel %vm150, %v118, %v182
  %v215 = vsel %vm151, %v119, %v183
  %v216 = vsel %vm152, %v120, %v184
  %v217 = vsel %vm153, %v121, %v185
  %v218 = vsel %vm154, %v122, %v186
  %v219 = vsel %vm155, %v123, %v187
  %v220 = vsel %vm156, %v124, %v188
  %v221 = vsel %vm157, %v125, %v189
  %v222 = vsel %vm158, %v126, %v190
  %v223 = vsel %vm159, %v127, %v191
  %v224 = vsel %vm160, %v128, %v192
  %v225 = vsel %vm161, %v129, %v193
  %v226 = vsel %vm162, %v130, %v194
  %v227 = vsel %vm163, %v131, %v195
  %v228 = vsel %vm164, %v132, %v196
  %v229 = vsel %vm165, %v133, %v197
  %v230 = vsel %vm166, %v134, %v198
  %v231 = vsel %vm167, %v135, %v199
  %v232 = vsel %vm168, %v136, %v200
  %v233 = vsel %vm169, %v137, %v201
  %v234 = vsel %vm170, %v138, %v202
  %v235 = vsel %vm171, %v139, %v203
  %236 = vst [vmem:[%s3] sm:$0xff] %v204
  %237 = vst [vmem:[%s3 + $0x8] sm:$0xff] %v205
  %238 = vst [vmem:[%s3 + $0x10] sm:$0xff] %v206
  %239 = vst [vmem:[%s3 + $0x18] sm:$0xff] %v207
  %240 = vst [vmem:[%s3 + $0x20] sm:$0xff] %v208
  %241 = vst [vmem:[%s3 + $0x28] sm:$0xff] %v209
  %242 = vst [vmem:[%s3 + $0x30] sm:$0xff] %v210
  %243 = vst [vmem:[%s3 + $0x38] sm:$0xff] %v211
  %244 = vst [vmem:[%s3 + $0x40] sm:$0xff] %v212
  %245 = vst [vmem:[%s3 + $0x48] sm:$0xff] %v213
  %246 = vst [vmem:[%s3 + $0x50] sm:$0xff] %v214
  %247 = vst [vmem:[%s3 + $0x58] sm:$0xff] %v215
  %248 = vst [vmem:[%s3 + $0x60] sm:$0xff] %v216
  %249 = vst [vmem:[%s3 + $0x68] sm:$0xff] %v217
  %250 = vst [vmem:[%s3 + $0x70] sm:$0xff] %v218
  %251 = vst [vmem:[%s3 + $0x78] sm:$0xff] %v219
  %252 = vst [vmem:[%s3 + $0x80] sm:$0xff] %v220
  %253 = vst [vmem:[%s3 + $0x88] sm:$0xff] %v221
  %254 = vst [vmem:[%s3 + $0x90] sm:$0xff] %v222
  %255 = vst [vmem:[%s3 + $0x98] sm:$0xff] %v223
  %256 = vst [vmem:[%s3 + $0xa0] sm:$0xff] %v224
  %257 = vst [vmem:[%s3 + $0xa8] sm:$0xff] %v225
  %258 = vst [vmem:[%s3 + $0xb0] sm:$0xff] %v226
  %259 = vst [vmem:[%s3 + $0xb8] sm:$0xff] %v227
  %260 = vst [vmem:[%s3 + $0xc0] sm:$0xff] %v228
  %261 = vst [vmem:[%s3 + $0xc8] sm:$0xff] %v229
  %262 = vst [vmem:[%s3 + $0xd0] sm:$0xff] %v230
  %263 = vst [vmem:[%s3 + $0xd8] sm:$0xff] %v231
  %264 = vst [vmem:[%s3 + $0xe0] sm:$0xff] %v232
  %265 = vst [vmem:[%s3 + $0xe8] sm:$0xff] %v233
  %266 = vst [vmem:[%s3 + $0xf0] sm:$0xff] %v234
  %267 = vst [vmem:[%s3 + $0xf8] sm:$0xff] %v235
  // Predicated region
  $region14: #{discriminator_forward.17} parent=0 // pred_check
    _
  $region15: #{discriminator_forward.17} parent=0 // pred_check_branch
    %269 = sbr.rel (0) target = $region17
  $region16: #{discriminator_forward.17} parent=0 // pred_region
    _
  $region17: #{discriminator_forward.17} parent=0 // pred_fallthru
    _
  // Predicated region
  $region18: #{discriminator_forward.17} parent=0 // pred_check
    _
  $region19: #{discriminator_forward.17} parent=0 // pred_check_branch
    %271 = sbr.rel (0) target = $region21
  $region20: #{discriminator_forward.17} parent=0 // pred_region
    _
  $region21: #{discriminator_forward.17} parent=0 // pred_fallthru
    _

// kernel: discriminator_forward.18
$region0: #{discriminator_forward.18}
  #allocation0 [shape = 'u32[]', space=smem, size = 0x4, offset = 0x4, fixed_abs, tag = 'smem constant byte address 0x4 - core index']
  #allocation1 [shape = 'u32[144,128]{1,0:T(1,128)}', space=vmem, size = 0x12000, scoped, tag = 'internal scratch']
  #allocation2 [shape = 'f32[32,256]{1,0:T(8,128)}', space=vmem, size = 0x8000, scoped, tag = 'scratch operand']
  %s0 = inlined_call_operand.vmem [shape: bf16[32,4096], index: 0, kind: input, shape index: {}]
  %s1 = inlined_call_operand.vmem [shape: bf16[4096,512], index: 1, kind: input, shape index: {}]
  %s2 = inlined_call_operand.vmem [shape: f32[32,512], index: 2, kind: output, shape index: {}]
  %s3 = sld [smem:[#allocation0]]
  $region129: #{discriminator_forward.18} parent=0
    _
  %s5 = ssub.s32 1, %s3
  %s6 = scalar_select 0, %s5, %s3
  $region1: #{discriminator_forward.18} parent=0
    #allocation3 [shape = 'u8[65536]{0}', space=vmem, size = 0x10000, scoped, tag = 'input window, operand 0']
    #allocation4 [shape = 'u8[524288]{0}', space=vmem, size = 0x80000, scoped, tag = 'input window, operand 1']
    #allocation5 [shape = 'u8[65536]{0}', space=vmem, size = 0x10000, scoped, tag = 'output window, operand 0']
    loop: start=0, step=1, limit=18
    $region2: #{discriminator_forward.18} parent=1 // loop_pre_header
      _
    $region3: #{discriminator_forward.18} parent=1 // loop_header
      %s8 = sphi 0, %s12
      %p9 = scmp.ge.s32.totalorder %s8, 18
      %s15 = sphi 0, %s34
      %s16 = sphi 0, %s30
      %s17 = sphi 0, %s26
      %s18 = sphi 0, %s15
      %s19 = sphi 0, %s16
      %s20 = sphi 0, %s17
      %s21 = sphi 0, %s18
      %s22 = sphi 0, %s19
      %s23 = sphi 0, %s20
      %s39 = sphi 0, %s41
      %s42 = sphi 0, %s39
      %s43 = sphi 0, %s42
      %s59 = sphi 0, %s43
      %s67 = sphi 0, %s69
      %s70 = sphi 0, %s67
      %s71 = sphi 0, %s70
      %s87 = sphi 0, %s71
      %s95 = sphi 0, %s97
      %s98 = sphi 0, %s95
      %s99 = sphi 0, %s98
      %s115 = sphi 0, %s99
    $region4: #{discriminator_forward.18} parent=1 // loop_header_branch
      %11 = sbr.rel (%p9) target = $region8
    $region5: #{discriminator_forward.18} parent=1 // loop_body
      %s13 = ssub.s32 %s8, 1
      %s14 = ssub.s32 %s8, 2
      %s24 = sadd.s32 1, %s17
      %p25 = scmp.ge.s32.totalorder %s24, 8
      %s26 = scalar_select %p25, 0, %s24
      %s27 = sadd.s32 1, %s16
      %s28 = scalar_select %p25, %s27, %s16
      %p29 = scmp.ge.s32.totalorder %s28, 2
      %s30 = scalar_select %p29, 0, %s28
      %s31 = sadd.s32 1, %s15
      %s32 = scalar_select %p29, %s31, %s15
      %p33 = scmp.ge.s32.totalorder %s32, 1
      %s34 = scalar_select %p33, 0, %s32
      %s35 = ssub.s32 %s15, %s34
      %s36 = ssub.s32 %s17, %s26
      %s37 = sor.u32 %s35, %s36
      %p38 = scmp.eq.s32.totalorder %s37, 0
      %s40 = sadd.s32 %s39, 1
      %s41 = scalar_select %p38, %s39, %s40
      %p44 = pneg %p38
      %p45 = scmp.eq.s32.totalorder %s8, 15
      %p46 = por %p44, %p45
      %p47 = scmp.ne.s32.totalorder %s39, %s42
      %p48 = scmp.eq.s32.totalorder %s8, 0
      %p49 = por %p47, %p48
      %p50 = scmp.ne.s32.totalorder %s39, %s42
      %p51 = scmp.eq.s32.totalorder %s13, 15
      %p52 = por %p50, %p51
      %p53 = scmp.ne.s32.totalorder %s42, %s43
      %p54 = scmp.eq.s32.totalorder %s13, 0
      %p55 = por %p53, %p54
      %p56 = scmp.ne.s32.totalorder %s42, %s43
      %p57 = scmp.eq.s32.totalorder %s14, 15
      %p58 = por %p56, %p57
      %p60 = scmp.ne.s32.totalorder %s43, %s59
      %p61 = scmp.eq.s32.totalorder %s14, 0
      %p62 = por %p60, %p61
      %s63 = ssub.s32 %s17, %s26
      %s64 = ssub.s32 %s16, %s30
      %s65 = sor.u32 %s63, %s64
      %p66 = scmp.eq.s32.totalorder %s65, 0
      %s68 = sadd.s32 %s67, 1
      %s69 = scalar_select %p66, %s67, %s68
      %p72 = pneg %p66
      %p73 = scmp.eq.s32.totalorder %s8, 15
      %p74 = por %p72, %p73
      %p75 = scmp.ne.s32.totalorder %s67, %s70
      %p76 = scmp.eq.s32.totalorder %s8, 0
      %p77 = por %p75, %p76
      %p78 = scmp.ne.s32.totalorder %s67, %s70
      %p79 = scmp.eq.s32.totalorder %s13, 15
      %p80 = por %p78, %p79
      %p81 = scmp.ne.s32.totalorder %s70, %s71
      %p82 = scmp.eq.s32.totalorder %s13, 0
      %p83 = por %p81, %p82
      %p84 = scmp.ne.s32.totalorder %s70, %s71
      %p85 = scmp.eq.s32.totalorder %s14, 15
      %p86 = por %p84, %p85
      %p88 = scmp.ne.s32.totalorder %s71, %s87
      %p89 = scmp.eq.s32.totalorder %s14, 0
      %p90 = por %p88, %p89
      %s91 = ssub.s32 %s15, %s34
      %s92 = ssub.s32 %s16, %s30
      %s93 = sor.u32 %s91, %s92
      %p94 = scmp.eq.s32.totalorder %s93, 0
      %s96 = sadd.s32 %s95, 1
      %s97 = scalar_select %p94, %s95, %s96
      %p100 = pneg %p94
      %p101 = scmp.eq.s32.totalorder %s8, 15
      %p102 = por %p100, %p101
      %p103 = scmp.ne.s32.totalorder %s95, %s98
      %p104 = scmp.eq.s32.totalorder %s8, 0
      %p105 = por %p103, %p104
      %p106 = scmp.ne.s32.totalorder %s95, %s98
      %p107 = scmp.eq.s32.totalorder %s13, 15
      %p108 = por %p106, %p107
      %p109 = scmp.ne.s32.totalorder %s98, %s99
      %p110 = scmp.eq.s32.totalorder %s13, 0
      %p111 = por %p109, %p110
      %p112 = scmp.ne.s32.totalorder %s98, %s99
      %p113 = scmp.eq.s32.totalorder %s14, 15
      %p114 = por %p112, %p113
      %p116 = scmp.ne.s32.totalorder %s99, %s115
      %p117 = scmp.eq.s32.totalorder %s14, 0
      %p118 = por %p116, %p117
      %p119 = scmp.le.s32.totalorder 1, %s8
      %p120 = scmp.lt.s32.totalorder %s8, 17
      %p121 = pnand %p119, %p120
      %p122 = pneg %p121
      // Predicated region
      $region9: #{discriminator_forward.18} parent=5 // pred_check
        _
      $region10: #{discriminator_forward.18} parent=5 // pred_check_branch
        %124 = sbr.rel (%p121) target = $region12
      $region11: #{discriminator_forward.18} parent=5 // pred_region
        %s125 = ssub.s32 %s8, 1
      $region12: #{discriminator_forward.18} parent=5 // pred_fallthru
        _
      %p126 = scmp.lt.s32.totalorder %s8, 16
      // Predicated region
      $region13: #{discriminator_forward.18} parent=5 // pred_check
        %p127 = pneg %p126
      $region14: #{discriminator_forward.18} parent=5 // pred_check_branch
        %129 = sbr.rel (%p127) target = $region16
      $region15: #{discriminator_forward.18} parent=5 // pred_region
        // Predicated region
        $region17: #{discriminator_forward.18} parent=15 // pred_check
          %p130 = pneg %p49
        $region18: #{discriminator_forward.18} parent=15 // pred_check_branch
          %132 = sbr.rel (%p130) target = $region20
        $region19: #{discriminator_forward.18} parent=15 // pred_region
          %s133 = sand.u32 %s39, 1
          %s134 = sand.u32 %s39, 1
          %s135 = smul.addr %s134, 64
          %s136 = scalar_lea.vmem [#allocation3], %s135
          %s137 = smul.u32 4, %s15
          %s138 = smul.u32 4, %s17
          %s139 = smul.addr %s137, 32
          %s140 = sadd.s32 %s138, %s139
          %s141 = smul.addr %s140, 4
          %s142 = scalar_lea.vmem %s0, %s141
          // Predicated region
          $region21: #{discriminator_forward.18} parent=19 // pred_check
            _
          $region22: #{discriminator_forward.18} parent=19 // pred_check_branch
            %144 = sbr.rel (0) target = $region24
          $region23: #{discriminator_forward.18} parent=19 // pred_region
            // Predicated region
            $region25: #{discriminator_forward.18} parent=23 // pred_check
              _
            $region26: #{discriminator_forward.18} parent=23 // pred_check_branch
              %146 = sbr.rel (0) target = $region28
            $region27: #{discriminator_forward.18} parent=23 // pred_region
              loop: start=0, step=1, limit=1
              $region29: #{discriminator_forward.18} parent=27 // loop_pre_header
                _
              $region30: #{discriminator_forward.18} parent=27 // loop_header
                %s148 = sphi 0, %s152
                %p149 = scmp.ge.s32.totalorder %s148, 1
                %s153 = sphi %s142, %s142
                %s154 = sphi %s136, %s136
              $region31: #{discriminator_forward.18} parent=27 // loop_header_branch
                %151 = sbr.rel (%p149) target = $region35
              $region32: #{discriminator_forward.18} parent=27 // loop_body
                %v155 = vld [vmem:[%s153] sm:$0xff]
                %156 = vst [vmem:[%s154] sm:$0xff] %v155
                %v157 = vld [vmem:[%s153 + $0x8] sm:$0xff]
                %158 = vst [vmem:[%s154 + $0x8] sm:$0xff] %v157
                %v159 = vld [vmem:[%s153 + $0x80] sm:$0xff]
                %160 = vst [vmem:[%s154 + $0x10] sm:$0xff] %v159
                %v161 = vld [vmem:[%s153 + $0x88] sm:$0xff]
                %162 = vst [vmem:[%s154 + $0x18] sm:$0xff] %v161
                %v163 = vld [vmem:[%s153 + $0x100] sm:$0xff]
                %164 = vst [vmem:[%s154 + $0x20] sm:$0xff] %v163
                %v165 = vld [vmem:[%s153 + $0x108] sm:$0xff]
                %166 = vst [vmem:[%s154 + $0x28] sm:$0xff] %v165
                %v167 = vld [vmem:[%s153 + $0x180] sm:$0xff]
                %168 = vst [vmem:[%s154 + $0x30] sm:$0xff] %v167
                %v169 = vld [vmem:[%s153 + $0x188] sm:$0xff]
                %170 = vst [vmem:[%s154 + $0x38] sm:$0xff] %v169
              $region33: #{discriminator_forward.18} parent=27 // loop_footer
                %s152 = sadd.s32 1, %s148
              $region34: #{discriminator_forward.18} parent=27 // loop_footer_branch
                %147 = sbr.rel target = $region30
              $region35: #{discriminator_forward.18} parent=27 // loop_exit
                _
            $region28: #{discriminator_forward.18} parent=23 // pred_fallthru
              _
            // Predicated region
            $region36: #{discriminator_forward.18} parent=23 // pred_check
              _
            $region37: #{discriminator_forward.18} parent=23 // pred_check_branch
              %172 = sbr.rel target = $region39
            $region38: #{discriminator_forward.18} parent=23 // pred_region
              _
            $region39: #{discriminator_forward.18} parent=23 // pred_fallthru
              _
          $region24: #{discriminator_forward.18} parent=19 // pred_fallthru
            _
          %173 = vnop
        $region20: #{discriminator_forward.18} parent=15 // pred_fallthru
          _
        // Predicated region
        $region40: #{discriminator_forward.18} parent=15 // pred_check
          %p174 = pneg %p77
        $region41: #{discriminator_forward.18} parent=15 // pred_check_branch
          %176 = sbr.rel (%p174) target = $region43
        $region42: #{discriminator_forward.18} parent=15 // pred_region
          %s177 = sand.u32 %s67, 1
          %s178 = sand.u32 %s67, 1
          %s179 = smul.addr %s178, 512
          %s180 = scalar_lea.vmem [#allocation4], %s179
          %s181 = smul.u32 64, %s17
          %s182 = smul.u32 2, %s16
          %s183 = smul.addr %s181, 4
          %s184 = sadd.s32 %s182, %s183
          %s185 = smul.addr %s184, 4
          %s186 = scalar_lea.vmem %s1, %s185
          // Predicated region
          $region44: #{discriminator_forward.18} parent=42 // pred_check
            _
          $region45: #{discriminator_forward.18} parent=42 // pred_check_branch
            %188 = sbr.rel (0) target = $region47
          $region46: #{discriminator_forward.18} parent=42 // pred_region
            // Predicated region
            $region48: #{discriminator_forward.18} parent=46 // pred_check
              _
            $region49: #{discriminator_forward.18} parent=46 // pred_check_branch
              %190 = sbr.rel (0) target = $region51
            $region50: #{discriminator_forward.18} parent=46 // pred_region
              // Predicated region
              $region63: #{discriminator_forward.18} parent=50 // pred_check
                _
              $region64: #{discriminator_forward.18} parent=50 // pred_check_branch
                %332 = sbr.rel (0) target = $region66
              $region65: #{discriminator_forward.18} parent=50 // pred_region
                loop: start=0, step=1, limit=1
                $region67: #{discriminator_forward.18} parent=65 // loop_pre_header
                  _
                $region68: #{discriminator_forward.18} parent=65 // loop_header
                  %s334 = sphi 0, %s338
                  %p335 = scmp.ge.s32.totalorder %s334, 1
                  %s339 = sphi %s186, %s186
                  %s340 = sphi %s180, %s180
                $region69: #{discriminator_forward.18} parent=65 // loop_header_branch
                  %337 = sbr.rel (%p335) target = $region73
                $region70: #{discriminator_forward.18} parent=65 // loop_body
                  %v341 = vld [vmem:[%s339] sm:$0xff]
                  %342 = vst [vmem:[%s340] sm:$0xff] %v341
                  %v343 = vld [vmem:[%s339 + $0x10] sm:$0xff]
                  %344 = vst [vmem:[%s340 + $0x8] sm:$0xff] %v343
                  %v345 = vld [vmem:[%s339 + $0x20] sm:$0xff]
                  %346 = vst [vmem:[%s340 + $0x10] sm:$0xff] %v345
                  %v347 = vld [vmem:[%s339 + $0x30] sm:$0xff]
                  %348 = vst [vmem:[%s340 + $0x18] sm:$0xff] %v347
                  %v349 = vld [vmem:[%s339 + $0x40] sm:$0xff]
                  %350 = vst [vmem:[%s340 + $0x20] sm:$0xff] %v349
                  %v351 = vld [vmem:[%s339 + $0x50] sm:$0xff]
                  %352 = vst [vmem:[%s340 + $0x28] sm:$0xff] %v351
                  %v353 = vld [vmem:[%s339 + $0x60] sm:$0xff]
                  %354 = vst [vmem:[%s340 + $0x30] sm:$0xff] %v353
                  %v355 = vld [vmem:[%s339 + $0x70] sm:$0xff]
                  %356 = vst [vmem:[%s340 + $0x38] sm:$0xff] %v355
                  %v357 = vld [vmem:[%s339 + $0x80] sm:$0xff]
                  %358 = vst [vmem:[%s340 + $0x40] sm:$0xff] %v357
                  %v359 = vld [vmem:[%s339 + $0x90] sm:$0xff]
                  %360 = vst [vmem:[%s340 + $0x48] sm:$0xff] %v359
                  %v361 = vld [vmem:[%s339 + $0xa0] sm:$0xff]
                  %362 = vst [vmem:[%s340 + $0x50] sm:$0xff] %v361
                  %v363 = vld [vmem:[%s339 + $0xb0] sm:$0xff]
                  %364 = vst [vmem:[%s340 + $0x58] sm:$0xff] %v363
                  %v365 = vld [vmem:[%s339 + $0xc0] sm:$0xff]
                  %366 = vst [vmem:[%s340 + $0x60] sm:$0xff] %v365
                  %v367 = vld [vmem:[%s339 + $0xd0] sm:$0xff]
                  %368 = vst [vmem:[%s340 + $0x68] sm:$0xff] %v367
                  %v369 = vld [vmem:[%s339 + $0xe0] sm:$0xff]
                  %370 = vst [vmem:[%s340 + $0x70] sm:$0xff] %v369
                  %v371 = vld [vmem:[%s339 + $0xf0] sm:$0xff]
                  %372 = vst [vmem:[%s340 + $0x78] sm:$0xff] %v371
                  %v373 = vld [vmem:[%s339 + $0x100] sm:$0xff]
                  %374 = vst [vmem:[%s340 + $0x80] sm:$0xff] %v373
                  %v375 = vld [vmem:[%s339 + $0x110] sm:$0xff]
                  %376 = vst [vmem:[%s340 + $0x88] sm:$0xff] %v375
                  %v377 = vld [vmem:[%s339 + $0x120] sm:$0xff]
                  %378 = vst [vmem:[%s340 + $0x90] sm:$0xff] %v377
                  %v379 = vld [vmem:[%s339 + $0x130] sm:$0xff]
                  %380 = vst [vmem:[%s340 + $0x98] sm:$0xff] %v379
                  %v381 = vld [vmem:[%s339 + $0x140] sm:$0xff]
                  %382 = vst [vmem:[%s340 + $0xa0] sm:$0xff] %v381
                  %v383 = vld [vmem:[%s339 + $0x150] sm:$0xff]
                  %384 = vst [vmem:[%s340 + $0xa8] sm:$0xff] %v383
                  %v385 = vld [vmem:[%s339 + $0x160] sm:$0xff]
                  %386 = vst [vmem:[%s340 + $0xb0] sm:$0xff] %v385
                  %v387 = vld [vmem:[%s339 + $0x170] sm:$0xff]
                  %388 = vst [vmem:[%s340 + $0xb8] sm:$0xff] %v387
                  %v389 = vld [vmem:[%s339 + $0x180] sm:$0xff]
                  %390 = vst [vmem:[%s340 + $0xc0] sm:$0xff] %v389
                  %v391 = vld [vmem:[%s339 + $0x190] sm:$0xff]
                  %392 = vst [vmem:[%s340 + $0xc8] sm:$0xff] %v391
                  %v393 = vld [vmem:[%s339 + $0x1a0] sm:$0xff]
                  %394 = vst [vmem:[%s340 + $0xd0] sm:$0xff] %v393
                  %v395 = vld [vmem:[%s339 + $0x1b0] sm:$0xff]
                  %396 = vst [vmem:[%s340 + $0xd8] sm:$0xff] %v395
                  %v397 = vld [vmem:[%s339 + $0x1c0] sm:$0xff]
                  %398 = vst [vmem:[%s340 + $0xe0] sm:$0xff] %v397
                  %v399 = vld [vmem:[%s339 + $0x1d0] sm:$0xff]
                  %400 = vst [vmem:[%s340 + $0xe8] sm:$0xff] %v399
                  %v401 = vld [vmem:[%s339 + $0x1e0] sm:$0xff]
                  %402 = vst [vmem:[%s340 + $0xf0] sm:$0xff] %v401
                  %v403 = vld [vmem:[%s339 + $0x1f0] sm:$0xff]
                  %404 = vst [vmem:[%s340 + $0xf8] sm:$0xff] %v403
                  %v405 = vld [vmem:[%s339 + $0x200] sm:$0xff]
                  %406 = vst [vmem:[%s340 + $0x100] sm:$0xff] %v405
                  %v407 = vld [vmem:[%s339 + $0x210] sm:$0xff]
                  %408 = vst [vmem:[%s340 + $0x108] sm:$0xff] %v407
                  %v409 = vld [vmem:[%s339 + $0x220] sm:$0xff]
                  %410 = vst [vmem:[%s340 + $0x110] sm:$0xff] %v409
                  %v411 = vld [vmem:[%s339 + $0x230] sm:$0xff]
                  %412 = vst [vmem:[%s340 + $0x118] sm:$0xff] %v411
                  %v413 = vld [vmem:[%s339 + $0x240] sm:$0xff]
                  %414 = vst [vmem:[%s340 + $0x120] sm:$0xff] %v413
                  %v415 = vld [vmem:[%s339 + $0x250] sm:$0xff]
                  %416 = vst [vmem:[%s340 + $0x128] sm:$0xff] %v415
                  %v417 = vld [vmem:[%s339 + $0x260] sm:$0xff]
                  %418 = vst [vmem:[%s340 + $0x130] sm:$0xff] %v417
                  %v419 = vld [vmem:[%s339 + $0x270] sm:$0xff]
                  %420 = vst [vmem:[%s340 + $0x138] sm:$0xff] %v419
                  %v421 = vld [vmem:[%s339 + $0x280] sm:$0xff]
                  %422 = vst [vmem:[%s340 + $0x140] sm:$0xff] %v421
                  %v423 = vld [vmem:[%s339 + $0x290] sm:$0xff]
                  %424 = vst [vmem:[%s340 + $0x148] sm:$0xff] %v423
                  %v425 = vld [vmem:[%s339 + $0x2a0] sm:$0xff]
                  %426 = vst [vmem:[%s340 + $0x150] sm:$0xff] %v425
                  %v427 = vld [vmem:[%s339 + $0x2b0] sm:$0xff]
                  %428 = vst [vmem:[%s340 + $0x158] sm:$0xff] %v427
                  %v429 = vld [vmem:[%s339 + $0x2c0] sm:$0xff]
                  %430 = vst [vmem:[%s340 + $0x160] sm:$0xff] %v429
                  %v431 = vld [vmem:[%s339 + $0x2d0] sm:$0xff]
                  %432 = vst [vmem:[%s340 + $0x168] sm:$0xff] %v431
                  %v433 = vld [vmem:[%s339 + $0x2e0] sm:$0xff]
                  %434 = vst [vmem:[%s340 + $0x170] sm:$0xff] %v433
                  %v435 = vld [vmem:[%s339 + $0x2f0] sm:$0xff]
                  %436 = vst [vmem:[%s340 + $0x178] sm:$0xff] %v435
                  %v437 = vld [vmem:[%s339 + $0x300] sm:$0xff]
                  %438 = vst [vmem:[%s340 + $0x180] sm:$0xff] %v437
                  %v439 = vld [vmem:[%s339 + $0x310] sm:$0xff]
                  %440 = vst [vmem:[%s340 + $0x188] sm:$0xff] %v439
                  %v441 = vld [vmem:[%s339 + $0x320] sm:$0xff]
                  %442 = vst [vmem:[%s340 + $0x190] sm:$0xff] %v441
                  %v443 = vld [vmem:[%s339 + $0x330] sm:$0xff]
                  %444 = vst [vmem:[%s340 + $0x198] sm:$0xff] %v443
                  %v445 = vld [vmem:[%s339 + $0x340] sm:$0xff]
                  %446 = vst [vmem:[%s340 + $0x1a0] sm:$0xff] %v445
                  %v447 = vld [vmem:[%s339 + $0x350] sm:$0xff]
                  %448 = vst [vmem:[%s340 + $0x1a8] sm:$0xff] %v447
                  %v449 = vld [vmem:[%s339 + $0x360] sm:$0xff]
                  %450 = vst [vmem:[%s340 + $0x1b0] sm:$0xff] %v449
                  %v451 = vld [vmem:[%s339 + $0x370] sm:$0xff]
                  %452 = vst [vmem:[%s340 + $0x1b8] sm:$0xff] %v451
                  %v453 = vld [vmem:[%s339 + $0x380] sm:$0xff]
                  %454 = vst [vmem:[%s340 + $0x1c0] sm:$0xff] %v453
                  %v455 = vld [vmem:[%s339 + $0x390] sm:$0xff]
                  %456 = vst [vmem:[%s340 + $0x1c8] sm:$0xff] %v455
                  %v457 = vld [vmem:[%s339 + $0x3a0] sm:$0xff]
                  %458 = vst [vmem:[%s340 + $0x1d0] sm:$0xff] %v457
                  %v459 = vld [vmem:[%s339 + $0x3b0] sm:$0xff]
                  %460 = vst [vmem:[%s340 + $0x1d8] sm:$0xff] %v459
                  %v461 = vld [vmem:[%s339 + $0x3c0] sm:$0xff]
                  %462 = vst [vmem:[%s340 + $0x1e0] sm:$0xff] %v461
                  %v463 = vld [vmem:[%s339 + $0x3d0] sm:$0xff]
                  %464 = vst [vmem:[%s340 + $0x1e8] sm:$0xff] %v463
                  %v465 = vld [vmem:[%s339 + $0x3e0] sm:$0xff]
                  %466 = vst [vmem:[%s340 + $0x1f0] sm:$0xff] %v465
                  %v467 = vld [vmem:[%s339 + $0x3f0] sm:$0xff]
                  %468 = vst [vmem:[%s340 + $0x1f8] sm:$0xff] %v467
                $region71: #{discriminator_forward.18} parent=65 // loop_footer
                  %s338 = sadd.s32 1, %s334
                $region72: #{discriminator_forward.18} parent=65 // loop_footer_branch
                  %333 = sbr.rel target = $region68
                $region73: #{discriminator_forward.18} parent=65 // loop_exit
                  _
              $region66: #{discriminator_forward.18} parent=50 // pred_fallthru
                _
              // Predicated region
              $region74: #{discriminator_forward.18} parent=50 // pred_check
                _
              $region75: #{discriminator_forward.18} parent=50 // pred_check_branch
                %470 = sbr.rel target = $region77
              $region76: #{discriminator_forward.18} parent=50 // pred_region
                _
              $region77: #{discriminator_forward.18} parent=50 // pred_fallthru
                _
            $region51: #{discriminator_forward.18} parent=46 // pred_fallthru
              _
            // Predicated region
            $region52: #{discriminator_forward.18} parent=46 // pred_check
              _
            $region53: #{discriminator_forward.18} parent=46 // pred_check_branch
              %192 = sbr.rel target = $region55
            $region54: #{discriminator_forward.18} parent=46 // pred_region
              %s194 = ssub.s32 256, 1
              loop: start=0, step=1, limit=1
              $region56: #{discriminator_forward.18} parent=54 // loop_pre_header
                _
              $region57: #{discriminator_forward.18} parent=54 // loop_header
                %s196 = sphi 0, %s200
                %p197 = scmp.ge.s32.totalorder %s196, 1
                %s201 = sphi %s186, %s186
                %s202 = sphi %s180, %s180
              $region58: #{discriminator_forward.18} parent=54 // loop_header_branch
                %199 = sbr.rel (%p197) target = $region62
              $region59: #{discriminator_forward.18} parent=54 // loop_body
                %v203 = vld [vmem:[%s201] sm:%s194]
                %204 = vst [vmem:[%s202] sm:%s194] %v203
                %v205 = vld [vmem:[%s201 + $0x10] sm:%s194]
                %206 = vst [vmem:[%s202 + $0x8] sm:%s194] %v205
                %v207 = vld [vmem:[%s201 + $0x20] sm:%s194]
                %208 = vst [vmem:[%s202 + $0x10] sm:%s194] %v207
                %v209 = vld [vmem:[%s201 + $0x30] sm:%s194]
                %210 = vst [vmem:[%s202 + $0x18] sm:%s194] %v209
                %v211 = vld [vmem:[%s201 + $0x40] sm:%s194]
                %212 = vst [vmem:[%s202 + $0x20] sm:%s194] %v211
                %v213 = vld [vmem:[%s201 + $0x50] sm:%s194]
                %214 = vst [vmem:[%s202 + $0x28] sm:%s194] %v213
                %v215 = vld [vmem:[%s201 + $0x60] sm:%s194]
                %216 = vst [vmem:[%s202 + $0x30] sm:%s194] %v215
                %v217 = vld [vmem:[%s201 + $0x70] sm:%s194]
                %218 = vst [vmem:[%s202 + $0x38] sm:%s194] %v217
                %v219 = vld [vmem:[%s201 + $0x80] sm:%s194]
                %220 = vst [vmem:[%s202 + $0x40] sm:%s194] %v219
                %v221 = vld [vmem:[%s201 + $0x90] sm:%s194]
                %222 = vst [vmem:[%s202 + $0x48] sm:%s194] %v221
                %v223 = vld [vmem:[%s201 + $0xa0] sm:%s194]
                %224 = vst [vmem:[%s202 + $0x50] sm:%s194] %v223
                %v225 = vld [vmem:[%s201 + $0xb0] sm:%s194]
                %226 = vst [vmem:[%s202 + $0x58] sm:%s194] %v225
                %v227 = vld [vmem:[%s201 + $0xc0] sm:%s194]
                %228 = vst [vmem:[%s202 + $0x60] sm:%s194] %v227
                %v229 = vld [vmem:[%s201 + $0xd0] sm:%s194]
                %230 = vst [vmem:[%s202 + $0x68] sm:%s194] %v229
                %v231 = vld [vmem:[%s201 + $0xe0] sm:%s194]
                %232 = vst [vmem:[%s202 + $0x70] sm:%s194] %v231
                %v233 = vld [vmem:[%s201 + $0xf0] sm:%s194]
                %234 = vst [vmem:[%s202 + $0x78] sm:%s194] %v233
                %v235 = vld [vmem:[%s201 + $0x100] sm:%s194]
                %236 = vst [vmem:[%s202 + $0x80] sm:%s194] %v235
                %v237 = vld [vmem:[%s201 + $0x110] sm:%s194]
                %238 = vst [vmem:[%s202 + $0x88] sm:%s194] %v237
                %v239 = vld [vmem:[%s201 + $0x120] sm:%s194]
                %240 = vst [vmem:[%s202 + $0x90] sm:%s194] %v239
                %v241 = vld [vmem:[%s201 + $0x130] sm:%s194]
                %242 = vst [vmem:[%s202 + $0x98] sm:%s194] %v241
                %v243 = vld [vmem:[%s201 + $0x140] sm:%s194]
                %244 = vst [vmem:[%s202 + $0xa0] sm:%s194] %v243
                %v245 = vld [vmem:[%s201 + $0x150] sm:%s194]
                %246 = vst [vmem:[%s202 + $0xa8] sm:%s194] %v245
                %v247 = vld [vmem:[%s201 + $0x160] sm:%s194]
                %248 = vst [vmem:[%s202 + $0xb0] sm:%s194] %v247
                %v249 = vld [vmem:[%s201 + $0x170] sm:%s194]
                %250 = vst [vmem:[%s202 + $0xb8] sm:%s194] %v249
                %v251 = vld [vmem:[%s201 + $0x180] sm:%s194]
                %252 = vst [vmem:[%s202 + $0xc0] sm:%s194] %v251
                %v253 = vld [vmem:[%s201 + $0x190] sm:%s194]
                %254 = vst [vmem:[%s202 + $0xc8] sm:%s194] %v253
                %v255 = vld [vmem:[%s201 + $0x1a0] sm:%s194]
                %256 = vst [vmem:[%s202 + $0xd0] sm:%s194] %v255
                %v257 = vld [vmem:[%s201 + $0x1b0] sm:%s194]
                %258 = vst [vmem:[%s202 + $0xd8] sm:%s194] %v257
                %v259 = vld [vmem:[%s201 + $0x1c0] sm:%s194]
                %260 = vst [vmem:[%s202 + $0xe0] sm:%s194] %v259
                %v261 = vld [vmem:[%s201 + $0x1d0] sm:%s194]
                %262 = vst [vmem:[%s202 + $0xe8] sm:%s194] %v261
                %v263 = vld [vmem:[%s201 + $0x1e0] sm:%s194]
                %264 = vst [vmem:[%s202 + $0xf0] sm:%s194] %v263
                %v265 = vld [vmem:[%s201 + $0x1f0] sm:%s194]
                %266 = vst [vmem:[%s202 + $0xf8] sm:%s194] %v265
                %v267 = vld [vmem:[%s201 + $0x200] sm:%s194]
                %268 = vst [vmem:[%s202 + $0x100] sm:%s194] %v267
                %v269 = vld [vmem:[%s201 + $0x210] sm:%s194]
                %270 = vst [vmem:[%s202 + $0x108] sm:%s194] %v269
                %v271 = vld [vmem:[%s201 + $0x220] sm:%s194]
                %272 = vst [vmem:[%s202 + $0x110] sm:%s194] %v271
                %v273 = vld [vmem:[%s201 + $0x230] sm:%s194]
                %274 = vst [vmem:[%s202 + $0x118] sm:%s194] %v273
                %v275 = vld [vmem:[%s201 + $0x240] sm:%s194]
                %276 = vst [vmem:[%s202 + $0x120] sm:%s194] %v275
                %v277 = vld [vmem:[%s201 + $0x250] sm:%s194]
                %278 = vst [vmem:[%s202 + $0x128] sm:%s194] %v277
                %v279 = vld [vmem:[%s201 + $0x260] sm:%s194]
                %280 = vst [vmem:[%s202 + $0x130] sm:%s194] %v279
                %v281 = vld [vmem:[%s201 + $0x270] sm:%s194]
                %282 = vst [vmem:[%s202 + $0x138] sm:%s194] %v281
                %v283 = vld [vmem:[%s201 + $0x280] sm:%s194]
                %284 = vst [vmem:[%s202 + $0x140] sm:%s194] %v283
                %v285 = vld [vmem:[%s201 + $0x290] sm:%s194]
                %286 = vst [vmem:[%s202 + $0x148] sm:%s194] %v285
                %v287 = vld [vmem:[%s201 + $0x2a0] sm:%s194]
                %288 = vst [vmem:[%s202 + $0x150] sm:%s194] %v287
                %v289 = vld [vmem:[%s201 + $0x2b0] sm:%s194]
                %290 = vst [vmem:[%s202 + $0x158] sm:%s194] %v289
                %v291 = vld [vmem:[%s201 + $0x2c0] sm:%s194]
                %292 = vst [vmem:[%s202 + $0x160] sm:%s194] %v291
                %v293 = vld [vmem:[%s201 + $0x2d0] sm:%s194]
                %294 = vst [vmem:[%s202 + $0x168] sm:%s194] %v293
                %v295 = vld [vmem:[%s201 + $0x2e0] sm:%s194]
                %296 = vst [vmem:[%s202 + $0x170] sm:%s194] %v295
                %v297 = vld [vmem:[%s201 + $0x2f0] sm:%s194]
                %298 = vst [vmem:[%s202 + $0x178] sm:%s194] %v297
                %v299 = vld [vmem:[%s201 + $0x300] sm:%s194]
                %300 = vst [vmem:[%s202 + $0x180] sm:%s194] %v299
                %v301 = vld [vmem:[%s201 + $0x310] sm:%s194]
                %302 = vst [vmem:[%s202 + $0x188] sm:%s194] %v301
                %v303 = vld [vmem:[%s201 + $0x320] sm:%s194]
                %304 = vst [vmem:[%s202 + $0x190] sm:%s194] %v303
                %v305 = vld [vmem:[%s201 + $0x330] sm:%s194]
                %306 = vst [vmem:[%s202 + $0x198] sm:%s194] %v305
                %v307 = vld [vmem:[%s201 + $0x340] sm:%s194]
                %308 = vst [vmem:[%s202 + $0x1a0] sm:%s194] %v307
                %v309 = vld [vmem:[%s201 + $0x350] sm:%s194]
                %310 = vst [vmem:[%s202 + $0x1a8] sm:%s194] %v309
                %v311 = vld [vmem:[%s201 + $0x360] sm:%s194]
                %312 = vst [vmem:[%s202 + $0x1b0] sm:%s194] %v311
                %v313 = vld [vmem:[%s201 + $0x370] sm:%s194]
                %314 = vst [vmem:[%s202 + $0x1b8] sm:%s194] %v313
                %v315 = vld [vmem:[%s201 + $0x380] sm:%s194]
                %316 = vst [vmem:[%s202 + $0x1c0] sm:%s194] %v315
                %v317 = vld [vmem:[%s201 + $0x390] sm:%s194]
                %318 = vst [vmem:[%s202 + $0x1c8] sm:%s194] %v317
                %v319 = vld [vmem:[%s201 + $0x3a0] sm:%s194]
                %320 = vst [vmem:[%s202 + $0x1d0] sm:%s194] %v319
                %v321 = vld [vmem:[%s201 + $0x3b0] sm:%s194]
                %322 = vst [vmem:[%s202 + $0x1d8] sm:%s194] %v321
                %v323 = vld [vmem:[%s201 + $0x3c0] sm:%s194]
                %324 = vst [vmem:[%s202 + $0x1e0] sm:%s194] %v323
                %v325 = vld [vmem:[%s201 + $0x3d0] sm:%s194]
                %326 = vst [vmem:[%s202 + $0x1e8] sm:%s194] %v325
                %v327 = vld [vmem:[%s201 + $0x3e0] sm:%s194]
                %328 = vst [vmem:[%s202 + $0x1f0] sm:%s194] %v327
                %v329 = vld [vmem:[%s201 + $0x3f0] sm:%s194]
                %330 = vst [vmem:[%s202 + $0x1f8] sm:%s194] %v329
              $region60: #{discriminator_forward.18} parent=54 // loop_footer
                %s200 = sadd.s32 1, %s196
              $region61: #{discriminator_forward.18} parent=54 // loop_footer_branch
                %195 = sbr.rel target = $region57
              $region62: #{discriminator_forward.18} parent=54 // loop_exit
                _
            $region55: #{discriminator_forward.18} parent=46 // pred_fallthru
              _
          $region47: #{discriminator_forward.18} parent=42 // pred_fallthru
            _
          %471 = vnop
        $region43: #{discriminator_forward.18} parent=15 // pred_fallthru
          _
      $region16: #{discriminator_forward.18} parent=5 // pred_fallthru
        _
      %p472 = scmp.le.s32.totalorder 1, %s8
      %p473 = scmp.lt.s32.totalorder %s8, 17
      %p474 = pnand %p472, %p473
      %p475 = pneg %p474
      // Predicated region
      $region78: #{discriminator_forward.18} parent=5 // pred_check
        _
      $region79: #{discriminator_forward.18} parent=5 // pred_check_branch
        %477 = sbr.rel (%p474) target = $region81
      $region80: #{discriminator_forward.18} parent=5 // pred_region
        %s478 = ssub.s32 %s8, 1
        %s479 = sand.u32 %s42, 1
        %s480 = sand.u32 %s42, 1
        %s481 = smul.addr %s480, 64
        %s482 = scalar_lea.vmem [#allocation3], %s481
        // Predicated region
        $region82: #{discriminator_forward.18} parent=80 // pred_check
          %p483 = pneg %p55
        $region83: #{discriminator_forward.18} parent=80 // pred_check_branch
          %485 = sbr.rel (%p483) target = $region85
        $region84: #{discriminator_forward.18} parent=80 // pred_region
          _
        $region85: #{discriminator_forward.18} parent=80 // pred_fallthru
          _
        %s486 = sand.u32 %s70, 1
        %s487 = sand.u32 %s70, 1
        %s488 = smul.addr %s487, 512
        %s489 = scalar_lea.vmem [#allocation4], %s488
        // Predicated region
        $region86: #{discriminator_forward.18} parent=80 // pred_check
          %p490 = pneg %p83
        $region87: #{discriminator_forward.18} parent=80 // pred_check_branch
          %492 = sbr.rel (%p490) target = $region89
        $region88: #{discriminator_forward.18} parent=80 // pred_region
          _
        $region89: #{discriminator_forward.18} parent=80 // pred_fallthru
          _
        %s493 = sand.u32 %s42, 1
        %s494 = sand.u32 %s42, 1
        %s495 = smul.addr %s494, 64
        %s496 = scalar_lea.vmem [#allocation3], %s495
        %p497 = pneg %p55
        %p498 = pneg %p52
        %s499 = sand.u32 %s70, 1
        %s500 = sand.u32 %s70, 1
        %s501 = smul.addr %s500, 512
        %s502 = scalar_lea.vmem [#allocation4], %s501
        %p503 = pneg %p83
        %p504 = pneg %p80
        %p505 = pneg %p111
        %p506 = pneg %p108
        %s507 = sand.u32 %s98, 1
        %s508 = sand.u32 %s98, 1
        %s509 = smul.addr %s508, 64
        %s510 = scalar_lea.vmem [#allocation5], %s509
        %s511 = smul.u32 4, %s18
        %s512 = smul.u32 4, %s20
        %s513 = smul.u32 64, %s20
        %s514 = smul.u32 2, %s19
        %s515 = smul.u32 4, %s18
        %s516 = smul.u32 2, %s19
        %p517 = scmp.eq.s32.totalorder %s20, 0
        // Predicated region
        $region90: #{discriminator_forward.18} parent=80 // pred_check
          %p518 = pneg %p517
        $region91: #{discriminator_forward.18} parent=80 // pred_check_branch
          %520 = sbr.rel (%p518) target = $region93
        $region92: #{discriminator_forward.18} parent=80 // pred_region
          %521 = vst [vmem:[#allocation2] sm:$0xff] 0.0
          %522 = vst [vmem:[#allocation2 + $0x8] sm:$0xff] 0.0
          %523 = vst [vmem:[#allocation2 + $0x10] sm:$0xff] 0.0
          %524 = vst [vmem:[#allocation2 + $0x18] sm:$0xff] 0.0
          %525 = vst [vmem:[#allocation2 + $0x20] sm:$0xff] 0.0
          %526 = vst [vmem:[#allocation2 + $0x28] sm:$0xff] 0.0
          %527 = vst [vmem:[#allocation2 + $0x30] sm:$0xff] 0.0
          %528 = vst [vmem:[#allocation2 + $0x38] sm:$0xff] 0.0
        $region93: #{discriminator_forward.18} parent=80 // pred_fallthru
          _
        %v529 = vld [vmem:[#allocation2] sm:$0xff]
        %v530 = vld [vmem:[#allocation2 + $0x8] sm:$0xff]
        %v531 = vld [vmem:[#allocation2 + $0x10] sm:$0xff]
        %v532 = vld [vmem:[#allocation2 + $0x18] sm:$0xff]
        %v533 = vld [vmem:[#allocation2 + $0x20] sm:$0xff]
        %v534 = vld [vmem:[#allocation2 + $0x28] sm:$0xff]
        %v535 = vld [vmem:[#allocation2 + $0x30] sm:$0xff]
        %v536 = vld [vmem:[#allocation2 + $0x38] sm:$0xff]
        %v537 = vld [vmem:[%s482] sm:$0xff]
        %v538 = vld [vmem:[%s482 + $0x8] sm:$0xff]
        %v539 = vld [vmem:[%s482 + $0x10] sm:$0xff]
        %v540 = vld [vmem:[%s482 + $0x18] sm:$0xff]
        %v541 = vld [vmem:[%s482 + $0x20] sm:$0xff]
        %v542 = vld [vmem:[%s482 + $0x28] sm:$0xff]
        %v543 = vld [vmem:[%s482 + $0x30] sm:$0xff]
        %v544 = vld [vmem:[%s482 + $0x38] sm:$0xff]
        %v545 = vld [vmem:[%s489] sm:$0xff]
        %v546 = vld [vmem:[%s489 + $0x8] sm:$0xff]
        %v547 = vld [vmem:[%s489 + $0x10] sm:$0xff]
        %v548 = vld [vmem:[%s489 + $0x18] sm:$0xff]
        %v549 = vld [vmem:[%s489 + $0x20] sm:$0xff]
        %v550 = vld [vmem:[%s489 + $0x28] sm:$0xff]
        %v551 = vld [vmem:[%s489 + $0x30] sm:$0xff]
        %v552 = vld [vmem:[%s489 + $0x38] sm:$0xff]
        %v553 = vld [vmem:[%s489 + $0x40] sm:$0xff]
        %v554 = vld [vmem:[%s489 + $0x48] sm:$0xff]
        %v555 = vld [vmem:[%s489 + $0x50] sm:$0xff]
        %v556 = vld [vmem:[%s489 + $0x58] sm:$0xff]
        %v557 = vld [vmem:[%s489 + $0x60] sm:$0xff]
        %v558 = vld [vmem:[%s489 + $0x68] sm:$0xff]
        %v559 = vld [vmem:[%s489 + $0x70] sm:$0xff]
        %v560 = vld [vmem:[%s489 + $0x78] sm:$0xff]
        %v561 = vld [vmem:[%s489 + $0x80] sm:$0xff]
        %v562 = vld [vmem:[%s489 + $0x88] sm:$0xff]
        %v563 = vld [vmem:[%s489 + $0x90] sm:$0xff]
        %v564 = vld [vmem:[%s489 + $0x98] sm:$0xff]
        %v565 = vld [vmem:[%s489 + $0xa0] sm:$0xff]
        %v566 = vld [vmem:[%s489 + $0xa8] sm:$0xff]
        %v567 = vld [vmem:[%s489 + $0xb0] sm:$0xff]
        %v568 = vld [vmem:[%s489 + $0xb8] sm:$0xff]
        %v569 = vld [vmem:[%s489 + $0xc0] sm:$0xff]
        %v570 = vld [vmem:[%s489 + $0xc8] sm:$0xff]
        %v571 = vld [vmem:[%s489 + $0xd0] sm:$0xff]
        %v572 = vld [vmem:[%s489 + $0xd8] sm:$0xff]
        %v573 = vld [vmem:[%s489 + $0xe0] sm:$0xff]
        %v574 = vld [vmem:[%s489 + $0xe8] sm:$0xff]
        %v575 = vld [vmem:[%s489 + $0xf0] sm:$0xff]
        %v576 = vld [vmem:[%s489 + $0xf8] sm:$0xff]
        %v577 = vld [vmem:[%s489 + $0x100] sm:$0xff]
        %v578 = vld [vmem:[%s489 + $0x108] sm:$0xff]
        %v579 = vld [vmem:[%s489 + $0x110] sm:$0xff]
        %v580 = vld [vmem:[%s489 + $0x118] sm:$0xff]
        %v581 = vld [vmem:[%s489 + $0x120] sm:$0xff]
        %v582 = vld [vmem:[%s489 + $0x128] sm:$0xff]
        %v583 = vld [vmem:[%s489 + $0x130] sm:$0xff]
        %v584 = vld [vmem:[%s489 + $0x138] sm:$0xff]
        %v585 = vld [vmem:[%s489 + $0x140] sm:$0xff]
        %v586 = vld [vmem:[%s489 + $0x148] sm:$0xff]
        %v587 = vld [vmem:[%s489 + $0x150] sm:$0xff]
        %v588 = vld [vmem:[%s489 + $0x158] sm:$0xff]
        %v589 = vld [vmem:[%s489 + $0x160] sm:$0xff]
        %v590 = vld [vmem:[%s489 + $0x168] sm:$0xff]
        %v591 = vld [vmem:[%s489 + $0x170] sm:$0xff]
        %v592 = vld [vmem:[%s489 + $0x178] sm:$0xff]
        %v593 = vld [vmem:[%s489 + $0x180] sm:$0xff]
        %v594 = vld [vmem:[%s489 + $0x188] sm:$0xff]
        %v595 = vld [vmem:[%s489 + $0x190] sm:$0xff]
        %v596 = vld [vmem:[%s489 + $0x198] sm:$0xff]
        %v597 = vld [vmem:[%s489 + $0x1a0] sm:$0xff]
        %v598 = vld [vmem:[%s489 + $0x1a8] sm:$0xff]
        %v599 = vld [vmem:[%s489 + $0x1b0] sm:$0xff]
        %v600 = vld [vmem:[%s489 + $0x1b8] sm:$0xff]
        %v601 = vld [vmem:[%s489 + $0x1c0] sm:$0xff]
        %v602 = vld [vmem:[%s489 + $0x1c8] sm:$0xff]
        %v603 = vld [vmem:[%s489 + $0x1d0] sm:$0xff]
        %v604 = vld [vmem:[%s489 + $0x1d8] sm:$0xff]
        %v605 = vld [vmem:[%s489 + $0x1e0] sm:$0xff]
        %v606 = vld [vmem:[%s489 + $0x1e8] sm:$0xff]
        %v607 = vld [vmem:[%s489 + $0x1f0] sm:$0xff]
        %v608 = vld [vmem:[%s489 + $0x1f8] sm:$0xff]
        %v617 = vunpack.c.l.b16 %v537
        %v618 = vunpack.c.h.b16 %v537
        %v619 = vunpack.c.l.b16 %v538
        %v620 = vunpack.c.h.b16 %v538
        %v621 = vunpack.c.l.b16 %v539
        %v622 = vunpack.c.h.b16 %v539
        %v623 = vunpack.c.l.b16 %v540
        %v624 = vunpack.c.h.b16 %v540
        %v625 = vunpack.c.l.b16 %v541
        %v626 = vunpack.c.h.b16 %v541
        %v627 = vunpack.c.l.b16 %v542
        %v628 = vunpack.c.h.b16 %v542
        %v629 = vunpack.c.l.b16 %v543
        %v630 = vunpack.c.h.b16 %v543
        %v631 = vunpack.c.l.b16 %v544
        %v632 = vunpack.c.h.b16 %v544
        %v633 = vpack.c.b16 %v621, %v617
        %v634 = vpack.c.b16 %v622, %v618
        %v635 = vpack.c.b16 %v623, %v619
        %v636 = vpack.c.b16 %v624, %v620
        %v637 = vpack.c.b16 %v629, %v625
        %v638 = vpack.c.b16 %v630, %v626
        %v639 = vpack.c.b16 %v631, %v627
        %v640 = vpack.c.b16 %v632, %v628
        %v713 = vunpack.c.l.b16 %v545
        %v714 = vunpack.c.h.b16 %v545
        %v715 = vunpack.c.l.b16 %v546
        %v716 = vunpack.c.h.b16 %v546
        %v717 = vunpack.c.l.b16 %v547
        %v718 = vunpack.c.h.b16 %v547
        %v719 = vunpack.c.l.b16 %v548
        %v720 = vunpack.c.h.b16 %v548
        %v721 = vunpack.c.l.b16 %v549
        %v722 = vunpack.c.h.b16 %v549
        %v723 = vunpack.c.l.b16 %v550
        %v724 = vunpack.c.h.b16 %v550
        %v725 = vunpack.c.l.b16 %v551
        %v726 = vunpack.c.h.b16 %v551
        %v727 = vunpack.c.l.b16 %v552
        %v728 = vunpack.c.h.b16 %v552
        %v729 = vunpack.c.l.b16 %v553
        %v730 = vunpack.c.h.b16 %v553
        %v731 = vunpack.c.l.b16 %v554
        %v732 = vunpack.c.h.b16 %v554
        %v733 = vunpack.c.l.b16 %v555
        %v734 = vunpack.c.h.b16 %v555
        %v735 = vunpack.c.l.b16 %v556
        %v736 = vunpack.c.h.b16 %v556
        %v737 = vunpack.c.l.b16 %v557
        %v738 = vunpack.c.h.b16 %v557
        %v739 = vunpack.c.l.b16 %v558
        %v740 = vunpack.c.h.b16 %v558
        %v741 = vunpack.c.l.b16 %v559
        %v742 = vunpack.c.h.b16 %v559
        %v743 = vunpack.c.l.b16 %v560
        %v744 = vunpack.c.h.b16 %v560
        %v745 = vunpack.c.l.b16 %v561
        %v746 = vunpack.c.h.b16 %v561
        %v747 = vunpack.c.l.b16 %v562
        %v748 = vunpack.c.h.b16 %v562
        %v749 = vunpack.c.l.b16 %v563
        %v750 = vunpack.c.h.b16 %v563
        %v751 = vunpack.c.l.b16 %v564
        %v752 = vunpack.c.h.b16 %v564
        %v753 = vunpack.c.l.b16 %v565
        %v754 = vunpack.c.h.b16 %v565
        %v755 = vunpack.c.l.b16 %v566
        %v756 = vunpack.c.h.b16 %v566
        %v757 = vunpack.c.l.b16 %v567
        %v758 = vunpack.c.h.b16 %v567
        %v759 = vunpack.c.l.b16 %v568
        %v760 = vunpack.c.h.b16 %v568
        %v761 = vunpack.c.l.b16 %v569
        %v762 = vunpack.c.h.b16 %v569
        %v763 = vunpack.c.l.b16 %v570
        %v764 = vunpack.c.h.b16 %v570
        %v765 = vunpack.c.l.b16 %v571
        %v766 = vunpack.c.h.b16 %v571
        %v767 = vunpack.c.l.b16 %v572
        %v768 = vunpack.c.h.b16 %v572
        %v769 = vunpack.c.l.b16 %v573
        %v770 = vunpack.c.h.b16 %v573
        %v771 = vunpack.c.l.b16 %v574
        %v772 = vunpack.c.h.b16 %v574
        %v773 = vunpack.c.l.b16 %v575
        %v774 = vunpack.c.h.b16 %v575
        %v775 = vunpack.c.l.b16 %v576
        %v776 = vunpack.c.h.b16 %v576
        %v777 = vunpack.c.l.b16 %v577
        %v778 = vunpack.c.h.b16 %v577
        %v779 = vunpack.c.l.b16 %v578
        %v780 = vunpack.c.h.b16 %v578
        %v781 = vunpack.c.l.b16 %v579
        %v782 = vunpack.c.h.b16 %v579
        %v783 = vunpack.c.l.b16 %v580
        %v784 = vunpack.c.h.b16 %v580
        %v785 = vunpack.c.l.b16 %v581
        %v786 = vunpack.c.h.b16 %v581
        %v787 = vunpack.c.l.b16 %v582
        %v788 = vunpack.c.h.b16 %v582
        %v789 = vunpack.c.l.b16 %v583
        %v790 = vunpack.c.h.b16 %v583
        %v791 = vunpack.c.l.b16 %v584
        %v792 = vunpack.c.h.b16 %v584
        %v793 = vunpack.c.l.b16 %v585
        %v794 = vunpack.c.h.b16 %v585
        %v795 = vunpack.c.l.b16 %v586
        %v796 = vunpack.c.h.b16 %v586
        %v797 = vunpack.c.l.b16 %v587
        %v798 = vunpack.c.h.b16 %v587
        %v799 = vunpack.c.l.b16 %v588
        %v800 = vunpack.c.h.b16 %v588
        %v801 = vunpack.c.l.b16 %v589
        %v802 = vunpack.c.h.b16 %v589
        %v803 = vunpack.c.l.b16 %v590
        %v804 = vunpack.c.h.b16 %v590
        %v805 = vunpack.c.l.b16 %v591
        %v806 = vunpack.c.h.b16 %v591
        %v807 = vunpack.c.l.b16 %v592
        %v808 = vunpack.c.h.b16 %v592
        %v809 = vunpack.c.l.b16 %v593
        %v810 = vunpack.c.h.b16 %v593
        %v811 = vunpack.c.l.b16 %v594
        %v812 = vunpack.c.h.b16 %v594
        %v813 = vunpack.c.l.b16 %v595
        %v814 = vunpack.c.h.b16 %v595
        %v815 = vunpack.c.l.b16 %v596
        %v816 = vunpack.c.h.b16 %v596
        %v817 = vunpack.c.l.b16 %v597
        %v818 = vunpack.c.h.b16 %v597
        %v819 = vunpack.c.l.b16 %v598
        %v820 = vunpack.c.h.b16 %v598
        %v821 = vunpack.c.l.b16 %v599
        %v822 = vunpack.c.h.b16 %v599
        %v823 = vunpack.c.l.b16 %v600
        %v824 = vunpack.c.h.b16 %v600
        %v825 = vunpack.c.l.b16 %v601
        %v826 = vunpack.c.h.b16 %v601
        %v827 = vunpack.c.l.b16 %v602
        %v828 = vunpack.c.h.b16 %v602
        %v829 = vunpack.c.l.b16 %v603
        %v830 = vunpack.c.h.b16 %v603
        %v831 = vunpack.c.l.b16 %v604
        %v832 = vunpack.c.h.b16 %v604
        %v833 = vunpack.c.l.b16 %v605
        %v834 = vunpack.c.h.b16 %v605
        %v835 = vunpack.c.l.b16 %v606
        %v836 = vunpack.c.h.b16 %v606
        %v837 = vunpack.c.l.b16 %v607
        %v838 = vunpack.c.h.b16 %v607
        %v839 = vunpack.c.l.b16 %v608
        %v840 = vunpack.c.h.b16 %v608
        %v841 = vpack.c.b16 %v715, %v713
        %v842 = vpack.c.b16 %v716, %v714
        %v843 = vpack.c.b16 %v719, %v717
        %v844 = vpack.c.b16 %v720, %v718
        %v845 = vpack.c.b16 %v723, %v721
        %v846 = vpack.c.b16 %v724, %v722
        %v847 = vpack.c.b16 %v727, %v725
        %v848 = vpack.c.b16 %v728, %v726
        %v849 = vpack.c.b16 %v731, %v729
        %v850 = vpack.c.b16 %v732, %v730
        %v851 = vpack.c.b16 %v735, %v733
        %v852 = vpack.c.b16 %v736, %v734
        %v853 = vpack.c.b16 %v739, %v737
        %v854 = vpack.c.b16 %v740, %v738
        %v855 = vpack.c.b16 %v743, %v741
        %v856 = vpack.c.b16 %v744, %v742
        %v857 = vpack.c.b16 %v747, %v745
        %v858 = vpack.c.b16 %v748, %v746
        %v859 = vpack.c.b16 %v751, %v749
        %v860 = vpack.c.b16 %v752, %v750
        %v861 = vpack.c.b16 %v755, %v753
        %v862 = vpack.c.b16 %v756, %v754
        %v863 = vpack.c.b16 %v759, %v757
        %v864 = vpack.c.b16 %v760, %v758
        %v865 = vpack.c.b16 %v763, %v761
        %v866 = vpack.c.b16 %v764, %v762
        %v867 = vpack.c.b16 %v767, %v765
        %v868 = vpack.c.b16 %v768, %v766
        %v869 = vpack.c.b16 %v771, %v769
        %v870 = vpack.c.b16 %v772, %v770
        %v871 = vpack.c.b16 %v775, %v773
        %v872 = vpack.c.b16 %v776, %v774
        %v873 = vpack.c.b16 %v779, %v777
        %v874 = vpack.c.b16 %v780, %v778
        %v875 = vpack.c.b16 %v783, %v781
        %v876 = vpack.c.b16 %v784, %v782
        %v877 = vpack.c.b16 %v787, %v785
        %v878 = vpack.c.b16 %v788, %v786
        %v879 = vpack.c.b16 %v791, %v789
        %v880 = vpack.c.b16 %v792, %v790
        %v881 = vpack.c.b16 %v795, %v793
        %v882 = vpack.c.b16 %v796, %v794
        %v883 = vpack.c.b16 %v799, %v797
        %v884 = vpack.c.b16 %v800, %v798
        %v885 = vpack.c.b16 %v803, %v801
        %v886 = vpack.c.b16 %v804, %v802
        %v887 = vpack.c.b16 %v807, %v805
        %v888 = vpack.c.b16 %v808, %v806
        %v889 = vpack.c.b16 %v811, %v809
        %v890 = vpack.c.b16 %v812, %v810
        %v891 = vpack.c.b16 %v815, %v813
        %v892 = vpack.c.b16 %v816, %v814
        %v893 = vpack.c.b16 %v819, %v817
        %v894 = vpack.c.b16 %v820, %v818
        %v895 = vpack.c.b16 %v823, %v821
        %v896 = vpack.c.b16 %v824, %v822
        %v897 = vpack.c.b16 %v827, %v825
        %v898 = vpack.c.b16 %v828, %v826
        %v899 = vpack.c.b16 %v831, %v829
        %v900 = vpack.c.b16 %v832, %v830
        %v901 = vpack.c.b16 %v835, %v833
        %v902 = vpack.c.b16 %v836, %v834
        %v903 = vpack.c.b16 %v839, %v837
        %v904 = vpack.c.b16 %v840, %v838
        %969 = vmatprep.subr.bf16.mxu0 %v856
        %970 = vmatpush1.bf16.msra.mxu0 %v855
        %971 = vmatprep.subr.bf16.mxu0 %v854
        %972 = vmatpush1.bf16.msra.mxu0 %v853
        %973 = vmatprep.subr.bf16.mxu0 %v852
        %974 = vmatpush1.bf16.msra.mxu0 %v851
        %975 = vmatprep.subr.bf16.mxu0 %v850
        %976 = vmatpush1.bf16.msra.mxu0 %v849
        %977 = vmatprep.subr.bf16.mxu0 %v848
        %978 = vmatpush1.bf16.msra.mxu0 %v847
        %979 = vmatprep.subr.bf16.mxu0 %v846
        %980 = vmatpush1.bf16.msra.mxu0 %v845
        %981 = vmatprep.subr.bf16.mxu0 %v844
        %982 = vmatpush1.bf16.msra.mxu0 %v843
        %983 = vmatprep.subr.bf16.mxu0 %v842
        %984 = vmatpush1.bf16.msra.mxu0 %v841
        %985 = vmatprep.subr.bf16.mxu0 %v872
        %986 = vmatpush2.bf16.msra.mxu0 %v871
        %987 = vmatprep.subr.bf16.mxu0 %v870
        %988 = vmatpush2.bf16.msra.mxu0 %v869
        %989 = vmatprep.subr.bf16.mxu0 %v868
        %990 = vmatpush2.bf16.msra.mxu0 %v867
        %991 = vmatprep.subr.bf16.mxu0 %v866
        %992 = vmatpush2.bf16.msra.mxu0 %v865
        %993 = vmatprep.subr.bf16.mxu0 %v864
        %994 = vmatpush2.bf16.msra.mxu0 %v863
        %995 = vmatprep.subr.bf16.mxu0 %v862
        %996 = vmatpush2.bf16.msra.mxu0 %v861
        %997 = vmatprep.subr.bf16.mxu0 %v860
        %998 = vmatpush2.bf16.msra.mxu0 %v859
        %999 = vmatprep.subr.bf16.mxu0 %v858
        %1000 = vmatpush2.bf16.msra.mxu0 %v857
        %1001 = vmatprep.mubr.bf16.mxu0 %v634
        %1002 = vmatmul.mubr.bf16.gmra.mxu0 %v633
        %v1003 = vpop.f32.mrf.mxu0
        %v1004 = vadd.f32 0.0, %v1003
        %v1005 = vpop.f32.mrf.mxu0
        %v1006 = vadd.f32 0.0, %v1005
        %v1007 = vpop.f32.mrf.mxu0
        %v1008 = vadd.f32 0.0, %v1007
        %v1009 = vpop.f32.mrf.mxu0
        %v1010 = vadd.f32 0.0, %v1009
        %1011 = vmatprep.mubr.bf16.mxu0 %v638
        %1012 = vmatmul.mubr.bf16.gmra.mxu0 %v637
        %v1013 = vpop.f32.mrf.mxu0
        %v1014 = vadd.f32 0.0, %v1013
        %v1015 = vpop.f32.mrf.mxu0
        %v1016 = vadd.f32 0.0, %v1015
        %v1017 = vpop.f32.mrf.mxu0
        %v1018 = vadd.f32 0.0, %v1017
        %v1019 = vpop.f32.mrf.mxu0
        %v1020 = vadd.f32 0.0, %v1019
        %1021 = vdwg.mxu0
        %1022 = vmatprep.subr.bf16.mxu0 %v888
        %1023 = vmatpush1.bf16.msra.mxu0 %v887
        %1024 = vmatprep.subr.bf16.mxu0 %v886
        %1025 = vmatpush1.bf16.msra.mxu0 %v885
        %1026 = vmatprep.subr.bf16.mxu0 %v884
        %1027 = vmatpush1.bf16.msra.mxu0 %v883
        %1028 = vmatprep.subr.bf16.mxu0 %v882
        %1029 = vmatpush1.bf16.msra.mxu0 %v881
        %1030 = vmatprep.subr.bf16.mxu0 %v880
        %1031 = vmatpush1.bf16.msra.mxu0 %v879
        %1032 = vmatprep.subr.bf16.mxu0 %v878
        %1033 = vmatpush1.bf16.msra.mxu0 %v877
        %1034 = vmatprep.subr.bf16.mxu0 %v876
        %1035 = vmatpush1.bf16.msra.mxu0 %v875
        %1036 = vmatprep.subr.bf16.mxu0 %v874
        %1037 = vmatpush1.bf16.msra.mxu0 %v873
        %1038 = vmatprep.subr.bf16.mxu0 %v904
        %1039 = vmatpush2.bf16.msra.mxu0 %v903
        %1040 = vmatprep.subr.bf16.mxu0 %v902
        %1041 = vmatpush2.bf16.msra.mxu0 %v901
        %1042 = vmatprep.subr.bf16.mxu0 %v900
        %1043 = vmatpush2.bf16.msra.mxu0 %v899
        %1044 = vmatprep.subr.bf16.mxu0 %v898
        %1045 = vmatpush2.bf16.msra.mxu0 %v897
        %1046 = vmatprep.subr.bf16.mxu0 %v896
        %1047 = vmatpush2.bf16.msra.mxu0 %v895
        %1048 = vmatprep.subr.bf16.mxu0 %v894
        %1049 = vmatpush2.bf16.msra.mxu0 %v893
        %1050 = vmatprep.subr.bf16.mxu0 %v892
        %1051 = vmatpush2.bf16.msra.mxu0 %v891
        %1052 = vmatprep.subr.bf16.mxu0 %v890
        %1053 = vmatpush2.bf16.msra.mxu0 %v889
        %1054 = vmatprep.mubr.bf16.mxu0 %v636
        %1055 = vmatmul.mubr.bf16.gmra.mxu0 %v635
        %v1056 = vpop.f32.mrf.mxu0
        %v1057 = vadd.f32 %v1004, %v1056
        %v1058 = vpop.f32.mrf.mxu0
        %v1059 = vadd.f32 %v1006, %v1058
        %v1060 = vpop.f32.mrf.mxu0
        %v1061 = vadd.f32 %v1008, %v1060
        %v1062 = vpop.f32.mrf.mxu0
        %v1063 = vadd.f32 %v1010, %v1062
        %1064 = vmatprep.mubr.bf16.mxu0 %v640
        %1065 = vmatmul.mubr.bf16.gmra.mxu0 %v639
        %v1066 = vpop.f32.mrf.mxu0
        %v1067 = vadd.f32 %v1014, %v1066
        %v1068 = vpop.f32.mrf.mxu0
        %v1069 = vadd.f32 %v1016, %v1068
        %v1070 = vpop.f32.mrf.mxu0
        %v1071 = vadd.f32 %v1018, %v1070
        %v1072 = vpop.f32.mrf.mxu0
        %v1073 = vadd.f32 %v1020, %v1072
        %1074 = vdwg.mxu0
        %v1075 = vadd.f32 %v529, %v1057
        %v1076 = vadd.f32 %v530, %v1059
        %v1077 = vadd.f32 %v531, %v1061
        %v1078 = vadd.f32 %v532, %v1063
        %v1079 = vadd.f32 %v533, %v1067
        %v1080 = vadd.f32 %v534, %v1069
        %v1081 = vadd.f32 %v535, %v1071
        %v1082 = vadd.f32 %v536, %v1073
        %1083 = vst [vmem:[#allocation2] sm:$0xff] %v1075
        %1084 = vst [vmem:[#allocation2 + $0x8] sm:$0xff] %v1076
        %1085 = vst [vmem:[#allocation2 + $0x10] sm:$0xff] %v1077
        %1086 = vst [vmem:[#allocation2 + $0x18] sm:$0xff] %v1078
        %1087 = vst [vmem:[#allocation2 + $0x20] sm:$0xff] %v1079
        %1088 = vst [vmem:[#allocation2 + $0x28] sm:$0xff] %v1080
        %1089 = vst [vmem:[#allocation2 + $0x30] sm:$0xff] %v1081
        %1090 = vst [vmem:[#allocation2 + $0x38] sm:$0xff] %v1082
        %p1091 = scmp.eq.s32.totalorder %s20, 7
        // Predicated region
        $region94: #{discriminator_forward.18} parent=80 // pred_check
          %p1092 = pneg %p1091
        $region95: #{discriminator_forward.18} parent=80 // pred_check_branch
          %1094 = sbr.rel (%p1092) target = $region97
        $region96: #{discriminator_forward.18} parent=80 // pred_region
          %v1095 = vld [vmem:[#allocation2] sm:$0xff]
          %v1096 = vld [vmem:[#allocation2 + $0x8] sm:$0xff]
          %v1097 = vld [vmem:[#allocation2 + $0x10] sm:$0xff]
          %v1098 = vld [vmem:[#allocation2 + $0x18] sm:$0xff]
          %v1099 = vld [vmem:[#allocation2 + $0x20] sm:$0xff]
          %v1100 = vld [vmem:[#allocation2 + $0x28] sm:$0xff]
          %v1101 = vld [vmem:[#allocation2 + $0x30] sm:$0xff]
          %v1102 = vld [vmem:[#allocation2 + $0x38] sm:$0xff]
          %1103 = vst [vmem:[%s510] sm:$0xff] %v1095
          %1104 = vst [vmem:[%s510 + $0x8] sm:$0xff] %v1096
          %1105 = vst [vmem:[%s510 + $0x10] sm:$0xff] %v1097
          %1106 = vst [vmem:[%s510 + $0x18] sm:$0xff] %v1098
          %1107 = vst [vmem:[%s510 + $0x20] sm:$0xff] %v1099
          %1108 = vst [vmem:[%s510 + $0x28] sm:$0xff] %v1100
          %1109 = vst [vmem:[%s510 + $0x30] sm:$0xff] %v1101
          %1110 = vst [vmem:[%s510 + $0x38] sm:$0xff] %v1102
        $region97: #{discriminator_forward.18} parent=80 // pred_fallthru
          _
        %s1111 = sand.u32 %s98, 1
        %s1112 = sand.u32 %s98, 1
        %s1113 = smul.addr %s1112, 64
        %s1114 = scalar_lea.vmem [#allocation5], %s1113
        // Predicated region
        $region98: #{discriminator_forward.18} parent=80 // pred_check
          %p1115 = pneg %p108
        $region99: #{discriminator_forward.18} parent=80 // pred_check_branch
          %1117 = sbr.rel (%p1115) target = $region101
        $region100: #{discriminator_forward.18} parent=80 // pred_region
          %s1118 = smul.u32 4, %s18
          %s1119 = smul.u32 2, %s19
          %s1120 = smul.addr %s1118, 4
          %s1121 = sadd.s32 %s1119, %s1120
          %s1122 = smul.addr %s1121, 8
          %s1123 = scalar_lea.vmem %s2, %s1122
          // Predicated region
          $region102: #{discriminator_forward.18} parent=100 // pred_check
            _
          $region103: #{discriminator_forward.18} parent=100 // pred_check_branch
            %1125 = sbr.rel (0) target = $region105
          $region104: #{discriminator_forward.18} parent=100 // pred_region
            // Predicated region
            $region106: #{discriminator_forward.18} parent=104 // pred_check
              _
            $region107: #{discriminator_forward.18} parent=104 // pred_check_branch
              %1127 = sbr.rel (0) target = $region109
            $region108: #{discriminator_forward.18} parent=104 // pred_region
              loop: start=0, step=1, limit=1
              $region110: #{discriminator_forward.18} parent=108 // loop_pre_header
                _
              $region111: #{discriminator_forward.18} parent=108 // loop_header
                %s1129 = sphi 0, %s1133
                %p1130 = scmp.ge.s32.totalorder %s1129, 1
                %s1134 = sphi %s1114, %s1114
                %s1135 = sphi %s1123, %s1123
              $region112: #{discriminator_forward.18} parent=108 // loop_header_branch
                %1132 = sbr.rel (%p1130) target = $region116
              $region113: #{discriminator_forward.18} parent=108 // loop_body
                %v1136 = vld [vmem:[%s1134] sm:$0xff]
                %1137 = vst [vmem:[%s1135] sm:$0xff] %v1136
                %v1138 = vld [vmem:[%s1134 + $0x8] sm:$0xff]
                %1139 = vst [vmem:[%s1135 + $0x8] sm:$0xff] %v1138
                %v1140 = vld [vmem:[%s1134 + $0x10] sm:$0xff]
                %1141 = vst [vmem:[%s1135 + $0x20] sm:$0xff] %v1140
                %v1142 = vld [vmem:[%s1134 + $0x18] sm:$0xff]
                %1143 = vst [vmem:[%s1135 + $0x28] sm:$0xff] %v1142
                %v1144 = vld [vmem:[%s1134 + $0x20] sm:$0xff]
                %1145 = vst [vmem:[%s1135 + $0x40] sm:$0xff] %v1144
                %v1146 = vld [vmem:[%s1134 + $0x28] sm:$0xff]
                %1147 = vst [vmem:[%s1135 + $0x48] sm:$0xff] %v1146
                %v1148 = vld [vmem:[%s1134 + $0x30] sm:$0xff]
                %1149 = vst [vmem:[%s1135 + $0x60] sm:$0xff] %v1148
                %v1150 = vld [vmem:[%s1134 + $0x38] sm:$0xff]
                %1151 = vst [vmem:[%s1135 + $0x68] sm:$0xff] %v1150
              $region114: #{discriminator_forward.18} parent=108 // loop_footer
                %s1133 = sadd.s32 1, %s1129
              $region115: #{discriminator_forward.18} parent=108 // loop_footer_branch
                %1128 = sbr.rel target = $region111
              $region116: #{discriminator_forward.18} parent=108 // loop_exit
                _
            $region109: #{discriminator_forward.18} parent=104 // pred_fallthru
              _
            // Predicated region
            $region117: #{discriminator_forward.18} parent=104 // pred_check
              _
            $region118: #{discriminator_forward.18} parent=104 // pred_check_branch
              %1153 = sbr.rel target = $region120
            $region119: #{discriminator_forward.18} parent=104 // pred_region
              _
            $region120: #{discriminator_forward.18} parent=104 // pred_fallthru
              _
          $region105: #{discriminator_forward.18} parent=100 // pred_fallthru
            _
          %1154 = vnop
        $region101: #{discriminator_forward.18} parent=80 // pred_fallthru
          _
      $region81: #{discriminator_forward.18} parent=5 // pred_fallthru
        _
      %p1155 = scmp.le.s32.totalorder 2, %s8
      // Predicated region
      $region121: #{discriminator_forward.18} parent=5 // pred_check
        %p1156 = pneg %p1155
      $region122: #{discriminator_forward.18} parent=5 // pred_check_branch
        %1158 = sbr.rel (%p1156) target = $region124
      $region123: #{discriminator_forward.18} parent=5 // pred_region
        %s1159 = ssub.s32 %s8, 2
        // Predicated region
        $region125: #{discriminator_forward.18} parent=123 // pred_check
          %p1160 = pneg %p114
        $region126: #{discriminator_forward.18} parent=123 // pred_check_branch
          %1162 = sbr.rel (%p1160) target = $region128
        $region127: #{discriminator_forward.18} parent=123 // pred_region
          %s1163 = sand.u32 %s99, 1
          %s1164 = sand.u32 %s99, 1
          %s1165 = smul.addr %s1164, 64
          %s1166 = scalar_lea.vmem [#allocation5], %s1165
        $region128: #{discriminator_forward.18} parent=123 // pred_fallthru
          _
      $region124: #{discriminator_forward.18} parent=5 // pred_fallthru
        _
    $region6: #{discriminator_forward.18} parent=1 // loop_footer
      %s12 = sadd.s32 1, %s8
    $region7: #{discriminator_forward.18} parent=1 // loop_footer_branch
      %7 = sbr.rel target = $region3
    $region8: #{discriminator_forward.18} parent=1 // loop_exit
      _

// kernel: discriminator_forward.19
$region0: #{discriminator_forward.19}
  #allocation0 [shape = 'u32[]', space=smem, size = 0x4, offset = 0x4, fixed_abs, tag = 'smem constant byte address 0x4 - core index']
  #allocation1 [shape = 'u32[144,128]{1,0:T(1,128)}', space=vmem, size = 0x12000, scoped, tag = 'internal scratch']
  %s0 = inlined_call_operand.vmem [shape: f32[32,512], index: 0, kind: input, shape index: {}]
  %s1 = inlined_call_operand.vmem [shape: f32[1,512], index: 1, kind: output, shape index: {0}]
  %s2 = inlined_call_operand.vmem [shape: f32[1,512], index: 2, kind: output, shape index: {1}]
  %3 = xla_tuple %s1, %s2
  %s4 = sld [smem:[#allocation0]]
  $region26: #{discriminator_forward.19} parent=0
    _
  %s6 = ssub.s32 1, %s4
  %s7 = scalar_select 0, %s6, %s4
  // Predicated region
  $region2: #{discriminator_forward.19} parent=0 // pred_check
    _
  $region3: #{discriminator_forward.19} parent=0 // pred_check_branch
    %9 = sbr.rel (0) target = $region5
  $region4: #{discriminator_forward.19} parent=0 // pred_region
    _
  $region5: #{discriminator_forward.19} parent=0 // pred_fallthru
    _
  %p10 = scmp.eq.s32.totalorder 0, 0
  // Predicated region
  $region6: #{discriminator_forward.19} parent=0 // pred_check
    %p11 = pneg %p10
  $region7: #{discriminator_forward.19} parent=0 // pred_check_branch
    %13 = sbr.rel (%p11) target = $region9
  $region8: #{discriminator_forward.19} parent=0 // pred_region
    %v14 = vlaneseq
    %vm15 = vcmp.ge.s32.totalorder %v14, 0
    %vm16 = vcmp.lt.s32.totalorder %v14, 512
    %vm17 = vmand %vm15, %vm16
    %18 = vst.msk [vmem:[%s1] sm:$0xf] %vm17, 0.0
    %19 = vst.msk [vmem:[%s2] sm:$0xf] %vm17, 0.0
  $region9: #{discriminator_forward.19} parent=0 // pred_fallthru
    _
  %v20 = vld [vmem:[%s0] sm:$0xff]
  %v21 = vld [vmem:[%s0 + $0x8] sm:$0xff]
  %v22 = vld [vmem:[%s0 + $0x10] sm:$0xff]
  %v23 = vld [vmem:[%s0 + $0x18] sm:$0xff]
  %v24 = vld [vmem:[%s0 + $0x20] sm:$0xff]
  %v25 = vld [vmem:[%s0 + $0x28] sm:$0xff]
  %v26 = vld [vmem:[%s0 + $0x30] sm:$0xff]
  %v27 = vld [vmem:[%s0 + $0x38] sm:$0xff]
  %v28 = vld [vmem:[%s0 + $0x40] sm:$0xff]
  %v29 = vld [vmem:[%s0 + $0x48] sm:$0xff]
  %v30 = vld [vmem:[%s0 + $0x50] sm:$0xff]
  %v31 = vld [vmem:[%s0 + $0x58] sm:$0xff]
  %v32 = vld [vmem:[%s0 + $0x60] sm:$0xff]
  %v33 = vld [vmem:[%s0 + $0x68] sm:$0xff]
  %v34 = vld [vmem:[%s0 + $0x70] sm:$0xff]
  %v35 = vld [vmem:[%s0 + $0x78] sm:$0xff]
  %v36 = vld [vmem:[%s1] sm:$0xf]
  %v37 = vadd.f32 %v20, %v24
  %v38 = vadd.f32 %v37, %v28
  %v39 = vadd.f32 %v38, %v32
  %v40 = vrot.slane %v39, 4
  %v41 = vadd.f32 %v39, %v40
  %v42 = vrot.slane %v41, 2
  %v43 = vadd.f32 %v41, %v42
  %v44 = vrot.slane %v43, 1
  %v45 = vadd.f32 %v43, %v44
  %v46 = vadd.f32 %v21, %v25
  %v47 = vadd.f32 %v46, %v29
  %v48 = vadd.f32 %v47, %v33
  %v49 = vrot.slane %v48, 4
  %v50 = vadd.f32 %v48, %v49
  %v51 = vrot.slane %v50, 2
  %v52 = vadd.f32 %v50, %v51
  %v53 = vrot.slane %v52, 1
  %v54 = vadd.f32 %v52, %v53
  %v55 = vadd.f32 %v22, %v26
  %v56 = vadd.f32 %v55, %v30
  %v57 = vadd.f32 %v56, %v34
  %v58 = vrot.slane %v57, 4
  %v59 = vadd.f32 %v57, %v58
  %v60 = vrot.slane %v59, 2
  %v61 = vadd.f32 %v59, %v60
  %v62 = vrot.slane %v61, 1
  %v63 = vadd.f32 %v61, %v62
  %v64 = vadd.f32 %v23, %v27
  %v65 = vadd.f32 %v64, %v31
  %v66 = vadd.f32 %v65, %v35
  %v67 = vrot.slane %v66, 4
  %v68 = vadd.f32 %v66, %v67
  %v69 = vrot.slane %v68, 2
  %v70 = vadd.f32 %v68, %v69
  %v71 = vrot.slane %v70, 1
  %v72 = vadd.f32 %v70, %v71
  %v77 = vcombine.low %v45, %v54
  %v78 = vcombine.low %v63, %v72
  %v80 = vunpack.c.l.s4 1966171168
  %v81 = vunpack.c.0.s8 %v80
  %v82 = vlaneseq
  %v83 = vshrl.u32 %v82, 7
  %v84 = vsub.s32 %v81, %v83
  %v85 = vrot.slane %v77, %v84
  %v87 = vunpack.c.l.s4 1966171168
  %v88 = vunpack.c.0.s8 %v87
  %v89 = vlaneseq
  %v90 = vshrl.u32 %v89, 7
  %v91 = vsub.s32 %v88, %v90
  %v92 = vrot.slane %v78, %v91
  %v93 = vcombine.low %v85, %v92
  %v95 = vunpack.c.l.s4 1966171168
  %v96 = vunpack.c.0.s8 %v95
  %v97 = vlaneseq
  %v98 = vshrl.u32 %v97, 7
  %v99 = vsub.s32 %v96, %v98
  %v100 = vrot.slane %v93, %v99
  %v102 = vadd.f32 %v36, %v100
  %v103 = vlaneseq
  %vm104 = vcmp.ge.s32.totalorder %v103, 0
  %vm105 = vcmp.lt.s32.totalorder %v103, 512
  %vm106 = vmand %vm104, %vm105
  %107 = vst.msk [vmem:[%s1] sm:$0xf] %vm106, %v102
  %v108 = vld [vmem:[%s2] sm:$0xf]
  %v109 = vmul.f32 %v20, %v20
  %v110 = vmul.f32 %v21, %v21
  %v111 = vmul.f32 %v22, %v22
  %v112 = vmul.f32 %v23, %v23
  %v113 = vmul.f32 %v24, %v24
  %v114 = vmul.f32 %v25, %v25
  %v115 = vmul.f32 %v26, %v26
  %v116 = vmul.f32 %v27, %v27
  %v117 = vmul.f32 %v28, %v28
  %v118 = vmul.f32 %v29, %v29
  %v119 = vmul.f32 %v30, %v30
  %v120 = vmul.f32 %v31, %v31
  %v121 = vmul.f32 %v32, %v32
  %v122 = vmul.f32 %v33, %v33
  %v123 = vmul.f32 %v34, %v34
  %v124 = vmul.f32 %v35, %v35
  %v125 = vadd.f32 %v109, %v113
  %v126 = vadd.f32 %v125, %v117
  %v127 = vadd.f32 %v126, %v121
  %v128 = vrot.slane %v127, 4
  %v129 = vadd.f32 %v127, %v128
  %v130 = vrot.slane %v129, 2
  %v131 = vadd.f32 %v129, %v130
  %v132 = vrot.slane %v131, 1
  %v133 = vadd.f32 %v131, %v132
  %v134 = vadd.f32 %v110, %v114
  %v135 = vadd.f32 %v134, %v118
  %v136 = vadd.f32 %v135, %v122
  %v137 = vrot.slane %v136, 4
  %v138 = vadd.f32 %v136, %v137
  %v139 = vrot.slane %v138, 2
  %v140 = vadd.f32 %v138, %v139
  %v141 = vrot.slane %v140, 1
  %v142 = vadd.f32 %v140, %v141
  %v143 = vadd.f32 %v111, %v115
  %v144 = vadd.f32 %v143, %v119
  %v145 = vadd.f32 %v144, %v123
  %v146 = vrot.slane %v145, 4
  %v147 = vadd.f32 %v145, %v146
  %v148 = vrot.slane %v147, 2
  %v149 = vadd.f32 %v147, %v148
  %v150 = vrot.slane %v149, 1
  %v151 = vadd.f32 %v149, %v150
  %v152 = vadd.f32 %v112, %v116
  %v153 = vadd.f32 %v152, %v120
  %v154 = vadd.f32 %v153, %v124
  %v155 = vrot.slane %v154, 4
  %v156 = vadd.f32 %v154, %v155
  %v157 = vrot.slane %v156, 2
  %v158 = vadd.f32 %v156, %v157
  %v159 = vrot.slane %v158, 1
  %v160 = vadd.f32 %v158, %v159
  %v165 = vcombine.low %v133, %v142
  %v166 = vcombine.low %v151, %v160
  %v168 = vunpack.c.l.s4 1966171168
  %v169 = vunpack.c.0.s8 %v168
  %v170 = vlaneseq
  %v171 = vshrl.u32 %v170, 7
  %v172 = vsub.s32 %v169, %v171
  %v173 = vrot.slane %v165, %v172
  %v175 = vunpack.c.l.s4 1966171168
  %v176 = vunpack.c.0.s8 %v175
  %v177 = vlaneseq
  %v178 = vshrl.u32 %v177, 7
  %v179 = vsub.s32 %v176, %v178
  %v180 = vrot.slane %v166, %v179
  %v181 = vcombine.low %v173, %v180
  %v183 = vunpack.c.l.s4 1966171168
  %v184 = vunpack.c.0.s8 %v183
  %v185 = vlaneseq
  %v186 = vshrl.u32 %v185, 7
  %v187 = vsub.s32 %v184, %v186
  %v188 = vrot.slane %v181, %v187
  %v190 = vadd.f32 %v108, %v188
  %191 = vst.msk [vmem:[%s2] sm:$0xf] %vm106, %v190
  // Predicated region
  $region10: #{discriminator_forward.19} parent=0 // pred_check
    _
  $region11: #{discriminator_forward.19} parent=0 // pred_check_branch
    %193 = sbr.rel (0) target = $region13
  $region12: #{discriminator_forward.19} parent=0 // pred_region
    _
  $region13: #{discriminator_forward.19} parent=0 // pred_fallthru
    _
  // Predicated region
  $region14: #{discriminator_forward.19} parent=0 // pred_check
    _
  $region15: #{discriminator_forward.19} parent=0 // pred_check_branch
    %195 = sbr.rel (0) target = $region17
  $region16: #{discriminator_forward.19} parent=0 // pred_region
    _
  $region17: #{discriminator_forward.19} parent=0 // pred_fallthru
    _
  // Predicated region
  $region18: #{discriminator_forward.19} parent=0 // pred_check
    _
  $region19: #{discriminator_forward.19} parent=0 // pred_check_branch
    %197 = sbr.rel (0) target = $region21
  $region20: #{discriminator_forward.19} parent=0 // pred_region
    _
  $region21: #{discriminator_forward.19} parent=0 // pred_fallthru
    _
  // Predicated region
  $region22: #{discriminator_forward.19} parent=0 // pred_check
    _
  $region23: #{discriminator_forward.19} parent=0 // pred_check_branch
    %199 = sbr.rel (0) target = $region25
  $region24: #{discriminator_forward.19} parent=0 // pred_region
    _
  $region25: #{discriminator_forward.19} parent=0 // pred_fallthru
    _

// kernel: discriminator_forward.20
$region0: #{discriminator_forward.20}
  #allocation0 [shape = 'u32[]', space=smem, size = 0x4, offset = 0x4, fixed_abs, tag = 'smem constant byte address 0x4 - core index']
  #allocation1 [shape = 'u32[144,128]{1,0:T(1,128)}', space=vmem, size = 0x12000, scoped, tag = 'internal scratch']
  %s0 = inlined_call_operand.vmem [shape: f32[32,512], index: 0, kind: input, shape index: {}]
  %s1 = inlined_call_operand.vmem [shape: f32[1,512], index: 1, kind: input, shape index: {}]
  %s2 = inlined_call_operand.vmem [shape: f32[1,512], index: 2, kind: input, shape index: {}]
  %s3 = inlined_call_operand.vmem [shape: f32[32,512], index: 3, kind: output, shape index: {}]
  %s4 = sld [smem:[#allocation0]]
  $region22: #{discriminator_forward.20} parent=0
    _
  %s6 = ssub.s32 1, %s4
  %s7 = scalar_select 0, %s6, %s4
  // Predicated region
  $region2: #{discriminator_forward.20} parent=0 // pred_check
    _
  $region3: #{discriminator_forward.20} parent=0 // pred_check_branch
    %9 = sbr.rel (0) target = $region5
  $region4: #{discriminator_forward.20} parent=0 // pred_region
    _
  $region5: #{discriminator_forward.20} parent=0 // pred_fallthru
    _
  // Predicated region
  $region6: #{discriminator_forward.20} parent=0 // pred_check
    _
  $region7: #{discriminator_forward.20} parent=0 // pred_check_branch
    %11 = sbr.rel (0) target = $region9
  $region8: #{discriminator_forward.20} parent=0 // pred_region
    _
  $region9: #{discriminator_forward.20} parent=0 // pred_fallthru
    _
  // Predicated region
  $region10: #{discriminator_forward.20} parent=0 // pred_check
    _
  $region11: #{discriminator_forward.20} parent=0 // pred_check_branch
    %13 = sbr.rel (0) target = $region13
  $region12: #{discriminator_forward.20} parent=0 // pred_region
    _
  $region13: #{discriminator_forward.20} parent=0 // pred_fallthru
    _
  %v14 = vld [vmem:[%s0] sm:$0xff]
  %v15 = vld [vmem:[%s0 + $0x8] sm:$0xff]
  %v16 = vld [vmem:[%s0 + $0x10] sm:$0xff]
  %v17 = vld [vmem:[%s0 + $0x18] sm:$0xff]
  %v18 = vld [vmem:[%s0 + $0x20] sm:$0xff]
  %v19 = vld [vmem:[%s0 + $0x28] sm:$0xff]
  %v20 = vld [vmem:[%s0 + $0x30] sm:$0xff]
  %v21 = vld [vmem:[%s0 + $0x38] sm:$0xff]
  %v22 = vld [vmem:[%s0 + $0x40] sm:$0xff]
  %v23 = vld [vmem:[%s0 + $0x48] sm:$0xff]
  %v24 = vld [vmem:[%s0 + $0x50] sm:$0xff]
  %v25 = vld [vmem:[%s0 + $0x58] sm:$0xff]
  %v26 = vld [vmem:[%s0 + $0x60] sm:$0xff]
  %v27 = vld [vmem:[%s0 + $0x68] sm:$0xff]
  %v28 = vld [vmem:[%s0 + $0x70] sm:$0xff]
  %v29 = vld [vmem:[%s0 + $0x78] sm:$0xff]
  %v30 = vld [vmem:[%s1] sm:$0xf]
  %v31 = vmul.f32 %v30, 0.03125
  %v32 = vld [vmem:[%s2] sm:$0xf]
  %v33 = vmul.f32 %v32, 0.03125
  %v34 = vmul.f32 %v31, %v31
  %v35 = vsub.f32 %v33, %v34
  %v37 = vlaneseq
  %v38 = vshrl.u32 %v37, 7
  %v39 = vsub.s32 0, %v38
  %v40 = vrot.slane %v31, %v39
  %v41 = vlaneseq
  %v42 = vshrl.u32 %v41, 7
  %v43 = vsub.s32 1, %v42
  %v44 = vrot.slane %v31, %v43
  %v45 = vlaneseq
  %v46 = vshrl.u32 %v45, 7
  %v47 = vsub.s32 2, %v46
  %v48 = vrot.slane %v31, %v47
  %v49 = vlaneseq
  %v50 = vshrl.u32 %v49, 7
  %v51 = vsub.s32 3, %v50
  %v52 = vrot.slane %v31, %v51
  %v57 = vsub.f32 %v14, %v40
  %v58 = vsub.f32 %v15, %v44
  %v59 = vsub.f32 %v16, %v48
  %v60 = vsub.f32 %v17, %v52
  %v61 = vsub.f32 %v18, %v40
  %v62 = vsub.f32 %v19, %v44
  %v63 = vsub.f32 %v20, %v48
  %v64 = vsub.f32 %v21, %v52
  %v65 = vsub.f32 %v22, %v40
  %v66 = vsub.f32 %v23, %v44
  %v67 = vsub.f32 %v24, %v48
  %v68 = vsub.f32 %v25, %v52
  %v69 = vsub.f32 %v26, %v40
  %v70 = vsub.f32 %v27, %v44
  %v71 = vsub.f32 %v28, %v48
  %v72 = vsub.f32 %v29, %v52
  %v73 = vadd.f32 %v35, 1e-05
  %v74 = vrsqrt.pop %v73
  %v76 = vlaneseq
  %v77 = vshrl.u32 %v76, 7
  %v78 = vsub.s32 0, %v77
  %v79 = vrot.slane %v74, %v78
  %v80 = vlaneseq
  %v81 = vshrl.u32 %v80, 7
  %v82 = vsub.s32 1, %v81
  %v83 = vrot.slane %v74, %v82
  %v84 = vlaneseq
  %v85 = vshrl.u32 %v84, 7
  %v86 = vsub.s32 2, %v85
  %v87 = vrot.slane %v74, %v86
  %v88 = vlaneseq
  %v89 = vshrl.u32 %v88, 7
  %v90 = vsub.s32 3, %v89
  %v91 = vrot.slane %v74, %v90
  %v96 = vmul.f32 %v57, %v79
  %v97 = vmul.f32 %v58, %v83
  %v98 = vmul.f32 %v59, %v87
  %v99 = vmul.f32 %v60, %v91
  %v100 = vmul.f32 %v61, %v79
  %v101 = vmul.f32 %v62, %v83
  %v102 = vmul.f32 %v63, %v87
  %v103 = vmul.f32 %v64, %v91
  %v104 = vmul.f32 %v65, %v79
  %v105 = vmul.f32 %v66, %v83
  %v106 = vmul.f32 %v67, %v87
  %v107 = vmul.f32 %v68, %v91
  %v108 = vmul.f32 %v69, %v79
  %v109 = vmul.f32 %v70, %v83
  %v110 = vmul.f32 %v71, %v87
  %v111 = vmul.f32 %v72, %v91
  %vm112 = vcmp.gt.f32.partialorder %v96, 0.0
  %vm113 = vcmp.gt.f32.partialorder %v97, 0.0
  %vm114 = vcmp.gt.f32.partialorder %v98, 0.0
  %vm115 = vcmp.gt.f32.partialorder %v99, 0.0
  %vm116 = vcmp.gt.f32.partialorder %v100, 0.0
  %vm117 = vcmp.gt.f32.partialorder %v101, 0.0
  %vm118 = vcmp.gt.f32.partialorder %v102, 0.0
  %vm119 = vcmp.gt.f32.partialorder %v103, 0.0
  %vm120 = vcmp.gt.f32.partialorder %v104, 0.0
  %vm121 = vcmp.gt.f32.partialorder %v105, 0.0
  %vm122 = vcmp.gt.f32.partialorder %v106, 0.0
  %vm123 = vcmp.gt.f32.partialorder %v107, 0.0
  %vm124 = vcmp.gt.f32.partialorder %v108, 0.0
  %vm125 = vcmp.gt.f32.partialorder %v109, 0.0
  %vm126 = vcmp.gt.f32.partialorder %v110, 0.0
  %vm127 = vcmp.gt.f32.partialorder %v111, 0.0
  %v128 = vmul.f32 %v96, 0.2
  %v129 = vmul.f32 %v97, 0.2
  %v130 = vmul.f32 %v98, 0.2
  %v131 = vmul.f32 %v99, 0.2
  %v132 = vmul.f32 %v100, 0.2
  %v133 = vmul.f32 %v101, 0.2
  %v134 = vmul.f32 %v102, 0.2
  %v135 = vmul.f32 %v103, 0.2
  %v136 = vmul.f32 %v104, 0.2
  %v137 = vmul.f32 %v105, 0.2
  %v138 = vmul.f32 %v106, 0.2
  %v139 = vmul.f32 %v107, 0.2
  %v140 = vmul.f32 %v108, 0.2
  %v141 = vmul.f32 %v109, 0.2
  %v142 = vmul.f32 %v110, 0.2
  %v143 = vmul.f32 %v111, 0.2
  %v144 = vsel %vm112, %v96, %v128
  %v145 = vsel %vm113, %v97, %v129
  %v146 = vsel %vm114, %v98, %v130
  %v147 = vsel %vm115, %v99, %v131
  %v148 = vsel %vm116, %v100, %v132
  %v149 = vsel %vm117, %v101, %v133
  %v150 = vsel %vm118, %v102, %v134
  %v151 = vsel %vm119, %v103, %v135
  %v152 = vsel %vm120, %v104, %v136
  %v153 = vsel %vm121, %v105, %v137
  %v154 = vsel %vm122, %v106, %v138
  %v155 = vsel %vm123, %v107, %v139
  %v156 = vsel %vm124, %v108, %v140
  %v157 = vsel %vm125, %v109, %v141
  %v158 = vsel %vm126, %v110, %v142
  %v159 = vsel %vm127, %v111, %v143
  %160 = vst [vmem:[%s3] sm:$0xff] %v144
  %161 = vst [vmem:[%s3 + $0x8] sm:$0xff] %v145
  %162 = vst [vmem:[%s3 + $0x10] sm:$0xff] %v146
  %163 = vst [vmem:[%s3 + $0x18] sm:$0xff] %v147
  %164 = vst [vmem:[%s3 + $0x20] sm:$0xff] %v148
  %165 = vst [vmem:[%s3 + $0x28] sm:$0xff] %v149
  %166 = vst [vmem:[%s3 + $0x30] sm:$0xff] %v150
  %167 = vst [vmem:[%s3 + $0x38] sm:$0xff] %v151
  %168 = vst [vmem:[%s3 + $0x40] sm:$0xff] %v152
  %169 = vst [vmem:[%s3 + $0x48] sm:$0xff] %v153
  %170 = vst [vmem:[%s3 + $0x50] sm:$0xff] %v154
  %171 = vst [vmem:[%s3 + $0x58] sm:$0xff] %v155
  %172 = vst [vmem:[%s3 + $0x60] sm:$0xff] %v156
  %173 = vst [vmem:[%s3 + $0x68] sm:$0xff] %v157
  %174 = vst [vmem:[%s3 + $0x70] sm:$0xff] %v158
  %175 = vst [vmem:[%s3 + $0x78] sm:$0xff] %v159
  // Predicated region
  $region14: #{discriminator_forward.20} parent=0 // pred_check
    _
  $region15: #{discriminator_forward.20} parent=0 // pred_check_branch
    %177 = sbr.rel (0) target = $region17
  $region16: #{discriminator_forward.20} parent=0 // pred_region
    _
  $region17: #{discriminator_forward.20} parent=0 // pred_fallthru
    _
  // Predicated region
  $region18: #{discriminator_forward.20} parent=0 // pred_check
    _
  $region19: #{discriminator_forward.20} parent=0 // pred_check_branch
    %179 = sbr.rel (0) target = $region21
  $region20: #{discriminator_forward.20} parent=0 // pred_region
    _
  $region21: #{discriminator_forward.20} parent=0 // pred_fallthru
    _

// kernel: discriminator_forward.21
$region0: #{discriminator_forward.21}
  #allocation0 [shape = 'u32[]', space=smem, size = 0x4, offset = 0x4, fixed_abs, tag = 'smem constant byte address 0x4 - core index']
  #allocation1 [shape = 'u32[144,128]{1,0:T(1,128)}', space=vmem, size = 0x12000, scoped, tag = 'internal scratch']
  #allocation2 [shape = 'f32[24,128]{1,0:T(8,128)}', space=vmem, size = 0x3000, scoped, tag = 'scratch operand']
  %s0 = inlined_call_operand.vmem [shape: bf16[24,8192], index: 0, kind: input, shape index: {}]
  %s1 = inlined_call_operand.vmem [shape: bf16[8192,128], index: 1, kind: input, shape index: {}]
  %s2 = inlined_call_operand.vmem [shape: f32[1,128], index: 2, kind: input, shape index: {}]
  %s3 = inlined_call_operand.vmem [shape: f32[24,128], index: 3, kind: output, shape index: {}]
  %s4 = sld [smem:[#allocation0]]
  $region76: #{discriminator_forward.21} parent=0
    _
  %s6 = ssub.s32 1, %s4
  %s7 = scalar_select 0, %s6, %s4
  $region1: #{discriminator_forward.21} parent=0
    #allocation3 [shape = 'u8[49152]{0}', space=vmem, size = 0xc000, scoped, tag = 'input window, operand 0']
    loop: start=0, step=1, limit=18
    $region2: #{discriminator_forward.21} parent=1 // loop_pre_header
      _
    $region3: #{discriminator_forward.21} parent=1 // loop_header
      %s9 = sphi 0, %s13
      %p10 = scmp.ge.s32.totalorder %s9, 18
      %s16 = sphi 0, %s35
      %s17 = sphi 0, %s31
      %s18 = sphi 0, %s27
      %s19 = sphi 0, %s16
      %s20 = sphi 0, %s17
      %s21 = sphi 0, %s18
      %s22 = sphi 0, %s19
      %s23 = sphi 0, %s20
      %s24 = sphi 0, %s21
      %s40 = sphi 0, %s42
      %s43 = sphi 0, %s40
      %s44 = sphi 0, %s43
      %s60 = sphi 0, %s44
      %s68 = sphi 0, %s70
      %s71 = sphi 0, %s68
      %s72 = sphi 0, %s71
      %s88 = sphi 0, %s72
      %s94 = sphi 0, %s96
      %s97 = sphi 0, %s94
      %s98 = sphi 0, %s97
      %s114 = sphi 0, %s98
      %s122 = sphi 0, %s124
      %s125 = sphi 0, %s122
      %s126 = sphi 0, %s125
      %s142 = sphi 0, %s126
    $region4: #{discriminator_forward.21} parent=1 // loop_header_branch
      %12 = sbr.rel (%p10) target = $region8
    $region5: #{discriminator_forward.21} parent=1 // loop_body
      %s14 = ssub.s32 %s9, 1
      %s15 = ssub.s32 %s9, 2
      %s25 = sadd.s32 1, %s18
      %p26 = scmp.ge.s32.totalorder %s25, 16
      %s27 = scalar_select %p26, 0, %s25
      %s28 = sadd.s32 1, %s17
      %s29 = scalar_select %p26, %s28, %s17
      %p30 = scmp.ge.s32.totalorder %s29, 1
      %s31 = scalar_select %p30, 0, %s29
      %s32 = sadd.s32 1, %s16
      %s33 = scalar_select %p30, %s32, %s16
      %p34 = scmp.ge.s32.totalorder %s33, 1
      %s35 = scalar_select %p34, 0, %s33
      %s36 = ssub.s32 %s16, %s35
      %s37 = ssub.s32 %s18, %s27
      %s38 = sor.u32 %s36, %s37
      %p39 = scmp.eq.s32.totalorder %s38, 0
      %s41 = sadd.s32 %s40, 1
      %s42 = scalar_select %p39, %s40, %s41
      %p45 = pneg %p39
      %p46 = scmp.eq.s32.totalorder %s9, 15
      %p47 = por %p45, %p46
      %p48 = scmp.ne.s32.totalorder %s40, %s43
      %p49 = scmp.eq.s32.totalorder %s9, 0
      %p50 = por %p48, %p49
      %p51 = scmp.ne.s32.totalorder %s40, %s43
      %p52 = scmp.eq.s32.totalorder %s14, 15
      %p53 = por %p51, %p52
      %p54 = scmp.ne.s32.totalorder %s43, %s44
      %p55 = scmp.eq.s32.totalorder %s14, 0
      %p56 = por %p54, %p55
      %p57 = scmp.ne.s32.totalorder %s43, %s44
      %p58 = scmp.eq.s32.totalorder %s15, 15
      %p59 = por %p57, %p58
      %p61 = scmp.ne.s32.totalorder %s44, %s60
      %p62 = scmp.eq.s32.totalorder %s15, 0
      %p63 = por %p61, %p62
      %s64 = ssub.s32 %s18, %s27
      %s65 = ssub.s32 %s17, %s31
      %s66 = sor.u32 %s64, %s65
      %p67 = scmp.eq.s32.totalorder %s66, 0
      %s69 = sadd.s32 %s68, 1
      %s70 = scalar_select %p67, %s68, %s69
      %p73 = pneg %p67
      %p74 = scmp.eq.s32.totalorder %s9, 15
      %p75 = por %p73, %p74
      %p76 = scmp.ne.s32.totalorder %s68, %s71
      %p77 = scmp.eq.s32.totalorder %s9, 0
      %p78 = por %p76, %p77
      %p79 = scmp.ne.s32.totalorder %s68, %s71
      %p80 = scmp.eq.s32.totalorder %s14, 15
      %p81 = por %p79, %p80
      %p82 = scmp.ne.s32.totalorder %s71, %s72
      %p83 = scmp.eq.s32.totalorder %s14, 0
      %p84 = por %p82, %p83
      %p85 = scmp.ne.s32.totalorder %s71, %s72
      %p86 = scmp.eq.s32.totalorder %s15, 15
      %p87 = por %p85, %p86
      %p89 = scmp.ne.s32.totalorder %s72, %s88
      %p90 = scmp.eq.s32.totalorder %s15, 0
      %p91 = por %p89, %p90
      %s92 = ssub.s32 %s17, %s31
      %p93 = scmp.eq.s32.totalorder %s92, 0
      %s95 = sadd.s32 %s94, 1
      %s96 = scalar_select %p93, %s94, %s95
      %p99 = pneg %p93
      %p100 = scmp.eq.s32.totalorder %s9, 15
      %p101 = por %p99, %p100
      %p102 = scmp.ne.s32.totalorder %s94, %s97
      %p103 = scmp.eq.s32.totalorder %s9, 0
      %p104 = por %p102, %p103
      %p105 = scmp.ne.s32.totalorder %s94, %s97
      %p106 = scmp.eq.s32.totalorder %s14, 15
      %p107 = por %p105, %p106
      %p108 = scmp.ne.s32.totalorder %s97, %s98
      %p109 = scmp.eq.s32.totalorder %s14, 0
      %p110 = por %p108, %p109
      %p111 = scmp.ne.s32.totalorder %s97, %s98
      %p112 = scmp.eq.s32.totalorder %s15, 15
      %p113 = por %p111, %p112
      %p115 = scmp.ne.s32.totalorder %s98, %s114
      %p116 = scmp.eq.s32.totalorder %s15, 0
      %p117 = por %p115, %p116
      %s118 = ssub.s32 %s16, %s35
      %s119 = ssub.s32 %s17, %s31
      %s120 = sor.u32 %s118, %s119
      %p121 = scmp.eq.s32.totalorder %s120, 0
      %s123 = sadd.s32 %s122, 1
      %s124 = scalar_select %p121, %s122, %s123
      %p127 = pneg %p121
      %p128 = scmp.eq.s32.totalorder %s9, 15
      %p129 = por %p127, %p128
      %p130 = scmp.ne.s32.totalorder %s122, %s125
      %p131 = scmp.eq.s32.totalorder %s9, 0
      %p132 = por %p130, %p131
      %p133 = scmp.ne.s32.totalorder %s122, %s125
      %p134 = scmp.eq.s32.totalorder %s14, 15
      %p135 = por %p133, %p134
      %p136 = scmp.ne.s32.totalorder %s125, %s126
      %p137 = scmp.eq.s32.totalorder %s14, 0
      %p138 = por %p136, %p137
      %p139 = scmp.ne.s32.totalorder %s125, %s126
      %p140 = scmp.eq.s32.totalorder %s15, 15
      %p141 = por %p139, %p140
      %p143 = scmp.ne.s32.totalorder %s126, %s142
      %p144 = scmp.eq.s32.totalorder %s15, 0
      %p145 = por %p143, %p144
      %p146 = scmp.le.s32.totalorder 1, %s9
      %p147 = scmp.lt.s32.totalorder %s9, 17
      %p148 = pnand %p146, %p147
      %p149 = pneg %p148
      // Predicated region
      $region9: #{discriminator_forward.21} parent=5 // pred_check
        _
      $region10: #{discriminator_forward.21} parent=5 // pred_check_branch
        %151 = sbr.rel (%p148) target = $region12
      $region11: #{discriminator_forward.21} parent=5 // pred_region
        %s152 = ssub.s32 %s9, 1
        // Predicated region
        $region13: #{discriminator_forward.21} parent=11 // pred_check
          %p153 = pneg %p110
        $region14: #{discriminator_forward.21} parent=11 // pred_check_branch
          %155 = sbr.rel (%p153) target = $region16
        $region15: #{discriminator_forward.21} parent=11 // pred_region
          %p156 = scmp.lt.s32.totalorder %s20, 0
          %s157 = scalar_select %p156, %s20, 0
          %s158 = scalar_lea.vmem %s2, %s157
        $region16: #{discriminator_forward.21} parent=11 // pred_fallthru
          _
      $region12: #{discriminator_forward.21} parent=5 // pred_fallthru
        _
      %p159 = scmp.lt.s32.totalorder %s9, 16
      // Predicated region
      $region17: #{discriminator_forward.21} parent=5 // pred_check
        %p160 = pneg %p159
      $region18: #{discriminator_forward.21} parent=5 // pred_check_branch
        %162 = sbr.rel (%p160) target = $region20
      $region19: #{discriminator_forward.21} parent=5 // pred_region
        // Predicated region
        $region21: #{discriminator_forward.21} parent=19 // pred_check
          %p163 = pneg %p50
        $region22: #{discriminator_forward.21} parent=19 // pred_check_branch
          %165 = sbr.rel (%p163) target = $region24
        $region23: #{discriminator_forward.21} parent=19 // pred_region
          %s166 = sand.u32 %s40, 1
          %s167 = sand.u32 %s40, 1
          %s168 = smul.addr %s167, 48
          %s169 = scalar_lea.vmem [#allocation3], %s168
          %s170 = smul.u32 3, %s16
          %s171 = smul.u32 4, %s18
          %s172 = smul.addr %s170, 64
          %s173 = sadd.s32 %s171, %s172
          %s174 = smul.addr %s173, 4
          %s175 = scalar_lea.vmem %s0, %s174
          // Predicated region
          $region25: #{discriminator_forward.21} parent=23 // pred_check
            _
          $region26: #{discriminator_forward.21} parent=23 // pred_check_branch
            %177 = sbr.rel (0) target = $region28
          $region27: #{discriminator_forward.21} parent=23 // pred_region
            // Predicated region
            $region29: #{discriminator_forward.21} parent=27 // pred_check
              _
            $region30: #{discriminator_forward.21} parent=27 // pred_check_branch
              %179 = sbr.rel (0) target = $region32
            $region31: #{discriminator_forward.21} parent=27 // pred_region
              loop: start=0, step=1, limit=1
              $region33: #{discriminator_forward.21} parent=31 // loop_pre_header
                _
              $region34: #{discriminator_forward.21} parent=31 // loop_header
                %s181 = sphi 0, %s185
                %p182 = scmp.ge.s32.totalorder %s181, 1
                %s186 = sphi %s175, %s175
                %s187 = sphi %s169, %s169
              $region35: #{discriminator_forward.21} parent=31 // loop_header_branch
                %184 = sbr.rel (%p182) target = $region39
              $region36: #{discriminator_forward.21} parent=31 // loop_body
                %v188 = vld [vmem:[%s186] sm:$0xff]
                %189 = vst [vmem:[%s187] sm:$0xff] %v188
                %v190 = vld [vmem:[%s186 + $0x8] sm:$0xff]
                %191 = vst [vmem:[%s187 + $0x8] sm:$0xff] %v190
                %v192 = vld [vmem:[%s186 + $0x100] sm:$0xff]
                %193 = vst [vmem:[%s187 + $0x10] sm:$0xff] %v192
                %v194 = vld [vmem:[%s186 + $0x108] sm:$0xff]
                %195 = vst [vmem:[%s187 + $0x18] sm:$0xff] %v194
                %v196 = vld [vmem:[%s186 + $0x200] sm:$0xff]
                %197 = vst [vmem:[%s187 + $0x20] sm:$0xff] %v196
                %v198 = vld [vmem:[%s186 + $0x208] sm:$0xff]
                %199 = vst [vmem:[%s187 + $0x28] sm:$0xff] %v198
              $region37: #{discriminator_forward.21} parent=31 // loop_footer
                %s185 = sadd.s32 1, %s181
              $region38: #{discriminator_forward.21} parent=31 // loop_footer_branch
                %180 = sbr.rel target = $region34
              $region39: #{discriminator_forward.21} parent=31 // loop_exit
                _
            $region32: #{discriminator_forward.21} parent=27 // pred_fallthru
              _
            // Predicated region
            $region40: #{discriminator_forward.21} parent=27 // pred_check
              _
            $region41: #{discriminator_forward.21} parent=27 // pred_check_branch
              %201 = sbr.rel target = $region43
            $region42: #{discriminator_forward.21} parent=27 // pred_region
              _
            $region43: #{discriminator_forward.21} parent=27 // pred_fallthru
              _
          $region28: #{discriminator_forward.21} parent=23 // pred_fallthru
            _
          %202 = vnop
        $region24: #{discriminator_forward.21} parent=19 // pred_fallthru
          _
        // Predicated region
        $region44: #{discriminator_forward.21} parent=19 // pred_check
          %p203 = pneg %p78
        $region45: #{discriminator_forward.21} parent=19 // pred_check_branch
          %205 = sbr.rel (%p203) target = $region47
        $region46: #{discriminator_forward.21} parent=19 // pred_region
          %s206 = smul.u32 64, %s18
          %p207 = scmp.lt.s32.totalorder %s206, 1023
          %s208 = scalar_select %p207, %s206, 1023
          %p209 = scmp.lt.s32.totalorder %s17, 0
          %s210 = scalar_select %p209, %s17, 0
          %s211 = sadd.s32 %s210, %s208
          %s212 = smul.addr %s211, 4
          %s213 = scalar_lea.vmem %s1, %s212
          %s214 = smul.u32 64, %s18
        $region47: #{discriminator_forward.21} parent=19 // pred_fallthru
          _
      $region20: #{discriminator_forward.21} parent=5 // pred_fallthru
        _
      %p215 = scmp.le.s32.totalorder 1, %s9
      %p216 = scmp.lt.s32.totalorder %s9, 17
      %p217 = pnand %p215, %p216
      %p218 = pneg %p217
      // Predicated region
      $region48: #{discriminator_forward.21} parent=5 // pred_check
        _
      $region49: #{discriminator_forward.21} parent=5 // pred_check_branch
        %220 = sbr.rel (%p217) target = $region51
      $region50: #{discriminator_forward.21} parent=5 // pred_region
        %s221 = ssub.s32 %s9, 1
        %s222 = sand.u32 %s43, 1
        %s223 = sand.u32 %s43, 1
        %s224 = smul.addr %s223, 48
        %s225 = scalar_lea.vmem [#allocation3], %s224
        // Predicated region
        $region52: #{discriminator_forward.21} parent=50 // pred_check
          %p226 = pneg %p56
        $region53: #{discriminator_forward.21} parent=50 // pred_check_branch
          %228 = sbr.rel (%p226) target = $region55
        $region54: #{discriminator_forward.21} parent=50 // pred_region
          _
        $region55: #{discriminator_forward.21} parent=50 // pred_fallthru
          _
        %s229 = sand.u32 %s43, 1
        %s230 = sand.u32 %s43, 1
        %s231 = smul.addr %s230, 48
        %s232 = scalar_lea.vmem [#allocation3], %s231
        %p233 = pneg %p56
        %p234 = pneg %p53
        %s235 = smul.u32 64, %s21
        %p236 = scmp.lt.s32.totalorder %s235, 1023
        %s237 = scalar_select %p236, %s235, 1023
        %p238 = scmp.lt.s32.totalorder %s20, 0
        %s239 = scalar_select %p238, %s20, 0
        %s240 = sadd.s32 %s239, %s237
        %s241 = smul.addr %s240, 4
        %s242 = scalar_lea.vmem %s1, %s241
        %p243 = pneg %p84
        %p244 = pneg %p81
        %p245 = scmp.lt.s32.totalorder %s20, 0
        %s246 = scalar_select %p245, %s20, 0
        %s247 = scalar_lea.vmem %s2, %s246
        %p248 = pneg %p110
        %p249 = pneg %p107
        %p250 = pneg %p138
        %p251 = pneg %p135
        %s252 = smul.u32 3, %s19
        %p253 = scmp.lt.s32.totalorder %s252, 2
        %s254 = scalar_select %p253, %s252, 2
        %p255 = scmp.lt.s32.totalorder %s20, 0
        %s256 = scalar_select %p255, %s20, 0
        %s257 = sadd.s32 %s256, %s254
        %s258 = smul.addr %s257, 8
        %s259 = scalar_lea.vmem %s3, %s258
        %s260 = smul.u32 3, %s19
        %s261 = smul.u32 4, %s21
        %s262 = smul.u32 64, %s21
        %p263 = scmp.lt.s32.totalorder %s262, 1023
        %s264 = scalar_select %p263, %s262, 1023
        %p265 = scmp.lt.s32.totalorder %s20, 0
        %s266 = scalar_select %p265, %s20, 0
        %s267 = sadd.s32 %s266, %s264
        %s268 = smul.addr %s267, 4
        %s269 = scalar_lea.vmem %s1, %s268
        %s270 = smul.u32 64, %s21
        %p271 = scmp.lt.s32.totalorder %s20, 0
        %s272 = scalar_select %p271, %s20, 0
        %s273 = scalar_lea.vmem %s2, %s272
        %s274 = smul.u32 3, %s19
        %p275 = scmp.lt.s32.totalorder %s274, 2
        %s276 = scalar_select %p275, %s274, 2
        %p277 = scmp.lt.s32.totalorder %s20, 0
        %s278 = scalar_select %p277, %s20, 0
        %s279 = sadd.s32 %s278, %s276
        %s280 = smul.addr %s279, 8
        %s281 = scalar_lea.vmem %s3, %s280
        %s282 = smul.u32 3, %s19
        %p284 = scmp.eq.s32.totalorder %s21, 0
        // Predicated region
        $region56: #{discriminator_forward.21} parent=50 // pred_check
          %p285 = pneg %p284
        $region57: #{discriminator_forward.21} parent=50 // pred_check_branch
          %287 = sbr.rel (%p285) target = $region59
        $region58: #{discriminator_forward.21} parent=50 // pred_region
          %288 = vst [vmem:[#allocation2] sm:$0xff] 0.0
          %289 = vst [vmem:[#allocation2 + $0x8] sm:$0xff] 0.0
          %290 = vst [vmem:[#allocation2 + $0x10] sm:$0xff] 0.0
        $region59: #{discriminator_forward.21} parent=50 // pred_fallthru
          _
        %v291 = vld [vmem:[#allocation2] sm:$0xff]
        %v292 = vld [vmem:[#allocation2 + $0x8] sm:$0xff]
        %v293 = vld [vmem:[#allocation2 + $0x10] sm:$0xff]
        %v294 = vld [vmem:[%s225] sm:$0xff]
        %v295 = vld [vmem:[%s225 + $0x8] sm:$0xff]
        %v296 = vld [vmem:[%s225 + $0x10] sm:$0xff]
        %v297 = vld [vmem:[%s225 + $0x18] sm:$0xff]
        %v298 = vld [vmem:[%s225 + $0x20] sm:$0xff]
        %v299 = vld [vmem:[%s225 + $0x28] sm:$0xff]
        %v300 = vld [vmem:[%s269] sm:$0xf]
        %v301 = vld [vmem:[%s269 + $0x4] sm:$0xf]
        %v302 = vld [vmem:[%s269 + $0x8] sm:$0xf]
        %v303 = vld [vmem:[%s269 + $0xc] sm:$0xf]
        %v304 = vld [vmem:[%s269 + $0x10] sm:$0xf]
        %v305 = vld [vmem:[%s269 + $0x14] sm:$0xf]
        %v306 = vld [vmem:[%s269 + $0x18] sm:$0xf]
        %v307 = vld [vmem:[%s269 + $0x1c] sm:$0xf]
        %v308 = vld [vmem:[%s269 + $0x20] sm:$0xf]
        %v309 = vld [vmem:[%s269 + $0x24] sm:$0xf]
        %v310 = vld [vmem:[%s269 + $0x28] sm:$0xf]
        %v311 = vld [vmem:[%s269 + $0x2c] sm:$0xf]
        %v312 = vld [vmem:[%s269 + $0x30] sm:$0xf]
        %v313 = vld [vmem:[%s269 + $0x34] sm:$0xf]
        %v314 = vld [vmem:[%s269 + $0x38] sm:$0xf]
        %v315 = vld [vmem:[%s269 + $0x3c] sm:$0xf]
        %v316 = vld [vmem:[%s269 + $0x40] sm:$0xf]
        %v317 = vld [vmem:[%s269 + $0x44] sm:$0xf]
        %v318 = vld [vmem:[%s269 + $0x48] sm:$0xf]
        %v319 = vld [vmem:[%s269 + $0x4c] sm:$0xf]
        %v320 = vld [vmem:[%s269 + $0x50] sm:$0xf]
        %v321 = vld [vmem:[%s269 + $0x54] sm:$0xf]
        %v322 = vld [vmem:[%s269 + $0x58] sm:$0xf]
        %v323 = vld [vmem:[%s269 + $0x5c] sm:$0xf]
        %v324 = vld [vmem:[%s269 + $0x60] sm:$0xf]
        %v325 = vld [vmem:[%s269 + $0x64] sm:$0xf]
        %v326 = vld [vmem:[%s269 + $0x68] sm:$0xf]
        %v327 = vld [vmem:[%s269 + $0x6c] sm:$0xf]
        %v328 = vld [vmem:[%s269 + $0x70] sm:$0xf]
        %v329 = vld [vmem:[%s269 + $0x74] sm:$0xf]
        %v330 = vld [vmem:[%s269 + $0x78] sm:$0xf]
        %v331 = vld [vmem:[%s269 + $0x7c] sm:$0xf]
        %v332 = vld [vmem:[%s269 + $0x80] sm:$0xf]
        %v333 = vld [vmem:[%s269 + $0x84] sm:$0xf]
        %v334 = vld [vmem:[%s269 + $0x88] sm:$0xf]
        %v335 = vld [vmem:[%s269 + $0x8c] sm:$0xf]
        %v336 = vld [vmem:[%s269 + $0x90] sm:$0xf]
        %v337 = vld [vmem:[%s269 + $0x94] sm:$0xf]
        %v338 = vld [vmem:[%s269 + $0x98] sm:$0xf]
        %v339 = vld [vmem:[%s269 + $0x9c] sm:$0xf]
        %v340 = vld [vmem:[%s269 + $0xa0] sm:$0xf]
        %v341 = vld [vmem:[%s269 + $0xa4] sm:$0xf]
        %v342 = vld [vmem:[%s269 + $0xa8] sm:$0xf]
        %v343 = vld [vmem:[%s269 + $0xac] sm:$0xf]
        %v344 = vld [vmem:[%s269 + $0xb0] sm:$0xf]
        %v345 = vld [vmem:[%s269 + $0xb4] sm:$0xf]
        %v346 = vld [vmem:[%s269 + $0xb8] sm:$0xf]
        %v347 = vld [vmem:[%s269 + $0xbc] sm:$0xf]
        %v348 = vld [vmem:[%s269 + $0xc0] sm:$0xf]
        %v349 = vld [vmem:[%s269 + $0xc4] sm:$0xf]
        %v350 = vld [vmem:[%s269 + $0xc8] sm:$0xf]
        %v351 = vld [vmem:[%s269 + $0xcc] sm:$0xf]
        %v352 = vld [vmem:[%s269 + $0xd0] sm:$0xf]
        %v353 = vld [vmem:[%s269 + $0xd4] sm:$0xf]
        %v354 = vld [vmem:[%s269 + $0xd8] sm:$0xf]
        %v355 = vld [vmem:[%s269 + $0xdc] sm:$0xf]
        %v356 = vld [vmem:[%s269 + $0xe0] sm:$0xf]
        %v357 = vld [vmem:[%s269 + $0xe4] sm:$0xf]
        %v358 = vld [vmem:[%s269 + $0xe8] sm:$0xf]
        %v359 = vld [vmem:[%s269 + $0xec] sm:$0xf]
        %v360 = vld [vmem:[%s269 + $0xf0] sm:$0xf]
        %v361 = vld [vmem:[%s269 + $0xf4] sm:$0xf]
        %v362 = vld [vmem:[%s269 + $0xf8] sm:$0xf]
        %v363 = vld [vmem:[%s269 + $0xfc] sm:$0xf]
        %v370 = vunpack.c.l.b16 %v294
        %v371 = vunpack.c.h.b16 %v294
        %v372 = vunpack.c.l.b16 %v295
        %v373 = vunpack.c.h.b16 %v295
        %v374 = vunpack.c.l.b16 %v296
        %v375 = vunpack.c.h.b16 %v296
        %v376 = vunpack.c.l.b16 %v297
        %v377 = vunpack.c.h.b16 %v297
        %v378 = vunpack.c.l.b16 %v298
        %v379 = vunpack.c.h.b16 %v298
        %v380 = vunpack.c.l.b16 %v299
        %v381 = vunpack.c.h.b16 %v299
        %v382 = vpack.c.b16 %v374, %v370
        %v383 = vpack.c.b16 %v375, %v371
        %v384 = vpack.c.b16 %v376, %v372
        %v385 = vpack.c.b16 %v377, %v373
        %v386 = vpack.c.b16 %v378, %v378
        %v387 = vpack.c.b16 %v379, %v379
        %v388 = vpack.c.b16 %v380, %v380
        %v389 = vpack.c.b16 %v381, %v381
        %v462 = vunpack.c.l.b16 %v300
        %v463 = vunpack.c.l.b16 %v301
        %v464 = vunpack.c.l.b16 %v302
        %v465 = vunpack.c.l.b16 %v303
        %v466 = vunpack.c.l.b16 %v304
        %v467 = vunpack.c.l.b16 %v305
        %v468 = vunpack.c.l.b16 %v306
        %v469 = vunpack.c.l.b16 %v307
        %v470 = vunpack.c.l.b16 %v308
        %v471 = vunpack.c.l.b16 %v309
        %v472 = vunpack.c.l.b16 %v310
        %v473 = vunpack.c.l.b16 %v311
        %v474 = vunpack.c.l.b16 %v312
        %v475 = vunpack.c.l.b16 %v313
        %v476 = vunpack.c.l.b16 %v314
        %v477 = vunpack.c.l.b16 %v315
        %v478 = vunpack.c.l.b16 %v316
        %v479 = vunpack.c.l.b16 %v317
        %v480 = vunpack.c.l.b16 %v318
        %v481 = vunpack.c.l.b16 %v319
        %v482 = vunpack.c.l.b16 %v320
        %v483 = vunpack.c.l.b16 %v321
        %v484 = vunpack.c.l.b16 %v322
        %v485 = vunpack.c.l.b16 %v323
        %v486 = vunpack.c.l.b16 %v324
        %v487 = vunpack.c.l.b16 %v325
        %v488 = vunpack.c.l.b16 %v326
        %v489 = vunpack.c.l.b16 %v327
        %v490 = vunpack.c.l.b16 %v328
        %v491 = vunpack.c.l.b16 %v329
        %v492 = vunpack.c.l.b16 %v330
        %v493 = vunpack.c.l.b16 %v331
        %v494 = vunpack.c.l.b16 %v332
        %v495 = vunpack.c.l.b16 %v333
        %v496 = vunpack.c.l.b16 %v334
        %v497 = vunpack.c.l.b16 %v335
        %v498 = vunpack.c.l.b16 %v336
        %v499 = vunpack.c.l.b16 %v337
        %v500 = vunpack.c.l.b16 %v338
        %v501 = vunpack.c.l.b16 %v339
        %v502 = vunpack.c.l.b16 %v340
        %v503 = vunpack.c.l.b16 %v341
        %v504 = vunpack.c.l.b16 %v342
        %v505 = vunpack.c.l.b16 %v343
        %v506 = vunpack.c.l.b16 %v344
        %v507 = vunpack.c.l.b16 %v345
        %v508 = vunpack.c.l.b16 %v346
        %v509 = vunpack.c.l.b16 %v347
        %v510 = vunpack.c.l.b16 %v348
        %v511 = vunpack.c.l.b16 %v349
        %v512 = vunpack.c.l.b16 %v350
        %v513 = vunpack.c.l.b16 %v351
        %v514 = vunpack.c.l.b16 %v352
        %v515 = vunpack.c.l.b16 %v353
        %v516 = vunpack.c.l.b16 %v354
        %v517 = vunpack.c.l.b16 %v355
        %v518 = vunpack.c.l.b16 %v356
        %v519 = vunpack.c.l.b16 %v357
        %v520 = vunpack.c.l.b16 %v358
        %v521 = vunpack.c.l.b16 %v359
        %v522 = vunpack.c.l.b16 %v360
        %v523 = vunpack.c.l.b16 %v361
        %v524 = vunpack.c.l.b16 %v362
        %v525 = vunpack.c.l.b16 %v363
        %v526 = vpack.c.b16 %v463, %v462
        %v527 = vpack.c.b16 %v465, %v464
        %v528 = vpack.c.b16 %v467, %v466
        %v529 = vpack.c.b16 %v469, %v468
        %v530 = vpack.c.b16 %v471, %v470
        %v531 = vpack.c.b16 %v473, %v472
        %v532 = vpack.c.b16 %v475, %v474
        %v533 = vpack.c.b16 %v477, %v476
        %v534 = vpack.c.b16 %v479, %v478
        %v535 = vpack.c.b16 %v481, %v480
        %v536 = vpack.c.b16 %v483, %v482
        %v537 = vpack.c.b16 %v485, %v484
        %v538 = vpack.c.b16 %v487, %v486
        %v539 = vpack.c.b16 %v489, %v488
        %v540 = vpack.c.b16 %v491, %v490
        %v541 = vpack.c.b16 %v493, %v492
        %v542 = vpack.c.b16 %v495, %v494
        %v543 = vpack.c.b16 %v497, %v496
        %v544 = vpack.c.b16 %v499, %v498
        %v545 = vpack.c.b16 %v501, %v500
        %v546 = vpack.c.b16 %v503, %v502
        %v547 = vpack.c.b16 %v505, %v504
        %v548 = vpack.c.b16 %v507, %v506
        %v549 = vpack.c.b16 %v509, %v508
        %v550 = vpack.c.b16 %v511, %v510
        %v551 = vpack.c.b16 %v513, %v512
        %v552 = vpack.c.b16 %v515, %v514
        %v553 = vpack.c.b16 %v517, %v516
        %v554 = vpack.c.b16 %v519, %v518
        %v555 = vpack.c.b16 %v521, %v520
        %v556 = vpack.c.b16 %v523, %v522
        %v557 = vpack.c.b16 %v525, %v524
        %590 = vmatprep.subr.bf16.mxu0 0
        %591 = vmatpush1.bf16.msra.mxu0 %v533
        %592 = vmatprep.subr.bf16.mxu0 0
        %593 = vmatpush1.bf16.msra.mxu0 %v532
        %594 = vmatprep.subr.bf16.mxu0 0
        %595 = vmatpush1.bf16.msra.mxu0 %v531
        %596 = vmatprep.subr.bf16.mxu0 0
        %597 = vmatpush1.bf16.msra.mxu0 %v530
        %598 = vmatprep.subr.bf16.mxu0 0
        %599 = vmatpush1.bf16.msra.mxu0 %v529
        %600 = vmatprep.subr.bf16.mxu0 0
        %601 = vmatpush1.bf16.msra.mxu0 %v528
        %602 = vmatprep.subr.bf16.mxu0 0
        %603 = vmatpush1.bf16.msra.mxu0 %v527
        %604 = vmatprep.subr.bf16.mxu0 0
        %605 = vmatpush1.bf16.msra.mxu0 %v526
        %606 = vmatprep.subr.bf16.mxu0 0
        %607 = vmatpush2.bf16.msra.mxu0 %v541
        %608 = vmatprep.subr.bf16.mxu0 0
        %609 = vmatpush2.bf16.msra.mxu0 %v540
        %610 = vmatprep.subr.bf16.mxu0 0
        %611 = vmatpush2.bf16.msra.mxu0 %v539
        %612 = vmatprep.subr.bf16.mxu0 0
        %613 = vmatpush2.bf16.msra.mxu0 %v538
        %614 = vmatprep.subr.bf16.mxu0 0
        %615 = vmatpush2.bf16.msra.mxu0 %v537
        %616 = vmatprep.subr.bf16.mxu0 0
        %617 = vmatpush2.bf16.msra.mxu0 %v536
        %618 = vmatprep.subr.bf16.mxu0 0
        %619 = vmatpush2.bf16.msra.mxu0 %v535
        %620 = vmatprep.subr.bf16.mxu0 0
        %621 = vmatpush2.bf16.msra.mxu0 %v534
        %622 = vmatprep.mubr.bf16.mxu0 %v383
        %623 = vmatmul.mubr.bf16.gmra.mxu0 %v382
        %v624 = vpop.f32.mrf.mxu0
        %v625 = vadd.f32 0.0, %v624
        %v626 = vpop.f32.mrf.mxu0
        %v627 = vpop.f32.mrf.mxu0
        %v628 = vadd.f32 0.0, %v627
        %v629 = vpop.f32.mrf.mxu0
        %630 = vmatprep.mubr.bf16.mxu0 %v387
        %631 = vmatmul.mubr.bf16.gmra.mxu0 %v386
        %v632 = vpop.f32.mrf.mxu0
        %v633 = vadd.f32 0.0, %v632
        %v634 = vpop.f32.mrf.mxu0
        %v635 = vpop.f32.mrf.mxu0
        %v636 = vpop.f32.mrf.mxu0
        %637 = vdwg.mxu0
        %638 = vmatprep.subr.bf16.mxu0 0
        %639 = vmatpush1.bf16.msra.mxu0 %v549
        %640 = vmatprep.subr.bf16.mxu0 0
        %641 = vmatpush1.bf16.msra.mxu0 %v548
        %642 = vmatprep.subr.bf16.mxu0 0
        %643 = vmatpush1.bf16.msra.mxu0 %v547
        %644 = vmatprep.subr.bf16.mxu0 0
        %645 = vmatpush1.bf16.msra.mxu0 %v546
        %646 = vmatprep.subr.bf16.mxu0 0
        %647 = vmatpush1.bf16.msra.mxu0 %v545
        %648 = vmatprep.subr.bf16.mxu0 0
        %649 = vmatpush1.bf16.msra.mxu0 %v544
        %650 = vmatprep.subr.bf16.mxu0 0
        %651 = vmatpush1.bf16.msra.mxu0 %v543
        %652 = vmatprep.subr.bf16.mxu0 0
        %653 = vmatpush1.bf16.msra.mxu0 %v542
        %654 = vmatprep.subr.bf16.mxu0 0
        %655 = vmatpush2.bf16.msra.mxu0 %v557
        %656 = vmatprep.subr.bf16.mxu0 0
        %657 = vmatpush2.bf16.msra.mxu0 %v556
        %658 = vmatprep.subr.bf16.mxu0 0
        %659 = vmatpush2.bf16.msra.mxu0 %v555
        %660 = vmatprep.subr.bf16.mxu0 0
        %661 = vmatpush2.bf16.msra.mxu0 %v554
        %662 = vmatprep.subr.bf16.mxu0 0
        %663 = vmatpush2.bf16.msra.mxu0 %v553
        %664 = vmatprep.subr.bf16.mxu0 0
        %665 = vmatpush2.bf16.msra.mxu0 %v552
        %666 = vmatprep.subr.bf16.mxu0 0
        %667 = vmatpush2.bf16.msra.mxu0 %v551
        %668 = vmatprep.subr.bf16.mxu0 0
        %669 = vmatpush2.bf16.msra.mxu0 %v550
        %670 = vmatprep.mubr.bf16.mxu0 %v385
        %671 = vmatmul.mubr.bf16.gmra.mxu0 %v384
        %v672 = vpop.f32.mrf.mxu0
        %v673 = vadd.f32 %v625, %v672
        %v674 = vpop.f32.mrf.mxu0
        %v675 = vpop.f32.mrf.mxu0
        %v676 = vadd.f32 %v628, %v675
        %v677 = vpop.f32.mrf.mxu0
        %678 = vmatprep.mubr.bf16.mxu0 %v389
        %679 = vmatmul.mubr.bf16.gmra.mxu0 %v388
        %v680 = vpop.f32.mrf.mxu0
        %v681 = vadd.f32 %v633, %v680
        %v682 = vpop.f32.mrf.mxu0
        %v683 = vpop.f32.mrf.mxu0
        %v684 = vpop.f32.mrf.mxu0
        %685 = vdwg.mxu0
        %v686 = vadd.f32 %v291, %v673
        %v687 = vadd.f32 %v292, %v676
        %v688 = vadd.f32 %v293, %v681
        %689 = vst [vmem:[#allocation2] sm:$0xff] %v686
        %690 = vst [vmem:[#allocation2 + $0x8] sm:$0xff] %v687
        %691 = vst [vmem:[#allocation2 + $0x10] sm:$0xff] %v688
        %p692 = scmp.eq.s32.totalorder %s21, 15
        // Predicated region
        $region60: #{discriminator_forward.21} parent=50 // pred_check
          %p693 = pneg %p692
        $region61: #{discriminator_forward.21} parent=50 // pred_check_branch
          %695 = sbr.rel (%p693) target = $region63
        $region62: #{discriminator_forward.21} parent=50 // pred_region
          %v696 = vld [vmem:[#allocation2] sm:$0xff]
          %v697 = vld [vmem:[#allocation2 + $0x8] sm:$0xff]
          %v698 = vld [vmem:[#allocation2 + $0x10] sm:$0xff]
          %v699 = vld [vmem:[%s273] sm:$0x1]
          %v701 = vlaneseq
          %v702 = vshrl.u32 %v701, 7
          %v703 = vsub.s32 0, %v702
          %v704 = vrot.slane %v699, %v703
          %v706 = vadd.f32 %v696, %v704
          %v707 = vadd.f32 %v697, %v704
          %v708 = vadd.f32 %v698, %v704
          %709 = vst [vmem:[%s281] sm:$0xff] %v706
          %710 = vst [vmem:[%s281 + $0x8] sm:$0xff] %v707
          %711 = vst [vmem:[%s281 + $0x10] sm:$0xff] %v708
        $region63: #{discriminator_forward.21} parent=50 // pred_fallthru
          _
        %s712 = smul.u32 3, %s19
        %p713 = scmp.lt.s32.totalorder %s712, 2
        %s714 = scalar_select %p713, %s712, 2
        %p715 = scmp.lt.s32.totalorder %s20, 0
        %s716 = scalar_select %p715, %s20, 0
        %s717 = sadd.s32 %s716, %s714
        %s718 = smul.addr %s717, 8
        %s719 = scalar_lea.vmem %s3, %s718
        // Predicated region
        $region64: #{discriminator_forward.21} parent=50 // pred_check
          %p720 = pneg %p135
        $region65: #{discriminator_forward.21} parent=50 // pred_check_branch
          %722 = sbr.rel (%p720) target = $region67
        $region66: #{discriminator_forward.21} parent=50 // pred_region
          %s723 = smul.u32 3, %s19
        $region67: #{discriminator_forward.21} parent=50 // pred_fallthru
          _
        // Predicated region
        $region68: #{discriminator_forward.21} parent=50 // pred_check
          %p724 = pneg %p135
        $region69: #{discriminator_forward.21} parent=50 // pred_check_branch
          %726 = sbr.rel (%p724) target = $region71
        $region70: #{discriminator_forward.21} parent=50 // pred_region
          %s727 = smul.u32 3, %s19
          %p728 = scmp.lt.s32.totalorder %s727, 2
          %s729 = scalar_select %p728, %s727, 2
          %p730 = scmp.lt.s32.totalorder %s20, 0
          %s731 = scalar_select %p730, %s20, 0
          %s732 = sadd.s32 %s731, %s729
          %s733 = smul.addr %s732, 8
          %s734 = scalar_lea.vmem %s3, %s733
        $region71: #{discriminator_forward.21} parent=50 // pred_fallthru
          _
      $region51: #{discriminator_forward.21} parent=5 // pred_fallthru
        _
      %p735 = scmp.le.s32.totalorder 2, %s9
      // Predicated region
      $region72: #{discriminator_forward.21} parent=5 // pred_check
        %p736 = pneg %p735
      $region73: #{discriminator_forward.21} parent=5 // pred_check_branch
        %738 = sbr.rel (%p736) target = $region75
      $region74: #{discriminator_forward.21} parent=5 // pred_region
        %s739 = ssub.s32 %s9, 2
      $region75: #{discriminator_forward.21} parent=5 // pred_fallthru
        _
    $region6: #{discriminator_forward.21} parent=1 // loop_footer
      %s13 = sadd.s32 1, %s9
    $region7: #{discriminator_forward.21} parent=1 // loop_footer_branch
      %8 = sbr.rel target = $region3
    $region8: #{discriminator_forward.21} parent=1 // loop_exit
      _

</llo_original>
